<compile_context>
chip_gen: v5e
topology: v5e:2x2
jax: 0.10.0
libtpu: 0.0.40
codegen_flags: <defaults>
</compile_context>

<pallas_src>
import jax
import jax.numpy as jnp
from jax import lax
from jax.experimental import pallas as pl
from jax.experimental.pallas import tpu as pltpu

# ---- problem sizes (small, consistent with the module) ----------------------
F = 8        # feature_size (= d_model = nhead -> head_dim == 1)
S = 16       # sequence length (transformer time axis, LSTM "batch")
B = 4        # batch (transformer batch, LSTM "time" axis due to batch_first)
DFF = 2048   # TransformerEncoderLayer default dim_feedforward
H = 32       # lstm_hidden (constructor arg; default 250, chosen small here)
L = 2        # num_layers
LN_EPS = 1e-5
FFN_CHUNK = 512   # tile of the DFF axis kept live at once
SB = S * B        # merged row count for batched row-wise encoder ops
# NOTE: hidden_size=500 is an unused constructor arg in the PyTorch module.

N_PARAMS = 21


def _layernorm(x, w, b):
    mu = jnp.mean(x, axis=-1, keepdims=True)
    xc = x - mu
    var = jnp.mean(xc * xc, axis=-1, keepdims=True)
    return xc * lax.rsqrt(var + LN_EPS) * w + b


def transam_kernel(src_ref,
                   wq_ref, bq_ref, wk_ref, bk_ref, wv_ref, bv_ref,
                   wo_ref, bo_ref,
                   ln1w_ref, ln1b_ref, ln2w_ref, ln2b_ref,
                   w1_ref, b1_ref, w2_ref, b2_ref,
                   wih_ref, whh_ref, blstm_ref,
                   wdec_ref, bdec_ref,
                   out_ref):
    # Causal mask: mask[i, j] = 0 if j <= i else -inf
    # (matches _generate_square_subsequent_mask). Diagonal is always finite,
    # so the softmax row max is finite and exp(-inf - m) == 0 (no NaNs).
    row = lax.broadcasted_iota(jnp.int32, (S, S), 0)
    col = lax.broadcasted_iota(jnp.int32, (S, S), 1)
    mask3 = jnp.where(col <= row, 0.0, -jnp.inf).astype(jnp.float32)[:, :, None]

    # x rows are ordered (b, s): row b*S + s  == src[s, b, :]
    x = src_ref[...].astype(jnp.float32)                        # (B*S, F)

    # ---- Transformer encoder, batched over all (b, s) rows ----------------
    for l in range(L):
        q = jnp.dot(x, wq_ref[l], preferred_element_type=jnp.float32) + bq_ref[l]
        k = jnp.dot(x, wk_ref[l], preferred_element_type=jnp.float32) + bk_ref[l]
        v = jnp.dot(x, wv_ref[l], preferred_element_type=jnp.float32) + bv_ref[l]

        # head_dim == 1: per-head scores are outer products of scalar features.
        # Only the softmax stays per batch column (contiguous 16-row blocks).
        attn_blocks = []
        for b in range(B):
            qb = q[b * S:(b + 1) * S, :]                        # (S, F)
            kb = k[b * S:(b + 1) * S, :]
            vb = v[b * S:(b + 1) * S, :]
            scores = qb[:, None, :] * kb[None, :, :] + mask3    # (S, S, F)
            m = jnp.max(scores, axis=1, keepdims=True)          # sublane reduce
            p = jnp.exp(scores - m)
            denom = jnp.sum(p, axis=1)                          # (S, F)
            num = jnp.sum(p * vb[None, :, :], axis=1)           # (S, F)
            attn_blocks.append(num * pl.reciprocal(denom, approx=True))
        attn = jnp.concatenate(attn_blocks, axis=0)             # (B*S, F)

        sa = jnp.dot(attn, wo_ref[l],
                     preferred_element_type=jnp.float32) + bo_ref[l]
        # TODO(synk): dropout layers implemented as eval-mode identity.
        x = _layernorm(x + sa, ln1w_ref[l], ln1b_ref[l])

        # FFN: bf16 operands, f32 accumulation, DFF tiled so the (B*S, DFF)
        # intermediate never materializes.
        xb = x.astype(jnp.bfloat16)
        h2 = jnp.zeros((SB, F), jnp.float32)
        for c0 in range(DFF // FFN_CHUNK):
            lo = c0 * FFN_CHUNK
            h1c = (jnp.dot(xb, w1_ref[l, :, lo:lo + FFN_CHUNK],
                           preferred_element_type=jnp.float32)
                   + b1_ref[l, :, lo:lo + FFN_CHUNK])           # (B*S, CH)
            h1c = jnp.maximum(h1c, 0.0).astype(jnp.bfloat16)    # relu
            h2 = h2 + jnp.dot(h1c, w2_ref[l, lo:lo + FFN_CHUNK, :],
                              preferred_element_type=jnp.float32)
        h2 = h2 + b2_ref[l]
        x = _layernorm(x + h2, ln2w_ref[l], ln2b_ref[l])

    # ---- LSTM (batch_first=True): time axis = B, batch = S, hidden = H ----
    # Hoist the input-to-gate matmul (and both biases) off the recurrence.
    gates_x = (jnp.dot(x, wih_ref[...], preferred_element_type=jnp.float32)
               + blstm_ref[...])                                # (B*S, 4H)
    whh = whh_ref[...]                                          # (H, 4H)

    h = jnp.zeros((S, H), jnp.float32)
    c = jnp.zeros((S, H), jnp.float32)
    hbar_rows = []
    for t in range(B):
        gates = (gates_x[t * S:(t + 1) * S, :]
                 + jnp.dot(h, whh, preferred_element_type=jnp.float32))
        # gate layout is [i | f | o | g]: one sigmoid over 3H contiguous lanes,
        # one tanh over the trailing H lanes.
        sig = jax.nn.sigmoid(gates[:, :3 * H])                  # (S, 3H)
        g_g = jnp.tanh(gates[:, 3 * H:])                        # (S, H)
        i_g = sig[:, 0:H]
        f_g = sig[:, H:2 * H]
        o_g = sig[:, 2 * H:3 * H]
        c = f_g * c + i_g * g_g
        h = o_g * jnp.tanh(c)
        # torch.mean(output, dim=0) averages over S; keep only the per-step
        # S-mean of h here, decode once after the loop.
        hbar_rows.append(jnp.mean(h, axis=0, keepdims=True))    # (1, H)

    # decoder Linear(H, 1) applied once, off the serial dependency chain
    hbar = jnp.concatenate(hbar_rows, axis=0)                   # (B, H)
    out_ref[...] = (jnp.sum(hbar * wdec_ref[...], axis=1, keepdims=True)
                    + bdec_ref[...])                            # (B, 1)


def init_params(key):
    ks = iter(jax.random.split(key, 24))

    def unif(shape, scale):
        return jax.random.uniform(next(ks), shape, jnp.float32,
                                  minval=-scale, maxval=scale)

    sF = 1.0 / float(F) ** 0.5
    sDFF = 1.0 / float(DFF) ** 0.5
    sH = 1.0 / float(H) ** 0.5

    wq = unif((L, F, F), sF); bq = unif((L, 1, F), sF)
    wk = unif((L, F, F), sF); bk = unif((L, 1, F), sF)
    wv = unif((L, F, F), sF); bv = unif((L, 1, F), sF)
    wo = unif((L, F, F), sF); bo = jnp.zeros((L, 1, F), jnp.float32)
    ln1w = jnp.ones((L, 1, F), jnp.float32)
    ln1b = jnp.zeros((L, 1, F), jnp.float32)
    ln2w = jnp.ones((L, 1, F), jnp.float32)
    ln2b = jnp.zeros((L, 1, F), jnp.float32)
    # FFN weights stored in bf16 (matmul operands); biases stay f32.
    w1 = unif((L, F, DFF), sF).astype(jnp.bfloat16)
    b1 = unif((L, 1, DFF), sF)
    w2 = unif((L, DFF, F), sDFF).astype(jnp.bfloat16)
    b2 = unif((L, 1, F), sDFF)
    # LSTM weights: gate columns laid out [i|f|o|g] (kernel convention).
    # NOTE: a real PyTorch checkpoint uses [i|f|g|o] and would need its g/o
    # column blocks swapped when loading; for random init this is equivalent.
    wih = unif((F, 4 * H), sH)
    whh = unif((H, 4 * H), sH)
    blstm = unif((1, 4 * H), sH) + unif((1, 4 * H), sH)        # b_ih + b_hh
    wdec = unif((1, H), 0.1)                 # decoder.weight.uniform_(-0.1, 0.1)
    bdec = jnp.zeros((1, 1), jnp.float32)    # decoder.bias.zero_()
    return (wq, bq, wk, bk, wv, bv, wo, bo, ln1w, ln1b, ln2w, ln2b,
            w1, b1, w2, b2, wih, whh, blstm, wdec, bdec)


@jax.jit
def transam_forward(src, params):
    # Reorder (S, B, F) -> (B, S, F) -> (B*S, F) OUTSIDE the kernel so each
    # transformer batch column / LSTM time step is a contiguous, sublane-
    # aligned 16-row block inside the kernel (no in-kernel relayouts).
    src2d = jnp.transpose(src, (1, 0, 2)).reshape(B * S, F)
    vmem = pl.BlockSpec(memory_space=pltpu.MemorySpace.VMEM)
    return pl.pallas_call(
        transam_kernel,
        out_shape=jax.ShapeDtypeStruct((B, 1), jnp.float32),
        in_specs=[vmem] * (1 + N_PARAMS),
        out_specs=vmem,
    )(src2d, *params)


if __name__ == "__main__":
    key = jax.random.PRNGKey(0)
    k_src, k_par = jax.random.split(key)
    src = jax.random.normal(k_src, (S, B, F), jnp.float32)
    params = init_params(k_par)

    out = transam_forward(src, params)
    out = jax.block_until_ready(out)

    assert out.shape == (B, 1), out.shape
    assert bool(jnp.all(jnp.isfinite(out)))
    print("KERNEL_OK")
</pallas_src>

<mosaic_0001>
module attributes {stable_mosaic.version = 11 : i64} {
  func.func @transam_kernel(%arg0: memref<64x8xf32, #tpu.memory_space<vmem>>, %arg1: memref<2x8x8xf32, #tpu.memory_space<vmem>>, %arg2: memref<2x1x8xf32, #tpu.memory_space<vmem>>, %arg3: memref<2x8x8xf32, #tpu.memory_space<vmem>>, %arg4: memref<2x1x8xf32, #tpu.memory_space<vmem>>, %arg5: memref<2x8x8xf32, #tpu.memory_space<vmem>>, %arg6: memref<2x1x8xf32, #tpu.memory_space<vmem>>, %arg7: memref<2x8x8xf32, #tpu.memory_space<vmem>>, %arg8: memref<2x1x8xf32, #tpu.memory_space<vmem>>, %arg9: memref<2x1x8xf32, #tpu.memory_space<vmem>>, %arg10: memref<2x1x8xf32, #tpu.memory_space<vmem>>, %arg11: memref<2x1x8xf32, #tpu.memory_space<vmem>>, %arg12: memref<2x1x8xf32, #tpu.memory_space<vmem>>, %arg13: memref<2x8x2048xbf16, #tpu.memory_space<vmem>>, %arg14: memref<2x1x2048xf32, #tpu.memory_space<vmem>>, %arg15: memref<2x2048x8xbf16, #tpu.memory_space<vmem>>, %arg16: memref<2x1x8xf32, #tpu.memory_space<vmem>>, %arg17: memref<8x128xf32, #tpu.memory_space<vmem>>, %arg18: memref<32x128xf32, #tpu.memory_space<vmem>>, %arg19: memref<1x128xf32, #tpu.memory_space<vmem>>, %arg20: memref<1x32xf32, #tpu.memory_space<vmem>>, %arg21: memref<1x1xf32, #tpu.memory_space<vmem>>, %arg22: memref<4x1xf32, #tpu.memory_space<vmem>>) attributes {dimension_semantics = [], scalar_prefetch = 0 : i64, scratch_operands = 0 : i64, tpu.core_type = #tpu.core_type<tc>} {
    %0 = tpu.iota {dimensions = array<i32: 0>} : vector<16x16xi32>
    %1 = tpu.iota {dimensions = array<i32: 1>} : vector<16x16xi32>
    %2 = arith.cmpi sle, %1, %0 : vector<16x16xi32>
    %cst = arith.constant 0.000000e+00 : f32
    %cst_0 = arith.constant 0xFF800000 : f32
    %3 = vector.broadcast %cst : f32 to vector<16x16xf32>
    %4 = vector.broadcast %cst_0 : f32 to vector<16x16xf32>
    %5 = arith.select %2, %3, %4 : vector<16x16xi1>, vector<16x16xf32>
    %6 = vector.shape_cast %5 : vector<16x16xf32> to vector<16x16x1xf32>
    %c0 = arith.constant 0 : index
    %c0_1 = arith.constant 0 : index
    %7 = vector.load %arg0[%c0, %c0_1] : memref<64x8xf32, #tpu.memory_space<vmem>>, vector<64x8xf32>
    %c0_2 = arith.constant 0 : index
    %c0_3 = arith.constant 0 : index
    %c0_4 = arith.constant 0 : index
    %8 = vector.load %arg1[%c0_2, %c0_3, %c0_4] : memref<2x8x8xf32, #tpu.memory_space<vmem>>, vector<1x8x8xf32>
    %9 = vector.shape_cast %8 : vector<1x8x8xf32> to vector<8x8xf32>
    %cst_5 = arith.constant dense<0.000000e+00> : vector<64x8xf32>
    %10 = tpu.matmul %7, %9, %cst_5 {dimension_numbers = #tpu.dot_dimension_numbers<[1], [0], [0], [1], [0, 0, 1, 1], [], []>} : vector<64x8xf32>, vector<8x8xf32>, vector<64x8xf32> -> vector<64x8xf32>
    %c0_6 = arith.constant 0 : index
    %c0_7 = arith.constant 0 : index
    %c0_8 = arith.constant 0 : index
    %11 = vector.load %arg2[%c0_6, %c0_7, %c0_8] : memref<2x1x8xf32, #tpu.memory_space<vmem>>, vector<1x1x8xf32>
    %12 = vector.shape_cast %11 : vector<1x1x8xf32> to vector<1x8xf32>
    %13 = vector.broadcast %12 : vector<1x8xf32> to vector<64x8xf32>
    %14 = arith.addf %10, %13 : vector<64x8xf32>
    %c0_9 = arith.constant 0 : index
    %c0_10 = arith.constant 0 : index
    %c0_11 = arith.constant 0 : index
    %15 = vector.load %arg3[%c0_9, %c0_10, %c0_11] : memref<2x8x8xf32, #tpu.memory_space<vmem>>, vector<1x8x8xf32>
    %16 = vector.shape_cast %15 : vector<1x8x8xf32> to vector<8x8xf32>
    %cst_12 = arith.constant dense<0.000000e+00> : vector<64x8xf32>
    %17 = tpu.matmul %7, %16, %cst_12 {dimension_numbers = #tpu.dot_dimension_numbers<[1], [0], [0], [1], [0, 0, 1, 1], [], []>} : vector<64x8xf32>, vector<8x8xf32>, vector<64x8xf32> -> vector<64x8xf32>
    %c0_13 = arith.constant 0 : index
    %c0_14 = arith.constant 0 : index
    %c0_15 = arith.constant 0 : index
    %18 = vector.load %arg4[%c0_13, %c0_14, %c0_15] : memref<2x1x8xf32, #tpu.memory_space<vmem>>, vector<1x1x8xf32>
    %19 = vector.shape_cast %18 : vector<1x1x8xf32> to vector<1x8xf32>
    %20 = vector.broadcast %19 : vector<1x8xf32> to vector<64x8xf32>
    %21 = arith.addf %17, %20 : vector<64x8xf32>
    %c0_16 = arith.constant 0 : index
    %c0_17 = arith.constant 0 : index
    %c0_18 = arith.constant 0 : index
    %22 = vector.load %arg5[%c0_16, %c0_17, %c0_18] : memref<2x8x8xf32, #tpu.memory_space<vmem>>, vector<1x8x8xf32>
    %23 = vector.shape_cast %22 : vector<1x8x8xf32> to vector<8x8xf32>
    %cst_19 = arith.constant dense<0.000000e+00> : vector<64x8xf32>
    %24 = tpu.matmul %7, %23, %cst_19 {dimension_numbers = #tpu.dot_dimension_numbers<[1], [0], [0], [1], [0, 0, 1, 1], [], []>} : vector<64x8xf32>, vector<8x8xf32>, vector<64x8xf32> -> vector<64x8xf32>
    %c0_20 = arith.constant 0 : index
    %c0_21 = arith.constant 0 : index
    %c0_22 = arith.constant 0 : index
    %25 = vector.load %arg6[%c0_20, %c0_21, %c0_22] : memref<2x1x8xf32, #tpu.memory_space<vmem>>, vector<1x1x8xf32>
    %26 = vector.shape_cast %25 : vector<1x1x8xf32> to vector<1x8xf32>
    %27 = vector.broadcast %26 : vector<1x8xf32> to vector<64x8xf32>
    %28 = arith.addf %24, %27 : vector<64x8xf32>
    %29 = vector.extract_strided_slice %14 {offsets = [0, 0], sizes = [16, 8], strides = [1, 1]} : vector<64x8xf32> to vector<16x8xf32>
    %30 = vector.extract_strided_slice %21 {offsets = [0, 0], sizes = [16, 8], strides = [1, 1]} : vector<64x8xf32> to vector<16x8xf32>
    %31 = vector.extract_strided_slice %28 {offsets = [0, 0], sizes = [16, 8], strides = [1, 1]} : vector<64x8xf32> to vector<16x8xf32>
    %32 = vector.shape_cast %29 : vector<16x8xf32> to vector<16x1x8xf32>
    %33 = vector.shape_cast %30 : vector<16x8xf32> to vector<1x16x8xf32>
    %34 = vector.broadcast %32 : vector<16x1x8xf32> to vector<16x16x8xf32>
    %35 = vector.broadcast %33 : vector<1x16x8xf32> to vector<16x16x8xf32>
    %36 = arith.mulf %34, %35 : vector<16x16x8xf32>
    %37 = vector.broadcast %6 : vector<16x16x1xf32> to vector<16x16x8xf32>
    %38 = arith.addf %36, %37 : vector<16x16x8xf32>
    %cst_23 = arith.constant dense<0xFF800000> : vector<16x8xf32>
    %39 = vector.multi_reduction <maximumf>, %38, %cst_23 [1] : vector<16x16x8xf32> to vector<16x8xf32>
    %40 = vector.shape_cast %39 : vector<16x8xf32> to vector<16x1x8xf32>
    %41 = vector.broadcast %40 : vector<16x1x8xf32> to vector<16x16x8xf32>
    %42 = arith.subf %38, %41 : vector<16x16x8xf32>
    %43 = math.exp %42 : vector<16x16x8xf32>
    %cst_24 = arith.constant dense<0.000000e+00> : vector<16x8xf32>
    %44 = vector.multi_reduction <add>, %43, %cst_24 [1] : vector<16x16x8xf32> to vector<16x8xf32>
    %45 = vector.shape_cast %31 : vector<16x8xf32> to vector<1x16x8xf32>
    %46 = vector.broadcast %45 : vector<1x16x8xf32> to vector<16x16x8xf32>
    %47 = arith.mulf %43, %46 : vector<16x16x8xf32>
    %cst_25 = arith.constant dense<0.000000e+00> : vector<16x8xf32>
    %48 = vector.multi_reduction <add>, %47, %cst_25 [1] : vector<16x16x8xf32> to vector<16x8xf32>
    %49 = tpu.reciprocal %44 {approx = true} : vector<16x8xf32> -> vector<16x8xf32>
    %50 = arith.mulf %48, %49 : vector<16x8xf32>
    %51 = vector.extract_strided_slice %14 {offsets = [16, 0], sizes = [16, 8], strides = [1, 1]} : vector<64x8xf32> to vector<16x8xf32>
    %52 = vector.extract_strided_slice %21 {offsets = [16, 0], sizes = [16, 8], strides = [1, 1]} : vector<64x8xf32> to vector<16x8xf32>
    %53 = vector.extract_strided_slice %28 {offsets = [16, 0], sizes = [16, 8], strides = [1, 1]} : vector<64x8xf32> to vector<16x8xf32>
    %54 = vector.shape_cast %51 : vector<16x8xf32> to vector<16x1x8xf32>
    %55 = vector.shape_cast %52 : vector<16x8xf32> to vector<1x16x8xf32>
    %56 = vector.broadcast %54 : vector<16x1x8xf32> to vector<16x16x8xf32>
    %57 = vector.broadcast %55 : vector<1x16x8xf32> to vector<16x16x8xf32>
    %58 = arith.mulf %56, %57 : vector<16x16x8xf32>
    %59 = vector.broadcast %6 : vector<16x16x1xf32> to vector<16x16x8xf32>
    %60 = arith.addf %58, %59 : vector<16x16x8xf32>
    %cst_26 = arith.constant dense<0xFF800000> : vector<16x8xf32>
    %61 = vector.multi_reduction <maximumf>, %60, %cst_26 [1] : vector<16x16x8xf32> to vector<16x8xf32>
    %62 = vector.shape_cast %61 : vector<16x8xf32> to vector<16x1x8xf32>
    %63 = vector.broadcast %62 : vector<16x1x8xf32> to vector<16x16x8xf32>
    %64 = arith.subf %60, %63 : vector<16x16x8xf32>
    %65 = math.exp %64 : vector<16x16x8xf32>
    %cst_27 = arith.constant dense<0.000000e+00> : vector<16x8xf32>
    %66 = vector.multi_reduction <add>, %65, %cst_27 [1] : vector<16x16x8xf32> to vector<16x8xf32>
    %67 = vector.shape_cast %53 : vector<16x8xf32> to vector<1x16x8xf32>
    %68 = vector.broadcast %67 : vector<1x16x8xf32> to vector<16x16x8xf32>
    %69 = arith.mulf %65, %68 : vector<16x16x8xf32>
    %cst_28 = arith.constant dense<0.000000e+00> : vector<16x8xf32>
    %70 = vector.multi_reduction <add>, %69, %cst_28 [1] : vector<16x16x8xf32> to vector<16x8xf32>
    %71 = tpu.reciprocal %66 {approx = true} : vector<16x8xf32> -> vector<16x8xf32>
    %72 = arith.mulf %70, %71 : vector<16x8xf32>
    %73 = vector.extract_strided_slice %14 {offsets = [32, 0], sizes = [16, 8], strides = [1, 1]} : vector<64x8xf32> to vector<16x8xf32>
    %74 = vector.extract_strided_slice %21 {offsets = [32, 0], sizes = [16, 8], strides = [1, 1]} : vector<64x8xf32> to vector<16x8xf32>
    %75 = vector.extract_strided_slice %28 {offsets = [32, 0], sizes = [16, 8], strides = [1, 1]} : vector<64x8xf32> to vector<16x8xf32>
    %76 = vector.shape_cast %73 : vector<16x8xf32> to vector<16x1x8xf32>
    %77 = vector.shape_cast %74 : vector<16x8xf32> to vector<1x16x8xf32>
    %78 = vector.broadcast %76 : vector<16x1x8xf32> to vector<16x16x8xf32>
    %79 = vector.broadcast %77 : vector<1x16x8xf32> to vector<16x16x8xf32>
    %80 = arith.mulf %78, %79 : vector<16x16x8xf32>
    %81 = vector.broadcast %6 : vector<16x16x1xf32> to vector<16x16x8xf32>
    %82 = arith.addf %80, %81 : vector<16x16x8xf32>
    %cst_29 = arith.constant dense<0xFF800000> : vector<16x8xf32>
    %83 = vector.multi_reduction <maximumf>, %82, %cst_29 [1] : vector<16x16x8xf32> to vector<16x8xf32>
    %84 = vector.shape_cast %83 : vector<16x8xf32> to vector<16x1x8xf32>
    %85 = vector.broadcast %84 : vector<16x1x8xf32> to vector<16x16x8xf32>
    %86 = arith.subf %82, %85 : vector<16x16x8xf32>
    %87 = math.exp %86 : vector<16x16x8xf32>
    %cst_30 = arith.constant dense<0.000000e+00> : vector<16x8xf32>
    %88 = vector.multi_reduction <add>, %87, %cst_30 [1] : vector<16x16x8xf32> to vector<16x8xf32>
    %89 = vector.shape_cast %75 : vector<16x8xf32> to vector<1x16x8xf32>
    %90 = vector.broadcast %89 : vector<1x16x8xf32> to vector<16x16x8xf32>
    %91 = arith.mulf %87, %90 : vector<16x16x8xf32>
    %cst_31 = arith.constant dense<0.000000e+00> : vector<16x8xf32>
    %92 = vector.multi_reduction <add>, %91, %cst_31 [1] : vector<16x16x8xf32> to vector<16x8xf32>
    %93 = tpu.reciprocal %88 {approx = true} : vector<16x8xf32> -> vector<16x8xf32>
    %94 = arith.mulf %92, %93 : vector<16x8xf32>
    %95 = vector.extract_strided_slice %14 {offsets = [48, 0], sizes = [16, 8], strides = [1, 1]} : vector<64x8xf32> to vector<16x8xf32>
    %96 = vector.extract_strided_slice %21 {offsets = [48, 0], sizes = [16, 8], strides = [1, 1]} : vector<64x8xf32> to vector<16x8xf32>
    %97 = vector.extract_strided_slice %28 {offsets = [48, 0], sizes = [16, 8], strides = [1, 1]} : vector<64x8xf32> to vector<16x8xf32>
    %98 = vector.shape_cast %95 : vector<16x8xf32> to vector<16x1x8xf32>
    %99 = vector.shape_cast %96 : vector<16x8xf32> to vector<1x16x8xf32>
    %100 = vector.broadcast %98 : vector<16x1x8xf32> to vector<16x16x8xf32>
    %101 = vector.broadcast %99 : vector<1x16x8xf32> to vector<16x16x8xf32>
    %102 = arith.mulf %100, %101 : vector<16x16x8xf32>
    %103 = vector.broadcast %6 : vector<16x16x1xf32> to vector<16x16x8xf32>
    %104 = arith.addf %102, %103 : vector<16x16x8xf32>
    %cst_32 = arith.constant dense<0xFF800000> : vector<16x8xf32>
    %105 = vector.multi_reduction <maximumf>, %104, %cst_32 [1] : vector<16x16x8xf32> to vector<16x8xf32>
    %106 = vector.shape_cast %105 : vector<16x8xf32> to vector<16x1x8xf32>
    %107 = vector.broadcast %106 : vector<16x1x8xf32> to vector<16x16x8xf32>
    %108 = arith.subf %104, %107 : vector<16x16x8xf32>
    %109 = math.exp %108 : vector<16x16x8xf32>
    %cst_33 = arith.constant dense<0.000000e+00> : vector<16x8xf32>
    %110 = vector.multi_reduction <add>, %109, %cst_33 [1] : vector<16x16x8xf32> to vector<16x8xf32>
    %111 = vector.shape_cast %97 : vector<16x8xf32> to vector<1x16x8xf32>
    %112 = vector.broadcast %111 : vector<1x16x8xf32> to vector<16x16x8xf32>
    %113 = arith.mulf %109, %112 : vector<16x16x8xf32>
    %cst_34 = arith.constant dense<0.000000e+00> : vector<16x8xf32>
    %114 = vector.multi_reduction <add>, %113, %cst_34 [1] : vector<16x16x8xf32> to vector<16x8xf32>
    %115 = tpu.reciprocal %110 {approx = true} : vector<16x8xf32> -> vector<16x8xf32>
    %116 = arith.mulf %114, %115 : vector<16x8xf32>
    %117 = tpu.concatenate %50, %72, %94, %116 in 0 : vector<16x8xf32>, vector<16x8xf32>, vector<16x8xf32>, vector<16x8xf32> -> vector<64x8xf32>
    %c0_35 = arith.constant 0 : index
    %c0_36 = arith.constant 0 : index
    %c0_37 = arith.constant 0 : index
    %118 = vector.load %arg7[%c0_35, %c0_36, %c0_37] : memref<2x8x8xf32, #tpu.memory_space<vmem>>, vector<1x8x8xf32>
    %119 = vector.shape_cast %118 : vector<1x8x8xf32> to vector<8x8xf32>
    %cst_38 = arith.constant dense<0.000000e+00> : vector<64x8xf32>
    %120 = tpu.matmul %117, %119, %cst_38 {dimension_numbers = #tpu.dot_dimension_numbers<[1], [0], [0], [1], [0, 0, 1, 1], [], []>} : vector<64x8xf32>, vector<8x8xf32>, vector<64x8xf32> -> vector<64x8xf32>
    %c0_39 = arith.constant 0 : index
    %c0_40 = arith.constant 0 : index
    %c0_41 = arith.constant 0 : index
    %121 = vector.load %arg8[%c0_39, %c0_40, %c0_41] : memref<2x1x8xf32, #tpu.memory_space<vmem>>, vector<1x1x8xf32>
    %122 = vector.shape_cast %121 : vector<1x1x8xf32> to vector<1x8xf32>
    %123 = vector.broadcast %122 : vector<1x8xf32> to vector<64x8xf32>
    %124 = arith.addf %120, %123 : vector<64x8xf32>
    %125 = arith.addf %7, %124 : vector<64x8xf32>
    %c0_42 = arith.constant 0 : index
    %c0_43 = arith.constant 0 : index
    %c0_44 = arith.constant 0 : index
    %126 = vector.load %arg9[%c0_42, %c0_43, %c0_44] : memref<2x1x8xf32, #tpu.memory_space<vmem>>, vector<1x1x8xf32>
    %127 = vector.shape_cast %126 : vector<1x1x8xf32> to vector<1x8xf32>
    %c0_45 = arith.constant 0 : index
    %c0_46 = arith.constant 0 : index
    %c0_47 = arith.constant 0 : index
    %128 = vector.load %arg10[%c0_45, %c0_46, %c0_47] : memref<2x1x8xf32, #tpu.memory_space<vmem>>, vector<1x1x8xf32>
    %129 = vector.shape_cast %128 : vector<1x1x8xf32> to vector<1x8xf32>
    %cst_48 = arith.constant dense<0.000000e+00> : vector<64xf32>
    %130 = vector.multi_reduction <add>, %125, %cst_48 [1] : vector<64x8xf32> to vector<64xf32>
    %131 = vector.shape_cast %130 : vector<64xf32> to vector<64x1xf32>
    %cst_49 = arith.constant 8.000000e+00 : f32
    %132 = vector.broadcast %cst_49 : f32 to vector<64x1xf32>
    %133 = arith.divf %131, %132 : vector<64x1xf32>
    %134 = vector.broadcast %133 : vector<64x1xf32> to vector<64x8xf32>
    %135 = arith.subf %125, %134 : vector<64x8xf32>
    %136 = arith.mulf %135, %135 : vector<64x8xf32>
    %cst_50 = arith.constant dense<0.000000e+00> : vector<64xf32>
    %137 = vector.multi_reduction <add>, %136, %cst_50 [1] : vector<64x8xf32> to vector<64xf32>
    %138 = vector.shape_cast %137 : vector<64xf32> to vector<64x1xf32>
    %cst_51 = arith.constant 8.000000e+00 : f32
    %139 = vector.broadcast %cst_51 : f32 to vector<64x1xf32>
    %140 = arith.divf %138, %139 : vector<64x1xf32>
    %cst_52 = arith.constant 9.99999974E-6 : f32
    %141 = vector.broadcast %cst_52 : f32 to vector<64x1xf32>
    %142 = arith.addf %140, %141 : vector<64x1xf32>
    %143 = math.rsqrt %142 : vector<64x1xf32>
    %144 = vector.broadcast %143 : vector<64x1xf32> to vector<64x8xf32>
    %145 = arith.mulf %135, %144 : vector<64x8xf32>
    %146 = vector.broadcast %127 : vector<1x8xf32> to vector<64x8xf32>
    %147 = arith.mulf %145, %146 : vector<64x8xf32>
    %148 = vector.broadcast %129 : vector<1x8xf32> to vector<64x8xf32>
    %149 = arith.addf %147, %148 : vector<64x8xf32>
    %150 = arith.truncf %149 : vector<64x8xf32> to vector<64x8xbf16>
    %cst_53 = arith.constant 0.000000e+00 : f32
    %151 = vector.broadcast %cst_53 : f32 to vector<64x8xf32>
    %c0_54 = arith.constant 0 : index
    %c0_55 = arith.constant 0 : index
    %c0_56 = arith.constant 0 : index
    %152 = vector.load %arg13[%c0_54, %c0_55, %c0_56] : memref<2x8x2048xbf16, #tpu.memory_space<vmem>>, vector<1x8x512xbf16>
    %153 = vector.shape_cast %152 : vector<1x8x512xbf16> to vector<8x512xbf16>
    %cst_57 = arith.constant dense<0.000000e+00> : vector<64x512xf32>
    %154 = tpu.matmul %150, %153, %cst_57 {dimension_numbers = #tpu.dot_dimension_numbers<[1], [0], [0], [1], [0, 0, 1, 1], [], []>} : vector<64x8xbf16>, vector<8x512xbf16>, vector<64x512xf32> -> vector<64x512xf32>
    %c0_58 = arith.constant 0 : index
    %c0_59 = arith.constant 0 : index
    %c0_60 = arith.constant 0 : index
    %155 = vector.load %arg14[%c0_58, %c0_59, %c0_60] : memref<2x1x2048xf32, #tpu.memory_space<vmem>>, vector<1x1x512xf32>
    %156 = vector.shape_cast %155 : vector<1x1x512xf32> to vector<1x512xf32>
    %157 = vector.broadcast %156 : vector<1x512xf32> to vector<64x512xf32>
    %158 = arith.addf %154, %157 : vector<64x512xf32>
    %cst_61 = arith.constant 0.000000e+00 : f32
    %159 = vector.broadcast %cst_61 : f32 to vector<64x512xf32>
    %160 = arith.maximumf %158, %159 : vector<64x512xf32>
    %161 = arith.truncf %160 : vector<64x512xf32> to vector<64x512xbf16>
    %c0_62 = arith.constant 0 : index
    %c0_63 = arith.constant 0 : index
    %c0_64 = arith.constant 0 : index
    %162 = vector.load %arg15[%c0_62, %c0_63, %c0_64] : memref<2x2048x8xbf16, #tpu.memory_space<vmem>>, vector<1x512x8xbf16>
    %163 = vector.shape_cast %162 : vector<1x512x8xbf16> to vector<512x8xbf16>
    %cst_65 = arith.constant dense<0.000000e+00> : vector<64x8xf32>
    %164 = tpu.matmul %161, %163, %cst_65 {dimension_numbers = #tpu.dot_dimension_numbers<[1], [0], [0], [1], [0, 0, 1, 1], [], []>} : vector<64x512xbf16>, vector<512x8xbf16>, vector<64x8xf32> -> vector<64x8xf32>
    %165 = arith.addf %151, %164 : vector<64x8xf32>
    %c0_66 = arith.constant 0 : index
    %c0_67 = arith.constant 0 : index
    %c512 = arith.constant 512 : index
    %166 = vector.load %arg13[%c0_66, %c0_67, %c512] : memref<2x8x2048xbf16, #tpu.memory_space<vmem>>, vector<1x8x512xbf16>
    %167 = vector.shape_cast %166 : vector<1x8x512xbf16> to vector<8x512xbf16>
    %cst_68 = arith.constant dense<0.000000e+00> : vector<64x512xf32>
    %168 = tpu.matmul %150, %167, %cst_68 {dimension_numbers = #tpu.dot_dimension_numbers<[1], [0], [0], [1], [0, 0, 1, 1], [], []>} : vector<64x8xbf16>, vector<8x512xbf16>, vector<64x512xf32> -> vector<64x512xf32>
    %c0_69 = arith.constant 0 : index
    %c0_70 = arith.constant 0 : index
    %c512_71 = arith.constant 512 : index
    %169 = vector.load %arg14[%c0_69, %c0_70, %c512_71] : memref<2x1x2048xf32, #tpu.memory_space<vmem>>, vector<1x1x512xf32>
    %170 = vector.shape_cast %169 : vector<1x1x512xf32> to vector<1x512xf32>
    %171 = vector.broadcast %170 : vector<1x512xf32> to vector<64x512xf32>
    %172 = arith.addf %168, %171 : vector<64x512xf32>
    %cst_72 = arith.constant 0.000000e+00 : f32
    %173 = vector.broadcast %cst_72 : f32 to vector<64x512xf32>
    %174 = arith.maximumf %172, %173 : vector<64x512xf32>
    %175 = arith.truncf %174 : vector<64x512xf32> to vector<64x512xbf16>
    %c0_73 = arith.constant 0 : index
    %c512_74 = arith.constant 512 : index
    %c0_75 = arith.constant 0 : index
    %176 = vector.load %arg15[%c0_73, %c512_74, %c0_75] : memref<2x2048x8xbf16, #tpu.memory_space<vmem>>, vector<1x512x8xbf16>
    %177 = vector.shape_cast %176 : vector<1x512x8xbf16> to vector<512x8xbf16>
    %cst_76 = arith.constant dense<0.000000e+00> : vector<64x8xf32>
    %178 = tpu.matmul %175, %177, %cst_76 {dimension_numbers = #tpu.dot_dimension_numbers<[1], [0], [0], [1], [0, 0, 1, 1], [], []>} : vector<64x512xbf16>, vector<512x8xbf16>, vector<64x8xf32> -> vector<64x8xf32>
    %179 = arith.addf %165, %178 : vector<64x8xf32>
    %c0_77 = arith.constant 0 : index
    %c0_78 = arith.constant 0 : index
    %c1024 = arith.constant 1024 : index
    %180 = vector.load %arg13[%c0_77, %c0_78, %c1024] : memref<2x8x2048xbf16, #tpu.memory_space<vmem>>, vector<1x8x512xbf16>
    %181 = vector.shape_cast %180 : vector<1x8x512xbf16> to vector<8x512xbf16>
    %cst_79 = arith.constant dense<0.000000e+00> : vector<64x512xf32>
    %182 = tpu.matmul %150, %181, %cst_79 {dimension_numbers = #tpu.dot_dimension_numbers<[1], [0], [0], [1], [0, 0, 1, 1], [], []>} : vector<64x8xbf16>, vector<8x512xbf16>, vector<64x512xf32> -> vector<64x512xf32>
    %c0_80 = arith.constant 0 : index
    %c0_81 = arith.constant 0 : index
    %c1024_82 = arith.constant 1024 : index
    %183 = vector.load %arg14[%c0_80, %c0_81, %c1024_82] : memref<2x1x2048xf32, #tpu.memory_space<vmem>>, vector<1x1x512xf32>
    %184 = vector.shape_cast %183 : vector<1x1x512xf32> to vector<1x512xf32>
    %185 = vector.broadcast %184 : vector<1x512xf32> to vector<64x512xf32>
    %186 = arith.addf %182, %185 : vector<64x512xf32>
    %cst_83 = arith.constant 0.000000e+00 : f32
    %187 = vector.broadcast %cst_83 : f32 to vector<64x512xf32>
    %188 = arith.maximumf %186, %187 : vector<64x512xf32>
    %189 = arith.truncf %188 : vector<64x512xf32> to vector<64x512xbf16>
    %c0_84 = arith.constant 0 : index
    %c1024_85 = arith.constant 1024 : index
    %c0_86 = arith.constant 0 : index
    %190 = vector.load %arg15[%c0_84, %c1024_85, %c0_86] : memref<2x2048x8xbf16, #tpu.memory_space<vmem>>, vector<1x512x8xbf16>
    %191 = vector.shape_cast %190 : vector<1x512x8xbf16> to vector<512x8xbf16>
    %cst_87 = arith.constant dense<0.000000e+00> : vector<64x8xf32>
    %192 = tpu.matmul %189, %191, %cst_87 {dimension_numbers = #tpu.dot_dimension_numbers<[1], [0], [0], [1], [0, 0, 1, 1], [], []>} : vector<64x512xbf16>, vector<512x8xbf16>, vector<64x8xf32> -> vector<64x8xf32>
    %193 = arith.addf %179, %192 : vector<64x8xf32>
    %c0_88 = arith.constant 0 : index
    %c0_89 = arith.constant 0 : index
    %c1536 = arith.constant 1536 : index
    %194 = vector.load %arg13[%c0_88, %c0_89, %c1536] : memref<2x8x2048xbf16, #tpu.memory_space<vmem>>, vector<1x8x512xbf16>
    %195 = vector.shape_cast %194 : vector<1x8x512xbf16> to vector<8x512xbf16>
    %cst_90 = arith.constant dense<0.000000e+00> : vector<64x512xf32>
    %196 = tpu.matmul %150, %195, %cst_90 {dimension_numbers = #tpu.dot_dimension_numbers<[1], [0], [0], [1], [0, 0, 1, 1], [], []>} : vector<64x8xbf16>, vector<8x512xbf16>, vector<64x512xf32> -> vector<64x512xf32>
    %c0_91 = arith.constant 0 : index
    %c0_92 = arith.constant 0 : index
    %c1536_93 = arith.constant 1536 : index
    %197 = vector.load %arg14[%c0_91, %c0_92, %c1536_93] : memref<2x1x2048xf32, #tpu.memory_space<vmem>>, vector<1x1x512xf32>
    %198 = vector.shape_cast %197 : vector<1x1x512xf32> to vector<1x512xf32>
    %199 = vector.broadcast %198 : vector<1x512xf32> to vector<64x512xf32>
    %200 = arith.addf %196, %199 : vector<64x512xf32>
    %cst_94 = arith.constant 0.000000e+00 : f32
    %201 = vector.broadcast %cst_94 : f32 to vector<64x512xf32>
    %202 = arith.maximumf %200, %201 : vector<64x512xf32>
    %203 = arith.truncf %202 : vector<64x512xf32> to vector<64x512xbf16>
    %c0_95 = arith.constant 0 : index
    %c1536_96 = arith.constant 1536 : index
    %c0_97 = arith.constant 0 : index
    %204 = vector.load %arg15[%c0_95, %c1536_96, %c0_97] : memref<2x2048x8xbf16, #tpu.memory_space<vmem>>, vector<1x512x8xbf16>
    %205 = vector.shape_cast %204 : vector<1x512x8xbf16> to vector<512x8xbf16>
    %cst_98 = arith.constant dense<0.000000e+00> : vector<64x8xf32>
    %206 = tpu.matmul %203, %205, %cst_98 {dimension_numbers = #tpu.dot_dimension_numbers<[1], [0], [0], [1], [0, 0, 1, 1], [], []>} : vector<64x512xbf16>, vector<512x8xbf16>, vector<64x8xf32> -> vector<64x8xf32>
    %207 = arith.addf %193, %206 : vector<64x8xf32>
    %c0_99 = arith.constant 0 : index
    %c0_100 = arith.constant 0 : index
    %c0_101 = arith.constant 0 : index
    %208 = vector.load %arg16[%c0_99, %c0_100, %c0_101] : memref<2x1x8xf32, #tpu.memory_space<vmem>>, vector<1x1x8xf32>
    %209 = vector.shape_cast %208 : vector<1x1x8xf32> to vector<1x8xf32>
    %210 = vector.broadcast %209 : vector<1x8xf32> to vector<64x8xf32>
    %211 = arith.addf %207, %210 : vector<64x8xf32>
    %212 = arith.addf %149, %211 : vector<64x8xf32>
    %c0_102 = arith.constant 0 : index
    %c0_103 = arith.constant 0 : index
    %c0_104 = arith.constant 0 : index
    %213 = vector.load %arg11[%c0_102, %c0_103, %c0_104] : memref<2x1x8xf32, #tpu.memory_space<vmem>>, vector<1x1x8xf32>
    %214 = vector.shape_cast %213 : vector<1x1x8xf32> to vector<1x8xf32>
    %c0_105 = arith.constant 0 : index
    %c0_106 = arith.constant 0 : index
    %c0_107 = arith.constant 0 : index
    %215 = vector.load %arg12[%c0_105, %c0_106, %c0_107] : memref<2x1x8xf32, #tpu.memory_space<vmem>>, vector<1x1x8xf32>
    %216 = vector.shape_cast %215 : vector<1x1x8xf32> to vector<1x8xf32>
    %cst_108 = arith.constant dense<0.000000e+00> : vector<64xf32>
    %217 = vector.multi_reduction <add>, %212, %cst_108 [1] : vector<64x8xf32> to vector<64xf32>
    %218 = vector.shape_cast %217 : vector<64xf32> to vector<64x1xf32>
    %cst_109 = arith.constant 8.000000e+00 : f32
    %219 = vector.broadcast %cst_109 : f32 to vector<64x1xf32>
    %220 = arith.divf %218, %219 : vector<64x1xf32>
    %221 = vector.broadcast %220 : vector<64x1xf32> to vector<64x8xf32>
    %222 = arith.subf %212, %221 : vector<64x8xf32>
    %223 = arith.mulf %222, %222 : vector<64x8xf32>
    %cst_110 = arith.constant dense<0.000000e+00> : vector<64xf32>
    %224 = vector.multi_reduction <add>, %223, %cst_110 [1] : vector<64x8xf32> to vector<64xf32>
    %225 = vector.shape_cast %224 : vector<64xf32> to vector<64x1xf32>
    %cst_111 = arith.constant 8.000000e+00 : f32
    %226 = vector.broadcast %cst_111 : f32 to vector<64x1xf32>
    %227 = arith.divf %225, %226 : vector<64x1xf32>
    %cst_112 = arith.constant 9.99999974E-6 : f32
    %228 = vector.broadcast %cst_112 : f32 to vector<64x1xf32>
    %229 = arith.addf %227, %228 : vector<64x1xf32>
    %230 = math.rsqrt %229 : vector<64x1xf32>
    %231 = vector.broadcast %230 : vector<64x1xf32> to vector<64x8xf32>
    %232 = arith.mulf %222, %231 : vector<64x8xf32>
    %233 = vector.broadcast %214 : vector<1x8xf32> to vector<64x8xf32>
    %234 = arith.mulf %232, %233 : vector<64x8xf32>
    %235 = vector.broadcast %216 : vector<1x8xf32> to vector<64x8xf32>
    %236 = arith.addf %234, %235 : vector<64x8xf32>
    %c1 = arith.constant 1 : index
    %c0_113 = arith.constant 0 : index
    %c0_114 = arith.constant 0 : index
    %237 = vector.load %arg1[%c1, %c0_113, %c0_114] : memref<2x8x8xf32, #tpu.memory_space<vmem>>, vector<1x8x8xf32>
    %238 = vector.shape_cast %237 : vector<1x8x8xf32> to vector<8x8xf32>
    %cst_115 = arith.constant dense<0.000000e+00> : vector<64x8xf32>
    %239 = tpu.matmul %236, %238, %cst_115 {dimension_numbers = #tpu.dot_dimension_numbers<[1], [0], [0], [1], [0, 0, 1, 1], [], []>} : vector<64x8xf32>, vector<8x8xf32>, vector<64x8xf32> -> vector<64x8xf32>
    %c1_116 = arith.constant 1 : index
    %c0_117 = arith.constant 0 : index
    %c0_118 = arith.constant 0 : index
    %240 = vector.load %arg2[%c1_116, %c0_117, %c0_118] : memref<2x1x8xf32, #tpu.memory_space<vmem>>, vector<1x1x8xf32>
    %241 = vector.shape_cast %240 : vector<1x1x8xf32> to vector<1x8xf32>
    %242 = vector.broadcast %241 : vector<1x8xf32> to vector<64x8xf32>
    %243 = arith.addf %239, %242 : vector<64x8xf32>
    %c1_119 = arith.constant 1 : index
    %c0_120 = arith.constant 0 : index
    %c0_121 = arith.constant 0 : index
    %244 = vector.load %arg3[%c1_119, %c0_120, %c0_121] : memref<2x8x8xf32, #tpu.memory_space<vmem>>, vector<1x8x8xf32>
    %245 = vector.shape_cast %244 : vector<1x8x8xf32> to vector<8x8xf32>
    %cst_122 = arith.constant dense<0.000000e+00> : vector<64x8xf32>
    %246 = tpu.matmul %236, %245, %cst_122 {dimension_numbers = #tpu.dot_dimension_numbers<[1], [0], [0], [1], [0, 0, 1, 1], [], []>} : vector<64x8xf32>, vector<8x8xf32>, vector<64x8xf32> -> vector<64x8xf32>
    %c1_123 = arith.constant 1 : index
    %c0_124 = arith.constant 0 : index
    %c0_125 = arith.constant 0 : index
    %247 = vector.load %arg4[%c1_123, %c0_124, %c0_125] : memref<2x1x8xf32, #tpu.memory_space<vmem>>, vector<1x1x8xf32>
    %248 = vector.shape_cast %247 : vector<1x1x8xf32> to vector<1x8xf32>
    %249 = vector.broadcast %248 : vector<1x8xf32> to vector<64x8xf32>
    %250 = arith.addf %246, %249 : vector<64x8xf32>
    %c1_126 = arith.constant 1 : index
    %c0_127 = arith.constant 0 : index
    %c0_128 = arith.constant 0 : index
    %251 = vector.load %arg5[%c1_126, %c0_127, %c0_128] : memref<2x8x8xf32, #tpu.memory_space<vmem>>, vector<1x8x8xf32>
    %252 = vector.shape_cast %251 : vector<1x8x8xf32> to vector<8x8xf32>
    %cst_129 = arith.constant dense<0.000000e+00> : vector<64x8xf32>
    %253 = tpu.matmul %236, %252, %cst_129 {dimension_numbers = #tpu.dot_dimension_numbers<[1], [0], [0], [1], [0, 0, 1, 1], [], []>} : vector<64x8xf32>, vector<8x8xf32>, vector<64x8xf32> -> vector<64x8xf32>
    %c1_130 = arith.constant 1 : index
    %c0_131 = arith.constant 0 : index
    %c0_132 = arith.constant 0 : index
    %254 = vector.load %arg6[%c1_130, %c0_131, %c0_132] : memref<2x1x8xf32, #tpu.memory_space<vmem>>, vector<1x1x8xf32>
    %255 = vector.shape_cast %254 : vector<1x1x8xf32> to vector<1x8xf32>
    %256 = vector.broadcast %255 : vector<1x8xf32> to vector<64x8xf32>
    %257 = arith.addf %253, %256 : vector<64x8xf32>
    %258 = vector.extract_strided_slice %243 {offsets = [0, 0], sizes = [16, 8], strides = [1, 1]} : vector<64x8xf32> to vector<16x8xf32>
    %259 = vector.extract_strided_slice %250 {offsets = [0, 0], sizes = [16, 8], strides = [1, 1]} : vector<64x8xf32> to vector<16x8xf32>
    %260 = vector.extract_strided_slice %257 {offsets = [0, 0], sizes = [16, 8], strides = [1, 1]} : vector<64x8xf32> to vector<16x8xf32>
    %261 = vector.shape_cast %258 : vector<16x8xf32> to vector<16x1x8xf32>
    %262 = vector.shape_cast %259 : vector<16x8xf32> to vector<1x16x8xf32>
    %263 = vector.broadcast %261 : vector<16x1x8xf32> to vector<16x16x8xf32>
    %264 = vector.broadcast %262 : vector<1x16x8xf32> to vector<16x16x8xf32>
    %265 = arith.mulf %263, %264 : vector<16x16x8xf32>
    %266 = vector.broadcast %6 : vector<16x16x1xf32> to vector<16x16x8xf32>
    %267 = arith.addf %265, %266 : vector<16x16x8xf32>
    %cst_133 = arith.constant dense<0xFF800000> : vector<16x8xf32>
    %268 = vector.multi_reduction <maximumf>, %267, %cst_133 [1] : vector<16x16x8xf32> to vector<16x8xf32>
    %269 = vector.shape_cast %268 : vector<16x8xf32> to vector<16x1x8xf32>
    %270 = vector.broadcast %269 : vector<16x1x8xf32> to vector<16x16x8xf32>
    %271 = arith.subf %267, %270 : vector<16x16x8xf32>
    %272 = math.exp %271 : vector<16x16x8xf32>
    %cst_134 = arith.constant dense<0.000000e+00> : vector<16x8xf32>
    %273 = vector.multi_reduction <add>, %272, %cst_134 [1] : vector<16x16x8xf32> to vector<16x8xf32>
    %274 = vector.shape_cast %260 : vector<16x8xf32> to vector<1x16x8xf32>
    %275 = vector.broadcast %274 : vector<1x16x8xf32> to vector<16x16x8xf32>
    %276 = arith.mulf %272, %275 : vector<16x16x8xf32>
    %cst_135 = arith.constant dense<0.000000e+00> : vector<16x8xf32>
    %277 = vector.multi_reduction <add>, %276, %cst_135 [1] : vector<16x16x8xf32> to vector<16x8xf32>
    %278 = tpu.reciprocal %273 {approx = true} : vector<16x8xf32> -> vector<16x8xf32>
    %279 = arith.mulf %277, %278 : vector<16x8xf32>
    %280 = vector.extract_strided_slice %243 {offsets = [16, 0], sizes = [16, 8], strides = [1, 1]} : vector<64x8xf32> to vector<16x8xf32>
    %281 = vector.extract_strided_slice %250 {offsets = [16, 0], sizes = [16, 8], strides = [1, 1]} : vector<64x8xf32> to vector<16x8xf32>
    %282 = vector.extract_strided_slice %257 {offsets = [16, 0], sizes = [16, 8], strides = [1, 1]} : vector<64x8xf32> to vector<16x8xf32>
    %283 = vector.shape_cast %280 : vector<16x8xf32> to vector<16x1x8xf32>
    %284 = vector.shape_cast %281 : vector<16x8xf32> to vector<1x16x8xf32>
    %285 = vector.broadcast %283 : vector<16x1x8xf32> to vector<16x16x8xf32>
    %286 = vector.broadcast %284 : vector<1x16x8xf32> to vector<16x16x8xf32>
    %287 = arith.mulf %285, %286 : vector<16x16x8xf32>
    %288 = vector.broadcast %6 : vector<16x16x1xf32> to vector<16x16x8xf32>
    %289 = arith.addf %287, %288 : vector<16x16x8xf32>
    %cst_136 = arith.constant dense<0xFF800000> : vector<16x8xf32>
    %290 = vector.multi_reduction <maximumf>, %289, %cst_136 [1] : vector<16x16x8xf32> to vector<16x8xf32>
    %291 = vector.shape_cast %290 : vector<16x8xf32> to vector<16x1x8xf32>
    %292 = vector.broadcast %291 : vector<16x1x8xf32> to vector<16x16x8xf32>
    %293 = arith.subf %289, %292 : vector<16x16x8xf32>
    %294 = math.exp %293 : vector<16x16x8xf32>
    %cst_137 = arith.constant dense<0.000000e+00> : vector<16x8xf32>
    %295 = vector.multi_reduction <add>, %294, %cst_137 [1] : vector<16x16x8xf32> to vector<16x8xf32>
    %296 = vector.shape_cast %282 : vector<16x8xf32> to vector<1x16x8xf32>
    %297 = vector.broadcast %296 : vector<1x16x8xf32> to vector<16x16x8xf32>
    %298 = arith.mulf %294, %297 : vector<16x16x8xf32>
    %cst_138 = arith.constant dense<0.000000e+00> : vector<16x8xf32>
    %299 = vector.multi_reduction <add>, %298, %cst_138 [1] : vector<16x16x8xf32> to vector<16x8xf32>
    %300 = tpu.reciprocal %295 {approx = true} : vector<16x8xf32> -> vector<16x8xf32>
    %301 = arith.mulf %299, %300 : vector<16x8xf32>
    %302 = vector.extract_strided_slice %243 {offsets = [32, 0], sizes = [16, 8], strides = [1, 1]} : vector<64x8xf32> to vector<16x8xf32>
    %303 = vector.extract_strided_slice %250 {offsets = [32, 0], sizes = [16, 8], strides = [1, 1]} : vector<64x8xf32> to vector<16x8xf32>
    %304 = vector.extract_strided_slice %257 {offsets = [32, 0], sizes = [16, 8], strides = [1, 1]} : vector<64x8xf32> to vector<16x8xf32>
    %305 = vector.shape_cast %302 : vector<16x8xf32> to vector<16x1x8xf32>
    %306 = vector.shape_cast %303 : vector<16x8xf32> to vector<1x16x8xf32>
    %307 = vector.broadcast %305 : vector<16x1x8xf32> to vector<16x16x8xf32>
    %308 = vector.broadcast %306 : vector<1x16x8xf32> to vector<16x16x8xf32>
    %309 = arith.mulf %307, %308 : vector<16x16x8xf32>
    %310 = vector.broadcast %6 : vector<16x16x1xf32> to vector<16x16x8xf32>
    %311 = arith.addf %309, %310 : vector<16x16x8xf32>
    %cst_139 = arith.constant dense<0xFF800000> : vector<16x8xf32>
    %312 = vector.multi_reduction <maximumf>, %311, %cst_139 [1] : vector<16x16x8xf32> to vector<16x8xf32>
    %313 = vector.shape_cast %312 : vector<16x8xf32> to vector<16x1x8xf32>
    %314 = vector.broadcast %313 : vector<16x1x8xf32> to vector<16x16x8xf32>
    %315 = arith.subf %311, %314 : vector<16x16x8xf32>
    %316 = math.exp %315 : vector<16x16x8xf32>
    %cst_140 = arith.constant dense<0.000000e+00> : vector<16x8xf32>
    %317 = vector.multi_reduction <add>, %316, %cst_140 [1] : vector<16x16x8xf32> to vector<16x8xf32>
    %318 = vector.shape_cast %304 : vector<16x8xf32> to vector<1x16x8xf32>
    %319 = vector.broadcast %318 : vector<1x16x8xf32> to vector<16x16x8xf32>
    %320 = arith.mulf %316, %319 : vector<16x16x8xf32>
    %cst_141 = arith.constant dense<0.000000e+00> : vector<16x8xf32>
    %321 = vector.multi_reduction <add>, %320, %cst_141 [1] : vector<16x16x8xf32> to vector<16x8xf32>
    %322 = tpu.reciprocal %317 {approx = true} : vector<16x8xf32> -> vector<16x8xf32>
    %323 = arith.mulf %321, %322 : vector<16x8xf32>
    %324 = vector.extract_strided_slice %243 {offsets = [48, 0], sizes = [16, 8], strides = [1, 1]} : vector<64x8xf32> to vector<16x8xf32>
    %325 = vector.extract_strided_slice %250 {offsets = [48, 0], sizes = [16, 8], strides = [1, 1]} : vector<64x8xf32> to vector<16x8xf32>
    %326 = vector.extract_strided_slice %257 {offsets = [48, 0], sizes = [16, 8], strides = [1, 1]} : vector<64x8xf32> to vector<16x8xf32>
    %327 = vector.shape_cast %324 : vector<16x8xf32> to vector<16x1x8xf32>
    %328 = vector.shape_cast %325 : vector<16x8xf32> to vector<1x16x8xf32>
    %329 = vector.broadcast %327 : vector<16x1x8xf32> to vector<16x16x8xf32>
    %330 = vector.broadcast %328 : vector<1x16x8xf32> to vector<16x16x8xf32>
    %331 = arith.mulf %329, %330 : vector<16x16x8xf32>
    %332 = vector.broadcast %6 : vector<16x16x1xf32> to vector<16x16x8xf32>
    %333 = arith.addf %331, %332 : vector<16x16x8xf32>
    %cst_142 = arith.constant dense<0xFF800000> : vector<16x8xf32>
    %334 = vector.multi_reduction <maximumf>, %333, %cst_142 [1] : vector<16x16x8xf32> to vector<16x8xf32>
    %335 = vector.shape_cast %334 : vector<16x8xf32> to vector<16x1x8xf32>
    %336 = vector.broadcast %335 : vector<16x1x8xf32> to vector<16x16x8xf32>
    %337 = arith.subf %333, %336 : vector<16x16x8xf32>
    %338 = math.exp %337 : vector<16x16x8xf32>
    %cst_143 = arith.constant dense<0.000000e+00> : vector<16x8xf32>
    %339 = vector.multi_reduction <add>, %338, %cst_143 [1] : vector<16x16x8xf32> to vector<16x8xf32>
    %340 = vector.shape_cast %326 : vector<16x8xf32> to vector<1x16x8xf32>
    %341 = vector.broadcast %340 : vector<1x16x8xf32> to vector<16x16x8xf32>
    %342 = arith.mulf %338, %341 : vector<16x16x8xf32>
    %cst_144 = arith.constant dense<0.000000e+00> : vector<16x8xf32>
    %343 = vector.multi_reduction <add>, %342, %cst_144 [1] : vector<16x16x8xf32> to vector<16x8xf32>
    %344 = tpu.reciprocal %339 {approx = true} : vector<16x8xf32> -> vector<16x8xf32>
    %345 = arith.mulf %343, %344 : vector<16x8xf32>
    %346 = tpu.concatenate %279, %301, %323, %345 in 0 : vector<16x8xf32>, vector<16x8xf32>, vector<16x8xf32>, vector<16x8xf32> -> vector<64x8xf32>
    %c1_145 = arith.constant 1 : index
    %c0_146 = arith.constant 0 : index
    %c0_147 = arith.constant 0 : index
    %347 = vector.load %arg7[%c1_145, %c0_146, %c0_147] : memref<2x8x8xf32, #tpu.memory_space<vmem>>, vector<1x8x8xf32>
    %348 = vector.shape_cast %347 : vector<1x8x8xf32> to vector<8x8xf32>
    %cst_148 = arith.constant dense<0.000000e+00> : vector<64x8xf32>
    %349 = tpu.matmul %346, %348, %cst_148 {dimension_numbers = #tpu.dot_dimension_numbers<[1], [0], [0], [1], [0, 0, 1, 1], [], []>} : vector<64x8xf32>, vector<8x8xf32>, vector<64x8xf32> -> vector<64x8xf32>
    %c1_149 = arith.constant 1 : index
    %c0_150 = arith.constant 0 : index
    %c0_151 = arith.constant 0 : index
    %350 = vector.load %arg8[%c1_149, %c0_150, %c0_151] : memref<2x1x8xf32, #tpu.memory_space<vmem>>, vector<1x1x8xf32>
    %351 = vector.shape_cast %350 : vector<1x1x8xf32> to vector<1x8xf32>
    %352 = vector.broadcast %351 : vector<1x8xf32> to vector<64x8xf32>
    %353 = arith.addf %349, %352 : vector<64x8xf32>
    %354 = arith.addf %236, %353 : vector<64x8xf32>
    %c1_152 = arith.constant 1 : index
    %c0_153 = arith.constant 0 : index
    %c0_154 = arith.constant 0 : index
    %355 = vector.load %arg9[%c1_152, %c0_153, %c0_154] : memref<2x1x8xf32, #tpu.memory_space<vmem>>, vector<1x1x8xf32>
    %356 = vector.shape_cast %355 : vector<1x1x8xf32> to vector<1x8xf32>
    %c1_155 = arith.constant 1 : index
    %c0_156 = arith.constant 0 : index
    %c0_157 = arith.constant 0 : index
    %357 = vector.load %arg10[%c1_155, %c0_156, %c0_157] : memref<2x1x8xf32, #tpu.memory_space<vmem>>, vector<1x1x8xf32>
    %358 = vector.shape_cast %357 : vector<1x1x8xf32> to vector<1x8xf32>
    %cst_158 = arith.constant dense<0.000000e+00> : vector<64xf32>
    %359 = vector.multi_reduction <add>, %354, %cst_158 [1] : vector<64x8xf32> to vector<64xf32>
    %360 = vector.shape_cast %359 : vector<64xf32> to vector<64x1xf32>
    %cst_159 = arith.constant 8.000000e+00 : f32
    %361 = vector.broadcast %cst_159 : f32 to vector<64x1xf32>
    %362 = arith.divf %360, %361 : vector<64x1xf32>
    %363 = vector.broadcast %362 : vector<64x1xf32> to vector<64x8xf32>
    %364 = arith.subf %354, %363 : vector<64x8xf32>
    %365 = arith.mulf %364, %364 : vector<64x8xf32>
    %cst_160 = arith.constant dense<0.000000e+00> : vector<64xf32>
    %366 = vector.multi_reduction <add>, %365, %cst_160 [1] : vector<64x8xf32> to vector<64xf32>
    %367 = vector.shape_cast %366 : vector<64xf32> to vector<64x1xf32>
    %cst_161 = arith.constant 8.000000e+00 : f32
    %368 = vector.broadcast %cst_161 : f32 to vector<64x1xf32>
    %369 = arith.divf %367, %368 : vector<64x1xf32>
    %cst_162 = arith.constant 9.99999974E-6 : f32
    %370 = vector.broadcast %cst_162 : f32 to vector<64x1xf32>
    %371 = arith.addf %369, %370 : vector<64x1xf32>
    %372 = math.rsqrt %371 : vector<64x1xf32>
    %373 = vector.broadcast %372 : vector<64x1xf32> to vector<64x8xf32>
    %374 = arith.mulf %364, %373 : vector<64x8xf32>
    %375 = vector.broadcast %356 : vector<1x8xf32> to vector<64x8xf32>
    %376 = arith.mulf %374, %375 : vector<64x8xf32>
    %377 = vector.broadcast %358 : vector<1x8xf32> to vector<64x8xf32>
    %378 = arith.addf %376, %377 : vector<64x8xf32>
    %379 = arith.truncf %378 : vector<64x8xf32> to vector<64x8xbf16>
    %cst_163 = arith.constant 0.000000e+00 : f32
    %380 = vector.broadcast %cst_163 : f32 to vector<64x8xf32>
    %c1_164 = arith.constant 1 : index
    %c0_165 = arith.constant 0 : index
    %c0_166 = arith.constant 0 : index
    %381 = vector.load %arg13[%c1_164, %c0_165, %c0_166] : memref<2x8x2048xbf16, #tpu.memory_space<vmem>>, vector<1x8x512xbf16>
    %382 = vector.shape_cast %381 : vector<1x8x512xbf16> to vector<8x512xbf16>
    %cst_167 = arith.constant dense<0.000000e+00> : vector<64x512xf32>
    %383 = tpu.matmul %379, %382, %cst_167 {dimension_numbers = #tpu.dot_dimension_numbers<[1], [0], [0], [1], [0, 0, 1, 1], [], []>} : vector<64x8xbf16>, vector<8x512xbf16>, vector<64x512xf32> -> vector<64x512xf32>
    %c1_168 = arith.constant 1 : index
    %c0_169 = arith.constant 0 : index
    %c0_170 = arith.constant 0 : index
    %384 = vector.load %arg14[%c1_168, %c0_169, %c0_170] : memref<2x1x2048xf32, #tpu.memory_space<vmem>>, vector<1x1x512xf32>
    %385 = vector.shape_cast %384 : vector<1x1x512xf32> to vector<1x512xf32>
    %386 = vector.broadcast %385 : vector<1x512xf32> to vector<64x512xf32>
    %387 = arith.addf %383, %386 : vector<64x512xf32>
    %cst_171 = arith.constant 0.000000e+00 : f32
    %388 = vector.broadcast %cst_171 : f32 to vector<64x512xf32>
    %389 = arith.maximumf %387, %388 : vector<64x512xf32>
    %390 = arith.truncf %389 : vector<64x512xf32> to vector<64x512xbf16>
    %c1_172 = arith.constant 1 : index
    %c0_173 = arith.constant 0 : index
    %c0_174 = arith.constant 0 : index
    %391 = vector.load %arg15[%c1_172, %c0_173, %c0_174] : memref<2x2048x8xbf16, #tpu.memory_space<vmem>>, vector<1x512x8xbf16>
    %392 = vector.shape_cast %391 : vector<1x512x8xbf16> to vector<512x8xbf16>
    %cst_175 = arith.constant dense<0.000000e+00> : vector<64x8xf32>
    %393 = tpu.matmul %390, %392, %cst_175 {dimension_numbers = #tpu.dot_dimension_numbers<[1], [0], [0], [1], [0, 0, 1, 1], [], []>} : vector<64x512xbf16>, vector<512x8xbf16>, vector<64x8xf32> -> vector<64x8xf32>
    %394 = arith.addf %380, %393 : vector<64x8xf32>
    %c1_176 = arith.constant 1 : index
    %c0_177 = arith.constant 0 : index
    %c512_178 = arith.constant 512 : index
    %395 = vector.load %arg13[%c1_176, %c0_177, %c512_178] : memref<2x8x2048xbf16, #tpu.memory_space<vmem>>, vector<1x8x512xbf16>
    %396 = vector.shape_cast %395 : vector<1x8x512xbf16> to vector<8x512xbf16>
    %cst_179 = arith.constant dense<0.000000e+00> : vector<64x512xf32>
    %397 = tpu.matmul %379, %396, %cst_179 {dimension_numbers = #tpu.dot_dimension_numbers<[1], [0], [0], [1], [0, 0, 1, 1], [], []>} : vector<64x8xbf16>, vector<8x512xbf16>, vector<64x512xf32> -> vector<64x512xf32>
    %c1_180 = arith.constant 1 : index
    %c0_181 = arith.constant 0 : index
    %c512_182 = arith.constant 512 : index
    %398 = vector.load %arg14[%c1_180, %c0_181, %c512_182] : memref<2x1x2048xf32, #tpu.memory_space<vmem>>, vector<1x1x512xf32>
    %399 = vector.shape_cast %398 : vector<1x1x512xf32> to vector<1x512xf32>
    %400 = vector.broadcast %399 : vector<1x512xf32> to vector<64x512xf32>
    %401 = arith.addf %397, %400 : vector<64x512xf32>
    %cst_183 = arith.constant 0.000000e+00 : f32
    %402 = vector.broadcast %cst_183 : f32 to vector<64x512xf32>
    %403 = arith.maximumf %401, %402 : vector<64x512xf32>
    %404 = arith.truncf %403 : vector<64x512xf32> to vector<64x512xbf16>
    %c1_184 = arith.constant 1 : index
    %c512_185 = arith.constant 512 : index
    %c0_186 = arith.constant 0 : index
    %405 = vector.load %arg15[%c1_184, %c512_185, %c0_186] : memref<2x2048x8xbf16, #tpu.memory_space<vmem>>, vector<1x512x8xbf16>
    %406 = vector.shape_cast %405 : vector<1x512x8xbf16> to vector<512x8xbf16>
    %cst_187 = arith.constant dense<0.000000e+00> : vector<64x8xf32>
    %407 = tpu.matmul %404, %406, %cst_187 {dimension_numbers = #tpu.dot_dimension_numbers<[1], [0], [0], [1], [0, 0, 1, 1], [], []>} : vector<64x512xbf16>, vector<512x8xbf16>, vector<64x8xf32> -> vector<64x8xf32>
    %408 = arith.addf %394, %407 : vector<64x8xf32>
    %c1_188 = arith.constant 1 : index
    %c0_189 = arith.constant 0 : index
    %c1024_190 = arith.constant 1024 : index
    %409 = vector.load %arg13[%c1_188, %c0_189, %c1024_190] : memref<2x8x2048xbf16, #tpu.memory_space<vmem>>, vector<1x8x512xbf16>
    %410 = vector.shape_cast %409 : vector<1x8x512xbf16> to vector<8x512xbf16>
    %cst_191 = arith.constant dense<0.000000e+00> : vector<64x512xf32>
    %411 = tpu.matmul %379, %410, %cst_191 {dimension_numbers = #tpu.dot_dimension_numbers<[1], [0], [0], [1], [0, 0, 1, 1], [], []>} : vector<64x8xbf16>, vector<8x512xbf16>, vector<64x512xf32> -> vector<64x512xf32>
    %c1_192 = arith.constant 1 : index
    %c0_193 = arith.constant 0 : index
    %c1024_194 = arith.constant 1024 : index
    %412 = vector.load %arg14[%c1_192, %c0_193, %c1024_194] : memref<2x1x2048xf32, #tpu.memory_space<vmem>>, vector<1x1x512xf32>
    %413 = vector.shape_cast %412 : vector<1x1x512xf32> to vector<1x512xf32>
    %414 = vector.broadcast %413 : vector<1x512xf32> to vector<64x512xf32>
    %415 = arith.addf %411, %414 : vector<64x512xf32>
    %cst_195 = arith.constant 0.000000e+00 : f32
    %416 = vector.broadcast %cst_195 : f32 to vector<64x512xf32>
    %417 = arith.maximumf %415, %416 : vector<64x512xf32>
    %418 = arith.truncf %417 : vector<64x512xf32> to vector<64x512xbf16>
    %c1_196 = arith.constant 1 : index
    %c1024_197 = arith.constant 1024 : index
    %c0_198 = arith.constant 0 : index
    %419 = vector.load %arg15[%c1_196, %c1024_197, %c0_198] : memref<2x2048x8xbf16, #tpu.memory_space<vmem>>, vector<1x512x8xbf16>
    %420 = vector.shape_cast %419 : vector<1x512x8xbf16> to vector<512x8xbf16>
    %cst_199 = arith.constant dense<0.000000e+00> : vector<64x8xf32>
    %421 = tpu.matmul %418, %420, %cst_199 {dimension_numbers = #tpu.dot_dimension_numbers<[1], [0], [0], [1], [0, 0, 1, 1], [], []>} : vector<64x512xbf16>, vector<512x8xbf16>, vector<64x8xf32> -> vector<64x8xf32>
    %422 = arith.addf %408, %421 : vector<64x8xf32>
    %c1_200 = arith.constant 1 : index
    %c0_201 = arith.constant 0 : index
    %c1536_202 = arith.constant 1536 : index
    %423 = vector.load %arg13[%c1_200, %c0_201, %c1536_202] : memref<2x8x2048xbf16, #tpu.memory_space<vmem>>, vector<1x8x512xbf16>
    %424 = vector.shape_cast %423 : vector<1x8x512xbf16> to vector<8x512xbf16>
    %cst_203 = arith.constant dense<0.000000e+00> : vector<64x512xf32>
    %425 = tpu.matmul %379, %424, %cst_203 {dimension_numbers = #tpu.dot_dimension_numbers<[1], [0], [0], [1], [0, 0, 1, 1], [], []>} : vector<64x8xbf16>, vector<8x512xbf16>, vector<64x512xf32> -> vector<64x512xf32>
    %c1_204 = arith.constant 1 : index
    %c0_205 = arith.constant 0 : index
    %c1536_206 = arith.constant 1536 : index
    %426 = vector.load %arg14[%c1_204, %c0_205, %c1536_206] : memref<2x1x2048xf32, #tpu.memory_space<vmem>>, vector<1x1x512xf32>
    %427 = vector.shape_cast %426 : vector<1x1x512xf32> to vector<1x512xf32>
    %428 = vector.broadcast %427 : vector<1x512xf32> to vector<64x512xf32>
    %429 = arith.addf %425, %428 : vector<64x512xf32>
    %cst_207 = arith.constant 0.000000e+00 : f32
    %430 = vector.broadcast %cst_207 : f32 to vector<64x512xf32>
    %431 = arith.maximumf %429, %430 : vector<64x512xf32>
    %432 = arith.truncf %431 : vector<64x512xf32> to vector<64x512xbf16>
    %c1_208 = arith.constant 1 : index
    %c1536_209 = arith.constant 1536 : index
    %c0_210 = arith.constant 0 : index
    %433 = vector.load %arg15[%c1_208, %c1536_209, %c0_210] : memref<2x2048x8xbf16, #tpu.memory_space<vmem>>, vector<1x512x8xbf16>
    %434 = vector.shape_cast %433 : vector<1x512x8xbf16> to vector<512x8xbf16>
    %cst_211 = arith.constant dense<0.000000e+00> : vector<64x8xf32>
    %435 = tpu.matmul %432, %434, %cst_211 {dimension_numbers = #tpu.dot_dimension_numbers<[1], [0], [0], [1], [0, 0, 1, 1], [], []>} : vector<64x512xbf16>, vector<512x8xbf16>, vector<64x8xf32> -> vector<64x8xf32>
    %436 = arith.addf %422, %435 : vector<64x8xf32>
    %c1_212 = arith.constant 1 : index
    %c0_213 = arith.constant 0 : index
    %c0_214 = arith.constant 0 : index
    %437 = vector.load %arg16[%c1_212, %c0_213, %c0_214] : memref<2x1x8xf32, #tpu.memory_space<vmem>>, vector<1x1x8xf32>
    %438 = vector.shape_cast %437 : vector<1x1x8xf32> to vector<1x8xf32>
    %439 = vector.broadcast %438 : vector<1x8xf32> to vector<64x8xf32>
    %440 = arith.addf %436, %439 : vector<64x8xf32>
    %441 = arith.addf %378, %440 : vector<64x8xf32>
    %c1_215 = arith.constant 1 : index
    %c0_216 = arith.constant 0 : index
    %c0_217 = arith.constant 0 : index
    %442 = vector.load %arg11[%c1_215, %c0_216, %c0_217] : memref<2x1x8xf32, #tpu.memory_space<vmem>>, vector<1x1x8xf32>
    %443 = vector.shape_cast %442 : vector<1x1x8xf32> to vector<1x8xf32>
    %c1_218 = arith.constant 1 : index
    %c0_219 = arith.constant 0 : index
    %c0_220 = arith.constant 0 : index
    %444 = vector.load %arg12[%c1_218, %c0_219, %c0_220] : memref<2x1x8xf32, #tpu.memory_space<vmem>>, vector<1x1x8xf32>
    %445 = vector.shape_cast %444 : vector<1x1x8xf32> to vector<1x8xf32>
    %cst_221 = arith.constant dense<0.000000e+00> : vector<64xf32>
    %446 = vector.multi_reduction <add>, %441, %cst_221 [1] : vector<64x8xf32> to vector<64xf32>
    %447 = vector.shape_cast %446 : vector<64xf32> to vector<64x1xf32>
    %cst_222 = arith.constant 8.000000e+00 : f32
    %448 = vector.broadcast %cst_222 : f32 to vector<64x1xf32>
    %449 = arith.divf %447, %448 : vector<64x1xf32>
    %450 = vector.broadcast %449 : vector<64x1xf32> to vector<64x8xf32>
    %451 = arith.subf %441, %450 : vector<64x8xf32>
    %452 = arith.mulf %451, %451 : vector<64x8xf32>
    %cst_223 = arith.constant dense<0.000000e+00> : vector<64xf32>
    %453 = vector.multi_reduction <add>, %452, %cst_223 [1] : vector<64x8xf32> to vector<64xf32>
    %454 = vector.shape_cast %453 : vector<64xf32> to vector<64x1xf32>
    %cst_224 = arith.constant 8.000000e+00 : f32
    %455 = vector.broadcast %cst_224 : f32 to vector<64x1xf32>
    %456 = arith.divf %454, %455 : vector<64x1xf32>
    %cst_225 = arith.constant 9.99999974E-6 : f32
    %457 = vector.broadcast %cst_225 : f32 to vector<64x1xf32>
    %458 = arith.addf %456, %457 : vector<64x1xf32>
    %459 = math.rsqrt %458 : vector<64x1xf32>
    %460 = vector.broadcast %459 : vector<64x1xf32> to vector<64x8xf32>
    %461 = arith.mulf %451, %460 : vector<64x8xf32>
    %462 = vector.broadcast %443 : vector<1x8xf32> to vector<64x8xf32>
    %463 = arith.mulf %461, %462 : vector<64x8xf32>
    %464 = vector.broadcast %445 : vector<1x8xf32> to vector<64x8xf32>
    %465 = arith.addf %463, %464 : vector<64x8xf32>
    %c0_226 = arith.constant 0 : index
    %c0_227 = arith.constant 0 : index
    %466 = vector.load %arg17[%c0_226, %c0_227] : memref<8x128xf32, #tpu.memory_space<vmem>>, vector<8x128xf32>
    %cst_228 = arith.constant dense<0.000000e+00> : vector<64x128xf32>
    %467 = tpu.matmul %465, %466, %cst_228 {dimension_numbers = #tpu.dot_dimension_numbers<[1], [0], [0], [1], [0, 0, 1, 1], [], []>} : vector<64x8xf32>, vector<8x128xf32>, vector<64x128xf32> -> vector<64x128xf32>
    %c0_229 = arith.constant 0 : index
    %c0_230 = arith.constant 0 : index
    %468 = vector.load %arg19[%c0_229, %c0_230] : memref<1x128xf32, #tpu.memory_space<vmem>>, vector<1x128xf32>
    %469 = vector.broadcast %468 : vector<1x128xf32> to vector<64x128xf32>
    %470 = arith.addf %467, %469 : vector<64x128xf32>
    %c0_231 = arith.constant 0 : index
    %c0_232 = arith.constant 0 : index
    %471 = vector.load %arg18[%c0_231, %c0_232] : memref<32x128xf32, #tpu.memory_space<vmem>>, vector<32x128xf32>
    %cst_233 = arith.constant 0.000000e+00 : f32
    %472 = vector.broadcast %cst_233 : f32 to vector<16x32xf32>
    %cst_234 = arith.constant 0.000000e+00 : f32
    %473 = vector.broadcast %cst_234 : f32 to vector<16x32xf32>
    %474 = vector.extract_strided_slice %470 {offsets = [0, 0], sizes = [16, 128], strides = [1, 1]} : vector<64x128xf32> to vector<16x128xf32>
    %cst_235 = arith.constant dense<0.000000e+00> : vector<16x128xf32>
    %475 = tpu.matmul %472, %471, %cst_235 {dimension_numbers = #tpu.dot_dimension_numbers<[1], [0], [0], [1], [0, 0, 1, 1], [], []>} : vector<16x32xf32>, vector<32x128xf32>, vector<16x128xf32> -> vector<16x128xf32>
    %476 = arith.addf %474, %475 : vector<16x128xf32>
    %477 = vector.extract_strided_slice %476 {offsets = [0, 0], sizes = [16, 96], strides = [1, 1]} : vector<16x128xf32> to vector<16x96xf32>
    %478 = arith.negf %477 : vector<16x96xf32>
    %479 = math.exp %478 : vector<16x96xf32>
    %cst_236 = arith.constant 1.000000e+00 : f32
    %480 = vector.broadcast %cst_236 : f32 to vector<16x96xf32>
    %481 = arith.addf %480, %479 : vector<16x96xf32>
    %482 = arith.divf %480, %481 : vector<16x96xf32>
    %483 = vector.extract_strided_slice %476 {offsets = [0, 96], sizes = [16, 32], strides = [1, 1]} : vector<16x128xf32> to vector<16x32xf32>
    %484 = math.tanh %483 : vector<16x32xf32>
    %485 = vector.extract_strided_slice %482 {offsets = [0, 0], sizes = [16, 32], strides = [1, 1]} : vector<16x96xf32> to vector<16x32xf32>
    %486 = vector.extract_strided_slice %482 {offsets = [0, 32], sizes = [16, 32], strides = [1, 1]} : vector<16x96xf32> to vector<16x32xf32>
    %487 = vector.extract_strided_slice %482 {offsets = [0, 64], sizes = [16, 32], strides = [1, 1]} : vector<16x96xf32> to vector<16x32xf32>
    %488 = arith.mulf %486, %473 : vector<16x32xf32>
    %489 = arith.mulf %485, %484 : vector<16x32xf32>
    %490 = arith.addf %488, %489 : vector<16x32xf32>
    %491 = math.tanh %490 : vector<16x32xf32>
    %492 = arith.mulf %487, %491 : vector<16x32xf32>
    %cst_237 = arith.constant dense<0.000000e+00> : vector<32xf32>
    %493 = vector.multi_reduction <add>, %492, %cst_237 [0] : vector<16x32xf32> to vector<32xf32>
    %494 = vector.shape_cast %493 : vector<32xf32> to vector<1x32xf32>
    %cst_238 = arith.constant 1.600000e+01 : f32
    %495 = vector.broadcast %cst_238 : f32 to vector<1x32xf32>
    %496 = arith.divf %494, %495 : vector<1x32xf32>
    %497 = vector.extract_strided_slice %470 {offsets = [16, 0], sizes = [16, 128], strides = [1, 1]} : vector<64x128xf32> to vector<16x128xf32>
    %cst_239 = arith.constant dense<0.000000e+00> : vector<16x128xf32>
    %498 = tpu.matmul %492, %471, %cst_239 {dimension_numbers = #tpu.dot_dimension_numbers<[1], [0], [0], [1], [0, 0, 1, 1], [], []>} : vector<16x32xf32>, vector<32x128xf32>, vector<16x128xf32> -> vector<16x128xf32>
    %499 = arith.addf %497, %498 : vector<16x128xf32>
    %500 = vector.extract_strided_slice %499 {offsets = [0, 0], sizes = [16, 96], strides = [1, 1]} : vector<16x128xf32> to vector<16x96xf32>
    %501 = arith.negf %500 : vector<16x96xf32>
    %502 = math.exp %501 : vector<16x96xf32>
    %cst_240 = arith.constant 1.000000e+00 : f32
    %503 = vector.broadcast %cst_240 : f32 to vector<16x96xf32>
    %504 = arith.addf %503, %502 : vector<16x96xf32>
    %505 = arith.divf %503, %504 : vector<16x96xf32>
    %506 = vector.extract_strided_slice %499 {offsets = [0, 96], sizes = [16, 32], strides = [1, 1]} : vector<16x128xf32> to vector<16x32xf32>
    %507 = math.tanh %506 : vector<16x32xf32>
    %508 = vector.extract_strided_slice %505 {offsets = [0, 0], sizes = [16, 32], strides = [1, 1]} : vector<16x96xf32> to vector<16x32xf32>
    %509 = vector.extract_strided_slice %505 {offsets = [0, 32], sizes = [16, 32], strides = [1, 1]} : vector<16x96xf32> to vector<16x32xf32>
    %510 = vector.extract_strided_slice %505 {offsets = [0, 64], sizes = [16, 32], strides = [1, 1]} : vector<16x96xf32> to vector<16x32xf32>
    %511 = arith.mulf %509, %490 : vector<16x32xf32>
    %512 = arith.mulf %508, %507 : vector<16x32xf32>
    %513 = arith.addf %511, %512 : vector<16x32xf32>
    %514 = math.tanh %513 : vector<16x32xf32>
    %515 = arith.mulf %510, %514 : vector<16x32xf32>
    %cst_241 = arith.constant dense<0.000000e+00> : vector<32xf32>
    %516 = vector.multi_reduction <add>, %515, %cst_241 [0] : vector<16x32xf32> to vector<32xf32>
    %517 = vector.shape_cast %516 : vector<32xf32> to vector<1x32xf32>
    %cst_242 = arith.constant 1.600000e+01 : f32
    %518 = vector.broadcast %cst_242 : f32 to vector<1x32xf32>
    %519 = arith.divf %517, %518 : vector<1x32xf32>
    %520 = vector.extract_strided_slice %470 {offsets = [32, 0], sizes = [16, 128], strides = [1, 1]} : vector<64x128xf32> to vector<16x128xf32>
    %cst_243 = arith.constant dense<0.000000e+00> : vector<16x128xf32>
    %521 = tpu.matmul %515, %471, %cst_243 {dimension_numbers = #tpu.dot_dimension_numbers<[1], [0], [0], [1], [0, 0, 1, 1], [], []>} : vector<16x32xf32>, vector<32x128xf32>, vector<16x128xf32> -> vector<16x128xf32>
    %522 = arith.addf %520, %521 : vector<16x128xf32>
    %523 = vector.extract_strided_slice %522 {offsets = [0, 0], sizes = [16, 96], strides = [1, 1]} : vector<16x128xf32> to vector<16x96xf32>
    %524 = arith.negf %523 : vector<16x96xf32>
    %525 = math.exp %524 : vector<16x96xf32>
    %cst_244 = arith.constant 1.000000e+00 : f32
    %526 = vector.broadcast %cst_244 : f32 to vector<16x96xf32>
    %527 = arith.addf %526, %525 : vector<16x96xf32>
    %528 = arith.divf %526, %527 : vector<16x96xf32>
    %529 = vector.extract_strided_slice %522 {offsets = [0, 96], sizes = [16, 32], strides = [1, 1]} : vector<16x128xf32> to vector<16x32xf32>
    %530 = math.tanh %529 : vector<16x32xf32>
    %531 = vector.extract_strided_slice %528 {offsets = [0, 0], sizes = [16, 32], strides = [1, 1]} : vector<16x96xf32> to vector<16x32xf32>
    %532 = vector.extract_strided_slice %528 {offsets = [0, 32], sizes = [16, 32], strides = [1, 1]} : vector<16x96xf32> to vector<16x32xf32>
    %533 = vector.extract_strided_slice %528 {offsets = [0, 64], sizes = [16, 32], strides = [1, 1]} : vector<16x96xf32> to vector<16x32xf32>
    %534 = arith.mulf %532, %513 : vector<16x32xf32>
    %535 = arith.mulf %531, %530 : vector<16x32xf32>
    %536 = arith.addf %534, %535 : vector<16x32xf32>
    %537 = math.tanh %536 : vector<16x32xf32>
    %538 = arith.mulf %533, %537 : vector<16x32xf32>
    %cst_245 = arith.constant dense<0.000000e+00> : vector<32xf32>
    %539 = vector.multi_reduction <add>, %538, %cst_245 [0] : vector<16x32xf32> to vector<32xf32>
    %540 = vector.shape_cast %539 : vector<32xf32> to vector<1x32xf32>
    %cst_246 = arith.constant 1.600000e+01 : f32
    %541 = vector.broadcast %cst_246 : f32 to vector<1x32xf32>
    %542 = arith.divf %540, %541 : vector<1x32xf32>
    %543 = vector.extract_strided_slice %470 {offsets = [48, 0], sizes = [16, 128], strides = [1, 1]} : vector<64x128xf32> to vector<16x128xf32>
    %cst_247 = arith.constant dense<0.000000e+00> : vector<16x128xf32>
    %544 = tpu.matmul %538, %471, %cst_247 {dimension_numbers = #tpu.dot_dimension_numbers<[1], [0], [0], [1], [0, 0, 1, 1], [], []>} : vector<16x32xf32>, vector<32x128xf32>, vector<16x128xf32> -> vector<16x128xf32>
    %545 = arith.addf %543, %544 : vector<16x128xf32>
    %546 = vector.extract_strided_slice %545 {offsets = [0, 0], sizes = [16, 96], strides = [1, 1]} : vector<16x128xf32> to vector<16x96xf32>
    %547 = arith.negf %546 : vector<16x96xf32>
    %548 = math.exp %547 : vector<16x96xf32>
    %cst_248 = arith.constant 1.000000e+00 : f32
    %549 = vector.broadcast %cst_248 : f32 to vector<16x96xf32>
    %550 = arith.addf %549, %548 : vector<16x96xf32>
    %551 = arith.divf %549, %550 : vector<16x96xf32>
    %552 = vector.extract_strided_slice %545 {offsets = [0, 96], sizes = [16, 32], strides = [1, 1]} : vector<16x128xf32> to vector<16x32xf32>
    %553 = math.tanh %552 : vector<16x32xf32>
    %554 = vector.extract_strided_slice %551 {offsets = [0, 0], sizes = [16, 32], strides = [1, 1]} : vector<16x96xf32> to vector<16x32xf32>
    %555 = vector.extract_strided_slice %551 {offsets = [0, 32], sizes = [16, 32], strides = [1, 1]} : vector<16x96xf32> to vector<16x32xf32>
    %556 = vector.extract_strided_slice %551 {offsets = [0, 64], sizes = [16, 32], strides = [1, 1]} : vector<16x96xf32> to vector<16x32xf32>
    %557 = arith.mulf %555, %536 : vector<16x32xf32>
    %558 = arith.mulf %554, %553 : vector<16x32xf32>
    %559 = arith.addf %557, %558 : vector<16x32xf32>
    %560 = math.tanh %559 : vector<16x32xf32>
    %561 = arith.mulf %556, %560 : vector<16x32xf32>
    %cst_249 = arith.constant dense<0.000000e+00> : vector<32xf32>
    %562 = vector.multi_reduction <add>, %561, %cst_249 [0] : vector<16x32xf32> to vector<32xf32>
    %563 = vector.shape_cast %562 : vector<32xf32> to vector<1x32xf32>
    %cst_250 = arith.constant 1.600000e+01 : f32
    %564 = vector.broadcast %cst_250 : f32 to vector<1x32xf32>
    %565 = arith.divf %563, %564 : vector<1x32xf32>
    %566 = tpu.concatenate %496, %519, %542, %565 in 0 : vector<1x32xf32>, vector<1x32xf32>, vector<1x32xf32>, vector<1x32xf32> -> vector<4x32xf32>
    %c0_251 = arith.constant 0 : index
    %c0_252 = arith.constant 0 : index
    %567 = vector.load %arg20[%c0_251, %c0_252] : memref<1x32xf32, #tpu.memory_space<vmem>>, vector<1x32xf32>
    %568 = vector.broadcast %567 : vector<1x32xf32> to vector<4x32xf32>
    %569 = arith.mulf %566, %568 : vector<4x32xf32>
    %cst_253 = arith.constant dense<0.000000e+00> : vector<4xf32>
    %570 = vector.multi_reduction <add>, %569, %cst_253 [1] : vector<4x32xf32> to vector<4xf32>
    %571 = vector.shape_cast %570 : vector<4xf32> to vector<4x1xf32>
    %c0_254 = arith.constant 0 : index
    %c0_255 = arith.constant 0 : index
    %572 = vector.load %arg21[%c0_254, %c0_255] : memref<1x1xf32, #tpu.memory_space<vmem>>, vector<1x1xf32>
    %573 = vector.broadcast %572 : vector<1x1xf32> to vector<4x1xf32>
    %574 = arith.addf %571, %573 : vector<4x1xf32>
    %c0_256 = arith.constant 0 : index
    %c0_257 = arith.constant 0 : index
    %575 = vector.load %arg22[%c0_256, %c0_257] : memref<4x1xf32, #tpu.memory_space<vmem>>, vector<4x1xf32>
    tpu.vector_store %arg22[%c0_256, %c0_257], %574 {strides = array<i32>} : memref<4x1xf32, #tpu.memory_space<vmem>>, vector<4x1xf32>,
    return
  }
}

</mosaic_0001>

<llo_original>
// kernel: transam_forward.1
$region0: #{transam_forward.1}
  #allocation0 [shape = 'u32[]', space=smem, size = 0x4, offset = 0x4, fixed_abs, tag = 'smem constant byte address 0x4 - core index']
  #allocation1 [shape = 'u32[72,128]{1,0:T(1,128)}', space=vmem, size = 0x9000, scoped, tag = 'internal scratch']
  #allocation2 [shape = 'f32[1,1]{1,0:T(1,128)S(1)}', space=vmem, size = 0x200, scoped, tag = 'scoped memory for transam_forward.1']
  %s0 = inlined_call_operand.vmem [shape: f32[64,8], index: 0, kind: input, shape index: {}]
  %s1 = inlined_call_operand.vmem [shape: f32[2,8,8], index: 1, kind: input, shape index: {}]
  %s2 = inlined_call_operand.vmem [shape: f32[2,1,8], index: 2, kind: input, shape index: {}]
  %s3 = inlined_call_operand.vmem [shape: f32[2,8,8], index: 3, kind: input, shape index: {}]
  %s4 = inlined_call_operand.vmem [shape: f32[2,1,8], index: 4, kind: input, shape index: {}]
  %s5 = inlined_call_operand.vmem [shape: f32[2,8,8], index: 5, kind: input, shape index: {}]
  %s6 = inlined_call_operand.vmem [shape: f32[2,1,8], index: 6, kind: input, shape index: {}]
  %s7 = inlined_call_operand.vmem [shape: f32[2,8,8], index: 7, kind: input, shape index: {}]
  %s8 = inlined_call_operand.vmem [shape: f32[2,1,8], index: 8, kind: input, shape index: {}]
  %s9 = inlined_call_operand.vmem [shape: f32[2,1,8], index: 9, kind: input, shape index: {}]
  %s10 = inlined_call_operand.vmem [shape: f32[2,1,8], index: 10, kind: input, shape index: {}]
  %s11 = inlined_call_operand.vmem [shape: f32[2,1,8], index: 11, kind: input, shape index: {}]
  %s12 = inlined_call_operand.vmem [shape: f32[2,1,8], index: 12, kind: input, shape index: {}]
  %s13 = inlined_call_operand.vmem [shape: bf16[2,8,2048], index: 13, kind: input, shape index: {}]
  %s14 = inlined_call_operand.vmem [shape: f32[2,1,2048], index: 14, kind: input, shape index: {}]
  %s15 = inlined_call_operand.vmem [shape: bf16[2,2048,8], index: 15, kind: input, shape index: {}]
  %s16 = inlined_call_operand.vmem [shape: f32[2,1,8], index: 16, kind: input, shape index: {}]
  %s17 = inlined_call_operand.vmem [shape: f32[8,128], index: 17, kind: input, shape index: {}]
  %s18 = inlined_call_operand.vmem [shape: f32[32,128], index: 18, kind: input, shape index: {}]
  %s19 = inlined_call_operand.vmem [shape: f32[1,128], index: 19, kind: input, shape index: {}]
  %s20 = inlined_call_operand.vmem [shape: f32[1,32], index: 20, kind: input, shape index: {}]
  %s21 = inlined_call_operand.<no memory space> [shape: f32[1,1], index: 21, kind: input, shape index: {}]
  %s22 = inlined_call_operand.vmem [shape: f32[4,1], index: 22, kind: output, shape index: {}]
  %s23 = sld [smem:[#allocation0]]
  $region98: #{transam_forward.1} parent=0
    _
  %s25 = ssub.s32 1, %s23
  %s26 = scalar_select 0, %s25, %s23
  %v27 = vstv %s21
  %28 = vst [vmem:[#allocation2] sm:$0x1] %v27
  // Predicated region
  $region2: #{transam_forward.1} parent=0 // pred_check
    _
  $region3: #{transam_forward.1} parent=0 // pred_check_branch
    %30 = sbr.rel (0) target = $region5
  $region4: #{transam_forward.1} parent=0 // pred_region
    _
  $region5: #{transam_forward.1} parent=0 // pred_fallthru
    _
  // Predicated region
  $region6: #{transam_forward.1} parent=0 // pred_check
    _
  $region7: #{transam_forward.1} parent=0 // pred_check_branch
    %32 = sbr.rel (0) target = $region9
  $region8: #{transam_forward.1} parent=0 // pred_region
    _
  $region9: #{transam_forward.1} parent=0 // pred_fallthru
    _
  // Predicated region
  $region10: #{transam_forward.1} parent=0 // pred_check
    _
  $region11: #{transam_forward.1} parent=0 // pred_check_branch
    %34 = sbr.rel (0) target = $region13
  $region12: #{transam_forward.1} parent=0 // pred_region
    _
  $region13: #{transam_forward.1} parent=0 // pred_fallthru
    _
  // Predicated region
  $region14: #{transam_forward.1} parent=0 // pred_check
    _
  $region15: #{transam_forward.1} parent=0 // pred_check_branch
    %36 = sbr.rel (0) target = $region17
  $region16: #{transam_forward.1} parent=0 // pred_region
    _
  $region17: #{transam_forward.1} parent=0 // pred_fallthru
    _
  // Predicated region
  $region18: #{transam_forward.1} parent=0 // pred_check
    _
  $region19: #{transam_forward.1} parent=0 // pred_check_branch
    %38 = sbr.rel (0) target = $region21
  $region20: #{transam_forward.1} parent=0 // pred_region
    _
  $region21: #{transam_forward.1} parent=0 // pred_fallthru
    _
  // Predicated region
  $region22: #{transam_forward.1} parent=0 // pred_check
    _
  $region23: #{transam_forward.1} parent=0 // pred_check_branch
    %40 = sbr.rel (0) target = $region25
  $region24: #{transam_forward.1} parent=0 // pred_region
    _
  $region25: #{transam_forward.1} parent=0 // pred_fallthru
    _
  // Predicated region
  $region26: #{transam_forward.1} parent=0 // pred_check
    _
  $region27: #{transam_forward.1} parent=0 // pred_check_branch
    %42 = sbr.rel (0) target = $region29
  $region28: #{transam_forward.1} parent=0 // pred_region
    _
  $region29: #{transam_forward.1} parent=0 // pred_fallthru
    _
  // Predicated region
  $region30: #{transam_forward.1} parent=0 // pred_check
    _
  $region31: #{transam_forward.1} parent=0 // pred_check_branch
    %44 = sbr.rel (0) target = $region33
  $region32: #{transam_forward.1} parent=0 // pred_region
    _
  $region33: #{transam_forward.1} parent=0 // pred_fallthru
    _
  // Predicated region
  $region34: #{transam_forward.1} parent=0 // pred_check
    _
  $region35: #{transam_forward.1} parent=0 // pred_check_branch
    %46 = sbr.rel (0) target = $region37
  $region36: #{transam_forward.1} parent=0 // pred_region
    _
  $region37: #{transam_forward.1} parent=0 // pred_fallthru
    _
  // Predicated region
  $region38: #{transam_forward.1} parent=0 // pred_check
    _
  $region39: #{transam_forward.1} parent=0 // pred_check_branch
    %48 = sbr.rel (0) target = $region41
  $region40: #{transam_forward.1} parent=0 // pred_region
    _
  $region41: #{transam_forward.1} parent=0 // pred_fallthru
    _
  // Predicated region
  $region42: #{transam_forward.1} parent=0 // pred_check
    _
  $region43: #{transam_forward.1} parent=0 // pred_check_branch
    %50 = sbr.rel (0) target = $region45
  $region44: #{transam_forward.1} parent=0 // pred_region
    _
  $region45: #{transam_forward.1} parent=0 // pred_fallthru
    _
  // Predicated region
  $region46: #{transam_forward.1} parent=0 // pred_check
    _
  $region47: #{transam_forward.1} parent=0 // pred_check_branch
    %52 = sbr.rel (0) target = $region49
  $region48: #{transam_forward.1} parent=0 // pred_region
    _
  $region49: #{transam_forward.1} parent=0 // pred_fallthru
    _
  // Predicated region
  $region50: #{transam_forward.1} parent=0 // pred_check
    _
  $region51: #{transam_forward.1} parent=0 // pred_check_branch
    %54 = sbr.rel (0) target = $region53
  $region52: #{transam_forward.1} parent=0 // pred_region
    _
  $region53: #{transam_forward.1} parent=0 // pred_fallthru
    _
  // Predicated region
  $region54: #{transam_forward.1} parent=0 // pred_check
    _
  $region55: #{transam_forward.1} parent=0 // pred_check_branch
    %56 = sbr.rel (0) target = $region57
  $region56: #{transam_forward.1} parent=0 // pred_region
    _
  $region57: #{transam_forward.1} parent=0 // pred_fallthru
    _
  // Predicated region
  $region58: #{transam_forward.1} parent=0 // pred_check
    _
  $region59: #{transam_forward.1} parent=0 // pred_check_branch
    %58 = sbr.rel (0) target = $region61
  $region60: #{transam_forward.1} parent=0 // pred_region
    _
  $region61: #{transam_forward.1} parent=0 // pred_fallthru
    _
  // Predicated region
  $region62: #{transam_forward.1} parent=0 // pred_check
    _
  $region63: #{transam_forward.1} parent=0 // pred_check_branch
    %60 = sbr.rel (0) target = $region65
  $region64: #{transam_forward.1} parent=0 // pred_region
    _
  $region65: #{transam_forward.1} parent=0 // pred_fallthru
    _
  // Predicated region
  $region66: #{transam_forward.1} parent=0 // pred_check
    _
  $region67: #{transam_forward.1} parent=0 // pred_check_branch
    %62 = sbr.rel (0) target = $region69
  $region68: #{transam_forward.1} parent=0 // pred_region
    _
  $region69: #{transam_forward.1} parent=0 // pred_fallthru
    _
  // Predicated region
  $region70: #{transam_forward.1} parent=0 // pred_check
    _
  $region71: #{transam_forward.1} parent=0 // pred_check_branch
    %64 = sbr.rel (0) target = $region73
  $region72: #{transam_forward.1} parent=0 // pred_region
    _
  $region73: #{transam_forward.1} parent=0 // pred_fallthru
    _
  // Predicated region
  $region74: #{transam_forward.1} parent=0 // pred_check
    _
  $region75: #{transam_forward.1} parent=0 // pred_check_branch
    %66 = sbr.rel (0) target = $region77
  $region76: #{transam_forward.1} parent=0 // pred_region
    _
  $region77: #{transam_forward.1} parent=0 // pred_fallthru
    _
  // Predicated region
  $region78: #{transam_forward.1} parent=0 // pred_check
    _
  $region79: #{transam_forward.1} parent=0 // pred_check_branch
    %68 = sbr.rel (0) target = $region81
  $region80: #{transam_forward.1} parent=0 // pred_region
    _
  $region81: #{transam_forward.1} parent=0 // pred_fallthru
    _
  // Predicated region
  $region82: #{transam_forward.1} parent=0 // pred_check
    _
  $region83: #{transam_forward.1} parent=0 // pred_check_branch
    %70 = sbr.rel (0) target = $region85
  $region84: #{transam_forward.1} parent=0 // pred_region
    _
  $region85: #{transam_forward.1} parent=0 // pred_fallthru
    _
  // Predicated region
  $region86: #{transam_forward.1} parent=0 // pred_check
    _
  $region87: #{transam_forward.1} parent=0 // pred_check_branch
    %72 = sbr.rel (0) target = $region89
  $region88: #{transam_forward.1} parent=0 // pred_region
    _
  $region89: #{transam_forward.1} parent=0 // pred_fallthru
    _
  %v74 = vlaneseq
  %v75 = vshrl.u32 %v74, 7
  %v76 = vadd.s32 %v75, 8
  %v77 = vlaneseq
  %v78 = vand.u32 %v77, 127
  %vm79 = vcmp.le.s32.totalorder %v78, %v75
  %vm80 = vcmp.le.s32.totalorder %v78, %v76
  %v81 = vsel %vm79, 0.0, -inf
  %v82 = vsel %vm80, 0.0, -inf
  %v83 = vperm.slane %v81, 0
  %v84 = vlaneseq
  %v85 = vshrl.u32 %v84, 7
  %87 = vset.pattern.permute.xlu0 %v85
  %88 = vperm.xlu0 %87, %v83
  %v89 = vpop.permute.xlu0 %88
  %v90 = vlaneseq
  %v91 = vshrl.u32 %v90, 7
  %v92 = vadd.s32 %v91, 8
  %93 = vset.pattern.permute.xlu0 %v92
  %94 = vperm.xlu0 %93, %v83
  %v95 = vpop.permute.xlu0 %94
  %v96 = vperm.slane %v81, 1
  %v97 = vlaneseq
  %v98 = vshrl.u32 %v97, 7
  %100 = vset.pattern.permute.xlu0 %v98
  %101 = vperm.xlu0 %100, %v96
  %v102 = vpop.permute.xlu0 %101
  %v103 = vlaneseq
  %v104 = vshrl.u32 %v103, 7
  %v105 = vadd.s32 %v104, 8
  %106 = vset.pattern.permute.xlu0 %v105
  %107 = vperm.xlu0 %106, %v96
  %v108 = vpop.permute.xlu0 %107
  %v109 = vperm.slane %v81, 2
  %v110 = vlaneseq
  %v111 = vshrl.u32 %v110, 7
  %113 = vset.pattern.permute.xlu0 %v111
  %114 = vperm.xlu0 %113, %v109
  %v115 = vpop.permute.xlu0 %114
  %v116 = vlaneseq
  %v117 = vshrl.u32 %v116, 7
  %v118 = vadd.s32 %v117, 8
  %119 = vset.pattern.permute.xlu0 %v118
  %120 = vperm.xlu0 %119, %v109
  %v121 = vpop.permute.xlu0 %120
  %v122 = vperm.slane %v81, 3
  %v123 = vlaneseq
  %v124 = vshrl.u32 %v123, 7
  %126 = vset.pattern.permute.xlu0 %v124
  %127 = vperm.xlu0 %126, %v122
  %v128 = vpop.permute.xlu0 %127
  %v129 = vlaneseq
  %v130 = vshrl.u32 %v129, 7
  %v131 = vadd.s32 %v130, 8
  %132 = vset.pattern.permute.xlu0 %v131
  %133 = vperm.xlu0 %132, %v122
  %v134 = vpop.permute.xlu0 %133
  %v135 = vperm.slane %v81, 4
  %v136 = vlaneseq
  %v137 = vshrl.u32 %v136, 7
  %139 = vset.pattern.permute.xlu0 %v137
  %140 = vperm.xlu0 %139, %v135
  %v141 = vpop.permute.xlu0 %140
  %v142 = vlaneseq
  %v143 = vshrl.u32 %v142, 7
  %v144 = vadd.s32 %v143, 8
  %145 = vset.pattern.permute.xlu0 %v144
  %146 = vperm.xlu0 %145, %v135
  %v147 = vpop.permute.xlu0 %146
  %v148 = vperm.slane %v81, 5
  %v149 = vlaneseq
  %v150 = vshrl.u32 %v149, 7
  %152 = vset.pattern.permute.xlu0 %v150
  %153 = vperm.xlu0 %152, %v148
  %v154 = vpop.permute.xlu0 %153
  %v155 = vlaneseq
  %v156 = vshrl.u32 %v155, 7
  %v157 = vadd.s32 %v156, 8
  %158 = vset.pattern.permute.xlu0 %v157
  %159 = vperm.xlu0 %158, %v148
  %v160 = vpop.permute.xlu0 %159
  %v161 = vperm.slane %v81, 6
  %v162 = vlaneseq
  %v163 = vshrl.u32 %v162, 7
  %165 = vset.pattern.permute.xlu0 %v163
  %166 = vperm.xlu0 %165, %v161
  %v167 = vpop.permute.xlu0 %166
  %v168 = vlaneseq
  %v169 = vshrl.u32 %v168, 7
  %v170 = vadd.s32 %v169, 8
  %171 = vset.pattern.permute.xlu0 %v170
  %172 = vperm.xlu0 %171, %v161
  %v173 = vpop.permute.xlu0 %172
  %v174 = vperm.slane %v81, 7
  %v175 = vlaneseq
  %v176 = vshrl.u32 %v175, 7
  %178 = vset.pattern.permute.xlu0 %v176
  %179 = vperm.xlu0 %178, %v174
  %v180 = vpop.permute.xlu0 %179
  %v181 = vlaneseq
  %v182 = vshrl.u32 %v181, 7
  %v183 = vadd.s32 %v182, 8
  %184 = vset.pattern.permute.xlu0 %v183
  %185 = vperm.xlu0 %184, %v174
  %v186 = vpop.permute.xlu0 %185
  %v187 = vperm.slane %v82, 0
  %v188 = vlaneseq
  %v189 = vshrl.u32 %v188, 7
  %191 = vset.pattern.permute.xlu0 %v189
  %192 = vperm.xlu0 %191, %v187
  %v193 = vpop.permute.xlu0 %192
  %v194 = vlaneseq
  %v195 = vshrl.u32 %v194, 7
  %v196 = vadd.s32 %v195, 8
  %197 = vset.pattern.permute.xlu0 %v196
  %198 = vperm.xlu0 %197, %v187
  %v199 = vpop.permute.xlu0 %198
  %v200 = vperm.slane %v82, 1
  %v201 = vlaneseq
  %v202 = vshrl.u32 %v201, 7
  %204 = vset.pattern.permute.xlu0 %v202
  %205 = vperm.xlu0 %204, %v200
  %v206 = vpop.permute.xlu0 %205
  %v207 = vlaneseq
  %v208 = vshrl.u32 %v207, 7
  %v209 = vadd.s32 %v208, 8
  %210 = vset.pattern.permute.xlu0 %v209
  %211 = vperm.xlu0 %210, %v200
  %v212 = vpop.permute.xlu0 %211
  %v213 = vperm.slane %v82, 2
  %v214 = vlaneseq
  %v215 = vshrl.u32 %v214, 7
  %217 = vset.pattern.permute.xlu0 %v215
  %218 = vperm.xlu0 %217, %v213
  %v219 = vpop.permute.xlu0 %218
  %v220 = vlaneseq
  %v221 = vshrl.u32 %v220, 7
  %v222 = vadd.s32 %v221, 8
  %223 = vset.pattern.permute.xlu0 %v222
  %224 = vperm.xlu0 %223, %v213
  %v225 = vpop.permute.xlu0 %224
  %v226 = vperm.slane %v82, 3
  %v227 = vlaneseq
  %v228 = vshrl.u32 %v227, 7
  %230 = vset.pattern.permute.xlu0 %v228
  %231 = vperm.xlu0 %230, %v226
  %v232 = vpop.permute.xlu0 %231
  %v233 = vlaneseq
  %v234 = vshrl.u32 %v233, 7
  %v235 = vadd.s32 %v234, 8
  %236 = vset.pattern.permute.xlu0 %v235
  %237 = vperm.xlu0 %236, %v226
  %v238 = vpop.permute.xlu0 %237
  %v239 = vperm.slane %v82, 4
  %v240 = vlaneseq
  %v241 = vshrl.u32 %v240, 7
  %243 = vset.pattern.permute.xlu0 %v241
  %244 = vperm.xlu0 %243, %v239
  %v245 = vpop.permute.xlu0 %244
  %v246 = vlaneseq
  %v247 = vshrl.u32 %v246, 7
  %v248 = vadd.s32 %v247, 8
  %249 = vset.pattern.permute.xlu0 %v248
  %250 = vperm.xlu0 %249, %v239
  %v251 = vpop.permute.xlu0 %250
  %v252 = vperm.slane %v82, 5
  %v253 = vlaneseq
  %v254 = vshrl.u32 %v253, 7
  %256 = vset.pattern.permute.xlu0 %v254
  %257 = vperm.xlu0 %256, %v252
  %v258 = vpop.permute.xlu0 %257
  %v259 = vlaneseq
  %v260 = vshrl.u32 %v259, 7
  %v261 = vadd.s32 %v260, 8
  %262 = vset.pattern.permute.xlu0 %v261
  %263 = vperm.xlu0 %262, %v252
  %v264 = vpop.permute.xlu0 %263
  %v265 = vperm.slane %v82, 6
  %v266 = vlaneseq
  %v267 = vshrl.u32 %v266, 7
  %269 = vset.pattern.permute.xlu0 %v267
  %270 = vperm.xlu0 %269, %v265
  %v271 = vpop.permute.xlu0 %270
  %v272 = vlaneseq
  %v273 = vshrl.u32 %v272, 7
  %v274 = vadd.s32 %v273, 8
  %275 = vset.pattern.permute.xlu0 %v274
  %276 = vperm.xlu0 %275, %v265
  %v277 = vpop.permute.xlu0 %276
  %v278 = vperm.slane %v82, 7
  %v279 = vlaneseq
  %v280 = vshrl.u32 %v279, 7
  %282 = vset.pattern.permute.xlu0 %v280
  %283 = vperm.xlu0 %282, %v278
  %v284 = vpop.permute.xlu0 %283
  %v285 = vlaneseq
  %v286 = vshrl.u32 %v285, 7
  %v287 = vadd.s32 %v286, 8
  %288 = vset.pattern.permute.xlu0 %v287
  %289 = vperm.xlu0 %288, %v278
  %v290 = vpop.permute.xlu0 %289
  %v291 = vld [vmem:[%s0] sm:$0xff]
  %v292 = vld [vmem:[%s0 + $0x8] sm:$0xff]
  %v293 = vld [vmem:[%s0 + $0x10] sm:$0xff]
  %v294 = vld [vmem:[%s0 + $0x18] sm:$0xff]
  %v295 = vld [vmem:[%s0 + $0x20] sm:$0xff]
  %v296 = vld [vmem:[%s0 + $0x28] sm:$0xff]
  %v297 = vld [vmem:[%s0 + $0x30] sm:$0xff]
  %v298 = vld [vmem:[%s0 + $0x38] sm:$0xff]
  %v299 = vld [vmem:[%s1] sm:$0xff]
  %v300 = vld [vmem:[%s2] sm:$0x1]
  %v302 = vperm.slane %v300, 0
  %vm304 = vcmask 64512
  %v306 = vsel %vm304, %v291, 0
  %v309 = vsel %vm304, %v292, 0
  %v312 = vsel %vm304, %v293, 0
  %v315 = vsel %vm304, %v294, 0
  %v318 = vsel %vm304, %v295, 0
  %v321 = vsel %vm304, %v296, 0
  %v324 = vsel %vm304, %v297, 0
  %v327 = vsel %vm304, %v298, 0
  %329 = vmatpush.msra.mxu0 0.0
  %330 = vmatpush.msra.mxu0 0.0
  %331 = vmatpush.msra.mxu0 0.0
  %332 = vmatpush.msra.mxu0 0.0
  %333 = vmatpush.msra.mxu0 0.0
  %334 = vmatpush.msra.mxu0 0.0
  %335 = vmatpush.msra.mxu0 0.0
  %336 = vmatpush.msra.mxu0 0.0
  %337 = vmatpush.msra.mxu0 0.0
  %338 = vmatpush.msra.mxu0 0.0
  %339 = vmatpush.msra.mxu0 0.0
  %340 = vmatpush.msra.mxu0 0.0
  %341 = vmatpush.msra.mxu0 0.0
  %342 = vmatpush.msra.mxu0 0.0
  %343 = vmatpush.msra.mxu0 0.0
  %344 = vmatpush.msra.mxu0 %v299
  %345 = vmatmul.f32.gmra.mxu0 %v306
  %v346 = vpop.f32.mrf.mxu0
  %v347 = vadd.f32 %v302, %v346
  %348 = vmatmul.f32.gmra.mxu0 %v309
  %v349 = vpop.f32.mrf.mxu0
  %v350 = vadd.f32 %v302, %v349
  %351 = vmatmul.f32.gmra.mxu0 %v312
  %v352 = vpop.f32.mrf.mxu0
  %v353 = vadd.f32 %v302, %v352
  %354 = vmatmul.f32.gmra.mxu0 %v315
  %v355 = vpop.f32.mrf.mxu0
  %v356 = vadd.f32 %v302, %v355
  %357 = vmatmul.f32.gmra.mxu0 %v318
  %v358 = vpop.f32.mrf.mxu0
  %v359 = vadd.f32 %v302, %v358
  %360 = vmatmul.f32.gmra.mxu0 %v321
  %v361 = vpop.f32.mrf.mxu0
  %v362 = vadd.f32 %v302, %v361
  %363 = vmatmul.f32.gmra.mxu0 %v324
  %v364 = vpop.f32.mrf.mxu0
  %v365 = vadd.f32 %v302, %v364
  %366 = vmatmul.f32.gmra.mxu0 %v327
  %v367 = vpop.f32.mrf.mxu0
  %v368 = vadd.f32 %v302, %v367
  %369 = vdwg.mxu0
  %v370 = vld [vmem:[%s3] sm:$0xff]
  %v371 = vld [vmem:[%s4] sm:$0x1]
  %v373 = vperm.slane %v371, 0
  %375 = vmatpush.msra.mxu0 0.0
  %376 = vmatpush.msra.mxu0 0.0
  %377 = vmatpush.msra.mxu0 0.0
  %378 = vmatpush.msra.mxu0 0.0
  %379 = vmatpush.msra.mxu0 0.0
  %380 = vmatpush.msra.mxu0 0.0
  %381 = vmatpush.msra.mxu0 0.0
  %382 = vmatpush.msra.mxu0 0.0
  %383 = vmatpush.msra.mxu0 0.0
  %384 = vmatpush.msra.mxu0 0.0
  %385 = vmatpush.msra.mxu0 0.0
  %386 = vmatpush.msra.mxu0 0.0
  %387 = vmatpush.msra.mxu0 0.0
  %388 = vmatpush.msra.mxu0 0.0
  %389 = vmatpush.msra.mxu0 0.0
  %390 = vmatpush.msra.mxu0 %v370
  %391 = vmatmul.f32.gmra.mxu0 %v306
  %v392 = vpop.f32.mrf.mxu0
  %v393 = vadd.f32 %v373, %v392
  %394 = vmatmul.f32.gmra.mxu0 %v309
  %v395 = vpop.f32.mrf.mxu0
  %v396 = vadd.f32 %v373, %v395
  %397 = vmatmul.f32.gmra.mxu0 %v312
  %v398 = vpop.f32.mrf.mxu0
  %v399 = vadd.f32 %v373, %v398
  %400 = vmatmul.f32.gmra.mxu0 %v315
  %v401 = vpop.f32.mrf.mxu0
  %v402 = vadd.f32 %v373, %v401
  %403 = vmatmul.f32.gmra.mxu0 %v318
  %v404 = vpop.f32.mrf.mxu0
  %v405 = vadd.f32 %v373, %v404
  %406 = vmatmul.f32.gmra.mxu0 %v321
  %v407 = vpop.f32.mrf.mxu0
  %v408 = vadd.f32 %v373, %v407
  %409 = vmatmul.f32.gmra.mxu0 %v324
  %v410 = vpop.f32.mrf.mxu0
  %v411 = vadd.f32 %v373, %v410
  %412 = vmatmul.f32.gmra.mxu0 %v327
  %v413 = vpop.f32.mrf.mxu0
  %v414 = vadd.f32 %v373, %v413
  %415 = vdwg.mxu0
  %v416 = vld [vmem:[%s5] sm:$0xff]
  %v417 = vld [vmem:[%s6] sm:$0x1]
  %v419 = vperm.slane %v417, 0
  %421 = vmatpush.msra.mxu0 0.0
  %422 = vmatpush.msra.mxu0 0.0
  %423 = vmatpush.msra.mxu0 0.0
  %424 = vmatpush.msra.mxu0 0.0
  %425 = vmatpush.msra.mxu0 0.0
  %426 = vmatpush.msra.mxu0 0.0
  %427 = vmatpush.msra.mxu0 0.0
  %428 = vmatpush.msra.mxu0 0.0
  %429 = vmatpush.msra.mxu0 0.0
  %430 = vmatpush.msra.mxu0 0.0
  %431 = vmatpush.msra.mxu0 0.0
  %432 = vmatpush.msra.mxu0 0.0
  %433 = vmatpush.msra.mxu0 0.0
  %434 = vmatpush.msra.mxu0 0.0
  %435 = vmatpush.msra.mxu0 0.0
  %436 = vmatpush.msra.mxu0 %v416
  %437 = vmatmul.f32.gmra.mxu0 %v306
  %v438 = vpop.f32.mrf.mxu0
  %v439 = vadd.f32 %v419, %v438
  %440 = vmatmul.f32.gmra.mxu0 %v309
  %v441 = vpop.f32.mrf.mxu0
  %v442 = vadd.f32 %v419, %v441
  %443 = vmatmul.f32.gmra.mxu0 %v312
  %v444 = vpop.f32.mrf.mxu0
  %v445 = vadd.f32 %v419, %v444
  %446 = vmatmul.f32.gmra.mxu0 %v315
  %v447 = vpop.f32.mrf.mxu0
  %v448 = vadd.f32 %v419, %v447
  %449 = vmatmul.f32.gmra.mxu0 %v318
  %v450 = vpop.f32.mrf.mxu0
  %v451 = vadd.f32 %v419, %v450
  %452 = vmatmul.f32.gmra.mxu0 %v321
  %v453 = vpop.f32.mrf.mxu0
  %v454 = vadd.f32 %v419, %v453
  %455 = vmatmul.f32.gmra.mxu0 %v324
  %v456 = vpop.f32.mrf.mxu0
  %v457 = vadd.f32 %v419, %v456
  %458 = vmatmul.f32.gmra.mxu0 %v327
  %v459 = vpop.f32.mrf.mxu0
  %v460 = vadd.f32 %v419, %v459
  %461 = vdwg.mxu0
  %v464 = vrot.slane %v347, 1
  %v465 = vrot.slane %v347, 2
  %v466 = vrot.slane %v347, 3
  %v467 = vrot.slane %v347, 4
  %v468 = vrot.slane %v347, 5
  %v469 = vrot.slane %v347, 6
  %v470 = vrot.slane %v347, 7
  %v471 = vrot.slane %v350, 1
  %v472 = vrot.slane %v350, 2
  %v473 = vrot.slane %v350, 3
  %v474 = vrot.slane %v350, 4
  %v475 = vrot.slane %v350, 5
  %v476 = vrot.slane %v350, 6
  %v477 = vrot.slane %v350, 7
  %v478 = vperm.slane %v347, 0
  %v479 = vperm.slane %v464, 0
  %v480 = vperm.slane %v465, 0
  %v481 = vperm.slane %v466, 0
  %v482 = vperm.slane %v467, 0
  %v483 = vperm.slane %v468, 0
  %v484 = vperm.slane %v469, 0
  %v485 = vperm.slane %v470, 0
  %v486 = vperm.slane %v350, 0
  %v487 = vperm.slane %v471, 0
  %v488 = vperm.slane %v472, 0
  %v489 = vperm.slane %v473, 0
  %v490 = vperm.slane %v474, 0
  %v491 = vperm.slane %v475, 0
  %v492 = vperm.slane %v476, 0
  %v493 = vperm.slane %v477, 0
  %v510 = vmul.f32 %v478, %v393
  %v511 = vmul.f32 %v478, %v396
  %v512 = vmul.f32 %v479, %v393
  %v513 = vmul.f32 %v479, %v396
  %v514 = vmul.f32 %v480, %v393
  %v515 = vmul.f32 %v480, %v396
  %v516 = vmul.f32 %v481, %v393
  %v517 = vmul.f32 %v481, %v396
  %v518 = vmul.f32 %v482, %v393
  %v519 = vmul.f32 %v482, %v396
  %v520 = vmul.f32 %v483, %v393
  %v521 = vmul.f32 %v483, %v396
  %v522 = vmul.f32 %v484, %v393
  %v523 = vmul.f32 %v484, %v396
  %v524 = vmul.f32 %v485, %v393
  %v525 = vmul.f32 %v485, %v396
  %v526 = vmul.f32 %v486, %v393
  %v527 = vmul.f32 %v486, %v396
  %v528 = vmul.f32 %v487, %v393
  %v529 = vmul.f32 %v487, %v396
  %v530 = vmul.f32 %v488, %v393
  %v531 = vmul.f32 %v488, %v396
  %v532 = vmul.f32 %v489, %v393
  %v533 = vmul.f32 %v489, %v396
  %v534 = vmul.f32 %v490, %v393
  %v535 = vmul.f32 %v490, %v396
  %v536 = vmul.f32 %v491, %v393
  %v537 = vmul.f32 %v491, %v396
  %v538 = vmul.f32 %v492, %v393
  %v539 = vmul.f32 %v492, %v396
  %v540 = vmul.f32 %v493, %v393
  %v541 = vmul.f32 %v493, %v396
  %v542 = vadd.f32 %v510, %v89
  %v543 = vadd.f32 %v511, %v95
  %v544 = vadd.f32 %v512, %v102
  %v545 = vadd.f32 %v513, %v108
  %v546 = vadd.f32 %v514, %v115
  %v547 = vadd.f32 %v515, %v121
  %v548 = vadd.f32 %v516, %v128
  %v549 = vadd.f32 %v517, %v134
  %v550 = vadd.f32 %v518, %v141
  %v551 = vadd.f32 %v519, %v147
  %v552 = vadd.f32 %v520, %v154
  %v553 = vadd.f32 %v521, %v160
  %v554 = vadd.f32 %v522, %v167
  %v555 = vadd.f32 %v523, %v173
  %v556 = vadd.f32 %v524, %v180
  %v557 = vadd.f32 %v525, %v186
  %v558 = vadd.f32 %v526, %v193
  %v559 = vadd.f32 %v527, %v199
  %v560 = vadd.f32 %v528, %v206
  %v561 = vadd.f32 %v529, %v212
  %v562 = vadd.f32 %v530, %v219
  %v563 = vadd.f32 %v531, %v225
  %v564 = vadd.f32 %v532, %v232
  %v565 = vadd.f32 %v533, %v238
  %v566 = vadd.f32 %v534, %v245
  %v567 = vadd.f32 %v535, %v251
  %v568 = vadd.f32 %v536, %v258
  %v569 = vadd.f32 %v537, %v264
  %v570 = vadd.f32 %v538, %v271
  %v571 = vadd.f32 %v539, %v277
  %v572 = vadd.f32 %v540, %v284
  %v573 = vadd.f32 %v541, %v290
  %v574 = vsel %vm304, %v542, -inf
  %v575 = vsel %vm304, %v543, -inf
  %v576 = vmax.f32 %v574, %v575
  %v577 = vrot.slane %v576, 4
  %v578 = vmax.f32 %v576, %v577
  %v579 = vrot.slane %v578, 2
  %v580 = vmax.f32 %v578, %v579
  %v581 = vrot.slane %v580, 1
  %v582 = vmax.f32 %v580, %v581
  %v583 = vsel %vm304, %v544, -inf
  %v584 = vsel %vm304, %v545, -inf
  %v585 = vmax.f32 %v583, %v584
  %v586 = vrot.slane %v585, 4
  %v587 = vmax.f32 %v585, %v586
  %v588 = vrot.slane %v587, 2
  %v589 = vmax.f32 %v587, %v588
  %v590 = vrot.slane %v589, 1
  %v591 = vmax.f32 %v589, %v590
  %v592 = vsel %vm304, %v546, -inf
  %v593 = vsel %vm304, %v547, -inf
  %v594 = vmax.f32 %v592, %v593
  %v595 = vrot.slane %v594, 4
  %v596 = vmax.f32 %v594, %v595
  %v597 = vrot.slane %v596, 2
  %v598 = vmax.f32 %v596, %v597
  %v599 = vrot.slane %v598, 1
  %v600 = vmax.f32 %v598, %v599
  %v601 = vsel %vm304, %v548, -inf
  %v602 = vsel %vm304, %v549, -inf
  %v603 = vmax.f32 %v601, %v602
  %v604 = vrot.slane %v603, 4
  %v605 = vmax.f32 %v603, %v604
  %v606 = vrot.slane %v605, 2
  %v607 = vmax.f32 %v605, %v606
  %v608 = vrot.slane %v607, 1
  %v609 = vmax.f32 %v607, %v608
  %v610 = vsel %vm304, %v550, -inf
  %v611 = vsel %vm304, %v551, -inf
  %v612 = vmax.f32 %v610, %v611
  %v613 = vrot.slane %v612, 4
  %v614 = vmax.f32 %v612, %v613
  %v615 = vrot.slane %v614, 2
  %v616 = vmax.f32 %v614, %v615
  %v617 = vrot.slane %v616, 1
  %v618 = vmax.f32 %v616, %v617
  %v619 = vsel %vm304, %v552, -inf
  %v620 = vsel %vm304, %v553, -inf
  %v621 = vmax.f32 %v619, %v620
  %v622 = vrot.slane %v621, 4
  %v623 = vmax.f32 %v621, %v622
  %v624 = vrot.slane %v623, 2
  %v625 = vmax.f32 %v623, %v624
  %v626 = vrot.slane %v625, 1
  %v627 = vmax.f32 %v625, %v626
  %v628 = vsel %vm304, %v554, -inf
  %v629 = vsel %vm304, %v555, -inf
  %v630 = vmax.f32 %v628, %v629
  %v631 = vrot.slane %v630, 4
  %v632 = vmax.f32 %v630, %v631
  %v633 = vrot.slane %v632, 2
  %v634 = vmax.f32 %v632, %v633
  %v635 = vrot.slane %v634, 1
  %v636 = vmax.f32 %v634, %v635
  %v637 = vsel %vm304, %v556, -inf
  %v638 = vsel %vm304, %v557, -inf
  %v639 = vmax.f32 %v637, %v638
  %v640 = vrot.slane %v639, 4
  %v641 = vmax.f32 %v639, %v640
  %v642 = vrot.slane %v641, 2
  %v643 = vmax.f32 %v641, %v642
  %v644 = vrot.slane %v643, 1
  %v645 = vmax.f32 %v643, %v644
  %v646 = vsel %vm304, %v558, -inf
  %v647 = vsel %vm304, %v559, -inf
  %v648 = vmax.f32 %v646, %v647
  %v649 = vrot.slane %v648, 4
  %v650 = vmax.f32 %v648, %v649
  %v651 = vrot.slane %v650, 2
  %v652 = vmax.f32 %v650, %v651
  %v653 = vrot.slane %v652, 1
  %v654 = vmax.f32 %v652, %v653
  %v655 = vsel %vm304, %v560, -inf
  %v656 = vsel %vm304, %v561, -inf
  %v657 = vmax.f32 %v655, %v656
  %v658 = vrot.slane %v657, 4
  %v659 = vmax.f32 %v657, %v658
  %v660 = vrot.slane %v659, 2
  %v661 = vmax.f32 %v659, %v660
  %v662 = vrot.slane %v661, 1
  %v663 = vmax.f32 %v661, %v662
  %v664 = vsel %vm304, %v562, -inf
  %v665 = vsel %vm304, %v563, -inf
  %v666 = vmax.f32 %v664, %v665
  %v667 = vrot.slane %v666, 4
  %v668 = vmax.f32 %v666, %v667
  %v669 = vrot.slane %v668, 2
  %v670 = vmax.f32 %v668, %v669
  %v671 = vrot.slane %v670, 1
  %v672 = vmax.f32 %v670, %v671
  %v673 = vsel %vm304, %v564, -inf
  %v674 = vsel %vm304, %v565, -inf
  %v675 = vmax.f32 %v673, %v674
  %v676 = vrot.slane %v675, 4
  %v677 = vmax.f32 %v675, %v676
  %v678 = vrot.slane %v677, 2
  %v679 = vmax.f32 %v677, %v678
  %v680 = vrot.slane %v679, 1
  %v681 = vmax.f32 %v679, %v680
  %v682 = vsel %vm304, %v566, -inf
  %v683 = vsel %vm304, %v567, -inf
  %v684 = vmax.f32 %v682, %v683
  %v685 = vrot.slane %v684, 4
  %v686 = vmax.f32 %v684, %v685
  %v687 = vrot.slane %v686, 2
  %v688 = vmax.f32 %v686, %v687
  %v689 = vrot.slane %v688, 1
  %v690 = vmax.f32 %v688, %v689
  %v691 = vsel %vm304, %v568, -inf
  %v692 = vsel %vm304, %v569, -inf
  %v693 = vmax.f32 %v691, %v692
  %v694 = vrot.slane %v693, 4
  %v695 = vmax.f32 %v693, %v694
  %v696 = vrot.slane %v695, 2
  %v697 = vmax.f32 %v695, %v696
  %v698 = vrot.slane %v697, 1
  %v699 = vmax.f32 %v697, %v698
  %v700 = vsel %vm304, %v570, -inf
  %v701 = vsel %vm304, %v571, -inf
  %v702 = vmax.f32 %v700, %v701
  %v703 = vrot.slane %v702, 4
  %v704 = vmax.f32 %v702, %v703
  %v705 = vrot.slane %v704, 2
  %v706 = vmax.f32 %v704, %v705
  %v707 = vrot.slane %v706, 1
  %v708 = vmax.f32 %v706, %v707
  %v709 = vsel %vm304, %v572, -inf
  %v710 = vsel %vm304, %v573, -inf
  %v711 = vmax.f32 %v709, %v710
  %v712 = vrot.slane %v711, 4
  %v713 = vmax.f32 %v711, %v712
  %v714 = vrot.slane %v713, 2
  %v715 = vmax.f32 %v713, %v714
  %v716 = vrot.slane %v715, 1
  %v717 = vmax.f32 %v715, %v716
  %v718 = vsub.f32 %v542, %v582
  %v719 = vsub.f32 %v543, %v582
  %v720 = vsub.f32 %v544, %v591
  %v721 = vsub.f32 %v545, %v591
  %v722 = vsub.f32 %v546, %v600
  %v723 = vsub.f32 %v547, %v600
  %v724 = vsub.f32 %v548, %v609
  %v725 = vsub.f32 %v549, %v609
  %v726 = vsub.f32 %v550, %v618
  %v727 = vsub.f32 %v551, %v618
  %v728 = vsub.f32 %v552, %v627
  %v729 = vsub.f32 %v553, %v627
  %v730 = vsub.f32 %v554, %v636
  %v731 = vsub.f32 %v555, %v636
  %v732 = vsub.f32 %v556, %v645
  %v733 = vsub.f32 %v557, %v645
  %v734 = vsub.f32 %v558, %v654
  %v735 = vsub.f32 %v559, %v654
  %v736 = vsub.f32 %v560, %v663
  %v737 = vsub.f32 %v561, %v663
  %v738 = vsub.f32 %v562, %v672
  %v739 = vsub.f32 %v563, %v672
  %v740 = vsub.f32 %v564, %v681
  %v741 = vsub.f32 %v565, %v681
  %v742 = vsub.f32 %v566, %v690
  %v743 = vsub.f32 %v567, %v690
  %v744 = vsub.f32 %v568, %v699
  %v745 = vsub.f32 %v569, %v699
  %v746 = vsub.f32 %v570, %v708
  %v747 = vsub.f32 %v571, %v708
  %v748 = vsub.f32 %v572, %v717
  %v749 = vsub.f32 %v573, %v717
  %v750 = vmul.f32 %v718, 1.442695
  %v751 = vpow.pop %v750
  %v752 = vmul.f32 %v719, 1.442695
  %v753 = vpow.pop %v752
  %v754 = vmul.f32 %v720, 1.442695
  %v755 = vpow.pop %v754
  %v756 = vmul.f32 %v721, 1.442695
  %v757 = vpow.pop %v756
  %v758 = vmul.f32 %v722, 1.442695
  %v759 = vpow.pop %v758
  %v760 = vmul.f32 %v723, 1.442695
  %v761 = vpow.pop %v760
  %v762 = vmul.f32 %v724, 1.442695
  %v763 = vpow.pop %v762
  %v764 = vmul.f32 %v725, 1.442695
  %v765 = vpow.pop %v764
  %v766 = vmul.f32 %v726, 1.442695
  %v767 = vpow.pop %v766
  %v768 = vmul.f32 %v727, 1.442695
  %v769 = vpow.pop %v768
  %v770 = vmul.f32 %v728, 1.442695
  %v771 = vpow.pop %v770
  %v772 = vmul.f32 %v729, 1.442695
  %v773 = vpow.pop %v772
  %v774 = vmul.f32 %v730, 1.442695
  %v775 = vpow.pop %v774
  %v776 = vmul.f32 %v731, 1.442695
  %v777 = vpow.pop %v776
  %v778 = vmul.f32 %v732, 1.442695
  %v779 = vpow.pop %v778
  %v780 = vmul.f32 %v733, 1.442695
  %v781 = vpow.pop %v780
  %v782 = vmul.f32 %v734, 1.442695
  %v783 = vpow.pop %v782
  %v784 = vmul.f32 %v735, 1.442695
  %v785 = vpow.pop %v784
  %v786 = vmul.f32 %v736, 1.442695
  %v787 = vpow.pop %v786
  %v788 = vmul.f32 %v737, 1.442695
  %v789 = vpow.pop %v788
  %v790 = vmul.f32 %v738, 1.442695
  %v791 = vpow.pop %v790
  %v792 = vmul.f32 %v739, 1.442695
  %v793 = vpow.pop %v792
  %v794 = vmul.f32 %v740, 1.442695
  %v795 = vpow.pop %v794
  %v796 = vmul.f32 %v741, 1.442695
  %v797 = vpow.pop %v796
  %v798 = vmul.f32 %v742, 1.442695
  %v799 = vpow.pop %v798
  %v800 = vmul.f32 %v743, 1.442695
  %v801 = vpow.pop %v800
  %v802 = vmul.f32 %v744, 1.442695
  %v803 = vpow.pop %v802
  %v804 = vmul.f32 %v745, 1.442695
  %v805 = vpow.pop %v804
  %v806 = vmul.f32 %v746, 1.442695
  %v807 = vpow.pop %v806
  %v808 = vmul.f32 %v747, 1.442695
  %v809 = vpow.pop %v808
  %v810 = vmul.f32 %v748, 1.442695
  %v811 = vpow.pop %v810
  %v812 = vmul.f32 %v749, 1.442695
  %v813 = vpow.pop %v812
  %v814 = vsel %vm304, %v751, 0.0
  %v815 = vsel %vm304, %v753, 0.0
  %v816 = vadd.f32 %v814, %v815
  %v817 = vrot.slane %v816, 4
  %v818 = vadd.f32 %v816, %v817
  %v819 = vrot.slane %v818, 2
  %v820 = vadd.f32 %v818, %v819
  %v821 = vrot.slane %v820, 1
  %v822 = vadd.f32 %v820, %v821
  %v823 = vsel %vm304, %v755, 0.0
  %v824 = vsel %vm304, %v757, 0.0
  %v825 = vadd.f32 %v823, %v824
  %v826 = vrot.slane %v825, 4
  %v827 = vadd.f32 %v825, %v826
  %v828 = vrot.slane %v827, 2
  %v829 = vadd.f32 %v827, %v828
  %v830 = vrot.slane %v829, 1
  %v831 = vadd.f32 %v829, %v830
  %v832 = vsel %vm304, %v759, 0.0
  %v833 = vsel %vm304, %v761, 0.0
  %v834 = vadd.f32 %v832, %v833
  %v835 = vrot.slane %v834, 4
  %v836 = vadd.f32 %v834, %v835
  %v837 = vrot.slane %v836, 2
  %v838 = vadd.f32 %v836, %v837
  %v839 = vrot.slane %v838, 1
  %v840 = vadd.f32 %v838, %v839
  %v841 = vsel %vm304, %v763, 0.0
  %v842 = vsel %vm304, %v765, 0.0
  %v843 = vadd.f32 %v841, %v842
  %v844 = vrot.slane %v843, 4
  %v845 = vadd.f32 %v843, %v844
  %v846 = vrot.slane %v845, 2
  %v847 = vadd.f32 %v845, %v846
  %v848 = vrot.slane %v847, 1
  %v849 = vadd.f32 %v847, %v848
  %v850 = vsel %vm304, %v767, 0.0
  %v851 = vsel %vm304, %v769, 0.0
  %v852 = vadd.f32 %v850, %v851
  %v853 = vrot.slane %v852, 4
  %v854 = vadd.f32 %v852, %v853
  %v855 = vrot.slane %v854, 2
  %v856 = vadd.f32 %v854, %v855
  %v857 = vrot.slane %v856, 1
  %v858 = vadd.f32 %v856, %v857
  %v859 = vsel %vm304, %v771, 0.0
  %v860 = vsel %vm304, %v773, 0.0
  %v861 = vadd.f32 %v859, %v860
  %v862 = vrot.slane %v861, 4
  %v863 = vadd.f32 %v861, %v862
  %v864 = vrot.slane %v863, 2
  %v865 = vadd.f32 %v863, %v864
  %v866 = vrot.slane %v865, 1
  %v867 = vadd.f32 %v865, %v866
  %v868 = vsel %vm304, %v775, 0.0
  %v869 = vsel %vm304, %v777, 0.0
  %v870 = vadd.f32 %v868, %v869
  %v871 = vrot.slane %v870, 4
  %v872 = vadd.f32 %v870, %v871
  %v873 = vrot.slane %v872, 2
  %v874 = vadd.f32 %v872, %v873
  %v875 = vrot.slane %v874, 1
  %v876 = vadd.f32 %v874, %v875
  %v877 = vsel %vm304, %v779, 0.0
  %v878 = vsel %vm304, %v781, 0.0
  %v879 = vadd.f32 %v877, %v878
  %v880 = vrot.slane %v879, 4
  %v881 = vadd.f32 %v879, %v880
  %v882 = vrot.slane %v881, 2
  %v883 = vadd.f32 %v881, %v882
  %v884 = vrot.slane %v883, 1
  %v885 = vadd.f32 %v883, %v884
  %v886 = vsel %vm304, %v783, 0.0
  %v887 = vsel %vm304, %v785, 0.0
  %v888 = vadd.f32 %v886, %v887
  %v889 = vrot.slane %v888, 4
  %v890 = vadd.f32 %v888, %v889
  %v891 = vrot.slane %v890, 2
  %v892 = vadd.f32 %v890, %v891
  %v893 = vrot.slane %v892, 1
  %v894 = vadd.f32 %v892, %v893
  %v895 = vsel %vm304, %v787, 0.0
  %v896 = vsel %vm304, %v789, 0.0
  %v897 = vadd.f32 %v895, %v896
  %v898 = vrot.slane %v897, 4
  %v899 = vadd.f32 %v897, %v898
  %v900 = vrot.slane %v899, 2
  %v901 = vadd.f32 %v899, %v900
  %v902 = vrot.slane %v901, 1
  %v903 = vadd.f32 %v901, %v902
  %v904 = vsel %vm304, %v791, 0.0
  %v905 = vsel %vm304, %v793, 0.0
  %v906 = vadd.f32 %v904, %v905
  %v907 = vrot.slane %v906, 4
  %v908 = vadd.f32 %v906, %v907
  %v909 = vrot.slane %v908, 2
  %v910 = vadd.f32 %v908, %v909
  %v911 = vrot.slane %v910, 1
  %v912 = vadd.f32 %v910, %v911
  %v913 = vsel %vm304, %v795, 0.0
  %v914 = vsel %vm304, %v797, 0.0
  %v915 = vadd.f32 %v913, %v914
  %v916 = vrot.slane %v915, 4
  %v917 = vadd.f32 %v915, %v916
  %v918 = vrot.slane %v917, 2
  %v919 = vadd.f32 %v917, %v918
  %v920 = vrot.slane %v919, 1
  %v921 = vadd.f32 %v919, %v920
  %v922 = vsel %vm304, %v799, 0.0
  %v923 = vsel %vm304, %v801, 0.0
  %v924 = vadd.f32 %v922, %v923
  %v925 = vrot.slane %v924, 4
  %v926 = vadd.f32 %v924, %v925
  %v927 = vrot.slane %v926, 2
  %v928 = vadd.f32 %v926, %v927
  %v929 = vrot.slane %v928, 1
  %v930 = vadd.f32 %v928, %v929
  %v931 = vsel %vm304, %v803, 0.0
  %v932 = vsel %vm304, %v805, 0.0
  %v933 = vadd.f32 %v931, %v932
  %v934 = vrot.slane %v933, 4
  %v935 = vadd.f32 %v933, %v934
  %v936 = vrot.slane %v935, 2
  %v937 = vadd.f32 %v935, %v936
  %v938 = vrot.slane %v937, 1
  %v939 = vadd.f32 %v937, %v938
  %v940 = vsel %vm304, %v807, 0.0
  %v941 = vsel %vm304, %v809, 0.0
  %v942 = vadd.f32 %v940, %v941
  %v943 = vrot.slane %v942, 4
  %v944 = vadd.f32 %v942, %v943
  %v945 = vrot.slane %v944, 2
  %v946 = vadd.f32 %v944, %v945
  %v947 = vrot.slane %v946, 1
  %v948 = vadd.f32 %v946, %v947
  %v949 = vsel %vm304, %v811, 0.0
  %v950 = vsel %vm304, %v813, 0.0
  %v951 = vadd.f32 %v949, %v950
  %v952 = vrot.slane %v951, 4
  %v953 = vadd.f32 %v951, %v952
  %v954 = vrot.slane %v953, 2
  %v955 = vadd.f32 %v953, %v954
  %v956 = vrot.slane %v955, 1
  %v957 = vadd.f32 %v955, %v956
  %v958 = vmul.f32 %v751, %v439
  %v959 = vmul.f32 %v753, %v442
  %v960 = vmul.f32 %v755, %v439
  %v961 = vmul.f32 %v757, %v442
  %v962 = vmul.f32 %v759, %v439
  %v963 = vmul.f32 %v761, %v442
  %v964 = vmul.f32 %v763, %v439
  %v965 = vmul.f32 %v765, %v442
  %v966 = vmul.f32 %v767, %v439
  %v967 = vmul.f32 %v769, %v442
  %v968 = vmul.f32 %v771, %v439
  %v969 = vmul.f32 %v773, %v442
  %v970 = vmul.f32 %v775, %v439
  %v971 = vmul.f32 %v777, %v442
  %v972 = vmul.f32 %v779, %v439
  %v973 = vmul.f32 %v781, %v442
  %v974 = vmul.f32 %v783, %v439
  %v975 = vmul.f32 %v785, %v442
  %v976 = vmul.f32 %v787, %v439
  %v977 = vmul.f32 %v789, %v442
  %v978 = vmul.f32 %v791, %v439
  %v979 = vmul.f32 %v793, %v442
  %v980 = vmul.f32 %v795, %v439
  %v981 = vmul.f32 %v797, %v442
  %v982 = vmul.f32 %v799, %v439
  %v983 = vmul.f32 %v801, %v442
  %v984 = vmul.f32 %v803, %v439
  %v985 = vmul.f32 %v805, %v442
  %v986 = vmul.f32 %v807, %v439
  %v987 = vmul.f32 %v809, %v442
  %v988 = vmul.f32 %v811, %v439
  %v989 = vmul.f32 %v813, %v442
  %v990 = vsel %vm304, %v958, 0.0
  %v991 = vsel %vm304, %v959, 0.0
  %v992 = vadd.f32 %v990, %v991
  %v993 = vrot.slane %v992, 4
  %v994 = vadd.f32 %v992, %v993
  %v995 = vrot.slane %v994, 2
  %v996 = vadd.f32 %v994, %v995
  %v997 = vrot.slane %v996, 1
  %v998 = vadd.f32 %v996, %v997
  %v999 = vsel %vm304, %v960, 0.0
  %v1000 = vsel %vm304, %v961, 0.0
  %v1001 = vadd.f32 %v999, %v1000
  %v1002 = vrot.slane %v1001, 4
  %v1003 = vadd.f32 %v1001, %v1002
  %v1004 = vrot.slane %v1003, 2
  %v1005 = vadd.f32 %v1003, %v1004
  %v1006 = vrot.slane %v1005, 1
  %v1007 = vadd.f32 %v1005, %v1006
  %v1008 = vsel %vm304, %v962, 0.0
  %v1009 = vsel %vm304, %v963, 0.0
  %v1010 = vadd.f32 %v1008, %v1009
  %v1011 = vrot.slane %v1010, 4
  %v1012 = vadd.f32 %v1010, %v1011
  %v1013 = vrot.slane %v1012, 2
  %v1014 = vadd.f32 %v1012, %v1013
  %v1015 = vrot.slane %v1014, 1
  %v1016 = vadd.f32 %v1014, %v1015
  %v1017 = vsel %vm304, %v964, 0.0
  %v1018 = vsel %vm304, %v965, 0.0
  %v1019 = vadd.f32 %v1017, %v1018
  %v1020 = vrot.slane %v1019, 4
  %v1021 = vadd.f32 %v1019, %v1020
  %v1022 = vrot.slane %v1021, 2
  %v1023 = vadd.f32 %v1021, %v1022
  %v1024 = vrot.slane %v1023, 1
  %v1025 = vadd.f32 %v1023, %v1024
  %v1026 = vsel %vm304, %v966, 0.0
  %v1027 = vsel %vm304, %v967, 0.0
  %v1028 = vadd.f32 %v1026, %v1027
  %v1029 = vrot.slane %v1028, 4
  %v1030 = vadd.f32 %v1028, %v1029
  %v1031 = vrot.slane %v1030, 2
  %v1032 = vadd.f32 %v1030, %v1031
  %v1033 = vrot.slane %v1032, 1
  %v1034 = vadd.f32 %v1032, %v1033
  %v1035 = vsel %vm304, %v968, 0.0
  %v1036 = vsel %vm304, %v969, 0.0
  %v1037 = vadd.f32 %v1035, %v1036
  %v1038 = vrot.slane %v1037, 4
  %v1039 = vadd.f32 %v1037, %v1038
  %v1040 = vrot.slane %v1039, 2
  %v1041 = vadd.f32 %v1039, %v1040
  %v1042 = vrot.slane %v1041, 1
  %v1043 = vadd.f32 %v1041, %v1042
  %v1044 = vsel %vm304, %v970, 0.0
  %v1045 = vsel %vm304, %v971, 0.0
  %v1046 = vadd.f32 %v1044, %v1045
  %v1047 = vrot.slane %v1046, 4
  %v1048 = vadd.f32 %v1046, %v1047
  %v1049 = vrot.slane %v1048, 2
  %v1050 = vadd.f32 %v1048, %v1049
  %v1051 = vrot.slane %v1050, 1
  %v1052 = vadd.f32 %v1050, %v1051
  %v1053 = vsel %vm304, %v972, 0.0
  %v1054 = vsel %vm304, %v973, 0.0
  %v1055 = vadd.f32 %v1053, %v1054
  %v1056 = vrot.slane %v1055, 4
  %v1057 = vadd.f32 %v1055, %v1056
  %v1058 = vrot.slane %v1057, 2
  %v1059 = vadd.f32 %v1057, %v1058
  %v1060 = vrot.slane %v1059, 1
  %v1061 = vadd.f32 %v1059, %v1060
  %v1062 = vsel %vm304, %v974, 0.0
  %v1063 = vsel %vm304, %v975, 0.0
  %v1064 = vadd.f32 %v1062, %v1063
  %v1065 = vrot.slane %v1064, 4
  %v1066 = vadd.f32 %v1064, %v1065
  %v1067 = vrot.slane %v1066, 2
  %v1068 = vadd.f32 %v1066, %v1067
  %v1069 = vrot.slane %v1068, 1
  %v1070 = vadd.f32 %v1068, %v1069
  %v1071 = vsel %vm304, %v976, 0.0
  %v1072 = vsel %vm304, %v977, 0.0
  %v1073 = vadd.f32 %v1071, %v1072
  %v1074 = vrot.slane %v1073, 4
  %v1075 = vadd.f32 %v1073, %v1074
  %v1076 = vrot.slane %v1075, 2
  %v1077 = vadd.f32 %v1075, %v1076
  %v1078 = vrot.slane %v1077, 1
  %v1079 = vadd.f32 %v1077, %v1078
  %v1080 = vsel %vm304, %v978, 0.0
  %v1081 = vsel %vm304, %v979, 0.0
  %v1082 = vadd.f32 %v1080, %v1081
  %v1083 = vrot.slane %v1082, 4
  %v1084 = vadd.f32 %v1082, %v1083
  %v1085 = vrot.slane %v1084, 2
  %v1086 = vadd.f32 %v1084, %v1085
  %v1087 = vrot.slane %v1086, 1
  %v1088 = vadd.f32 %v1086, %v1087
  %v1089 = vsel %vm304, %v980, 0.0
  %v1090 = vsel %vm304, %v981, 0.0
  %v1091 = vadd.f32 %v1089, %v1090
  %v1092 = vrot.slane %v1091, 4
  %v1093 = vadd.f32 %v1091, %v1092
  %v1094 = vrot.slane %v1093, 2
  %v1095 = vadd.f32 %v1093, %v1094
  %v1096 = vrot.slane %v1095, 1
  %v1097 = vadd.f32 %v1095, %v1096
  %v1098 = vsel %vm304, %v982, 0.0
  %v1099 = vsel %vm304, %v983, 0.0
  %v1100 = vadd.f32 %v1098, %v1099
  %v1101 = vrot.slane %v1100, 4
  %v1102 = vadd.f32 %v1100, %v1101
  %v1103 = vrot.slane %v1102, 2
  %v1104 = vadd.f32 %v1102, %v1103
  %v1105 = vrot.slane %v1104, 1
  %v1106 = vadd.f32 %v1104, %v1105
  %v1107 = vsel %vm304, %v984, 0.0
  %v1108 = vsel %vm304, %v985, 0.0
  %v1109 = vadd.f32 %v1107, %v1108
  %v1110 = vrot.slane %v1109, 4
  %v1111 = vadd.f32 %v1109, %v1110
  %v1112 = vrot.slane %v1111, 2
  %v1113 = vadd.f32 %v1111, %v1112
  %v1114 = vrot.slane %v1113, 1
  %v1115 = vadd.f32 %v1113, %v1114
  %v1116 = vsel %vm304, %v986, 0.0
  %v1117 = vsel %vm304, %v987, 0.0
  %v1118 = vadd.f32 %v1116, %v1117
  %v1119 = vrot.slane %v1118, 4
  %v1120 = vadd.f32 %v1118, %v1119
  %v1121 = vrot.slane %v1120, 2
  %v1122 = vadd.f32 %v1120, %v1121
  %v1123 = vrot.slane %v1122, 1
  %v1124 = vadd.f32 %v1122, %v1123
  %v1125 = vsel %vm304, %v988, 0.0
  %v1126 = vsel %vm304, %v989, 0.0
  %v1127 = vadd.f32 %v1125, %v1126
  %v1128 = vrot.slane %v1127, 4
  %v1129 = vadd.f32 %v1127, %v1128
  %v1130 = vrot.slane %v1129, 2
  %v1131 = vadd.f32 %v1129, %v1130
  %v1132 = vrot.slane %v1131, 1
  %v1133 = vadd.f32 %v1131, %v1132
  %v1134 = vrcp.pop %v822
  %v1135 = vrcp.pop %v831
  %v1136 = vrcp.pop %v840
  %v1137 = vrcp.pop %v849
  %v1138 = vrcp.pop %v858
  %v1139 = vrcp.pop %v867
  %v1140 = vrcp.pop %v876
  %v1141 = vrcp.pop %v885
  %v1142 = vrcp.pop %v894
  %v1143 = vrcp.pop %v903
  %v1144 = vrcp.pop %v912
  %v1145 = vrcp.pop %v921
  %v1146 = vrcp.pop %v930
  %v1147 = vrcp.pop %v939
  %v1148 = vrcp.pop %v948
  %v1149 = vrcp.pop %v957
  %v1150 = vmul.f32 %v998, %v1134
  %v1151 = vmul.f32 %v1007, %v1135
  %v1152 = vmul.f32 %v1016, %v1136
  %v1153 = vmul.f32 %v1025, %v1137
  %v1154 = vmul.f32 %v1034, %v1138
  %v1155 = vmul.f32 %v1043, %v1139
  %v1156 = vmul.f32 %v1052, %v1140
  %v1157 = vmul.f32 %v1061, %v1141
  %v1158 = vmul.f32 %v1070, %v1142
  %v1159 = vmul.f32 %v1079, %v1143
  %v1160 = vmul.f32 %v1088, %v1144
  %v1161 = vmul.f32 %v1097, %v1145
  %v1162 = vmul.f32 %v1106, %v1146
  %v1163 = vmul.f32 %v1115, %v1147
  %v1164 = vmul.f32 %v1124, %v1148
  %v1165 = vmul.f32 %v1133, %v1149
  %v1168 = vrot.slane %v353, 1
  %v1169 = vrot.slane %v353, 2
  %v1170 = vrot.slane %v353, 3
  %v1171 = vrot.slane %v353, 4
  %v1172 = vrot.slane %v353, 5
  %v1173 = vrot.slane %v353, 6
  %v1174 = vrot.slane %v353, 7
  %v1175 = vrot.slane %v356, 1
  %v1176 = vrot.slane %v356, 2
  %v1177 = vrot.slane %v356, 3
  %v1178 = vrot.slane %v356, 4
  %v1179 = vrot.slane %v356, 5
  %v1180 = vrot.slane %v356, 6
  %v1181 = vrot.slane %v356, 7
  %v1182 = vperm.slane %v353, 0
  %v1183 = vperm.slane %v1168, 0
  %v1184 = vperm.slane %v1169, 0
  %v1185 = vperm.slane %v1170, 0
  %v1186 = vperm.slane %v1171, 0
  %v1187 = vperm.slane %v1172, 0
  %v1188 = vperm.slane %v1173, 0
  %v1189 = vperm.slane %v1174, 0
  %v1190 = vperm.slane %v356, 0
  %v1191 = vperm.slane %v1175, 0
  %v1192 = vperm.slane %v1176, 0
  %v1193 = vperm.slane %v1177, 0
  %v1194 = vperm.slane %v1178, 0
  %v1195 = vperm.slane %v1179, 0
  %v1196 = vperm.slane %v1180, 0
  %v1197 = vperm.slane %v1181, 0
  %v1214 = vmul.f32 %v1182, %v399
  %v1215 = vmul.f32 %v1182, %v402
  %v1216 = vmul.f32 %v1183, %v399
  %v1217 = vmul.f32 %v1183, %v402
  %v1218 = vmul.f32 %v1184, %v399
  %v1219 = vmul.f32 %v1184, %v402
  %v1220 = vmul.f32 %v1185, %v399
  %v1221 = vmul.f32 %v1185, %v402
  %v1222 = vmul.f32 %v1186, %v399
  %v1223 = vmul.f32 %v1186, %v402
  %v1224 = vmul.f32 %v1187, %v399
  %v1225 = vmul.f32 %v1187, %v402
  %v1226 = vmul.f32 %v1188, %v399
  %v1227 = vmul.f32 %v1188, %v402
  %v1228 = vmul.f32 %v1189, %v399
  %v1229 = vmul.f32 %v1189, %v402
  %v1230 = vmul.f32 %v1190, %v399
  %v1231 = vmul.f32 %v1190, %v402
  %v1232 = vmul.f32 %v1191, %v399
  %v1233 = vmul.f32 %v1191, %v402
  %v1234 = vmul.f32 %v1192, %v399
  %v1235 = vmul.f32 %v1192, %v402
  %v1236 = vmul.f32 %v1193, %v399
  %v1237 = vmul.f32 %v1193, %v402
  %v1238 = vmul.f32 %v1194, %v399
  %v1239 = vmul.f32 %v1194, %v402
  %v1240 = vmul.f32 %v1195, %v399
  %v1241 = vmul.f32 %v1195, %v402
  %v1242 = vmul.f32 %v1196, %v399
  %v1243 = vmul.f32 %v1196, %v402
  %v1244 = vmul.f32 %v1197, %v399
  %v1245 = vmul.f32 %v1197, %v402
  %v1246 = vadd.f32 %v1214, %v89
  %v1247 = vadd.f32 %v1215, %v95
  %v1248 = vadd.f32 %v1216, %v102
  %v1249 = vadd.f32 %v1217, %v108
  %v1250 = vadd.f32 %v1218, %v115
  %v1251 = vadd.f32 %v1219, %v121
  %v1252 = vadd.f32 %v1220, %v128
  %v1253 = vadd.f32 %v1221, %v134
  %v1254 = vadd.f32 %v1222, %v141
  %v1255 = vadd.f32 %v1223, %v147
  %v1256 = vadd.f32 %v1224, %v154
  %v1257 = vadd.f32 %v1225, %v160
  %v1258 = vadd.f32 %v1226, %v167
  %v1259 = vadd.f32 %v1227, %v173
  %v1260 = vadd.f32 %v1228, %v180
  %v1261 = vadd.f32 %v1229, %v186
  %v1262 = vadd.f32 %v1230, %v193
  %v1263 = vadd.f32 %v1231, %v199
  %v1264 = vadd.f32 %v1232, %v206
  %v1265 = vadd.f32 %v1233, %v212
  %v1266 = vadd.f32 %v1234, %v219
  %v1267 = vadd.f32 %v1235, %v225
  %v1268 = vadd.f32 %v1236, %v232
  %v1269 = vadd.f32 %v1237, %v238
  %v1270 = vadd.f32 %v1238, %v245
  %v1271 = vadd.f32 %v1239, %v251
  %v1272 = vadd.f32 %v1240, %v258
  %v1273 = vadd.f32 %v1241, %v264
  %v1274 = vadd.f32 %v1242, %v271
  %v1275 = vadd.f32 %v1243, %v277
  %v1276 = vadd.f32 %v1244, %v284
  %v1277 = vadd.f32 %v1245, %v290
  %v1278 = vsel %vm304, %v1246, -inf
  %v1279 = vsel %vm304, %v1247, -inf
  %v1280 = vmax.f32 %v1278, %v1279
  %v1281 = vrot.slane %v1280, 4
  %v1282 = vmax.f32 %v1280, %v1281
  %v1283 = vrot.slane %v1282, 2
  %v1284 = vmax.f32 %v1282, %v1283
  %v1285 = vrot.slane %v1284, 1
  %v1286 = vmax.f32 %v1284, %v1285
  %v1287 = vsel %vm304, %v1248, -inf
  %v1288 = vsel %vm304, %v1249, -inf
  %v1289 = vmax.f32 %v1287, %v1288
  %v1290 = vrot.slane %v1289, 4
  %v1291 = vmax.f32 %v1289, %v1290
  %v1292 = vrot.slane %v1291, 2
  %v1293 = vmax.f32 %v1291, %v1292
  %v1294 = vrot.slane %v1293, 1
  %v1295 = vmax.f32 %v1293, %v1294
  %v1296 = vsel %vm304, %v1250, -inf
  %v1297 = vsel %vm304, %v1251, -inf
  %v1298 = vmax.f32 %v1296, %v1297
  %v1299 = vrot.slane %v1298, 4
  %v1300 = vmax.f32 %v1298, %v1299
  %v1301 = vrot.slane %v1300, 2
  %v1302 = vmax.f32 %v1300, %v1301
  %v1303 = vrot.slane %v1302, 1
  %v1304 = vmax.f32 %v1302, %v1303
  %v1305 = vsel %vm304, %v1252, -inf
  %v1306 = vsel %vm304, %v1253, -inf
  %v1307 = vmax.f32 %v1305, %v1306
  %v1308 = vrot.slane %v1307, 4
  %v1309 = vmax.f32 %v1307, %v1308
  %v1310 = vrot.slane %v1309, 2
  %v1311 = vmax.f32 %v1309, %v1310
  %v1312 = vrot.slane %v1311, 1
  %v1313 = vmax.f32 %v1311, %v1312
  %v1314 = vsel %vm304, %v1254, -inf
  %v1315 = vsel %vm304, %v1255, -inf
  %v1316 = vmax.f32 %v1314, %v1315
  %v1317 = vrot.slane %v1316, 4
  %v1318 = vmax.f32 %v1316, %v1317
  %v1319 = vrot.slane %v1318, 2
  %v1320 = vmax.f32 %v1318, %v1319
  %v1321 = vrot.slane %v1320, 1
  %v1322 = vmax.f32 %v1320, %v1321
  %v1323 = vsel %vm304, %v1256, -inf
  %v1324 = vsel %vm304, %v1257, -inf
  %v1325 = vmax.f32 %v1323, %v1324
  %v1326 = vrot.slane %v1325, 4
  %v1327 = vmax.f32 %v1325, %v1326
  %v1328 = vrot.slane %v1327, 2
  %v1329 = vmax.f32 %v1327, %v1328
  %v1330 = vrot.slane %v1329, 1
  %v1331 = vmax.f32 %v1329, %v1330
  %v1332 = vsel %vm304, %v1258, -inf
  %v1333 = vsel %vm304, %v1259, -inf
  %v1334 = vmax.f32 %v1332, %v1333
  %v1335 = vrot.slane %v1334, 4
  %v1336 = vmax.f32 %v1334, %v1335
  %v1337 = vrot.slane %v1336, 2
  %v1338 = vmax.f32 %v1336, %v1337
  %v1339 = vrot.slane %v1338, 1
  %v1340 = vmax.f32 %v1338, %v1339
  %v1341 = vsel %vm304, %v1260, -inf
  %v1342 = vsel %vm304, %v1261, -inf
  %v1343 = vmax.f32 %v1341, %v1342
  %v1344 = vrot.slane %v1343, 4
  %v1345 = vmax.f32 %v1343, %v1344
  %v1346 = vrot.slane %v1345, 2
  %v1347 = vmax.f32 %v1345, %v1346
  %v1348 = vrot.slane %v1347, 1
  %v1349 = vmax.f32 %v1347, %v1348
  %v1350 = vsel %vm304, %v1262, -inf
  %v1351 = vsel %vm304, %v1263, -inf
  %v1352 = vmax.f32 %v1350, %v1351
  %v1353 = vrot.slane %v1352, 4
  %v1354 = vmax.f32 %v1352, %v1353
  %v1355 = vrot.slane %v1354, 2
  %v1356 = vmax.f32 %v1354, %v1355
  %v1357 = vrot.slane %v1356, 1
  %v1358 = vmax.f32 %v1356, %v1357
  %v1359 = vsel %vm304, %v1264, -inf
  %v1360 = vsel %vm304, %v1265, -inf
  %v1361 = vmax.f32 %v1359, %v1360
  %v1362 = vrot.slane %v1361, 4
  %v1363 = vmax.f32 %v1361, %v1362
  %v1364 = vrot.slane %v1363, 2
  %v1365 = vmax.f32 %v1363, %v1364
  %v1366 = vrot.slane %v1365, 1
  %v1367 = vmax.f32 %v1365, %v1366
  %v1368 = vsel %vm304, %v1266, -inf
  %v1369 = vsel %vm304, %v1267, -inf
  %v1370 = vmax.f32 %v1368, %v1369
  %v1371 = vrot.slane %v1370, 4
  %v1372 = vmax.f32 %v1370, %v1371
  %v1373 = vrot.slane %v1372, 2
  %v1374 = vmax.f32 %v1372, %v1373
  %v1375 = vrot.slane %v1374, 1
  %v1376 = vmax.f32 %v1374, %v1375
  %v1377 = vsel %vm304, %v1268, -inf
  %v1378 = vsel %vm304, %v1269, -inf
  %v1379 = vmax.f32 %v1377, %v1378
  %v1380 = vrot.slane %v1379, 4
  %v1381 = vmax.f32 %v1379, %v1380
  %v1382 = vrot.slane %v1381, 2
  %v1383 = vmax.f32 %v1381, %v1382
  %v1384 = vrot.slane %v1383, 1
  %v1385 = vmax.f32 %v1383, %v1384
  %v1386 = vsel %vm304, %v1270, -inf
  %v1387 = vsel %vm304, %v1271, -inf
  %v1388 = vmax.f32 %v1386, %v1387
  %v1389 = vrot.slane %v1388, 4
  %v1390 = vmax.f32 %v1388, %v1389
  %v1391 = vrot.slane %v1390, 2
  %v1392 = vmax.f32 %v1390, %v1391
  %v1393 = vrot.slane %v1392, 1
  %v1394 = vmax.f32 %v1392, %v1393
  %v1395 = vsel %vm304, %v1272, -inf
  %v1396 = vsel %vm304, %v1273, -inf
  %v1397 = vmax.f32 %v1395, %v1396
  %v1398 = vrot.slane %v1397, 4
  %v1399 = vmax.f32 %v1397, %v1398
  %v1400 = vrot.slane %v1399, 2
  %v1401 = vmax.f32 %v1399, %v1400
  %v1402 = vrot.slane %v1401, 1
  %v1403 = vmax.f32 %v1401, %v1402
  %v1404 = vsel %vm304, %v1274, -inf
  %v1405 = vsel %vm304, %v1275, -inf
  %v1406 = vmax.f32 %v1404, %v1405
  %v1407 = vrot.slane %v1406, 4
  %v1408 = vmax.f32 %v1406, %v1407
  %v1409 = vrot.slane %v1408, 2
  %v1410 = vmax.f32 %v1408, %v1409
  %v1411 = vrot.slane %v1410, 1
  %v1412 = vmax.f32 %v1410, %v1411
  %v1413 = vsel %vm304, %v1276, -inf
  %v1414 = vsel %vm304, %v1277, -inf
  %v1415 = vmax.f32 %v1413, %v1414
  %v1416 = vrot.slane %v1415, 4
  %v1417 = vmax.f32 %v1415, %v1416
  %v1418 = vrot.slane %v1417, 2
  %v1419 = vmax.f32 %v1417, %v1418
  %v1420 = vrot.slane %v1419, 1
  %v1421 = vmax.f32 %v1419, %v1420
  %v1422 = vsub.f32 %v1246, %v1286
  %v1423 = vsub.f32 %v1247, %v1286
  %v1424 = vsub.f32 %v1248, %v1295
  %v1425 = vsub.f32 %v1249, %v1295
  %v1426 = vsub.f32 %v1250, %v1304
  %v1427 = vsub.f32 %v1251, %v1304
  %v1428 = vsub.f32 %v1252, %v1313
  %v1429 = vsub.f32 %v1253, %v1313
  %v1430 = vsub.f32 %v1254, %v1322
  %v1431 = vsub.f32 %v1255, %v1322
  %v1432 = vsub.f32 %v1256, %v1331
  %v1433 = vsub.f32 %v1257, %v1331
  %v1434 = vsub.f32 %v1258, %v1340
  %v1435 = vsub.f32 %v1259, %v1340
  %v1436 = vsub.f32 %v1260, %v1349
  %v1437 = vsub.f32 %v1261, %v1349
  %v1438 = vsub.f32 %v1262, %v1358
  %v1439 = vsub.f32 %v1263, %v1358
  %v1440 = vsub.f32 %v1264, %v1367
  %v1441 = vsub.f32 %v1265, %v1367
  %v1442 = vsub.f32 %v1266, %v1376
  %v1443 = vsub.f32 %v1267, %v1376
  %v1444 = vsub.f32 %v1268, %v1385
  %v1445 = vsub.f32 %v1269, %v1385
  %v1446 = vsub.f32 %v1270, %v1394
  %v1447 = vsub.f32 %v1271, %v1394
  %v1448 = vsub.f32 %v1272, %v1403
  %v1449 = vsub.f32 %v1273, %v1403
  %v1450 = vsub.f32 %v1274, %v1412
  %v1451 = vsub.f32 %v1275, %v1412
  %v1452 = vsub.f32 %v1276, %v1421
  %v1453 = vsub.f32 %v1277, %v1421
  %v1454 = vmul.f32 %v1422, 1.442695
  %v1455 = vpow.pop %v1454
  %v1456 = vmul.f32 %v1423, 1.442695
  %v1457 = vpow.pop %v1456
  %v1458 = vmul.f32 %v1424, 1.442695
  %v1459 = vpow.pop %v1458
  %v1460 = vmul.f32 %v1425, 1.442695
  %v1461 = vpow.pop %v1460
  %v1462 = vmul.f32 %v1426, 1.442695
  %v1463 = vpow.pop %v1462
  %v1464 = vmul.f32 %v1427, 1.442695
  %v1465 = vpow.pop %v1464
  %v1466 = vmul.f32 %v1428, 1.442695
  %v1467 = vpow.pop %v1466
  %v1468 = vmul.f32 %v1429, 1.442695
  %v1469 = vpow.pop %v1468
  %v1470 = vmul.f32 %v1430, 1.442695
  %v1471 = vpow.pop %v1470
  %v1472 = vmul.f32 %v1431, 1.442695
  %v1473 = vpow.pop %v1472
  %v1474 = vmul.f32 %v1432, 1.442695
  %v1475 = vpow.pop %v1474
  %v1476 = vmul.f32 %v1433, 1.442695
  %v1477 = vpow.pop %v1476
  %v1478 = vmul.f32 %v1434, 1.442695
  %v1479 = vpow.pop %v1478
  %v1480 = vmul.f32 %v1435, 1.442695
  %v1481 = vpow.pop %v1480
  %v1482 = vmul.f32 %v1436, 1.442695
  %v1483 = vpow.pop %v1482
  %v1484 = vmul.f32 %v1437, 1.442695
  %v1485 = vpow.pop %v1484
  %v1486 = vmul.f32 %v1438, 1.442695
  %v1487 = vpow.pop %v1486
  %v1488 = vmul.f32 %v1439, 1.442695
  %v1489 = vpow.pop %v1488
  %v1490 = vmul.f32 %v1440, 1.442695
  %v1491 = vpow.pop %v1490
  %v1492 = vmul.f32 %v1441, 1.442695
  %v1493 = vpow.pop %v1492
  %v1494 = vmul.f32 %v1442, 1.442695
  %v1495 = vpow.pop %v1494
  %v1496 = vmul.f32 %v1443, 1.442695
  %v1497 = vpow.pop %v1496
  %v1498 = vmul.f32 %v1444, 1.442695
  %v1499 = vpow.pop %v1498
  %v1500 = vmul.f32 %v1445, 1.442695
  %v1501 = vpow.pop %v1500
  %v1502 = vmul.f32 %v1446, 1.442695
  %v1503 = vpow.pop %v1502
  %v1504 = vmul.f32 %v1447, 1.442695
  %v1505 = vpow.pop %v1504
  %v1506 = vmul.f32 %v1448, 1.442695
  %v1507 = vpow.pop %v1506
  %v1508 = vmul.f32 %v1449, 1.442695
  %v1509 = vpow.pop %v1508
  %v1510 = vmul.f32 %v1450, 1.442695
  %v1511 = vpow.pop %v1510
  %v1512 = vmul.f32 %v1451, 1.442695
  %v1513 = vpow.pop %v1512
  %v1514 = vmul.f32 %v1452, 1.442695
  %v1515 = vpow.pop %v1514
  %v1516 = vmul.f32 %v1453, 1.442695
  %v1517 = vpow.pop %v1516
  %v1518 = vsel %vm304, %v1455, 0.0
  %v1519 = vsel %vm304, %v1457, 0.0
  %v1520 = vadd.f32 %v1518, %v1519
  %v1521 = vrot.slane %v1520, 4
  %v1522 = vadd.f32 %v1520, %v1521
  %v1523 = vrot.slane %v1522, 2
  %v1524 = vadd.f32 %v1522, %v1523
  %v1525 = vrot.slane %v1524, 1
  %v1526 = vadd.f32 %v1524, %v1525
  %v1527 = vsel %vm304, %v1459, 0.0
  %v1528 = vsel %vm304, %v1461, 0.0
  %v1529 = vadd.f32 %v1527, %v1528
  %v1530 = vrot.slane %v1529, 4
  %v1531 = vadd.f32 %v1529, %v1530
  %v1532 = vrot.slane %v1531, 2
  %v1533 = vadd.f32 %v1531, %v1532
  %v1534 = vrot.slane %v1533, 1
  %v1535 = vadd.f32 %v1533, %v1534
  %v1536 = vsel %vm304, %v1463, 0.0
  %v1537 = vsel %vm304, %v1465, 0.0
  %v1538 = vadd.f32 %v1536, %v1537
  %v1539 = vrot.slane %v1538, 4
  %v1540 = vadd.f32 %v1538, %v1539
  %v1541 = vrot.slane %v1540, 2
  %v1542 = vadd.f32 %v1540, %v1541
  %v1543 = vrot.slane %v1542, 1
  %v1544 = vadd.f32 %v1542, %v1543
  %v1545 = vsel %vm304, %v1467, 0.0
  %v1546 = vsel %vm304, %v1469, 0.0
  %v1547 = vadd.f32 %v1545, %v1546
  %v1548 = vrot.slane %v1547, 4
  %v1549 = vadd.f32 %v1547, %v1548
  %v1550 = vrot.slane %v1549, 2
  %v1551 = vadd.f32 %v1549, %v1550
  %v1552 = vrot.slane %v1551, 1
  %v1553 = vadd.f32 %v1551, %v1552
  %v1554 = vsel %vm304, %v1471, 0.0
  %v1555 = vsel %vm304, %v1473, 0.0
  %v1556 = vadd.f32 %v1554, %v1555
  %v1557 = vrot.slane %v1556, 4
  %v1558 = vadd.f32 %v1556, %v1557
  %v1559 = vrot.slane %v1558, 2
  %v1560 = vadd.f32 %v1558, %v1559
  %v1561 = vrot.slane %v1560, 1
  %v1562 = vadd.f32 %v1560, %v1561
  %v1563 = vsel %vm304, %v1475, 0.0
  %v1564 = vsel %vm304, %v1477, 0.0
  %v1565 = vadd.f32 %v1563, %v1564
  %v1566 = vrot.slane %v1565, 4
  %v1567 = vadd.f32 %v1565, %v1566
  %v1568 = vrot.slane %v1567, 2
  %v1569 = vadd.f32 %v1567, %v1568
  %v1570 = vrot.slane %v1569, 1
  %v1571 = vadd.f32 %v1569, %v1570
  %v1572 = vsel %vm304, %v1479, 0.0
  %v1573 = vsel %vm304, %v1481, 0.0
  %v1574 = vadd.f32 %v1572, %v1573
  %v1575 = vrot.slane %v1574, 4
  %v1576 = vadd.f32 %v1574, %v1575
  %v1577 = vrot.slane %v1576, 2
  %v1578 = vadd.f32 %v1576, %v1577
  %v1579 = vrot.slane %v1578, 1
  %v1580 = vadd.f32 %v1578, %v1579
  %v1581 = vsel %vm304, %v1483, 0.0
  %v1582 = vsel %vm304, %v1485, 0.0
  %v1583 = vadd.f32 %v1581, %v1582
  %v1584 = vrot.slane %v1583, 4
  %v1585 = vadd.f32 %v1583, %v1584
  %v1586 = vrot.slane %v1585, 2
  %v1587 = vadd.f32 %v1585, %v1586
  %v1588 = vrot.slane %v1587, 1
  %v1589 = vadd.f32 %v1587, %v1588
  %v1590 = vsel %vm304, %v1487, 0.0
  %v1591 = vsel %vm304, %v1489, 0.0
  %v1592 = vadd.f32 %v1590, %v1591
  %v1593 = vrot.slane %v1592, 4
  %v1594 = vadd.f32 %v1592, %v1593
  %v1595 = vrot.slane %v1594, 2
  %v1596 = vadd.f32 %v1594, %v1595
  %v1597 = vrot.slane %v1596, 1
  %v1598 = vadd.f32 %v1596, %v1597
  %v1599 = vsel %vm304, %v1491, 0.0
  %v1600 = vsel %vm304, %v1493, 0.0
  %v1601 = vadd.f32 %v1599, %v1600
  %v1602 = vrot.slane %v1601, 4
  %v1603 = vadd.f32 %v1601, %v1602
  %v1604 = vrot.slane %v1603, 2
  %v1605 = vadd.f32 %v1603, %v1604
  %v1606 = vrot.slane %v1605, 1
  %v1607 = vadd.f32 %v1605, %v1606
  %v1608 = vsel %vm304, %v1495, 0.0
  %v1609 = vsel %vm304, %v1497, 0.0
  %v1610 = vadd.f32 %v1608, %v1609
  %v1611 = vrot.slane %v1610, 4
  %v1612 = vadd.f32 %v1610, %v1611
  %v1613 = vrot.slane %v1612, 2
  %v1614 = vadd.f32 %v1612, %v1613
  %v1615 = vrot.slane %v1614, 1
  %v1616 = vadd.f32 %v1614, %v1615
  %v1617 = vsel %vm304, %v1499, 0.0
  %v1618 = vsel %vm304, %v1501, 0.0
  %v1619 = vadd.f32 %v1617, %v1618
  %v1620 = vrot.slane %v1619, 4
  %v1621 = vadd.f32 %v1619, %v1620
  %v1622 = vrot.slane %v1621, 2
  %v1623 = vadd.f32 %v1621, %v1622
  %v1624 = vrot.slane %v1623, 1
  %v1625 = vadd.f32 %v1623, %v1624
  %v1626 = vsel %vm304, %v1503, 0.0
  %v1627 = vsel %vm304, %v1505, 0.0
  %v1628 = vadd.f32 %v1626, %v1627
  %v1629 = vrot.slane %v1628, 4
  %v1630 = vadd.f32 %v1628, %v1629
  %v1631 = vrot.slane %v1630, 2
  %v1632 = vadd.f32 %v1630, %v1631
  %v1633 = vrot.slane %v1632, 1
  %v1634 = vadd.f32 %v1632, %v1633
  %v1635 = vsel %vm304, %v1507, 0.0
  %v1636 = vsel %vm304, %v1509, 0.0
  %v1637 = vadd.f32 %v1635, %v1636
  %v1638 = vrot.slane %v1637, 4
  %v1639 = vadd.f32 %v1637, %v1638
  %v1640 = vrot.slane %v1639, 2
  %v1641 = vadd.f32 %v1639, %v1640
  %v1642 = vrot.slane %v1641, 1
  %v1643 = vadd.f32 %v1641, %v1642
  %v1644 = vsel %vm304, %v1511, 0.0
  %v1645 = vsel %vm304, %v1513, 0.0
  %v1646 = vadd.f32 %v1644, %v1645
  %v1647 = vrot.slane %v1646, 4
  %v1648 = vadd.f32 %v1646, %v1647
  %v1649 = vrot.slane %v1648, 2
  %v1650 = vadd.f32 %v1648, %v1649
  %v1651 = vrot.slane %v1650, 1
  %v1652 = vadd.f32 %v1650, %v1651
  %v1653 = vsel %vm304, %v1515, 0.0
  %v1654 = vsel %vm304, %v1517, 0.0
  %v1655 = vadd.f32 %v1653, %v1654
  %v1656 = vrot.slane %v1655, 4
  %v1657 = vadd.f32 %v1655, %v1656
  %v1658 = vrot.slane %v1657, 2
  %v1659 = vadd.f32 %v1657, %v1658
  %v1660 = vrot.slane %v1659, 1
  %v1661 = vadd.f32 %v1659, %v1660
  %v1662 = vmul.f32 %v1455, %v445
  %v1663 = vmul.f32 %v1457, %v448
  %v1664 = vmul.f32 %v1459, %v445
  %v1665 = vmul.f32 %v1461, %v448
  %v1666 = vmul.f32 %v1463, %v445
  %v1667 = vmul.f32 %v1465, %v448
  %v1668 = vmul.f32 %v1467, %v445
  %v1669 = vmul.f32 %v1469, %v448
  %v1670 = vmul.f32 %v1471, %v445
  %v1671 = vmul.f32 %v1473, %v448
  %v1672 = vmul.f32 %v1475, %v445
  %v1673 = vmul.f32 %v1477, %v448
  %v1674 = vmul.f32 %v1479, %v445
  %v1675 = vmul.f32 %v1481, %v448
  %v1676 = vmul.f32 %v1483, %v445
  %v1677 = vmul.f32 %v1485, %v448
  %v1678 = vmul.f32 %v1487, %v445
  %v1679 = vmul.f32 %v1489, %v448
  %v1680 = vmul.f32 %v1491, %v445
  %v1681 = vmul.f32 %v1493, %v448
  %v1682 = vmul.f32 %v1495, %v445
  %v1683 = vmul.f32 %v1497, %v448
  %v1684 = vmul.f32 %v1499, %v445
  %v1685 = vmul.f32 %v1501, %v448
  %v1686 = vmul.f32 %v1503, %v445
  %v1687 = vmul.f32 %v1505, %v448
  %v1688 = vmul.f32 %v1507, %v445
  %v1689 = vmul.f32 %v1509, %v448
  %v1690 = vmul.f32 %v1511, %v445
  %v1691 = vmul.f32 %v1513, %v448
  %v1692 = vmul.f32 %v1515, %v445
  %v1693 = vmul.f32 %v1517, %v448
  %v1694 = vsel %vm304, %v1662, 0.0
  %v1695 = vsel %vm304, %v1663, 0.0
  %v1696 = vadd.f32 %v1694, %v1695
  %v1697 = vrot.slane %v1696, 4
  %v1698 = vadd.f32 %v1696, %v1697
  %v1699 = vrot.slane %v1698, 2
  %v1700 = vadd.f32 %v1698, %v1699
  %v1701 = vrot.slane %v1700, 1
  %v1702 = vadd.f32 %v1700, %v1701
  %v1703 = vsel %vm304, %v1664, 0.0
  %v1704 = vsel %vm304, %v1665, 0.0
  %v1705 = vadd.f32 %v1703, %v1704
  %v1706 = vrot.slane %v1705, 4
  %v1707 = vadd.f32 %v1705, %v1706
  %v1708 = vrot.slane %v1707, 2
  %v1709 = vadd.f32 %v1707, %v1708
  %v1710 = vrot.slane %v1709, 1
  %v1711 = vadd.f32 %v1709, %v1710
  %v1712 = vsel %vm304, %v1666, 0.0
  %v1713 = vsel %vm304, %v1667, 0.0
  %v1714 = vadd.f32 %v1712, %v1713
  %v1715 = vrot.slane %v1714, 4
  %v1716 = vadd.f32 %v1714, %v1715
  %v1717 = vrot.slane %v1716, 2
  %v1718 = vadd.f32 %v1716, %v1717
  %v1719 = vrot.slane %v1718, 1
  %v1720 = vadd.f32 %v1718, %v1719
  %v1721 = vsel %vm304, %v1668, 0.0
  %v1722 = vsel %vm304, %v1669, 0.0
  %v1723 = vadd.f32 %v1721, %v1722
  %v1724 = vrot.slane %v1723, 4
  %v1725 = vadd.f32 %v1723, %v1724
  %v1726 = vrot.slane %v1725, 2
  %v1727 = vadd.f32 %v1725, %v1726
  %v1728 = vrot.slane %v1727, 1
  %v1729 = vadd.f32 %v1727, %v1728
  %v1730 = vsel %vm304, %v1670, 0.0
  %v1731 = vsel %vm304, %v1671, 0.0
  %v1732 = vadd.f32 %v1730, %v1731
  %v1733 = vrot.slane %v1732, 4
  %v1734 = vadd.f32 %v1732, %v1733
  %v1735 = vrot.slane %v1734, 2
  %v1736 = vadd.f32 %v1734, %v1735
  %v1737 = vrot.slane %v1736, 1
  %v1738 = vadd.f32 %v1736, %v1737
  %v1739 = vsel %vm304, %v1672, 0.0
  %v1740 = vsel %vm304, %v1673, 0.0
  %v1741 = vadd.f32 %v1739, %v1740
  %v1742 = vrot.slane %v1741, 4
  %v1743 = vadd.f32 %v1741, %v1742
  %v1744 = vrot.slane %v1743, 2
  %v1745 = vadd.f32 %v1743, %v1744
  %v1746 = vrot.slane %v1745, 1
  %v1747 = vadd.f32 %v1745, %v1746
  %v1748 = vsel %vm304, %v1674, 0.0
  %v1749 = vsel %vm304, %v1675, 0.0
  %v1750 = vadd.f32 %v1748, %v1749
  %v1751 = vrot.slane %v1750, 4
  %v1752 = vadd.f32 %v1750, %v1751
  %v1753 = vrot.slane %v1752, 2
  %v1754 = vadd.f32 %v1752, %v1753
  %v1755 = vrot.slane %v1754, 1
  %v1756 = vadd.f32 %v1754, %v1755
  %v1757 = vsel %vm304, %v1676, 0.0
  %v1758 = vsel %vm304, %v1677, 0.0
  %v1759 = vadd.f32 %v1757, %v1758
  %v1760 = vrot.slane %v1759, 4
  %v1761 = vadd.f32 %v1759, %v1760
  %v1762 = vrot.slane %v1761, 2
  %v1763 = vadd.f32 %v1761, %v1762
  %v1764 = vrot.slane %v1763, 1
  %v1765 = vadd.f32 %v1763, %v1764
  %v1766 = vsel %vm304, %v1678, 0.0
  %v1767 = vsel %vm304, %v1679, 0.0
  %v1768 = vadd.f32 %v1766, %v1767
  %v1769 = vrot.slane %v1768, 4
  %v1770 = vadd.f32 %v1768, %v1769
  %v1771 = vrot.slane %v1770, 2
  %v1772 = vadd.f32 %v1770, %v1771
  %v1773 = vrot.slane %v1772, 1
  %v1774 = vadd.f32 %v1772, %v1773
  %v1775 = vsel %vm304, %v1680, 0.0
  %v1776 = vsel %vm304, %v1681, 0.0
  %v1777 = vadd.f32 %v1775, %v1776
  %v1778 = vrot.slane %v1777, 4
  %v1779 = vadd.f32 %v1777, %v1778
  %v1780 = vrot.slane %v1779, 2
  %v1781 = vadd.f32 %v1779, %v1780
  %v1782 = vrot.slane %v1781, 1
  %v1783 = vadd.f32 %v1781, %v1782
  %v1784 = vsel %vm304, %v1682, 0.0
  %v1785 = vsel %vm304, %v1683, 0.0
  %v1786 = vadd.f32 %v1784, %v1785
  %v1787 = vrot.slane %v1786, 4
  %v1788 = vadd.f32 %v1786, %v1787
  %v1789 = vrot.slane %v1788, 2
  %v1790 = vadd.f32 %v1788, %v1789
  %v1791 = vrot.slane %v1790, 1
  %v1792 = vadd.f32 %v1790, %v1791
  %v1793 = vsel %vm304, %v1684, 0.0
  %v1794 = vsel %vm304, %v1685, 0.0
  %v1795 = vadd.f32 %v1793, %v1794
  %v1796 = vrot.slane %v1795, 4
  %v1797 = vadd.f32 %v1795, %v1796
  %v1798 = vrot.slane %v1797, 2
  %v1799 = vadd.f32 %v1797, %v1798
  %v1800 = vrot.slane %v1799, 1
  %v1801 = vadd.f32 %v1799, %v1800
  %v1802 = vsel %vm304, %v1686, 0.0
  %v1803 = vsel %vm304, %v1687, 0.0
  %v1804 = vadd.f32 %v1802, %v1803
  %v1805 = vrot.slane %v1804, 4
  %v1806 = vadd.f32 %v1804, %v1805
  %v1807 = vrot.slane %v1806, 2
  %v1808 = vadd.f32 %v1806, %v1807
  %v1809 = vrot.slane %v1808, 1
  %v1810 = vadd.f32 %v1808, %v1809
  %v1811 = vsel %vm304, %v1688, 0.0
  %v1812 = vsel %vm304, %v1689, 0.0
  %v1813 = vadd.f32 %v1811, %v1812
  %v1814 = vrot.slane %v1813, 4
  %v1815 = vadd.f32 %v1813, %v1814
  %v1816 = vrot.slane %v1815, 2
  %v1817 = vadd.f32 %v1815, %v1816
  %v1818 = vrot.slane %v1817, 1
  %v1819 = vadd.f32 %v1817, %v1818
  %v1820 = vsel %vm304, %v1690, 0.0
  %v1821 = vsel %vm304, %v1691, 0.0
  %v1822 = vadd.f32 %v1820, %v1821
  %v1823 = vrot.slane %v1822, 4
  %v1824 = vadd.f32 %v1822, %v1823
  %v1825 = vrot.slane %v1824, 2
  %v1826 = vadd.f32 %v1824, %v1825
  %v1827 = vrot.slane %v1826, 1
  %v1828 = vadd.f32 %v1826, %v1827
  %v1829 = vsel %vm304, %v1692, 0.0
  %v1830 = vsel %vm304, %v1693, 0.0
  %v1831 = vadd.f32 %v1829, %v1830
  %v1832 = vrot.slane %v1831, 4
  %v1833 = vadd.f32 %v1831, %v1832
  %v1834 = vrot.slane %v1833, 2
  %v1835 = vadd.f32 %v1833, %v1834
  %v1836 = vrot.slane %v1835, 1
  %v1837 = vadd.f32 %v1835, %v1836
  %v1838 = vrcp.pop %v1526
  %v1839 = vrcp.pop %v1535
  %v1840 = vrcp.pop %v1544
  %v1841 = vrcp.pop %v1553
  %v1842 = vrcp.pop %v1562
  %v1843 = vrcp.pop %v1571
  %v1844 = vrcp.pop %v1580
  %v1845 = vrcp.pop %v1589
  %v1846 = vrcp.pop %v1598
  %v1847 = vrcp.pop %v1607
  %v1848 = vrcp.pop %v1616
  %v1849 = vrcp.pop %v1625
  %v1850 = vrcp.pop %v1634
  %v1851 = vrcp.pop %v1643
  %v1852 = vrcp.pop %v1652
  %v1853 = vrcp.pop %v1661
  %v1854 = vmul.f32 %v1702, %v1838
  %v1855 = vmul.f32 %v1711, %v1839
  %v1856 = vmul.f32 %v1720, %v1840
  %v1857 = vmul.f32 %v1729, %v1841
  %v1858 = vmul.f32 %v1738, %v1842
  %v1859 = vmul.f32 %v1747, %v1843
  %v1860 = vmul.f32 %v1756, %v1844
  %v1861 = vmul.f32 %v1765, %v1845
  %v1862 = vmul.f32 %v1774, %v1846
  %v1863 = vmul.f32 %v1783, %v1847
  %v1864 = vmul.f32 %v1792, %v1848
  %v1865 = vmul.f32 %v1801, %v1849
  %v1866 = vmul.f32 %v1810, %v1850
  %v1867 = vmul.f32 %v1819, %v1851
  %v1868 = vmul.f32 %v1828, %v1852
  %v1869 = vmul.f32 %v1837, %v1853
  %v1872 = vrot.slane %v359, 1
  %v1873 = vrot.slane %v359, 2
  %v1874 = vrot.slane %v359, 3
  %v1875 = vrot.slane %v359, 4
  %v1876 = vrot.slane %v359, 5
  %v1877 = vrot.slane %v359, 6
  %v1878 = vrot.slane %v359, 7
  %v1879 = vrot.slane %v362, 1
  %v1880 = vrot.slane %v362, 2
  %v1881 = vrot.slane %v362, 3
  %v1882 = vrot.slane %v362, 4
  %v1883 = vrot.slane %v362, 5
  %v1884 = vrot.slane %v362, 6
  %v1885 = vrot.slane %v362, 7
  %v1886 = vperm.slane %v359, 0
  %v1887 = vperm.slane %v1872, 0
  %v1888 = vperm.slane %v1873, 0
  %v1889 = vperm.slane %v1874, 0
  %v1890 = vperm.slane %v1875, 0
  %v1891 = vperm.slane %v1876, 0
  %v1892 = vperm.slane %v1877, 0
  %v1893 = vperm.slane %v1878, 0
  %v1894 = vperm.slane %v362, 0
  %v1895 = vperm.slane %v1879, 0
  %v1896 = vperm.slane %v1880, 0
  %v1897 = vperm.slane %v1881, 0
  %v1898 = vperm.slane %v1882, 0
  %v1899 = vperm.slane %v1883, 0
  %v1900 = vperm.slane %v1884, 0
  %v1901 = vperm.slane %v1885, 0
  %v1918 = vmul.f32 %v1886, %v405
  %v1919 = vmul.f32 %v1886, %v408
  %v1920 = vmul.f32 %v1887, %v405
  %v1921 = vmul.f32 %v1887, %v408
  %v1922 = vmul.f32 %v1888, %v405
  %v1923 = vmul.f32 %v1888, %v408
  %v1924 = vmul.f32 %v1889, %v405
  %v1925 = vmul.f32 %v1889, %v408
  %v1926 = vmul.f32 %v1890, %v405
  %v1927 = vmul.f32 %v1890, %v408
  %v1928 = vmul.f32 %v1891, %v405
  %v1929 = vmul.f32 %v1891, %v408
  %v1930 = vmul.f32 %v1892, %v405
  %v1931 = vmul.f32 %v1892, %v408
  %v1932 = vmul.f32 %v1893, %v405
  %v1933 = vmul.f32 %v1893, %v408
  %v1934 = vmul.f32 %v1894, %v405
  %v1935 = vmul.f32 %v1894, %v408
  %v1936 = vmul.f32 %v1895, %v405
  %v1937 = vmul.f32 %v1895, %v408
  %v1938 = vmul.f32 %v1896, %v405
  %v1939 = vmul.f32 %v1896, %v408
  %v1940 = vmul.f32 %v1897, %v405
  %v1941 = vmul.f32 %v1897, %v408
  %v1942 = vmul.f32 %v1898, %v405
  %v1943 = vmul.f32 %v1898, %v408
  %v1944 = vmul.f32 %v1899, %v405
  %v1945 = vmul.f32 %v1899, %v408
  %v1946 = vmul.f32 %v1900, %v405
  %v1947 = vmul.f32 %v1900, %v408
  %v1948 = vmul.f32 %v1901, %v405
  %v1949 = vmul.f32 %v1901, %v408
  %v1950 = vadd.f32 %v1918, %v89
  %v1951 = vadd.f32 %v1919, %v95
  %v1952 = vadd.f32 %v1920, %v102
  %v1953 = vadd.f32 %v1921, %v108
  %v1954 = vadd.f32 %v1922, %v115
  %v1955 = vadd.f32 %v1923, %v121
  %v1956 = vadd.f32 %v1924, %v128
  %v1957 = vadd.f32 %v1925, %v134
  %v1958 = vadd.f32 %v1926, %v141
  %v1959 = vadd.f32 %v1927, %v147
  %v1960 = vadd.f32 %v1928, %v154
  %v1961 = vadd.f32 %v1929, %v160
  %v1962 = vadd.f32 %v1930, %v167
  %v1963 = vadd.f32 %v1931, %v173
  %v1964 = vadd.f32 %v1932, %v180
  %v1965 = vadd.f32 %v1933, %v186
  %v1966 = vadd.f32 %v1934, %v193
  %v1967 = vadd.f32 %v1935, %v199
  %v1968 = vadd.f32 %v1936, %v206
  %v1969 = vadd.f32 %v1937, %v212
  %v1970 = vadd.f32 %v1938, %v219
  %v1971 = vadd.f32 %v1939, %v225
  %v1972 = vadd.f32 %v1940, %v232
  %v1973 = vadd.f32 %v1941, %v238
  %v1974 = vadd.f32 %v1942, %v245
  %v1975 = vadd.f32 %v1943, %v251
  %v1976 = vadd.f32 %v1944, %v258
  %v1977 = vadd.f32 %v1945, %v264
  %v1978 = vadd.f32 %v1946, %v271
  %v1979 = vadd.f32 %v1947, %v277
  %v1980 = vadd.f32 %v1948, %v284
  %v1981 = vadd.f32 %v1949, %v290
  %v1982 = vsel %vm304, %v1950, -inf
  %v1983 = vsel %vm304, %v1951, -inf
  %v1984 = vmax.f32 %v1982, %v1983
  %v1985 = vrot.slane %v1984, 4
  %v1986 = vmax.f32 %v1984, %v1985
  %v1987 = vrot.slane %v1986, 2
  %v1988 = vmax.f32 %v1986, %v1987
  %v1989 = vrot.slane %v1988, 1
  %v1990 = vmax.f32 %v1988, %v1989
  %v1991 = vsel %vm304, %v1952, -inf
  %v1992 = vsel %vm304, %v1953, -inf
  %v1993 = vmax.f32 %v1991, %v1992
  %v1994 = vrot.slane %v1993, 4
  %v1995 = vmax.f32 %v1993, %v1994
  %v1996 = vrot.slane %v1995, 2
  %v1997 = vmax.f32 %v1995, %v1996
  %v1998 = vrot.slane %v1997, 1
  %v1999 = vmax.f32 %v1997, %v1998
  %v2000 = vsel %vm304, %v1954, -inf
  %v2001 = vsel %vm304, %v1955, -inf
  %v2002 = vmax.f32 %v2000, %v2001
  %v2003 = vrot.slane %v2002, 4
  %v2004 = vmax.f32 %v2002, %v2003
  %v2005 = vrot.slane %v2004, 2
  %v2006 = vmax.f32 %v2004, %v2005
  %v2007 = vrot.slane %v2006, 1
  %v2008 = vmax.f32 %v2006, %v2007
  %v2009 = vsel %vm304, %v1956, -inf
  %v2010 = vsel %vm304, %v1957, -inf
  %v2011 = vmax.f32 %v2009, %v2010
  %v2012 = vrot.slane %v2011, 4
  %v2013 = vmax.f32 %v2011, %v2012
  %v2014 = vrot.slane %v2013, 2
  %v2015 = vmax.f32 %v2013, %v2014
  %v2016 = vrot.slane %v2015, 1
  %v2017 = vmax.f32 %v2015, %v2016
  %v2018 = vsel %vm304, %v1958, -inf
  %v2019 = vsel %vm304, %v1959, -inf
  %v2020 = vmax.f32 %v2018, %v2019
  %v2021 = vrot.slane %v2020, 4
  %v2022 = vmax.f32 %v2020, %v2021
  %v2023 = vrot.slane %v2022, 2
  %v2024 = vmax.f32 %v2022, %v2023
  %v2025 = vrot.slane %v2024, 1
  %v2026 = vmax.f32 %v2024, %v2025
  %v2027 = vsel %vm304, %v1960, -inf
  %v2028 = vsel %vm304, %v1961, -inf
  %v2029 = vmax.f32 %v2027, %v2028
  %v2030 = vrot.slane %v2029, 4
  %v2031 = vmax.f32 %v2029, %v2030
  %v2032 = vrot.slane %v2031, 2
  %v2033 = vmax.f32 %v2031, %v2032
  %v2034 = vrot.slane %v2033, 1
  %v2035 = vmax.f32 %v2033, %v2034
  %v2036 = vsel %vm304, %v1962, -inf
  %v2037 = vsel %vm304, %v1963, -inf
  %v2038 = vmax.f32 %v2036, %v2037
  %v2039 = vrot.slane %v2038, 4
  %v2040 = vmax.f32 %v2038, %v2039
  %v2041 = vrot.slane %v2040, 2
  %v2042 = vmax.f32 %v2040, %v2041
  %v2043 = vrot.slane %v2042, 1
  %v2044 = vmax.f32 %v2042, %v2043
  %v2045 = vsel %vm304, %v1964, -inf
  %v2046 = vsel %vm304, %v1965, -inf
  %v2047 = vmax.f32 %v2045, %v2046
  %v2048 = vrot.slane %v2047, 4
  %v2049 = vmax.f32 %v2047, %v2048
  %v2050 = vrot.slane %v2049, 2
  %v2051 = vmax.f32 %v2049, %v2050
  %v2052 = vrot.slane %v2051, 1
  %v2053 = vmax.f32 %v2051, %v2052
  %v2054 = vsel %vm304, %v1966, -inf
  %v2055 = vsel %vm304, %v1967, -inf
  %v2056 = vmax.f32 %v2054, %v2055
  %v2057 = vrot.slane %v2056, 4
  %v2058 = vmax.f32 %v2056, %v2057
  %v2059 = vrot.slane %v2058, 2
  %v2060 = vmax.f32 %v2058, %v2059
  %v2061 = vrot.slane %v2060, 1
  %v2062 = vmax.f32 %v2060, %v2061
  %v2063 = vsel %vm304, %v1968, -inf
  %v2064 = vsel %vm304, %v1969, -inf
  %v2065 = vmax.f32 %v2063, %v2064
  %v2066 = vrot.slane %v2065, 4
  %v2067 = vmax.f32 %v2065, %v2066
  %v2068 = vrot.slane %v2067, 2
  %v2069 = vmax.f32 %v2067, %v2068
  %v2070 = vrot.slane %v2069, 1
  %v2071 = vmax.f32 %v2069, %v2070
  %v2072 = vsel %vm304, %v1970, -inf
  %v2073 = vsel %vm304, %v1971, -inf
  %v2074 = vmax.f32 %v2072, %v2073
  %v2075 = vrot.slane %v2074, 4
  %v2076 = vmax.f32 %v2074, %v2075
  %v2077 = vrot.slane %v2076, 2
  %v2078 = vmax.f32 %v2076, %v2077
  %v2079 = vrot.slane %v2078, 1
  %v2080 = vmax.f32 %v2078, %v2079
  %v2081 = vsel %vm304, %v1972, -inf
  %v2082 = vsel %vm304, %v1973, -inf
  %v2083 = vmax.f32 %v2081, %v2082
  %v2084 = vrot.slane %v2083, 4
  %v2085 = vmax.f32 %v2083, %v2084
  %v2086 = vrot.slane %v2085, 2
  %v2087 = vmax.f32 %v2085, %v2086
  %v2088 = vrot.slane %v2087, 1
  %v2089 = vmax.f32 %v2087, %v2088
  %v2090 = vsel %vm304, %v1974, -inf
  %v2091 = vsel %vm304, %v1975, -inf
  %v2092 = vmax.f32 %v2090, %v2091
  %v2093 = vrot.slane %v2092, 4
  %v2094 = vmax.f32 %v2092, %v2093
  %v2095 = vrot.slane %v2094, 2
  %v2096 = vmax.f32 %v2094, %v2095
  %v2097 = vrot.slane %v2096, 1
  %v2098 = vmax.f32 %v2096, %v2097
  %v2099 = vsel %vm304, %v1976, -inf
  %v2100 = vsel %vm304, %v1977, -inf
  %v2101 = vmax.f32 %v2099, %v2100
  %v2102 = vrot.slane %v2101, 4
  %v2103 = vmax.f32 %v2101, %v2102
  %v2104 = vrot.slane %v2103, 2
  %v2105 = vmax.f32 %v2103, %v2104
  %v2106 = vrot.slane %v2105, 1
  %v2107 = vmax.f32 %v2105, %v2106
  %v2108 = vsel %vm304, %v1978, -inf
  %v2109 = vsel %vm304, %v1979, -inf
  %v2110 = vmax.f32 %v2108, %v2109
  %v2111 = vrot.slane %v2110, 4
  %v2112 = vmax.f32 %v2110, %v2111
  %v2113 = vrot.slane %v2112, 2
  %v2114 = vmax.f32 %v2112, %v2113
  %v2115 = vrot.slane %v2114, 1
  %v2116 = vmax.f32 %v2114, %v2115
  %v2117 = vsel %vm304, %v1980, -inf
  %v2118 = vsel %vm304, %v1981, -inf
  %v2119 = vmax.f32 %v2117, %v2118
  %v2120 = vrot.slane %v2119, 4
  %v2121 = vmax.f32 %v2119, %v2120
  %v2122 = vrot.slane %v2121, 2
  %v2123 = vmax.f32 %v2121, %v2122
  %v2124 = vrot.slane %v2123, 1
  %v2125 = vmax.f32 %v2123, %v2124
  %v2126 = vsub.f32 %v1950, %v1990
  %v2127 = vsub.f32 %v1951, %v1990
  %v2128 = vsub.f32 %v1952, %v1999
  %v2129 = vsub.f32 %v1953, %v1999
  %v2130 = vsub.f32 %v1954, %v2008
  %v2131 = vsub.f32 %v1955, %v2008
  %v2132 = vsub.f32 %v1956, %v2017
  %v2133 = vsub.f32 %v1957, %v2017
  %v2134 = vsub.f32 %v1958, %v2026
  %v2135 = vsub.f32 %v1959, %v2026
  %v2136 = vsub.f32 %v1960, %v2035
  %v2137 = vsub.f32 %v1961, %v2035
  %v2138 = vsub.f32 %v1962, %v2044
  %v2139 = vsub.f32 %v1963, %v2044
  %v2140 = vsub.f32 %v1964, %v2053
  %v2141 = vsub.f32 %v1965, %v2053
  %v2142 = vsub.f32 %v1966, %v2062
  %v2143 = vsub.f32 %v1967, %v2062
  %v2144 = vsub.f32 %v1968, %v2071
  %v2145 = vsub.f32 %v1969, %v2071
  %v2146 = vsub.f32 %v1970, %v2080
  %v2147 = vsub.f32 %v1971, %v2080
  %v2148 = vsub.f32 %v1972, %v2089
  %v2149 = vsub.f32 %v1973, %v2089
  %v2150 = vsub.f32 %v1974, %v2098
  %v2151 = vsub.f32 %v1975, %v2098
  %v2152 = vsub.f32 %v1976, %v2107
  %v2153 = vsub.f32 %v1977, %v2107
  %v2154 = vsub.f32 %v1978, %v2116
  %v2155 = vsub.f32 %v1979, %v2116
  %v2156 = vsub.f32 %v1980, %v2125
  %v2157 = vsub.f32 %v1981, %v2125
  %v2158 = vmul.f32 %v2126, 1.442695
  %v2159 = vpow.pop %v2158
  %v2160 = vmul.f32 %v2127, 1.442695
  %v2161 = vpow.pop %v2160
  %v2162 = vmul.f32 %v2128, 1.442695
  %v2163 = vpow.pop %v2162
  %v2164 = vmul.f32 %v2129, 1.442695
  %v2165 = vpow.pop %v2164
  %v2166 = vmul.f32 %v2130, 1.442695
  %v2167 = vpow.pop %v2166
  %v2168 = vmul.f32 %v2131, 1.442695
  %v2169 = vpow.pop %v2168
  %v2170 = vmul.f32 %v2132, 1.442695
  %v2171 = vpow.pop %v2170
  %v2172 = vmul.f32 %v2133, 1.442695
  %v2173 = vpow.pop %v2172
  %v2174 = vmul.f32 %v2134, 1.442695
  %v2175 = vpow.pop %v2174
  %v2176 = vmul.f32 %v2135, 1.442695
  %v2177 = vpow.pop %v2176
  %v2178 = vmul.f32 %v2136, 1.442695
  %v2179 = vpow.pop %v2178
  %v2180 = vmul.f32 %v2137, 1.442695
  %v2181 = vpow.pop %v2180
  %v2182 = vmul.f32 %v2138, 1.442695
  %v2183 = vpow.pop %v2182
  %v2184 = vmul.f32 %v2139, 1.442695
  %v2185 = vpow.pop %v2184
  %v2186 = vmul.f32 %v2140, 1.442695
  %v2187 = vpow.pop %v2186
  %v2188 = vmul.f32 %v2141, 1.442695
  %v2189 = vpow.pop %v2188
  %v2190 = vmul.f32 %v2142, 1.442695
  %v2191 = vpow.pop %v2190
  %v2192 = vmul.f32 %v2143, 1.442695
  %v2193 = vpow.pop %v2192
  %v2194 = vmul.f32 %v2144, 1.442695
  %v2195 = vpow.pop %v2194
  %v2196 = vmul.f32 %v2145, 1.442695
  %v2197 = vpow.pop %v2196
  %v2198 = vmul.f32 %v2146, 1.442695
  %v2199 = vpow.pop %v2198
  %v2200 = vmul.f32 %v2147, 1.442695
  %v2201 = vpow.pop %v2200
  %v2202 = vmul.f32 %v2148, 1.442695
  %v2203 = vpow.pop %v2202
  %v2204 = vmul.f32 %v2149, 1.442695
  %v2205 = vpow.pop %v2204
  %v2206 = vmul.f32 %v2150, 1.442695
  %v2207 = vpow.pop %v2206
  %v2208 = vmul.f32 %v2151, 1.442695
  %v2209 = vpow.pop %v2208
  %v2210 = vmul.f32 %v2152, 1.442695
  %v2211 = vpow.pop %v2210
  %v2212 = vmul.f32 %v2153, 1.442695
  %v2213 = vpow.pop %v2212
  %v2214 = vmul.f32 %v2154, 1.442695
  %v2215 = vpow.pop %v2214
  %v2216 = vmul.f32 %v2155, 1.442695
  %v2217 = vpow.pop %v2216
  %v2218 = vmul.f32 %v2156, 1.442695
  %v2219 = vpow.pop %v2218
  %v2220 = vmul.f32 %v2157, 1.442695
  %v2221 = vpow.pop %v2220
  %v2222 = vsel %vm304, %v2159, 0.0
  %v2223 = vsel %vm304, %v2161, 0.0
  %v2224 = vadd.f32 %v2222, %v2223
  %v2225 = vrot.slane %v2224, 4
  %v2226 = vadd.f32 %v2224, %v2225
  %v2227 = vrot.slane %v2226, 2
  %v2228 = vadd.f32 %v2226, %v2227
  %v2229 = vrot.slane %v2228, 1
  %v2230 = vadd.f32 %v2228, %v2229
  %v2231 = vsel %vm304, %v2163, 0.0
  %v2232 = vsel %vm304, %v2165, 0.0
  %v2233 = vadd.f32 %v2231, %v2232
  %v2234 = vrot.slane %v2233, 4
  %v2235 = vadd.f32 %v2233, %v2234
  %v2236 = vrot.slane %v2235, 2
  %v2237 = vadd.f32 %v2235, %v2236
  %v2238 = vrot.slane %v2237, 1
  %v2239 = vadd.f32 %v2237, %v2238
  %v2240 = vsel %vm304, %v2167, 0.0
  %v2241 = vsel %vm304, %v2169, 0.0
  %v2242 = vadd.f32 %v2240, %v2241
  %v2243 = vrot.slane %v2242, 4
  %v2244 = vadd.f32 %v2242, %v2243
  %v2245 = vrot.slane %v2244, 2
  %v2246 = vadd.f32 %v2244, %v2245
  %v2247 = vrot.slane %v2246, 1
  %v2248 = vadd.f32 %v2246, %v2247
  %v2249 = vsel %vm304, %v2171, 0.0
  %v2250 = vsel %vm304, %v2173, 0.0
  %v2251 = vadd.f32 %v2249, %v2250
  %v2252 = vrot.slane %v2251, 4
  %v2253 = vadd.f32 %v2251, %v2252
  %v2254 = vrot.slane %v2253, 2
  %v2255 = vadd.f32 %v2253, %v2254
  %v2256 = vrot.slane %v2255, 1
  %v2257 = vadd.f32 %v2255, %v2256
  %v2258 = vsel %vm304, %v2175, 0.0
  %v2259 = vsel %vm304, %v2177, 0.0
  %v2260 = vadd.f32 %v2258, %v2259
  %v2261 = vrot.slane %v2260, 4
  %v2262 = vadd.f32 %v2260, %v2261
  %v2263 = vrot.slane %v2262, 2
  %v2264 = vadd.f32 %v2262, %v2263
  %v2265 = vrot.slane %v2264, 1
  %v2266 = vadd.f32 %v2264, %v2265
  %v2267 = vsel %vm304, %v2179, 0.0
  %v2268 = vsel %vm304, %v2181, 0.0
  %v2269 = vadd.f32 %v2267, %v2268
  %v2270 = vrot.slane %v2269, 4
  %v2271 = vadd.f32 %v2269, %v2270
  %v2272 = vrot.slane %v2271, 2
  %v2273 = vadd.f32 %v2271, %v2272
  %v2274 = vrot.slane %v2273, 1
  %v2275 = vadd.f32 %v2273, %v2274
  %v2276 = vsel %vm304, %v2183, 0.0
  %v2277 = vsel %vm304, %v2185, 0.0
  %v2278 = vadd.f32 %v2276, %v2277
  %v2279 = vrot.slane %v2278, 4
  %v2280 = vadd.f32 %v2278, %v2279
  %v2281 = vrot.slane %v2280, 2
  %v2282 = vadd.f32 %v2280, %v2281
  %v2283 = vrot.slane %v2282, 1
  %v2284 = vadd.f32 %v2282, %v2283
  %v2285 = vsel %vm304, %v2187, 0.0
  %v2286 = vsel %vm304, %v2189, 0.0
  %v2287 = vadd.f32 %v2285, %v2286
  %v2288 = vrot.slane %v2287, 4
  %v2289 = vadd.f32 %v2287, %v2288
  %v2290 = vrot.slane %v2289, 2
  %v2291 = vadd.f32 %v2289, %v2290
  %v2292 = vrot.slane %v2291, 1
  %v2293 = vadd.f32 %v2291, %v2292
  %v2294 = vsel %vm304, %v2191, 0.0
  %v2295 = vsel %vm304, %v2193, 0.0
  %v2296 = vadd.f32 %v2294, %v2295
  %v2297 = vrot.slane %v2296, 4
  %v2298 = vadd.f32 %v2296, %v2297
  %v2299 = vrot.slane %v2298, 2
  %v2300 = vadd.f32 %v2298, %v2299
  %v2301 = vrot.slane %v2300, 1
  %v2302 = vadd.f32 %v2300, %v2301
  %v2303 = vsel %vm304, %v2195, 0.0
  %v2304 = vsel %vm304, %v2197, 0.0
  %v2305 = vadd.f32 %v2303, %v2304
  %v2306 = vrot.slane %v2305, 4
  %v2307 = vadd.f32 %v2305, %v2306
  %v2308 = vrot.slane %v2307, 2
  %v2309 = vadd.f32 %v2307, %v2308
  %v2310 = vrot.slane %v2309, 1
  %v2311 = vadd.f32 %v2309, %v2310
  %v2312 = vsel %vm304, %v2199, 0.0
  %v2313 = vsel %vm304, %v2201, 0.0
  %v2314 = vadd.f32 %v2312, %v2313
  %v2315 = vrot.slane %v2314, 4
  %v2316 = vadd.f32 %v2314, %v2315
  %v2317 = vrot.slane %v2316, 2
  %v2318 = vadd.f32 %v2316, %v2317
  %v2319 = vrot.slane %v2318, 1
  %v2320 = vadd.f32 %v2318, %v2319
  %v2321 = vsel %vm304, %v2203, 0.0
  %v2322 = vsel %vm304, %v2205, 0.0
  %v2323 = vadd.f32 %v2321, %v2322
  %v2324 = vrot.slane %v2323, 4
  %v2325 = vadd.f32 %v2323, %v2324
  %v2326 = vrot.slane %v2325, 2
  %v2327 = vadd.f32 %v2325, %v2326
  %v2328 = vrot.slane %v2327, 1
  %v2329 = vadd.f32 %v2327, %v2328
  %v2330 = vsel %vm304, %v2207, 0.0
  %v2331 = vsel %vm304, %v2209, 0.0
  %v2332 = vadd.f32 %v2330, %v2331
  %v2333 = vrot.slane %v2332, 4
  %v2334 = vadd.f32 %v2332, %v2333
  %v2335 = vrot.slane %v2334, 2
  %v2336 = vadd.f32 %v2334, %v2335
  %v2337 = vrot.slane %v2336, 1
  %v2338 = vadd.f32 %v2336, %v2337
  %v2339 = vsel %vm304, %v2211, 0.0
  %v2340 = vsel %vm304, %v2213, 0.0
  %v2341 = vadd.f32 %v2339, %v2340
  %v2342 = vrot.slane %v2341, 4
  %v2343 = vadd.f32 %v2341, %v2342
  %v2344 = vrot.slane %v2343, 2
  %v2345 = vadd.f32 %v2343, %v2344
  %v2346 = vrot.slane %v2345, 1
  %v2347 = vadd.f32 %v2345, %v2346
  %v2348 = vsel %vm304, %v2215, 0.0
  %v2349 = vsel %vm304, %v2217, 0.0
  %v2350 = vadd.f32 %v2348, %v2349
  %v2351 = vrot.slane %v2350, 4
  %v2352 = vadd.f32 %v2350, %v2351
  %v2353 = vrot.slane %v2352, 2
  %v2354 = vadd.f32 %v2352, %v2353
  %v2355 = vrot.slane %v2354, 1
  %v2356 = vadd.f32 %v2354, %v2355
  %v2357 = vsel %vm304, %v2219, 0.0
  %v2358 = vsel %vm304, %v2221, 0.0
  %v2359 = vadd.f32 %v2357, %v2358
  %v2360 = vrot.slane %v2359, 4
  %v2361 = vadd.f32 %v2359, %v2360
  %v2362 = vrot.slane %v2361, 2
  %v2363 = vadd.f32 %v2361, %v2362
  %v2364 = vrot.slane %v2363, 1
  %v2365 = vadd.f32 %v2363, %v2364
  %v2366 = vmul.f32 %v2159, %v451
  %v2367 = vmul.f32 %v2161, %v454
  %v2368 = vmul.f32 %v2163, %v451
  %v2369 = vmul.f32 %v2165, %v454
  %v2370 = vmul.f32 %v2167, %v451
  %v2371 = vmul.f32 %v2169, %v454
  %v2372 = vmul.f32 %v2171, %v451
  %v2373 = vmul.f32 %v2173, %v454
  %v2374 = vmul.f32 %v2175, %v451
  %v2375 = vmul.f32 %v2177, %v454
  %v2376 = vmul.f32 %v2179, %v451
  %v2377 = vmul.f32 %v2181, %v454
  %v2378 = vmul.f32 %v2183, %v451
  %v2379 = vmul.f32 %v2185, %v454
  %v2380 = vmul.f32 %v2187, %v451
  %v2381 = vmul.f32 %v2189, %v454
  %v2382 = vmul.f32 %v2191, %v451
  %v2383 = vmul.f32 %v2193, %v454
  %v2384 = vmul.f32 %v2195, %v451
  %v2385 = vmul.f32 %v2197, %v454
  %v2386 = vmul.f32 %v2199, %v451
  %v2387 = vmul.f32 %v2201, %v454
  %v2388 = vmul.f32 %v2203, %v451
  %v2389 = vmul.f32 %v2205, %v454
  %v2390 = vmul.f32 %v2207, %v451
  %v2391 = vmul.f32 %v2209, %v454
  %v2392 = vmul.f32 %v2211, %v451
  %v2393 = vmul.f32 %v2213, %v454
  %v2394 = vmul.f32 %v2215, %v451
  %v2395 = vmul.f32 %v2217, %v454
  %v2396 = vmul.f32 %v2219, %v451
  %v2397 = vmul.f32 %v2221, %v454
  %v2398 = vsel %vm304, %v2366, 0.0
  %v2399 = vsel %vm304, %v2367, 0.0
  %v2400 = vadd.f32 %v2398, %v2399
  %v2401 = vrot.slane %v2400, 4
  %v2402 = vadd.f32 %v2400, %v2401
  %v2403 = vrot.slane %v2402, 2
  %v2404 = vadd.f32 %v2402, %v2403
  %v2405 = vrot.slane %v2404, 1
  %v2406 = vadd.f32 %v2404, %v2405
  %v2407 = vsel %vm304, %v2368, 0.0
  %v2408 = vsel %vm304, %v2369, 0.0
  %v2409 = vadd.f32 %v2407, %v2408
  %v2410 = vrot.slane %v2409, 4
  %v2411 = vadd.f32 %v2409, %v2410
  %v2412 = vrot.slane %v2411, 2
  %v2413 = vadd.f32 %v2411, %v2412
  %v2414 = vrot.slane %v2413, 1
  %v2415 = vadd.f32 %v2413, %v2414
  %v2416 = vsel %vm304, %v2370, 0.0
  %v2417 = vsel %vm304, %v2371, 0.0
  %v2418 = vadd.f32 %v2416, %v2417
  %v2419 = vrot.slane %v2418, 4
  %v2420 = vadd.f32 %v2418, %v2419
  %v2421 = vrot.slane %v2420, 2
  %v2422 = vadd.f32 %v2420, %v2421
  %v2423 = vrot.slane %v2422, 1
  %v2424 = vadd.f32 %v2422, %v2423
  %v2425 = vsel %vm304, %v2372, 0.0
  %v2426 = vsel %vm304, %v2373, 0.0
  %v2427 = vadd.f32 %v2425, %v2426
  %v2428 = vrot.slane %v2427, 4
  %v2429 = vadd.f32 %v2427, %v2428
  %v2430 = vrot.slane %v2429, 2
  %v2431 = vadd.f32 %v2429, %v2430
  %v2432 = vrot.slane %v2431, 1
  %v2433 = vadd.f32 %v2431, %v2432
  %v2434 = vsel %vm304, %v2374, 0.0
  %v2435 = vsel %vm304, %v2375, 0.0
  %v2436 = vadd.f32 %v2434, %v2435
  %v2437 = vrot.slane %v2436, 4
  %v2438 = vadd.f32 %v2436, %v2437
  %v2439 = vrot.slane %v2438, 2
  %v2440 = vadd.f32 %v2438, %v2439
  %v2441 = vrot.slane %v2440, 1
  %v2442 = vadd.f32 %v2440, %v2441
  %v2443 = vsel %vm304, %v2376, 0.0
  %v2444 = vsel %vm304, %v2377, 0.0
  %v2445 = vadd.f32 %v2443, %v2444
  %v2446 = vrot.slane %v2445, 4
  %v2447 = vadd.f32 %v2445, %v2446
  %v2448 = vrot.slane %v2447, 2
  %v2449 = vadd.f32 %v2447, %v2448
  %v2450 = vrot.slane %v2449, 1
  %v2451 = vadd.f32 %v2449, %v2450
  %v2452 = vsel %vm304, %v2378, 0.0
  %v2453 = vsel %vm304, %v2379, 0.0
  %v2454 = vadd.f32 %v2452, %v2453
  %v2455 = vrot.slane %v2454, 4
  %v2456 = vadd.f32 %v2454, %v2455
  %v2457 = vrot.slane %v2456, 2
  %v2458 = vadd.f32 %v2456, %v2457
  %v2459 = vrot.slane %v2458, 1
  %v2460 = vadd.f32 %v2458, %v2459
  %v2461 = vsel %vm304, %v2380, 0.0
  %v2462 = vsel %vm304, %v2381, 0.0
  %v2463 = vadd.f32 %v2461, %v2462
  %v2464 = vrot.slane %v2463, 4
  %v2465 = vadd.f32 %v2463, %v2464
  %v2466 = vrot.slane %v2465, 2
  %v2467 = vadd.f32 %v2465, %v2466
  %v2468 = vrot.slane %v2467, 1
  %v2469 = vadd.f32 %v2467, %v2468
  %v2470 = vsel %vm304, %v2382, 0.0
  %v2471 = vsel %vm304, %v2383, 0.0
  %v2472 = vadd.f32 %v2470, %v2471
  %v2473 = vrot.slane %v2472, 4
  %v2474 = vadd.f32 %v2472, %v2473
  %v2475 = vrot.slane %v2474, 2
  %v2476 = vadd.f32 %v2474, %v2475
  %v2477 = vrot.slane %v2476, 1
  %v2478 = vadd.f32 %v2476, %v2477
  %v2479 = vsel %vm304, %v2384, 0.0
  %v2480 = vsel %vm304, %v2385, 0.0
  %v2481 = vadd.f32 %v2479, %v2480
  %v2482 = vrot.slane %v2481, 4
  %v2483 = vadd.f32 %v2481, %v2482
  %v2484 = vrot.slane %v2483, 2
  %v2485 = vadd.f32 %v2483, %v2484
  %v2486 = vrot.slane %v2485, 1
  %v2487 = vadd.f32 %v2485, %v2486
  %v2488 = vsel %vm304, %v2386, 0.0
  %v2489 = vsel %vm304, %v2387, 0.0
  %v2490 = vadd.f32 %v2488, %v2489
  %v2491 = vrot.slane %v2490, 4
  %v2492 = vadd.f32 %v2490, %v2491
  %v2493 = vrot.slane %v2492, 2
  %v2494 = vadd.f32 %v2492, %v2493
  %v2495 = vrot.slane %v2494, 1
  %v2496 = vadd.f32 %v2494, %v2495
  %v2497 = vsel %vm304, %v2388, 0.0
  %v2498 = vsel %vm304, %v2389, 0.0
  %v2499 = vadd.f32 %v2497, %v2498
  %v2500 = vrot.slane %v2499, 4
  %v2501 = vadd.f32 %v2499, %v2500
  %v2502 = vrot.slane %v2501, 2
  %v2503 = vadd.f32 %v2501, %v2502
  %v2504 = vrot.slane %v2503, 1
  %v2505 = vadd.f32 %v2503, %v2504
  %v2506 = vsel %vm304, %v2390, 0.0
  %v2507 = vsel %vm304, %v2391, 0.0
  %v2508 = vadd.f32 %v2506, %v2507
  %v2509 = vrot.slane %v2508, 4
  %v2510 = vadd.f32 %v2508, %v2509
  %v2511 = vrot.slane %v2510, 2
  %v2512 = vadd.f32 %v2510, %v2511
  %v2513 = vrot.slane %v2512, 1
  %v2514 = vadd.f32 %v2512, %v2513
  %v2515 = vsel %vm304, %v2392, 0.0
  %v2516 = vsel %vm304, %v2393, 0.0
  %v2517 = vadd.f32 %v2515, %v2516
  %v2518 = vrot.slane %v2517, 4
  %v2519 = vadd.f32 %v2517, %v2518
  %v2520 = vrot.slane %v2519, 2
  %v2521 = vadd.f32 %v2519, %v2520
  %v2522 = vrot.slane %v2521, 1
  %v2523 = vadd.f32 %v2521, %v2522
  %v2524 = vsel %vm304, %v2394, 0.0
  %v2525 = vsel %vm304, %v2395, 0.0
  %v2526 = vadd.f32 %v2524, %v2525
  %v2527 = vrot.slane %v2526, 4
  %v2528 = vadd.f32 %v2526, %v2527
  %v2529 = vrot.slane %v2528, 2
  %v2530 = vadd.f32 %v2528, %v2529
  %v2531 = vrot.slane %v2530, 1
  %v2532 = vadd.f32 %v2530, %v2531
  %v2533 = vsel %vm304, %v2396, 0.0
  %v2534 = vsel %vm304, %v2397, 0.0
  %v2535 = vadd.f32 %v2533, %v2534
  %v2536 = vrot.slane %v2535, 4
  %v2537 = vadd.f32 %v2535, %v2536
  %v2538 = vrot.slane %v2537, 2
  %v2539 = vadd.f32 %v2537, %v2538
  %v2540 = vrot.slane %v2539, 1
  %v2541 = vadd.f32 %v2539, %v2540
  %v2542 = vrcp.pop %v2230
  %v2543 = vrcp.pop %v2239
  %v2544 = vrcp.pop %v2248
  %v2545 = vrcp.pop %v2257
  %v2546 = vrcp.pop %v2266
  %v2547 = vrcp.pop %v2275
  %v2548 = vrcp.pop %v2284
  %v2549 = vrcp.pop %v2293
  %v2550 = vrcp.pop %v2302
  %v2551 = vrcp.pop %v2311
  %v2552 = vrcp.pop %v2320
  %v2553 = vrcp.pop %v2329
  %v2554 = vrcp.pop %v2338
  %v2555 = vrcp.pop %v2347
  %v2556 = vrcp.pop %v2356
  %v2557 = vrcp.pop %v2365
  %v2558 = vmul.f32 %v2406, %v2542
  %v2559 = vmul.f32 %v2415, %v2543
  %v2560 = vmul.f32 %v2424, %v2544
  %v2561 = vmul.f32 %v2433, %v2545
  %v2562 = vmul.f32 %v2442, %v2546
  %v2563 = vmul.f32 %v2451, %v2547
  %v2564 = vmul.f32 %v2460, %v2548
  %v2565 = vmul.f32 %v2469, %v2549
  %v2566 = vmul.f32 %v2478, %v2550
  %v2567 = vmul.f32 %v2487, %v2551
  %v2568 = vmul.f32 %v2496, %v2552
  %v2569 = vmul.f32 %v2505, %v2553
  %v2570 = vmul.f32 %v2514, %v2554
  %v2571 = vmul.f32 %v2523, %v2555
  %v2572 = vmul.f32 %v2532, %v2556
  %v2573 = vmul.f32 %v2541, %v2557
  %v2576 = vrot.slane %v365, 1
  %v2577 = vrot.slane %v365, 2
  %v2578 = vrot.slane %v365, 3
  %v2579 = vrot.slane %v365, 4
  %v2580 = vrot.slane %v365, 5
  %v2581 = vrot.slane %v365, 6
  %v2582 = vrot.slane %v365, 7
  %v2583 = vrot.slane %v368, 1
  %v2584 = vrot.slane %v368, 2
  %v2585 = vrot.slane %v368, 3
  %v2586 = vrot.slane %v368, 4
  %v2587 = vrot.slane %v368, 5
  %v2588 = vrot.slane %v368, 6
  %v2589 = vrot.slane %v368, 7
  %v2590 = vperm.slane %v365, 0
  %v2591 = vperm.slane %v2576, 0
  %v2592 = vperm.slane %v2577, 0
  %v2593 = vperm.slane %v2578, 0
  %v2594 = vperm.slane %v2579, 0
  %v2595 = vperm.slane %v2580, 0
  %v2596 = vperm.slane %v2581, 0
  %v2597 = vperm.slane %v2582, 0
  %v2598 = vperm.slane %v368, 0
  %v2599 = vperm.slane %v2583, 0
  %v2600 = vperm.slane %v2584, 0
  %v2601 = vperm.slane %v2585, 0
  %v2602 = vperm.slane %v2586, 0
  %v2603 = vperm.slane %v2587, 0
  %v2604 = vperm.slane %v2588, 0
  %v2605 = vperm.slane %v2589, 0
  %v2622 = vmul.f32 %v2590, %v411
  %v2623 = vmul.f32 %v2590, %v414
  %v2624 = vmul.f32 %v2591, %v411
  %v2625 = vmul.f32 %v2591, %v414
  %v2626 = vmul.f32 %v2592, %v411
  %v2627 = vmul.f32 %v2592, %v414
  %v2628 = vmul.f32 %v2593, %v411
  %v2629 = vmul.f32 %v2593, %v414
  %v2630 = vmul.f32 %v2594, %v411
  %v2631 = vmul.f32 %v2594, %v414
  %v2632 = vmul.f32 %v2595, %v411
  %v2633 = vmul.f32 %v2595, %v414
  %v2634 = vmul.f32 %v2596, %v411
  %v2635 = vmul.f32 %v2596, %v414
  %v2636 = vmul.f32 %v2597, %v411
  %v2637 = vmul.f32 %v2597, %v414
  %v2638 = vmul.f32 %v2598, %v411
  %v2639 = vmul.f32 %v2598, %v414
  %v2640 = vmul.f32 %v2599, %v411
  %v2641 = vmul.f32 %v2599, %v414
  %v2642 = vmul.f32 %v2600, %v411
  %v2643 = vmul.f32 %v2600, %v414
  %v2644 = vmul.f32 %v2601, %v411
  %v2645 = vmul.f32 %v2601, %v414
  %v2646 = vmul.f32 %v2602, %v411
  %v2647 = vmul.f32 %v2602, %v414
  %v2648 = vmul.f32 %v2603, %v411
  %v2649 = vmul.f32 %v2603, %v414
  %v2650 = vmul.f32 %v2604, %v411
  %v2651 = vmul.f32 %v2604, %v414
  %v2652 = vmul.f32 %v2605, %v411
  %v2653 = vmul.f32 %v2605, %v414
  %v2654 = vadd.f32 %v2622, %v89
  %v2655 = vadd.f32 %v2623, %v95
  %v2656 = vadd.f32 %v2624, %v102
  %v2657 = vadd.f32 %v2625, %v108
  %v2658 = vadd.f32 %v2626, %v115
  %v2659 = vadd.f32 %v2627, %v121
  %v2660 = vadd.f32 %v2628, %v128
  %v2661 = vadd.f32 %v2629, %v134
  %v2662 = vadd.f32 %v2630, %v141
  %v2663 = vadd.f32 %v2631, %v147
  %v2664 = vadd.f32 %v2632, %v154
  %v2665 = vadd.f32 %v2633, %v160
  %v2666 = vadd.f32 %v2634, %v167
  %v2667 = vadd.f32 %v2635, %v173
  %v2668 = vadd.f32 %v2636, %v180
  %v2669 = vadd.f32 %v2637, %v186
  %v2670 = vadd.f32 %v2638, %v193
  %v2671 = vadd.f32 %v2639, %v199
  %v2672 = vadd.f32 %v2640, %v206
  %v2673 = vadd.f32 %v2641, %v212
  %v2674 = vadd.f32 %v2642, %v219
  %v2675 = vadd.f32 %v2643, %v225
  %v2676 = vadd.f32 %v2644, %v232
  %v2677 = vadd.f32 %v2645, %v238
  %v2678 = vadd.f32 %v2646, %v245
  %v2679 = vadd.f32 %v2647, %v251
  %v2680 = vadd.f32 %v2648, %v258
  %v2681 = vadd.f32 %v2649, %v264
  %v2682 = vadd.f32 %v2650, %v271
  %v2683 = vadd.f32 %v2651, %v277
  %v2684 = vadd.f32 %v2652, %v284
  %v2685 = vadd.f32 %v2653, %v290
  %v2686 = vsel %vm304, %v2654, -inf
  %v2687 = vsel %vm304, %v2655, -inf
  %v2688 = vmax.f32 %v2686, %v2687
  %v2689 = vrot.slane %v2688, 4
  %v2690 = vmax.f32 %v2688, %v2689
  %v2691 = vrot.slane %v2690, 2
  %v2692 = vmax.f32 %v2690, %v2691
  %v2693 = vrot.slane %v2692, 1
  %v2694 = vmax.f32 %v2692, %v2693
  %v2695 = vsel %vm304, %v2656, -inf
  %v2696 = vsel %vm304, %v2657, -inf
  %v2697 = vmax.f32 %v2695, %v2696
  %v2698 = vrot.slane %v2697, 4
  %v2699 = vmax.f32 %v2697, %v2698
  %v2700 = vrot.slane %v2699, 2
  %v2701 = vmax.f32 %v2699, %v2700
  %v2702 = vrot.slane %v2701, 1
  %v2703 = vmax.f32 %v2701, %v2702
  %v2704 = vsel %vm304, %v2658, -inf
  %v2705 = vsel %vm304, %v2659, -inf
  %v2706 = vmax.f32 %v2704, %v2705
  %v2707 = vrot.slane %v2706, 4
  %v2708 = vmax.f32 %v2706, %v2707
  %v2709 = vrot.slane %v2708, 2
  %v2710 = vmax.f32 %v2708, %v2709
  %v2711 = vrot.slane %v2710, 1
  %v2712 = vmax.f32 %v2710, %v2711
  %v2713 = vsel %vm304, %v2660, -inf
  %v2714 = vsel %vm304, %v2661, -inf
  %v2715 = vmax.f32 %v2713, %v2714
  %v2716 = vrot.slane %v2715, 4
  %v2717 = vmax.f32 %v2715, %v2716
  %v2718 = vrot.slane %v2717, 2
  %v2719 = vmax.f32 %v2717, %v2718
  %v2720 = vrot.slane %v2719, 1
  %v2721 = vmax.f32 %v2719, %v2720
  %v2722 = vsel %vm304, %v2662, -inf
  %v2723 = vsel %vm304, %v2663, -inf
  %v2724 = vmax.f32 %v2722, %v2723
  %v2725 = vrot.slane %v2724, 4
  %v2726 = vmax.f32 %v2724, %v2725
  %v2727 = vrot.slane %v2726, 2
  %v2728 = vmax.f32 %v2726, %v2727
  %v2729 = vrot.slane %v2728, 1
  %v2730 = vmax.f32 %v2728, %v2729
  %v2731 = vsel %vm304, %v2664, -inf
  %v2732 = vsel %vm304, %v2665, -inf
  %v2733 = vmax.f32 %v2731, %v2732
  %v2734 = vrot.slane %v2733, 4
  %v2735 = vmax.f32 %v2733, %v2734
  %v2736 = vrot.slane %v2735, 2
  %v2737 = vmax.f32 %v2735, %v2736
  %v2738 = vrot.slane %v2737, 1
  %v2739 = vmax.f32 %v2737, %v2738
  %v2740 = vsel %vm304, %v2666, -inf
  %v2741 = vsel %vm304, %v2667, -inf
  %v2742 = vmax.f32 %v2740, %v2741
  %v2743 = vrot.slane %v2742, 4
  %v2744 = vmax.f32 %v2742, %v2743
  %v2745 = vrot.slane %v2744, 2
  %v2746 = vmax.f32 %v2744, %v2745
  %v2747 = vrot.slane %v2746, 1
  %v2748 = vmax.f32 %v2746, %v2747
  %v2749 = vsel %vm304, %v2668, -inf
  %v2750 = vsel %vm304, %v2669, -inf
  %v2751 = vmax.f32 %v2749, %v2750
  %v2752 = vrot.slane %v2751, 4
  %v2753 = vmax.f32 %v2751, %v2752
  %v2754 = vrot.slane %v2753, 2
  %v2755 = vmax.f32 %v2753, %v2754
  %v2756 = vrot.slane %v2755, 1
  %v2757 = vmax.f32 %v2755, %v2756
  %v2758 = vsel %vm304, %v2670, -inf
  %v2759 = vsel %vm304, %v2671, -inf
  %v2760 = vmax.f32 %v2758, %v2759
  %v2761 = vrot.slane %v2760, 4
  %v2762 = vmax.f32 %v2760, %v2761
  %v2763 = vrot.slane %v2762, 2
  %v2764 = vmax.f32 %v2762, %v2763
  %v2765 = vrot.slane %v2764, 1
  %v2766 = vmax.f32 %v2764, %v2765
  %v2767 = vsel %vm304, %v2672, -inf
  %v2768 = vsel %vm304, %v2673, -inf
  %v2769 = vmax.f32 %v2767, %v2768
  %v2770 = vrot.slane %v2769, 4
  %v2771 = vmax.f32 %v2769, %v2770
  %v2772 = vrot.slane %v2771, 2
  %v2773 = vmax.f32 %v2771, %v2772
  %v2774 = vrot.slane %v2773, 1
  %v2775 = vmax.f32 %v2773, %v2774
  %v2776 = vsel %vm304, %v2674, -inf
  %v2777 = vsel %vm304, %v2675, -inf
  %v2778 = vmax.f32 %v2776, %v2777
  %v2779 = vrot.slane %v2778, 4
  %v2780 = vmax.f32 %v2778, %v2779
  %v2781 = vrot.slane %v2780, 2
  %v2782 = vmax.f32 %v2780, %v2781
  %v2783 = vrot.slane %v2782, 1
  %v2784 = vmax.f32 %v2782, %v2783
  %v2785 = vsel %vm304, %v2676, -inf
  %v2786 = vsel %vm304, %v2677, -inf
  %v2787 = vmax.f32 %v2785, %v2786
  %v2788 = vrot.slane %v2787, 4
  %v2789 = vmax.f32 %v2787, %v2788
  %v2790 = vrot.slane %v2789, 2
  %v2791 = vmax.f32 %v2789, %v2790
  %v2792 = vrot.slane %v2791, 1
  %v2793 = vmax.f32 %v2791, %v2792
  %v2794 = vsel %vm304, %v2678, -inf
  %v2795 = vsel %vm304, %v2679, -inf
  %v2796 = vmax.f32 %v2794, %v2795
  %v2797 = vrot.slane %v2796, 4
  %v2798 = vmax.f32 %v2796, %v2797
  %v2799 = vrot.slane %v2798, 2
  %v2800 = vmax.f32 %v2798, %v2799
  %v2801 = vrot.slane %v2800, 1
  %v2802 = vmax.f32 %v2800, %v2801
  %v2803 = vsel %vm304, %v2680, -inf
  %v2804 = vsel %vm304, %v2681, -inf
  %v2805 = vmax.f32 %v2803, %v2804
  %v2806 = vrot.slane %v2805, 4
  %v2807 = vmax.f32 %v2805, %v2806
  %v2808 = vrot.slane %v2807, 2
  %v2809 = vmax.f32 %v2807, %v2808
  %v2810 = vrot.slane %v2809, 1
  %v2811 = vmax.f32 %v2809, %v2810
  %v2812 = vsel %vm304, %v2682, -inf
  %v2813 = vsel %vm304, %v2683, -inf
  %v2814 = vmax.f32 %v2812, %v2813
  %v2815 = vrot.slane %v2814, 4
  %v2816 = vmax.f32 %v2814, %v2815
  %v2817 = vrot.slane %v2816, 2
  %v2818 = vmax.f32 %v2816, %v2817
  %v2819 = vrot.slane %v2818, 1
  %v2820 = vmax.f32 %v2818, %v2819
  %v2821 = vsel %vm304, %v2684, -inf
  %v2822 = vsel %vm304, %v2685, -inf
  %v2823 = vmax.f32 %v2821, %v2822
  %v2824 = vrot.slane %v2823, 4
  %v2825 = vmax.f32 %v2823, %v2824
  %v2826 = vrot.slane %v2825, 2
  %v2827 = vmax.f32 %v2825, %v2826
  %v2828 = vrot.slane %v2827, 1
  %v2829 = vmax.f32 %v2827, %v2828
  %v2830 = vsub.f32 %v2654, %v2694
  %v2831 = vsub.f32 %v2655, %v2694
  %v2832 = vsub.f32 %v2656, %v2703
  %v2833 = vsub.f32 %v2657, %v2703
  %v2834 = vsub.f32 %v2658, %v2712
  %v2835 = vsub.f32 %v2659, %v2712
  %v2836 = vsub.f32 %v2660, %v2721
  %v2837 = vsub.f32 %v2661, %v2721
  %v2838 = vsub.f32 %v2662, %v2730
  %v2839 = vsub.f32 %v2663, %v2730
  %v2840 = vsub.f32 %v2664, %v2739
  %v2841 = vsub.f32 %v2665, %v2739
  %v2842 = vsub.f32 %v2666, %v2748
  %v2843 = vsub.f32 %v2667, %v2748
  %v2844 = vsub.f32 %v2668, %v2757
  %v2845 = vsub.f32 %v2669, %v2757
  %v2846 = vsub.f32 %v2670, %v2766
  %v2847 = vsub.f32 %v2671, %v2766
  %v2848 = vsub.f32 %v2672, %v2775
  %v2849 = vsub.f32 %v2673, %v2775
  %v2850 = vsub.f32 %v2674, %v2784
  %v2851 = vsub.f32 %v2675, %v2784
  %v2852 = vsub.f32 %v2676, %v2793
  %v2853 = vsub.f32 %v2677, %v2793
  %v2854 = vsub.f32 %v2678, %v2802
  %v2855 = vsub.f32 %v2679, %v2802
  %v2856 = vsub.f32 %v2680, %v2811
  %v2857 = vsub.f32 %v2681, %v2811
  %v2858 = vsub.f32 %v2682, %v2820
  %v2859 = vsub.f32 %v2683, %v2820
  %v2860 = vsub.f32 %v2684, %v2829
  %v2861 = vsub.f32 %v2685, %v2829
  %v2862 = vmul.f32 %v2830, 1.442695
  %v2863 = vpow.pop %v2862
  %v2864 = vmul.f32 %v2831, 1.442695
  %v2865 = vpow.pop %v2864
  %v2866 = vmul.f32 %v2832, 1.442695
  %v2867 = vpow.pop %v2866
  %v2868 = vmul.f32 %v2833, 1.442695
  %v2869 = vpow.pop %v2868
  %v2870 = vmul.f32 %v2834, 1.442695
  %v2871 = vpow.pop %v2870
  %v2872 = vmul.f32 %v2835, 1.442695
  %v2873 = vpow.pop %v2872
  %v2874 = vmul.f32 %v2836, 1.442695
  %v2875 = vpow.pop %v2874
  %v2876 = vmul.f32 %v2837, 1.442695
  %v2877 = vpow.pop %v2876
  %v2878 = vmul.f32 %v2838, 1.442695
  %v2879 = vpow.pop %v2878
  %v2880 = vmul.f32 %v2839, 1.442695
  %v2881 = vpow.pop %v2880
  %v2882 = vmul.f32 %v2840, 1.442695
  %v2883 = vpow.pop %v2882
  %v2884 = vmul.f32 %v2841, 1.442695
  %v2885 = vpow.pop %v2884
  %v2886 = vmul.f32 %v2842, 1.442695
  %v2887 = vpow.pop %v2886
  %v2888 = vmul.f32 %v2843, 1.442695
  %v2889 = vpow.pop %v2888
  %v2890 = vmul.f32 %v2844, 1.442695
  %v2891 = vpow.pop %v2890
  %v2892 = vmul.f32 %v2845, 1.442695
  %v2893 = vpow.pop %v2892
  %v2894 = vmul.f32 %v2846, 1.442695
  %v2895 = vpow.pop %v2894
  %v2896 = vmul.f32 %v2847, 1.442695
  %v2897 = vpow.pop %v2896
  %v2898 = vmul.f32 %v2848, 1.442695
  %v2899 = vpow.pop %v2898
  %v2900 = vmul.f32 %v2849, 1.442695
  %v2901 = vpow.pop %v2900
  %v2902 = vmul.f32 %v2850, 1.442695
  %v2903 = vpow.pop %v2902
  %v2904 = vmul.f32 %v2851, 1.442695
  %v2905 = vpow.pop %v2904
  %v2906 = vmul.f32 %v2852, 1.442695
  %v2907 = vpow.pop %v2906
  %v2908 = vmul.f32 %v2853, 1.442695
  %v2909 = vpow.pop %v2908
  %v2910 = vmul.f32 %v2854, 1.442695
  %v2911 = vpow.pop %v2910
  %v2912 = vmul.f32 %v2855, 1.442695
  %v2913 = vpow.pop %v2912
  %v2914 = vmul.f32 %v2856, 1.442695
  %v2915 = vpow.pop %v2914
  %v2916 = vmul.f32 %v2857, 1.442695
  %v2917 = vpow.pop %v2916
  %v2918 = vmul.f32 %v2858, 1.442695
  %v2919 = vpow.pop %v2918
  %v2920 = vmul.f32 %v2859, 1.442695
  %v2921 = vpow.pop %v2920
  %v2922 = vmul.f32 %v2860, 1.442695
  %v2923 = vpow.pop %v2922
  %v2924 = vmul.f32 %v2861, 1.442695
  %v2925 = vpow.pop %v2924
  %v2926 = vsel %vm304, %v2863, 0.0
  %v2927 = vsel %vm304, %v2865, 0.0
  %v2928 = vadd.f32 %v2926, %v2927
  %v2929 = vrot.slane %v2928, 4
  %v2930 = vadd.f32 %v2928, %v2929
  %v2931 = vrot.slane %v2930, 2
  %v2932 = vadd.f32 %v2930, %v2931
  %v2933 = vrot.slane %v2932, 1
  %v2934 = vadd.f32 %v2932, %v2933
  %v2935 = vsel %vm304, %v2867, 0.0
  %v2936 = vsel %vm304, %v2869, 0.0
  %v2937 = vadd.f32 %v2935, %v2936
  %v2938 = vrot.slane %v2937, 4
  %v2939 = vadd.f32 %v2937, %v2938
  %v2940 = vrot.slane %v2939, 2
  %v2941 = vadd.f32 %v2939, %v2940
  %v2942 = vrot.slane %v2941, 1
  %v2943 = vadd.f32 %v2941, %v2942
  %v2944 = vsel %vm304, %v2871, 0.0
  %v2945 = vsel %vm304, %v2873, 0.0
  %v2946 = vadd.f32 %v2944, %v2945
  %v2947 = vrot.slane %v2946, 4
  %v2948 = vadd.f32 %v2946, %v2947
  %v2949 = vrot.slane %v2948, 2
  %v2950 = vadd.f32 %v2948, %v2949
  %v2951 = vrot.slane %v2950, 1
  %v2952 = vadd.f32 %v2950, %v2951
  %v2953 = vsel %vm304, %v2875, 0.0
  %v2954 = vsel %vm304, %v2877, 0.0
  %v2955 = vadd.f32 %v2953, %v2954
  %v2956 = vrot.slane %v2955, 4
  %v2957 = vadd.f32 %v2955, %v2956
  %v2958 = vrot.slane %v2957, 2
  %v2959 = vadd.f32 %v2957, %v2958
  %v2960 = vrot.slane %v2959, 1
  %v2961 = vadd.f32 %v2959, %v2960
  %v2962 = vsel %vm304, %v2879, 0.0
  %v2963 = vsel %vm304, %v2881, 0.0
  %v2964 = vadd.f32 %v2962, %v2963
  %v2965 = vrot.slane %v2964, 4
  %v2966 = vadd.f32 %v2964, %v2965
  %v2967 = vrot.slane %v2966, 2
  %v2968 = vadd.f32 %v2966, %v2967
  %v2969 = vrot.slane %v2968, 1
  %v2970 = vadd.f32 %v2968, %v2969
  %v2971 = vsel %vm304, %v2883, 0.0
  %v2972 = vsel %vm304, %v2885, 0.0
  %v2973 = vadd.f32 %v2971, %v2972
  %v2974 = vrot.slane %v2973, 4
  %v2975 = vadd.f32 %v2973, %v2974
  %v2976 = vrot.slane %v2975, 2
  %v2977 = vadd.f32 %v2975, %v2976
  %v2978 = vrot.slane %v2977, 1
  %v2979 = vadd.f32 %v2977, %v2978
  %v2980 = vsel %vm304, %v2887, 0.0
  %v2981 = vsel %vm304, %v2889, 0.0
  %v2982 = vadd.f32 %v2980, %v2981
  %v2983 = vrot.slane %v2982, 4
  %v2984 = vadd.f32 %v2982, %v2983
  %v2985 = vrot.slane %v2984, 2
  %v2986 = vadd.f32 %v2984, %v2985
  %v2987 = vrot.slane %v2986, 1
  %v2988 = vadd.f32 %v2986, %v2987
  %v2989 = vsel %vm304, %v2891, 0.0
  %v2990 = vsel %vm304, %v2893, 0.0
  %v2991 = vadd.f32 %v2989, %v2990
  %v2992 = vrot.slane %v2991, 4
  %v2993 = vadd.f32 %v2991, %v2992
  %v2994 = vrot.slane %v2993, 2
  %v2995 = vadd.f32 %v2993, %v2994
  %v2996 = vrot.slane %v2995, 1
  %v2997 = vadd.f32 %v2995, %v2996
  %v2998 = vsel %vm304, %v2895, 0.0
  %v2999 = vsel %vm304, %v2897, 0.0
  %v3000 = vadd.f32 %v2998, %v2999
  %v3001 = vrot.slane %v3000, 4
  %v3002 = vadd.f32 %v3000, %v3001
  %v3003 = vrot.slane %v3002, 2
  %v3004 = vadd.f32 %v3002, %v3003
  %v3005 = vrot.slane %v3004, 1
  %v3006 = vadd.f32 %v3004, %v3005
  %v3007 = vsel %vm304, %v2899, 0.0
  %v3008 = vsel %vm304, %v2901, 0.0
  %v3009 = vadd.f32 %v3007, %v3008
  %v3010 = vrot.slane %v3009, 4
  %v3011 = vadd.f32 %v3009, %v3010
  %v3012 = vrot.slane %v3011, 2
  %v3013 = vadd.f32 %v3011, %v3012
  %v3014 = vrot.slane %v3013, 1
  %v3015 = vadd.f32 %v3013, %v3014
  %v3016 = vsel %vm304, %v2903, 0.0
  %v3017 = vsel %vm304, %v2905, 0.0
  %v3018 = vadd.f32 %v3016, %v3017
  %v3019 = vrot.slane %v3018, 4
  %v3020 = vadd.f32 %v3018, %v3019
  %v3021 = vrot.slane %v3020, 2
  %v3022 = vadd.f32 %v3020, %v3021
  %v3023 = vrot.slane %v3022, 1
  %v3024 = vadd.f32 %v3022, %v3023
  %v3025 = vsel %vm304, %v2907, 0.0
  %v3026 = vsel %vm304, %v2909, 0.0
  %v3027 = vadd.f32 %v3025, %v3026
  %v3028 = vrot.slane %v3027, 4
  %v3029 = vadd.f32 %v3027, %v3028
  %v3030 = vrot.slane %v3029, 2
  %v3031 = vadd.f32 %v3029, %v3030
  %v3032 = vrot.slane %v3031, 1
  %v3033 = vadd.f32 %v3031, %v3032
  %v3034 = vsel %vm304, %v2911, 0.0
  %v3035 = vsel %vm304, %v2913, 0.0
  %v3036 = vadd.f32 %v3034, %v3035
  %v3037 = vrot.slane %v3036, 4
  %v3038 = vadd.f32 %v3036, %v3037
  %v3039 = vrot.slane %v3038, 2
  %v3040 = vadd.f32 %v3038, %v3039
  %v3041 = vrot.slane %v3040, 1
  %v3042 = vadd.f32 %v3040, %v3041
  %v3043 = vsel %vm304, %v2915, 0.0
  %v3044 = vsel %vm304, %v2917, 0.0
  %v3045 = vadd.f32 %v3043, %v3044
  %v3046 = vrot.slane %v3045, 4
  %v3047 = vadd.f32 %v3045, %v3046
  %v3048 = vrot.slane %v3047, 2
  %v3049 = vadd.f32 %v3047, %v3048
  %v3050 = vrot.slane %v3049, 1
  %v3051 = vadd.f32 %v3049, %v3050
  %v3052 = vsel %vm304, %v2919, 0.0
  %v3053 = vsel %vm304, %v2921, 0.0
  %v3054 = vadd.f32 %v3052, %v3053
  %v3055 = vrot.slane %v3054, 4
  %v3056 = vadd.f32 %v3054, %v3055
  %v3057 = vrot.slane %v3056, 2
  %v3058 = vadd.f32 %v3056, %v3057
  %v3059 = vrot.slane %v3058, 1
  %v3060 = vadd.f32 %v3058, %v3059
  %v3061 = vsel %vm304, %v2923, 0.0
  %v3062 = vsel %vm304, %v2925, 0.0
  %v3063 = vadd.f32 %v3061, %v3062
  %v3064 = vrot.slane %v3063, 4
  %v3065 = vadd.f32 %v3063, %v3064
  %v3066 = vrot.slane %v3065, 2
  %v3067 = vadd.f32 %v3065, %v3066
  %v3068 = vrot.slane %v3067, 1
  %v3069 = vadd.f32 %v3067, %v3068
  %v3070 = vmul.f32 %v2863, %v457
  %v3071 = vmul.f32 %v2865, %v460
  %v3072 = vmul.f32 %v2867, %v457
  %v3073 = vmul.f32 %v2869, %v460
  %v3074 = vmul.f32 %v2871, %v457
  %v3075 = vmul.f32 %v2873, %v460
  %v3076 = vmul.f32 %v2875, %v457
  %v3077 = vmul.f32 %v2877, %v460
  %v3078 = vmul.f32 %v2879, %v457
  %v3079 = vmul.f32 %v2881, %v460
  %v3080 = vmul.f32 %v2883, %v457
  %v3081 = vmul.f32 %v2885, %v460
  %v3082 = vmul.f32 %v2887, %v457
  %v3083 = vmul.f32 %v2889, %v460
  %v3084 = vmul.f32 %v2891, %v457
  %v3085 = vmul.f32 %v2893, %v460
  %v3086 = vmul.f32 %v2895, %v457
  %v3087 = vmul.f32 %v2897, %v460
  %v3088 = vmul.f32 %v2899, %v457
  %v3089 = vmul.f32 %v2901, %v460
  %v3090 = vmul.f32 %v2903, %v457
  %v3091 = vmul.f32 %v2905, %v460
  %v3092 = vmul.f32 %v2907, %v457
  %v3093 = vmul.f32 %v2909, %v460
  %v3094 = vmul.f32 %v2911, %v457
  %v3095 = vmul.f32 %v2913, %v460
  %v3096 = vmul.f32 %v2915, %v457
  %v3097 = vmul.f32 %v2917, %v460
  %v3098 = vmul.f32 %v2919, %v457
  %v3099 = vmul.f32 %v2921, %v460
  %v3100 = vmul.f32 %v2923, %v457
  %v3101 = vmul.f32 %v2925, %v460
  %v3102 = vsel %vm304, %v3070, 0.0
  %v3103 = vsel %vm304, %v3071, 0.0
  %v3104 = vadd.f32 %v3102, %v3103
  %v3105 = vrot.slane %v3104, 4
  %v3106 = vadd.f32 %v3104, %v3105
  %v3107 = vrot.slane %v3106, 2
  %v3108 = vadd.f32 %v3106, %v3107
  %v3109 = vrot.slane %v3108, 1
  %v3110 = vadd.f32 %v3108, %v3109
  %v3111 = vsel %vm304, %v3072, 0.0
  %v3112 = vsel %vm304, %v3073, 0.0
  %v3113 = vadd.f32 %v3111, %v3112
  %v3114 = vrot.slane %v3113, 4
  %v3115 = vadd.f32 %v3113, %v3114
  %v3116 = vrot.slane %v3115, 2
  %v3117 = vadd.f32 %v3115, %v3116
  %v3118 = vrot.slane %v3117, 1
  %v3119 = vadd.f32 %v3117, %v3118
  %v3120 = vsel %vm304, %v3074, 0.0
  %v3121 = vsel %vm304, %v3075, 0.0
  %v3122 = vadd.f32 %v3120, %v3121
  %v3123 = vrot.slane %v3122, 4
  %v3124 = vadd.f32 %v3122, %v3123
  %v3125 = vrot.slane %v3124, 2
  %v3126 = vadd.f32 %v3124, %v3125
  %v3127 = vrot.slane %v3126, 1
  %v3128 = vadd.f32 %v3126, %v3127
  %v3129 = vsel %vm304, %v3076, 0.0
  %v3130 = vsel %vm304, %v3077, 0.0
  %v3131 = vadd.f32 %v3129, %v3130
  %v3132 = vrot.slane %v3131, 4
  %v3133 = vadd.f32 %v3131, %v3132
  %v3134 = vrot.slane %v3133, 2
  %v3135 = vadd.f32 %v3133, %v3134
  %v3136 = vrot.slane %v3135, 1
  %v3137 = vadd.f32 %v3135, %v3136
  %v3138 = vsel %vm304, %v3078, 0.0
  %v3139 = vsel %vm304, %v3079, 0.0
  %v3140 = vadd.f32 %v3138, %v3139
  %v3141 = vrot.slane %v3140, 4
  %v3142 = vadd.f32 %v3140, %v3141
  %v3143 = vrot.slane %v3142, 2
  %v3144 = vadd.f32 %v3142, %v3143
  %v3145 = vrot.slane %v3144, 1
  %v3146 = vadd.f32 %v3144, %v3145
  %v3147 = vsel %vm304, %v3080, 0.0
  %v3148 = vsel %vm304, %v3081, 0.0
  %v3149 = vadd.f32 %v3147, %v3148
  %v3150 = vrot.slane %v3149, 4
  %v3151 = vadd.f32 %v3149, %v3150
  %v3152 = vrot.slane %v3151, 2
  %v3153 = vadd.f32 %v3151, %v3152
  %v3154 = vrot.slane %v3153, 1
  %v3155 = vadd.f32 %v3153, %v3154
  %v3156 = vsel %vm304, %v3082, 0.0
  %v3157 = vsel %vm304, %v3083, 0.0
  %v3158 = vadd.f32 %v3156, %v3157
  %v3159 = vrot.slane %v3158, 4
  %v3160 = vadd.f32 %v3158, %v3159
  %v3161 = vrot.slane %v3160, 2
  %v3162 = vadd.f32 %v3160, %v3161
  %v3163 = vrot.slane %v3162, 1
  %v3164 = vadd.f32 %v3162, %v3163
  %v3165 = vsel %vm304, %v3084, 0.0
  %v3166 = vsel %vm304, %v3085, 0.0
  %v3167 = vadd.f32 %v3165, %v3166
  %v3168 = vrot.slane %v3167, 4
  %v3169 = vadd.f32 %v3167, %v3168
  %v3170 = vrot.slane %v3169, 2
  %v3171 = vadd.f32 %v3169, %v3170
  %v3172 = vrot.slane %v3171, 1
  %v3173 = vadd.f32 %v3171, %v3172
  %v3174 = vsel %vm304, %v3086, 0.0
  %v3175 = vsel %vm304, %v3087, 0.0
  %v3176 = vadd.f32 %v3174, %v3175
  %v3177 = vrot.slane %v3176, 4
  %v3178 = vadd.f32 %v3176, %v3177
  %v3179 = vrot.slane %v3178, 2
  %v3180 = vadd.f32 %v3178, %v3179
  %v3181 = vrot.slane %v3180, 1
  %v3182 = vadd.f32 %v3180, %v3181
  %v3183 = vsel %vm304, %v3088, 0.0
  %v3184 = vsel %vm304, %v3089, 0.0
  %v3185 = vadd.f32 %v3183, %v3184
  %v3186 = vrot.slane %v3185, 4
  %v3187 = vadd.f32 %v3185, %v3186
  %v3188 = vrot.slane %v3187, 2
  %v3189 = vadd.f32 %v3187, %v3188
  %v3190 = vrot.slane %v3189, 1
  %v3191 = vadd.f32 %v3189, %v3190
  %v3192 = vsel %vm304, %v3090, 0.0
  %v3193 = vsel %vm304, %v3091, 0.0
  %v3194 = vadd.f32 %v3192, %v3193
  %v3195 = vrot.slane %v3194, 4
  %v3196 = vadd.f32 %v3194, %v3195
  %v3197 = vrot.slane %v3196, 2
  %v3198 = vadd.f32 %v3196, %v3197
  %v3199 = vrot.slane %v3198, 1
  %v3200 = vadd.f32 %v3198, %v3199
  %v3201 = vsel %vm304, %v3092, 0.0
  %v3202 = vsel %vm304, %v3093, 0.0
  %v3203 = vadd.f32 %v3201, %v3202
  %v3204 = vrot.slane %v3203, 4
  %v3205 = vadd.f32 %v3203, %v3204
  %v3206 = vrot.slane %v3205, 2
  %v3207 = vadd.f32 %v3205, %v3206
  %v3208 = vrot.slane %v3207, 1
  %v3209 = vadd.f32 %v3207, %v3208
  %v3210 = vsel %vm304, %v3094, 0.0
  %v3211 = vsel %vm304, %v3095, 0.0
  %v3212 = vadd.f32 %v3210, %v3211
  %v3213 = vrot.slane %v3212, 4
  %v3214 = vadd.f32 %v3212, %v3213
  %v3215 = vrot.slane %v3214, 2
  %v3216 = vadd.f32 %v3214, %v3215
  %v3217 = vrot.slane %v3216, 1
  %v3218 = vadd.f32 %v3216, %v3217
  %v3219 = vsel %vm304, %v3096, 0.0
  %v3220 = vsel %vm304, %v3097, 0.0
  %v3221 = vadd.f32 %v3219, %v3220
  %v3222 = vrot.slane %v3221, 4
  %v3223 = vadd.f32 %v3221, %v3222
  %v3224 = vrot.slane %v3223, 2
  %v3225 = vadd.f32 %v3223, %v3224
  %v3226 = vrot.slane %v3225, 1
  %v3227 = vadd.f32 %v3225, %v3226
  %v3228 = vsel %vm304, %v3098, 0.0
  %v3229 = vsel %vm304, %v3099, 0.0
  %v3230 = vadd.f32 %v3228, %v3229
  %v3231 = vrot.slane %v3230, 4
  %v3232 = vadd.f32 %v3230, %v3231
  %v3233 = vrot.slane %v3232, 2
  %v3234 = vadd.f32 %v3232, %v3233
  %v3235 = vrot.slane %v3234, 1
  %v3236 = vadd.f32 %v3234, %v3235
  %v3237 = vsel %vm304, %v3100, 0.0
  %v3238 = vsel %vm304, %v3101, 0.0
  %v3239 = vadd.f32 %v3237, %v3238
  %v3240 = vrot.slane %v3239, 4
  %v3241 = vadd.f32 %v3239, %v3240
  %v3242 = vrot.slane %v3241, 2
  %v3243 = vadd.f32 %v3241, %v3242
  %v3244 = vrot.slane %v3243, 1
  %v3245 = vadd.f32 %v3243, %v3244
  %v3246 = vrcp.pop %v2934
  %v3247 = vrcp.pop %v2943
  %v3248 = vrcp.pop %v2952
  %v3249 = vrcp.pop %v2961
  %v3250 = vrcp.pop %v2970
  %v3251 = vrcp.pop %v2979
  %v3252 = vrcp.pop %v2988
  %v3253 = vrcp.pop %v2997
  %v3254 = vrcp.pop %v3006
  %v3255 = vrcp.pop %v3015
  %v3256 = vrcp.pop %v3024
  %v3257 = vrcp.pop %v3033
  %v3258 = vrcp.pop %v3042
  %v3259 = vrcp.pop %v3051
  %v3260 = vrcp.pop %v3060
  %v3261 = vrcp.pop %v3069
  %v3262 = vmul.f32 %v3110, %v3246
  %v3263 = vmul.f32 %v3119, %v3247
  %v3264 = vmul.f32 %v3128, %v3248
  %v3265 = vmul.f32 %v3137, %v3249
  %v3266 = vmul.f32 %v3146, %v3250
  %v3267 = vmul.f32 %v3155, %v3251
  %v3268 = vmul.f32 %v3164, %v3252
  %v3269 = vmul.f32 %v3173, %v3253
  %v3270 = vmul.f32 %v3182, %v3254
  %v3271 = vmul.f32 %v3191, %v3255
  %v3272 = vmul.f32 %v3200, %v3256
  %v3273 = vmul.f32 %v3209, %v3257
  %v3274 = vmul.f32 %v3218, %v3258
  %v3275 = vmul.f32 %v3227, %v3259
  %v3276 = vmul.f32 %v3236, %v3260
  %v3277 = vmul.f32 %v3245, %v3261
  %vm3294 = vcmask 1041409
  %v3295 = vsel %vm3294, %v1151, %v1150
  %vm3296 = vcmask 1042434
  %v3297 = vsel %vm3296, %v1152, %v3295
  %vm3298 = vcmask 1043459
  %v3299 = vsel %vm3298, %v1153, %v3297
  %vm3300 = vcmask 1044484
  %v3301 = vsel %vm3300, %v1154, %v3299
  %vm3302 = vcmask 1045509
  %v3303 = vsel %vm3302, %v1155, %v3301
  %vm3304 = vcmask 1046534
  %v3305 = vsel %vm3304, %v1156, %v3303
  %vm3306 = vcmask 1047559
  %v3307 = vsel %vm3306, %v1157, %v3305
  %v3308 = vsel %vm3294, %v1159, %v1158
  %v3309 = vsel %vm3296, %v1160, %v3308
  %v3310 = vsel %vm3298, %v1161, %v3309
  %v3311 = vsel %vm3300, %v1162, %v3310
  %v3312 = vsel %vm3302, %v1163, %v3311
  %v3313 = vsel %vm3304, %v1164, %v3312
  %v3314 = vsel %vm3306, %v1165, %v3313
  %v3331 = vsel %vm3294, %v1855, %v1854
  %v3332 = vsel %vm3296, %v1856, %v3331
  %v3333 = vsel %vm3298, %v1857, %v3332
  %v3334 = vsel %vm3300, %v1858, %v3333
  %v3335 = vsel %vm3302, %v1859, %v3334
  %v3336 = vsel %vm3304, %v1860, %v3335
  %v3337 = vsel %vm3306, %v1861, %v3336
  %v3338 = vsel %vm3294, %v1863, %v1862
  %v3339 = vsel %vm3296, %v1864, %v3338
  %v3340 = vsel %vm3298, %v1865, %v3339
  %v3341 = vsel %vm3300, %v1866, %v3340
  %v3342 = vsel %vm3302, %v1867, %v3341
  %v3343 = vsel %vm3304, %v1868, %v3342
  %v3344 = vsel %vm3306, %v1869, %v3343
  %v3361 = vsel %vm3294, %v2559, %v2558
  %v3362 = vsel %vm3296, %v2560, %v3361
  %v3363 = vsel %vm3298, %v2561, %v3362
  %v3364 = vsel %vm3300, %v2562, %v3363
  %v3365 = vsel %vm3302, %v2563, %v3364
  %v3366 = vsel %vm3304, %v2564, %v3365
  %v3367 = vsel %vm3306, %v2565, %v3366
  %v3368 = vsel %vm3294, %v2567, %v2566
  %v3369 = vsel %vm3296, %v2568, %v3368
  %v3370 = vsel %vm3298, %v2569, %v3369
  %v3371 = vsel %vm3300, %v2570, %v3370
  %v3372 = vsel %vm3302, %v2571, %v3371
  %v3373 = vsel %vm3304, %v2572, %v3372
  %v3374 = vsel %vm3306, %v2573, %v3373
  %v3391 = vsel %vm3294, %v3263, %v3262
  %v3392 = vsel %vm3296, %v3264, %v3391
  %v3393 = vsel %vm3298, %v3265, %v3392
  %v3394 = vsel %vm3300, %v3266, %v3393
  %v3395 = vsel %vm3302, %v3267, %v3394
  %v3396 = vsel %vm3304, %v3268, %v3395
  %v3397 = vsel %vm3306, %v3269, %v3396
  %v3398 = vsel %vm3294, %v3271, %v3270
  %v3399 = vsel %vm3296, %v3272, %v3398
  %v3400 = vsel %vm3298, %v3273, %v3399
  %v3401 = vsel %vm3300, %v3274, %v3400
  %v3402 = vsel %vm3302, %v3275, %v3401
  %v3403 = vsel %vm3304, %v3276, %v3402
  %v3404 = vsel %vm3306, %v3277, %v3403
  %v3405 = vld [vmem:[%s7] sm:$0xff]
  %v3406 = vld [vmem:[%s8] sm:$0x1]
  %v3408 = vperm.slane %v3406, 0
  %v3410 = vsel %vm304, %v3307, 0
  %v3412 = vsel %vm304, %v3314, 0
  %v3414 = vsel %vm304, %v3337, 0
  %v3416 = vsel %vm304, %v3344, 0
  %v3418 = vsel %vm304, %v3367, 0
  %v3420 = vsel %vm304, %v3374, 0
  %v3422 = vsel %vm304, %v3397, 0
  %v3424 = vsel %vm304, %v3404, 0
  %3426 = vmatpush.msra.mxu0 0.0
  %3427 = vmatpush.msra.mxu0 0.0
  %3428 = vmatpush.msra.mxu0 0.0
  %3429 = vmatpush.msra.mxu0 0.0
  %3430 = vmatpush.msra.mxu0 0.0
  %3431 = vmatpush.msra.mxu0 0.0
  %3432 = vmatpush.msra.mxu0 0.0
  %3433 = vmatpush.msra.mxu0 0.0
  %3434 = vmatpush.msra.mxu0 0.0
  %3435 = vmatpush.msra.mxu0 0.0
  %3436 = vmatpush.msra.mxu0 0.0
  %3437 = vmatpush.msra.mxu0 0.0
  %3438 = vmatpush.msra.mxu0 0.0
  %3439 = vmatpush.msra.mxu0 0.0
  %3440 = vmatpush.msra.mxu0 0.0
  %3441 = vmatpush.msra.mxu0 %v3405
  %3442 = vmatmul.f32.gmra.mxu0 %v3410
  %v3443 = vpop.f32.mrf.mxu0
  %v3444 = vadd.f32 %v3408, %v3443
  %3445 = vmatmul.f32.gmra.mxu0 %v3412
  %v3446 = vpop.f32.mrf.mxu0
  %v3447 = vadd.f32 %v3408, %v3446
  %3448 = vmatmul.f32.gmra.mxu0 %v3414
  %v3449 = vpop.f32.mrf.mxu0
  %v3450 = vadd.f32 %v3408, %v3449
  %3451 = vmatmul.f32.gmra.mxu0 %v3416
  %v3452 = vpop.f32.mrf.mxu0
  %v3453 = vadd.f32 %v3408, %v3452
  %3454 = vmatmul.f32.gmra.mxu0 %v3418
  %v3455 = vpop.f32.mrf.mxu0
  %v3456 = vadd.f32 %v3408, %v3455
  %3457 = vmatmul.f32.gmra.mxu0 %v3420
  %v3458 = vpop.f32.mrf.mxu0
  %v3459 = vadd.f32 %v3408, %v3458
  %3460 = vmatmul.f32.gmra.mxu0 %v3422
  %v3461 = vpop.f32.mrf.mxu0
  %v3462 = vadd.f32 %v3408, %v3461
  %3463 = vmatmul.f32.gmra.mxu0 %v3424
  %v3464 = vpop.f32.mrf.mxu0
  %v3465 = vadd.f32 %v3408, %v3464
  %3466 = vdwg.mxu0
  %v3467 = vadd.f32 %v291, %v3444
  %v3468 = vadd.f32 %v292, %v3447
  %v3469 = vadd.f32 %v293, %v3450
  %v3470 = vadd.f32 %v294, %v3453
  %v3471 = vadd.f32 %v295, %v3456
  %v3472 = vadd.f32 %v296, %v3459
  %v3473 = vadd.f32 %v297, %v3462
  %v3474 = vadd.f32 %v298, %v3465
  %v3475 = vld [vmem:[%s9] sm:$0x1]
  %v3476 = vld [vmem:[%s10] sm:$0x1]
  %v3477 = vsel %vm304, %v3467, 0.0
  %3478 = vadd.xlane.f32.xlu0 %v3477
  %v3479 = vpop.xlane.xlu0 %3478
  %v3480 = vsel %vm304, %v3468, 0.0
  %3481 = vadd.xlane.f32.xlu0 %v3480
  %v3482 = vpop.xlane.xlu0 %3481
  %v3483 = vsel %vm304, %v3469, 0.0
  %3484 = vadd.xlane.f32.xlu0 %v3483
  %v3485 = vpop.xlane.xlu0 %3484
  %v3486 = vsel %vm304, %v3470, 0.0
  %3487 = vadd.xlane.f32.xlu0 %v3486
  %v3488 = vpop.xlane.xlu0 %3487
  %v3489 = vsel %vm304, %v3471, 0.0
  %3490 = vadd.xlane.f32.xlu0 %v3489
  %v3491 = vpop.xlane.xlu0 %3490
  %v3492 = vsel %vm304, %v3472, 0.0
  %3493 = vadd.xlane.f32.xlu0 %v3492
  %v3494 = vpop.xlane.xlu0 %3493
  %v3495 = vsel %vm304, %v3473, 0.0
  %3496 = vadd.xlane.f32.xlu0 %v3495
  %v3497 = vpop.xlane.xlu0 %3496
  %v3498 = vsel %vm304, %v3474, 0.0
  %3499 = vadd.xlane.f32.xlu0 %v3498
  %v3500 = vpop.xlane.xlu0 %3499
  %v3501 = vrcp.pop 8.0
  %v3502 = vmul.f32 8.0, %v3501
  %v3503 = vsub.f32 1.0, %v3502
  %v3504 = vmul.f32 %v3501, %v3503
  %v3505 = vadd.f32 %v3501, %v3504
  %vm3506 = vweird.f32 %v3501
  %v3507 = vsel %vm3506, %v3501, %v3505
  %v3508 = vmul.f32 %v3479, %v3507
  %v3509 = vmul.f32 %v3482, %v3507
  %v3510 = vmul.f32 %v3485, %v3507
  %v3511 = vmul.f32 %v3488, %v3507
  %v3512 = vmul.f32 %v3491, %v3507
  %v3513 = vmul.f32 %v3494, %v3507
  %v3514 = vmul.f32 %v3497, %v3507
  %v3515 = vmul.f32 %v3500, %v3507
  %v3516 = vsub.f32 %v3467, %v3508
  %v3517 = vsub.f32 %v3468, %v3509
  %v3518 = vsub.f32 %v3469, %v3510
  %v3519 = vsub.f32 %v3470, %v3511
  %v3520 = vsub.f32 %v3471, %v3512
  %v3521 = vsub.f32 %v3472, %v3513
  %v3522 = vsub.f32 %v3473, %v3514
  %v3523 = vsub.f32 %v3474, %v3515
  %v3524 = vmul.f32 %v3516, %v3516
  %v3525 = vmul.f32 %v3517, %v3517
  %v3526 = vmul.f32 %v3518, %v3518
  %v3527 = vmul.f32 %v3519, %v3519
  %v3528 = vmul.f32 %v3520, %v3520
  %v3529 = vmul.f32 %v3521, %v3521
  %v3530 = vmul.f32 %v3522, %v3522
  %v3531 = vmul.f32 %v3523, %v3523
  %v3532 = vsel %vm304, %v3524, 0.0
  %3533 = vadd.xlane.f32.xlu0 %v3532
  %v3534 = vpop.xlane.xlu0 %3533
  %v3535 = vsel %vm304, %v3525, 0.0
  %3536 = vadd.xlane.f32.xlu0 %v3535
  %v3537 = vpop.xlane.xlu0 %3536
  %v3538 = vsel %vm304, %v3526, 0.0
  %3539 = vadd.xlane.f32.xlu0 %v3538
  %v3540 = vpop.xlane.xlu0 %3539
  %v3541 = vsel %vm304, %v3527, 0.0
  %3542 = vadd.xlane.f32.xlu0 %v3541
  %v3543 = vpop.xlane.xlu0 %3542
  %v3544 = vsel %vm304, %v3528, 0.0
  %3545 = vadd.xlane.f32.xlu0 %v3544
  %v3546 = vpop.xlane.xlu0 %3545
  %v3547 = vsel %vm304, %v3529, 0.0
  %3548 = vadd.xlane.f32.xlu0 %v3547
  %v3549 = vpop.xlane.xlu0 %3548
  %v3550 = vsel %vm304, %v3530, 0.0
  %3551 = vadd.xlane.f32.xlu0 %v3550
  %v3552 = vpop.xlane.xlu0 %3551
  %v3553 = vsel %vm304, %v3531, 0.0
  %3554 = vadd.xlane.f32.xlu0 %v3553
  %v3555 = vpop.xlane.xlu0 %3554
  %v3556 = vmul.f32 %v3534, %v3507
  %v3557 = vmul.f32 %v3537, %v3507
  %v3558 = vmul.f32 %v3540, %v3507
  %v3559 = vmul.f32 %v3543, %v3507
  %v3560 = vmul.f32 %v3546, %v3507
  %v3561 = vmul.f32 %v3549, %v3507
  %v3562 = vmul.f32 %v3552, %v3507
  %v3563 = vmul.f32 %v3555, %v3507
  %v3564 = vadd.f32 %v3556, 1e-05
  %v3565 = vadd.f32 %v3557, 1e-05
  %v3566 = vadd.f32 %v3558, 1e-05
  %v3567 = vadd.f32 %v3559, 1e-05
  %v3568 = vadd.f32 %v3560, 1e-05
  %v3569 = vadd.f32 %v3561, 1e-05
  %v3570 = vadd.f32 %v3562, 1e-05
  %v3571 = vadd.f32 %v3563, 1e-05
  %v3572 = vrsqrt.pop %v3564
  %v3573 = vmul.f32 %v3572, %v3564
  %v3574 = vmul.f32 %v3573, %v3572
  %v3575 = vmul.f32 0.5, %v3574
  %v3576 = vsub.f32 1.5, %v3575
  %v3577 = vmul.f32 %v3572, %v3576
  %vm3578 = vweird.f32 %v3564
  %vm3579 = vweird.f32 %v3572
  %vm3580 = vmor %vm3578, %vm3579
  %v3581 = vsel %vm3580, %v3572, %v3577
  %v3582 = vrsqrt.pop %v3565
  %v3583 = vmul.f32 %v3582, %v3565
  %v3584 = vmul.f32 %v3583, %v3582
  %v3585 = vmul.f32 0.5, %v3584
  %v3586 = vsub.f32 1.5, %v3585
  %v3587 = vmul.f32 %v3582, %v3586
  %vm3588 = vweird.f32 %v3565
  %vm3589 = vweird.f32 %v3582
  %vm3590 = vmor %vm3588, %vm3589
  %v3591 = vsel %vm3590, %v3582, %v3587
  %v3592 = vrsqrt.pop %v3566
  %v3593 = vmul.f32 %v3592, %v3566
  %v3594 = vmul.f32 %v3593, %v3592
  %v3595 = vmul.f32 0.5, %v3594
  %v3596 = vsub.f32 1.5, %v3595
  %v3597 = vmul.f32 %v3592, %v3596
  %vm3598 = vweird.f32 %v3566
  %vm3599 = vweird.f32 %v3592
  %vm3600 = vmor %vm3598, %vm3599
  %v3601 = vsel %vm3600, %v3592, %v3597
  %v3602 = vrsqrt.pop %v3567
  %v3603 = vmul.f32 %v3602, %v3567
  %v3604 = vmul.f32 %v3603, %v3602
  %v3605 = vmul.f32 0.5, %v3604
  %v3606 = vsub.f32 1.5, %v3605
  %v3607 = vmul.f32 %v3602, %v3606
  %vm3608 = vweird.f32 %v3567
  %vm3609 = vweird.f32 %v3602
  %vm3610 = vmor %vm3608, %vm3609
  %v3611 = vsel %vm3610, %v3602, %v3607
  %v3612 = vrsqrt.pop %v3568
  %v3613 = vmul.f32 %v3612, %v3568
  %v3614 = vmul.f32 %v3613, %v3612
  %v3615 = vmul.f32 0.5, %v3614
  %v3616 = vsub.f32 1.5, %v3615
  %v3617 = vmul.f32 %v3612, %v3616
  %vm3618 = vweird.f32 %v3568
  %vm3619 = vweird.f32 %v3612
  %vm3620 = vmor %vm3618, %vm3619
  %v3621 = vsel %vm3620, %v3612, %v3617
  %v3622 = vrsqrt.pop %v3569
  %v3623 = vmul.f32 %v3622, %v3569
  %v3624 = vmul.f32 %v3623, %v3622
  %v3625 = vmul.f32 0.5, %v3624
  %v3626 = vsub.f32 1.5, %v3625
  %v3627 = vmul.f32 %v3622, %v3626
  %vm3628 = vweird.f32 %v3569
  %vm3629 = vweird.f32 %v3622
  %vm3630 = vmor %vm3628, %vm3629
  %v3631 = vsel %vm3630, %v3622, %v3627
  %v3632 = vrsqrt.pop %v3570
  %v3633 = vmul.f32 %v3632, %v3570
  %v3634 = vmul.f32 %v3633, %v3632
  %v3635 = vmul.f32 0.5, %v3634
  %v3636 = vsub.f32 1.5, %v3635
  %v3637 = vmul.f32 %v3632, %v3636
  %vm3638 = vweird.f32 %v3570
  %vm3639 = vweird.f32 %v3632
  %vm3640 = vmor %vm3638, %vm3639
  %v3641 = vsel %vm3640, %v3632, %v3637
  %v3642 = vrsqrt.pop %v3571
  %v3643 = vmul.f32 %v3642, %v3571
  %v3644 = vmul.f32 %v3643, %v3642
  %v3645 = vmul.f32 0.5, %v3644
  %v3646 = vsub.f32 1.5, %v3645
  %v3647 = vmul.f32 %v3642, %v3646
  %vm3648 = vweird.f32 %v3571
  %vm3649 = vweird.f32 %v3642
  %vm3650 = vmor %vm3648, %vm3649
  %v3651 = vsel %vm3650, %v3642, %v3647
  %v3652 = vmul.f32 %v3516, %v3581
  %v3653 = vmul.f32 %v3517, %v3591
  %v3654 = vmul.f32 %v3518, %v3601
  %v3655 = vmul.f32 %v3519, %v3611
  %v3656 = vmul.f32 %v3520, %v3621
  %v3657 = vmul.f32 %v3521, %v3631
  %v3658 = vmul.f32 %v3522, %v3641
  %v3659 = vmul.f32 %v3523, %v3651
  %v3661 = vperm.slane %v3475, 0
  %v3663 = vmul.f32 %v3652, %v3661
  %v3664 = vmul.f32 %v3653, %v3661
  %v3665 = vmul.f32 %v3654, %v3661
  %v3666 = vmul.f32 %v3655, %v3661
  %v3667 = vmul.f32 %v3656, %v3661
  %v3668 = vmul.f32 %v3657, %v3661
  %v3669 = vmul.f32 %v3658, %v3661
  %v3670 = vmul.f32 %v3659, %v3661
  %v3672 = vperm.slane %v3476, 0
  %v3674 = vadd.f32 %v3663, %v3672
  %v3675 = vadd.f32 %v3664, %v3672
  %v3676 = vadd.f32 %v3665, %v3672
  %v3677 = vadd.f32 %v3666, %v3672
  %v3678 = vadd.f32 %v3667, %v3672
  %v3679 = vadd.f32 %v3668, %v3672
  %v3680 = vadd.f32 %v3669, %v3672
  %v3681 = vadd.f32 %v3670, %v3672
  %v3682 = vpack.c.bf16 %v3675, %v3674
  %v3683 = vpack.c.bf16 %v3677, %v3676
  %v3684 = vpack.c.bf16 %v3679, %v3678
  %v3685 = vpack.c.bf16 %v3681, %v3680
  %v3686 = vld [vmem:[%s13] sm:$0xff]
  %v3687 = vld [vmem:[%s13 + $0x8] sm:$0xff]
  %v3688 = vld [vmem:[%s14] sm:$0xf]
  %v3690 = vperm.slane %v3688, 0
  %v3691 = vperm.slane %v3688, 1
  %v3692 = vperm.slane %v3688, 2
  %v3693 = vperm.slane %v3688, 3
  %v3700 = vunpack.c.l.b16 %v3686
  %v3701 = vunpack.c.h.b16 %v3686
  %v3702 = vunpack.c.l.b16 %v3687
  %v3703 = vunpack.c.h.b16 %v3687
  %v3704 = vpack.c.b16 %v3700, %v3700
  %v3705 = vpack.c.b16 %v3701, %v3701
  %v3706 = vpack.c.b16 %v3702, %v3702
  %v3707 = vpack.c.b16 %v3703, %v3703
  %v3709 = vsel %vm304, %v3682, 0
  %v3712 = vsel %vm304, %v3683, 0
  %v3715 = vsel %vm304, %v3684, 0
  %v3718 = vsel %vm304, %v3685, 0
  %vm3720 = vcmask 1043456
  %v3722 = vsel %vm3720, %v3704, 0
  %v3725 = vsel %vm3720, %v3705, 0
  %v3728 = vsel %vm3720, %v3706, 0
  %v3731 = vsel %vm3720, %v3707, 0
  %3733 = vmatpush.bf16.msra.mxu0 0
  %3734 = vmatpush.bf16.msra.mxu0 0
  %3735 = vmatpush.bf16.msra.mxu0 0
  %3736 = vmatpush.bf16.msra.mxu0 0
  %3737 = vmatpush.bf16.msra.mxu0 0
  %3738 = vmatpush.bf16.msra.mxu0 0
  %3739 = vmatpush.bf16.msra.mxu0 0
  %3740 = vmatpush.bf16.msra.mxu0 %v3722
  %3741 = vmatmul.bf16.gmra.mxu0 %v3709
  %v3742 = vpop.f32.mrf.mxu0
  %v3743 = vadd.f32 %v3690, %v3742
  %v3744 = vpop.f32.mrf.mxu0
  %v3745 = vadd.f32 %v3690, %v3744
  %3746 = vmatmul.bf16.gmra.mxu0 %v3712
  %v3747 = vpop.f32.mrf.mxu0
  %v3748 = vadd.f32 %v3690, %v3747
  %v3749 = vpop.f32.mrf.mxu0
  %v3750 = vadd.f32 %v3690, %v3749
  %3751 = vmatmul.bf16.gmra.mxu0 %v3715
  %v3752 = vpop.f32.mrf.mxu0
  %v3753 = vadd.f32 %v3690, %v3752
  %v3754 = vpop.f32.mrf.mxu0
  %v3755 = vadd.f32 %v3690, %v3754
  %3756 = vmatmul.bf16.gmra.mxu0 %v3718
  %v3757 = vpop.f32.mrf.mxu0
  %v3758 = vadd.f32 %v3690, %v3757
  %v3759 = vpop.f32.mrf.mxu0
  %v3760 = vadd.f32 %v3690, %v3759
  %3761 = vdwg.mxu0
  %3762 = vmatpush.bf16.msra.mxu0 0
  %3763 = vmatpush.bf16.msra.mxu0 0
  %3764 = vmatpush.bf16.msra.mxu0 0
  %3765 = vmatpush.bf16.msra.mxu0 0
  %3766 = vmatpush.bf16.msra.mxu0 0
  %3767 = vmatpush.bf16.msra.mxu0 0
  %3768 = vmatpush.bf16.msra.mxu0 0
  %3769 = vmatpush.bf16.msra.mxu0 %v3725
  %3770 = vmatmul.bf16.gmra.mxu0 %v3709
  %v3771 = vpop.f32.mrf.mxu0
  %v3772 = vadd.f32 %v3691, %v3771
  %v3773 = vpop.f32.mrf.mxu0
  %v3774 = vadd.f32 %v3691, %v3773
  %3775 = vmatmul.bf16.gmra.mxu0 %v3712
  %v3776 = vpop.f32.mrf.mxu0
  %v3777 = vadd.f32 %v3691, %v3776
  %v3778 = vpop.f32.mrf.mxu0
  %v3779 = vadd.f32 %v3691, %v3778
  %3780 = vmatmul.bf16.gmra.mxu0 %v3715
  %v3781 = vpop.f32.mrf.mxu0
  %v3782 = vadd.f32 %v3691, %v3781
  %v3783 = vpop.f32.mrf.mxu0
  %v3784 = vadd.f32 %v3691, %v3783
  %3785 = vmatmul.bf16.gmra.mxu0 %v3718
  %v3786 = vpop.f32.mrf.mxu0
  %v3787 = vadd.f32 %v3691, %v3786
  %v3788 = vpop.f32.mrf.mxu0
  %v3789 = vadd.f32 %v3691, %v3788
  %3790 = vdwg.mxu0
  %3791 = vmatpush.bf16.msra.mxu0 0
  %3792 = vmatpush.bf16.msra.mxu0 0
  %3793 = vmatpush.bf16.msra.mxu0 0
  %3794 = vmatpush.bf16.msra.mxu0 0
  %3795 = vmatpush.bf16.msra.mxu0 0
  %3796 = vmatpush.bf16.msra.mxu0 0
  %3797 = vmatpush.bf16.msra.mxu0 0
  %3798 = vmatpush.bf16.msra.mxu0 %v3728
  %3799 = vmatmul.bf16.gmra.mxu0 %v3709
  %v3800 = vpop.f32.mrf.mxu0
  %v3801 = vadd.f32 %v3692, %v3800
  %v3802 = vpop.f32.mrf.mxu0
  %v3803 = vadd.f32 %v3692, %v3802
  %3804 = vmatmul.bf16.gmra.mxu0 %v3712
  %v3805 = vpop.f32.mrf.mxu0
  %v3806 = vadd.f32 %v3692, %v3805
  %v3807 = vpop.f32.mrf.mxu0
  %v3808 = vadd.f32 %v3692, %v3807
  %3809 = vmatmul.bf16.gmra.mxu0 %v3715
  %v3810 = vpop.f32.mrf.mxu0
  %v3811 = vadd.f32 %v3692, %v3810
  %v3812 = vpop.f32.mrf.mxu0
  %v3813 = vadd.f32 %v3692, %v3812
  %3814 = vmatmul.bf16.gmra.mxu0 %v3718
  %v3815 = vpop.f32.mrf.mxu0
  %v3816 = vadd.f32 %v3692, %v3815
  %v3817 = vpop.f32.mrf.mxu0
  %v3818 = vadd.f32 %v3692, %v3817
  %3819 = vdwg.mxu0
  %3820 = vmatpush.bf16.msra.mxu0 0
  %3821 = vmatpush.bf16.msra.mxu0 0
  %3822 = vmatpush.bf16.msra.mxu0 0
  %3823 = vmatpush.bf16.msra.mxu0 0
  %3824 = vmatpush.bf16.msra.mxu0 0
  %3825 = vmatpush.bf16.msra.mxu0 0
  %3826 = vmatpush.bf16.msra.mxu0 0
  %3827 = vmatpush.bf16.msra.mxu0 %v3731
  %3828 = vmatmul.bf16.gmra.mxu0 %v3709
  %v3829 = vpop.f32.mrf.mxu0
  %v3830 = vadd.f32 %v3693, %v3829
  %v3831 = vpop.f32.mrf.mxu0
  %v3832 = vadd.f32 %v3693, %v3831
  %3833 = vmatmul.bf16.gmra.mxu0 %v3712
  %v3834 = vpop.f32.mrf.mxu0
  %v3835 = vadd.f32 %v3693, %v3834
  %v3836 = vpop.f32.mrf.mxu0
  %v3837 = vadd.f32 %v3693, %v3836
  %3838 = vmatmul.bf16.gmra.mxu0 %v3715
  %v3839 = vpop.f32.mrf.mxu0
  %v3840 = vadd.f32 %v3693, %v3839
  %v3841 = vpop.f32.mrf.mxu0
  %v3842 = vadd.f32 %v3693, %v3841
  %3843 = vmatmul.bf16.gmra.mxu0 %v3718
  %v3844 = vpop.f32.mrf.mxu0
  %v3845 = vadd.f32 %v3693, %v3844
  %v3846 = vpop.f32.mrf.mxu0
  %v3847 = vadd.f32 %v3693, %v3846
  %3848 = vdwg.mxu0
  %v3849 = vmax.f32 %v3743, 0.0
  %v3850 = vmax.f32 %v3772, 0.0
  %v3851 = vmax.f32 %v3801, 0.0
  %v3852 = vmax.f32 %v3830, 0.0
  %v3853 = vmax.f32 %v3745, 0.0
  %v3854 = vmax.f32 %v3774, 0.0
  %v3855 = vmax.f32 %v3803, 0.0
  %v3856 = vmax.f32 %v3832, 0.0
  %v3857 = vmax.f32 %v3748, 0.0
  %v3858 = vmax.f32 %v3777, 0.0
  %v3859 = vmax.f32 %v3806, 0.0
  %v3860 = vmax.f32 %v3835, 0.0
  %v3861 = vmax.f32 %v3750, 0.0
  %v3862 = vmax.f32 %v3779, 0.0
  %v3863 = vmax.f32 %v3808, 0.0
  %v3864 = vmax.f32 %v3837, 0.0
  %v3865 = vmax.f32 %v3753, 0.0
  %v3866 = vmax.f32 %v3782, 0.0
  %v3867 = vmax.f32 %v3811, 0.0
  %v3868 = vmax.f32 %v3840, 0.0
  %v3869 = vmax.f32 %v3755, 0.0
  %v3870 = vmax.f32 %v3784, 0.0
  %v3871 = vmax.f32 %v3813, 0.0
  %v3872 = vmax.f32 %v3842, 0.0
  %v3873 = vmax.f32 %v3758, 0.0
  %v3874 = vmax.f32 %v3787, 0.0
  %v3875 = vmax.f32 %v3816, 0.0
  %v3876 = vmax.f32 %v3845, 0.0
  %v3877 = vmax.f32 %v3760, 0.0
  %v3878 = vmax.f32 %v3789, 0.0
  %v3879 = vmax.f32 %v3818, 0.0
  %v3880 = vmax.f32 %v3847, 0.0
  %v3881 = vpack.c.bf16 %v3853, %v3849
  %v3882 = vpack.c.bf16 %v3854, %v3850
  %v3883 = vpack.c.bf16 %v3855, %v3851
  %v3884 = vpack.c.bf16 %v3856, %v3852
  %v3885 = vpack.c.bf16 %v3861, %v3857
  %v3886 = vpack.c.bf16 %v3862, %v3858
  %v3887 = vpack.c.bf16 %v3863, %v3859
  %v3888 = vpack.c.bf16 %v3864, %v3860
  %v3889 = vpack.c.bf16 %v3869, %v3865
  %v3890 = vpack.c.bf16 %v3870, %v3866
  %v3891 = vpack.c.bf16 %v3871, %v3867
  %v3892 = vpack.c.bf16 %v3872, %v3868
  %v3893 = vpack.c.bf16 %v3877, %v3873
  %v3894 = vpack.c.bf16 %v3878, %v3874
  %v3895 = vpack.c.bf16 %v3879, %v3875
  %v3896 = vpack.c.bf16 %v3880, %v3876
  %v3897 = vld [vmem:[%s15] sm:$0xf]
  %v3898 = vld [vmem:[%s15 + $0x4] sm:$0xf]
  %v3899 = vld [vmem:[%s15 + $0x8] sm:$0xf]
  %v3900 = vld [vmem:[%s15 + $0xc] sm:$0xf]
  %v3901 = vld [vmem:[%s15 + $0x10] sm:$0xf]
  %v3902 = vld [vmem:[%s15 + $0x14] sm:$0xf]
  %v3903 = vld [vmem:[%s15 + $0x18] sm:$0xf]
  %v3904 = vld [vmem:[%s15 + $0x1c] sm:$0xf]
  %v3905 = vld [vmem:[%s15 + $0x20] sm:$0xf]
  %v3906 = vld [vmem:[%s15 + $0x24] sm:$0xf]
  %v3907 = vld [vmem:[%s15 + $0x28] sm:$0xf]
  %v3908 = vld [vmem:[%s15 + $0x2c] sm:$0xf]
  %v3909 = vld [vmem:[%s15 + $0x30] sm:$0xf]
  %v3910 = vld [vmem:[%s15 + $0x34] sm:$0xf]
  %v3911 = vld [vmem:[%s15 + $0x38] sm:$0xf]
  %v3912 = vld [vmem:[%s15 + $0x3c] sm:$0xf]
  %v3913 = vld [vmem:[%s15 + $0x40] sm:$0xf]
  %v3914 = vld [vmem:[%s15 + $0x44] sm:$0xf]
  %v3915 = vld [vmem:[%s15 + $0x48] sm:$0xf]
  %v3916 = vld [vmem:[%s15 + $0x4c] sm:$0xf]
  %v3917 = vld [vmem:[%s15 + $0x50] sm:$0xf]
  %v3918 = vld [vmem:[%s15 + $0x54] sm:$0xf]
  %v3919 = vld [vmem:[%s15 + $0x58] sm:$0xf]
  %v3920 = vld [vmem:[%s15 + $0x5c] sm:$0xf]
  %v3921 = vld [vmem:[%s15 + $0x60] sm:$0xf]
  %v3922 = vld [vmem:[%s15 + $0x64] sm:$0xf]
  %v3923 = vld [vmem:[%s15 + $0x68] sm:$0xf]
  %v3924 = vld [vmem:[%s15 + $0x6c] sm:$0xf]
  %v3925 = vld [vmem:[%s15 + $0x70] sm:$0xf]
  %v3926 = vld [vmem:[%s15 + $0x74] sm:$0xf]
  %v3927 = vld [vmem:[%s15 + $0x78] sm:$0xf]
  %v3928 = vld [vmem:[%s15 + $0x7c] sm:$0xf]
  %v3929 = vld [vmem:[%s15 + $0x80] sm:$0xf]
  %v3930 = vld [vmem:[%s15 + $0x84] sm:$0xf]
  %v3931 = vld [vmem:[%s15 + $0x88] sm:$0xf]
  %v3932 = vld [vmem:[%s15 + $0x8c] sm:$0xf]
  %v3933 = vld [vmem:[%s15 + $0x90] sm:$0xf]
  %v3934 = vld [vmem:[%s15 + $0x94] sm:$0xf]
  %v3935 = vld [vmem:[%s15 + $0x98] sm:$0xf]
  %v3936 = vld [vmem:[%s15 + $0x9c] sm:$0xf]
  %v3937 = vld [vmem:[%s15 + $0xa0] sm:$0xf]
  %v3938 = vld [vmem:[%s15 + $0xa4] sm:$0xf]
  %v3939 = vld [vmem:[%s15 + $0xa8] sm:$0xf]
  %v3940 = vld [vmem:[%s15 + $0xac] sm:$0xf]
  %v3941 = vld [vmem:[%s15 + $0xb0] sm:$0xf]
  %v3942 = vld [vmem:[%s15 + $0xb4] sm:$0xf]
  %v3943 = vld [vmem:[%s15 + $0xb8] sm:$0xf]
  %v3944 = vld [vmem:[%s15 + $0xbc] sm:$0xf]
  %v3945 = vld [vmem:[%s15 + $0xc0] sm:$0xf]
  %v3946 = vld [vmem:[%s15 + $0xc4] sm:$0xf]
  %v3947 = vld [vmem:[%s15 + $0xc8] sm:$0xf]
  %v3948 = vld [vmem:[%s15 + $0xcc] sm:$0xf]
  %v3949 = vld [vmem:[%s15 + $0xd0] sm:$0xf]
  %v3950 = vld [vmem:[%s15 + $0xd4] sm:$0xf]
  %v3951 = vld [vmem:[%s15 + $0xd8] sm:$0xf]
  %v3952 = vld [vmem:[%s15 + $0xdc] sm:$0xf]
  %v3953 = vld [vmem:[%s15 + $0xe0] sm:$0xf]
  %v3954 = vld [vmem:[%s15 + $0xe4] sm:$0xf]
  %v3955 = vld [vmem:[%s15 + $0xe8] sm:$0xf]
  %v3956 = vld [vmem:[%s15 + $0xec] sm:$0xf]
  %v3957 = vld [vmem:[%s15 + $0xf0] sm:$0xf]
  %v3958 = vld [vmem:[%s15 + $0xf4] sm:$0xf]
  %v3959 = vld [vmem:[%s15 + $0xf8] sm:$0xf]
  %v3960 = vld [vmem:[%s15 + $0xfc] sm:$0xf]
  %v3961 = vld [vmem:[%s13 + $0x10] sm:$0xff]
  %v3962 = vld [vmem:[%s13 + $0x18] sm:$0xff]
  %v3963 = vld [vmem:[%s14 + $0x4] sm:$0xf]
  %v3965 = vperm.slane %v3963, 0
  %v3966 = vperm.slane %v3963, 1
  %v3967 = vperm.slane %v3963, 2
  %v3968 = vperm.slane %v3963, 3
  %v3975 = vunpack.c.l.b16 %v3961
  %v3976 = vunpack.c.h.b16 %v3961
  %v3977 = vunpack.c.l.b16 %v3962
  %v3978 = vunpack.c.h.b16 %v3962
  %v3979 = vpack.c.b16 %v3975, %v3975
  %v3980 = vpack.c.b16 %v3976, %v3976
  %v3981 = vpack.c.b16 %v3977, %v3977
  %v3982 = vpack.c.b16 %v3978, %v3978
  %v3984 = vsel %vm3720, %v3979, 0
  %v3987 = vsel %vm3720, %v3980, 0
  %v3990 = vsel %vm3720, %v3981, 0
  %v3993 = vsel %vm3720, %v3982, 0
  %3995 = vmatpush.bf16.msra.mxu0 0
  %3996 = vmatpush.bf16.msra.mxu0 0
  %3997 = vmatpush.bf16.msra.mxu0 0
  %3998 = vmatpush.bf16.msra.mxu0 0
  %3999 = vmatpush.bf16.msra.mxu0 0
  %4000 = vmatpush.bf16.msra.mxu0 0
  %4001 = vmatpush.bf16.msra.mxu0 0
  %4002 = vmatpush.bf16.msra.mxu0 %v3984
  %4003 = vmatmul.bf16.gmra.mxu0 %v3709
  %v4004 = vpop.f32.mrf.mxu0
  %v4005 = vadd.f32 %v3965, %v4004
  %v4006 = vpop.f32.mrf.mxu0
  %v4007 = vadd.f32 %v3965, %v4006
  %4008 = vmatmul.bf16.gmra.mxu0 %v3712
  %v4009 = vpop.f32.mrf.mxu0
  %v4010 = vadd.f32 %v3965, %v4009
  %v4011 = vpop.f32.mrf.mxu0
  %v4012 = vadd.f32 %v3965, %v4011
  %4013 = vmatmul.bf16.gmra.mxu0 %v3715
  %v4014 = vpop.f32.mrf.mxu0
  %v4015 = vadd.f32 %v3965, %v4014
  %v4016 = vpop.f32.mrf.mxu0
  %v4017 = vadd.f32 %v3965, %v4016
  %4018 = vmatmul.bf16.gmra.mxu0 %v3718
  %v4019 = vpop.f32.mrf.mxu0
  %v4020 = vadd.f32 %v3965, %v4019
  %v4021 = vpop.f32.mrf.mxu0
  %v4022 = vadd.f32 %v3965, %v4021
  %4023 = vdwg.mxu0
  %4024 = vmatpush.bf16.msra.mxu0 0
  %4025 = vmatpush.bf16.msra.mxu0 0
  %4026 = vmatpush.bf16.msra.mxu0 0
  %4027 = vmatpush.bf16.msra.mxu0 0
  %4028 = vmatpush.bf16.msra.mxu0 0
  %4029 = vmatpush.bf16.msra.mxu0 0
  %4030 = vmatpush.bf16.msra.mxu0 0
  %4031 = vmatpush.bf16.msra.mxu0 %v3987
  %4032 = vmatmul.bf16.gmra.mxu0 %v3709
  %v4033 = vpop.f32.mrf.mxu0
  %v4034 = vadd.f32 %v3966, %v4033
  %v4035 = vpop.f32.mrf.mxu0
  %v4036 = vadd.f32 %v3966, %v4035
  %4037 = vmatmul.bf16.gmra.mxu0 %v3712
  %v4038 = vpop.f32.mrf.mxu0
  %v4039 = vadd.f32 %v3966, %v4038
  %v4040 = vpop.f32.mrf.mxu0
  %v4041 = vadd.f32 %v3966, %v4040
  %4042 = vmatmul.bf16.gmra.mxu0 %v3715
  %v4043 = vpop.f32.mrf.mxu0
  %v4044 = vadd.f32 %v3966, %v4043
  %v4045 = vpop.f32.mrf.mxu0
  %v4046 = vadd.f32 %v3966, %v4045
  %4047 = vmatmul.bf16.gmra.mxu0 %v3718
  %v4048 = vpop.f32.mrf.mxu0
  %v4049 = vadd.f32 %v3966, %v4048
  %v4050 = vpop.f32.mrf.mxu0
  %v4051 = vadd.f32 %v3966, %v4050
  %4052 = vdwg.mxu0
  %4053 = vmatpush.bf16.msra.mxu0 0
  %4054 = vmatpush.bf16.msra.mxu0 0
  %4055 = vmatpush.bf16.msra.mxu0 0
  %4056 = vmatpush.bf16.msra.mxu0 0
  %4057 = vmatpush.bf16.msra.mxu0 0
  %4058 = vmatpush.bf16.msra.mxu0 0
  %4059 = vmatpush.bf16.msra.mxu0 0
  %4060 = vmatpush.bf16.msra.mxu0 %v3990
  %4061 = vmatmul.bf16.gmra.mxu0 %v3709
  %v4062 = vpop.f32.mrf.mxu0
  %v4063 = vadd.f32 %v3967, %v4062
  %v4064 = vpop.f32.mrf.mxu0
  %v4065 = vadd.f32 %v3967, %v4064
  %4066 = vmatmul.bf16.gmra.mxu0 %v3712
  %v4067 = vpop.f32.mrf.mxu0
  %v4068 = vadd.f32 %v3967, %v4067
  %v4069 = vpop.f32.mrf.mxu0
  %v4070 = vadd.f32 %v3967, %v4069
  %4071 = vmatmul.bf16.gmra.mxu0 %v3715
  %v4072 = vpop.f32.mrf.mxu0
  %v4073 = vadd.f32 %v3967, %v4072
  %v4074 = vpop.f32.mrf.mxu0
  %v4075 = vadd.f32 %v3967, %v4074
  %4076 = vmatmul.bf16.gmra.mxu0 %v3718
  %v4077 = vpop.f32.mrf.mxu0
  %v4078 = vadd.f32 %v3967, %v4077
  %v4079 = vpop.f32.mrf.mxu0
  %v4080 = vadd.f32 %v3967, %v4079
  %4081 = vdwg.mxu0
  %4082 = vmatpush.bf16.msra.mxu0 0
  %4083 = vmatpush.bf16.msra.mxu0 0
  %4084 = vmatpush.bf16.msra.mxu0 0
  %4085 = vmatpush.bf16.msra.mxu0 0
  %4086 = vmatpush.bf16.msra.mxu0 0
  %4087 = vmatpush.bf16.msra.mxu0 0
  %4088 = vmatpush.bf16.msra.mxu0 0
  %4089 = vmatpush.bf16.msra.mxu0 %v3993
  %4090 = vmatmul.bf16.gmra.mxu0 %v3709
  %v4091 = vpop.f32.mrf.mxu0
  %v4092 = vadd.f32 %v3968, %v4091
  %v4093 = vpop.f32.mrf.mxu0
  %v4094 = vadd.f32 %v3968, %v4093
  %4095 = vmatmul.bf16.gmra.mxu0 %v3712
  %v4096 = vpop.f32.mrf.mxu0
  %v4097 = vadd.f32 %v3968, %v4096
  %v4098 = vpop.f32.mrf.mxu0
  %v4099 = vadd.f32 %v3968, %v4098
  %4100 = vmatmul.bf16.gmra.mxu0 %v3715
  %v4101 = vpop.f32.mrf.mxu0
  %v4102 = vadd.f32 %v3968, %v4101
  %v4103 = vpop.f32.mrf.mxu0
  %v4104 = vadd.f32 %v3968, %v4103
  %4105 = vmatmul.bf16.gmra.mxu0 %v3718
  %v4106 = vpop.f32.mrf.mxu0
  %v4107 = vadd.f32 %v3968, %v4106
  %v4108 = vpop.f32.mrf.mxu0
  %v4109 = vadd.f32 %v3968, %v4108
  %4110 = vdwg.mxu0
  %v4111 = vmax.f32 %v4005, 0.0
  %v4112 = vmax.f32 %v4034, 0.0
  %v4113 = vmax.f32 %v4063, 0.0
  %v4114 = vmax.f32 %v4092, 0.0
  %v4115 = vmax.f32 %v4007, 0.0
  %v4116 = vmax.f32 %v4036, 0.0
  %v4117 = vmax.f32 %v4065, 0.0
  %v4118 = vmax.f32 %v4094, 0.0
  %v4119 = vmax.f32 %v4010, 0.0
  %v4120 = vmax.f32 %v4039, 0.0
  %v4121 = vmax.f32 %v4068, 0.0
  %v4122 = vmax.f32 %v4097, 0.0
  %v4123 = vmax.f32 %v4012, 0.0
  %v4124 = vmax.f32 %v4041, 0.0
  %v4125 = vmax.f32 %v4070, 0.0
  %v4126 = vmax.f32 %v4099, 0.0
  %v4127 = vmax.f32 %v4015, 0.0
  %v4128 = vmax.f32 %v4044, 0.0
  %v4129 = vmax.f32 %v4073, 0.0
  %v4130 = vmax.f32 %v4102, 0.0
  %v4131 = vmax.f32 %v4017, 0.0
  %v4132 = vmax.f32 %v4046, 0.0
  %v4133 = vmax.f32 %v4075, 0.0
  %v4134 = vmax.f32 %v4104, 0.0
  %v4135 = vmax.f32 %v4020, 0.0
  %v4136 = vmax.f32 %v4049, 0.0
  %v4137 = vmax.f32 %v4078, 0.0
  %v4138 = vmax.f32 %v4107, 0.0
  %v4139 = vmax.f32 %v4022, 0.0
  %v4140 = vmax.f32 %v4051, 0.0
  %v4141 = vmax.f32 %v4080, 0.0
  %v4142 = vmax.f32 %v4109, 0.0
  %v4143 = vpack.c.bf16 %v4115, %v4111
  %v4144 = vpack.c.bf16 %v4116, %v4112
  %v4145 = vpack.c.bf16 %v4117, %v4113
  %v4146 = vpack.c.bf16 %v4118, %v4114
  %v4147 = vpack.c.bf16 %v4123, %v4119
  %v4148 = vpack.c.bf16 %v4124, %v4120
  %v4149 = vpack.c.bf16 %v4125, %v4121
  %v4150 = vpack.c.bf16 %v4126, %v4122
  %v4151 = vpack.c.bf16 %v4131, %v4127
  %v4152 = vpack.c.bf16 %v4132, %v4128
  %v4153 = vpack.c.bf16 %v4133, %v4129
  %v4154 = vpack.c.bf16 %v4134, %v4130
  %v4155 = vpack.c.bf16 %v4139, %v4135
  %v4156 = vpack.c.bf16 %v4140, %v4136
  %v4157 = vpack.c.bf16 %v4141, %v4137
  %v4158 = vpack.c.bf16 %v4142, %v4138
  %v4159 = vld [vmem:[%s15 + $0x100] sm:$0xf]
  %v4160 = vld [vmem:[%s15 + $0x104] sm:$0xf]
  %v4161 = vld [vmem:[%s15 + $0x108] sm:$0xf]
  %v4162 = vld [vmem:[%s15 + $0x10c] sm:$0xf]
  %v4163 = vld [vmem:[%s15 + $0x110] sm:$0xf]
  %v4164 = vld [vmem:[%s15 + $0x114] sm:$0xf]
  %v4165 = vld [vmem:[%s15 + $0x118] sm:$0xf]
  %v4166 = vld [vmem:[%s15 + $0x11c] sm:$0xf]
  %v4167 = vld [vmem:[%s15 + $0x120] sm:$0xf]
  %v4168 = vld [vmem:[%s15 + $0x124] sm:$0xf]
  %v4169 = vld [vmem:[%s15 + $0x128] sm:$0xf]
  %v4170 = vld [vmem:[%s15 + $0x12c] sm:$0xf]
  %v4171 = vld [vmem:[%s15 + $0x130] sm:$0xf]
  %v4172 = vld [vmem:[%s15 + $0x134] sm:$0xf]
  %v4173 = vld [vmem:[%s15 + $0x138] sm:$0xf]
  %v4174 = vld [vmem:[%s15 + $0x13c] sm:$0xf]
  %v4175 = vld [vmem:[%s15 + $0x140] sm:$0xf]
  %v4176 = vld [vmem:[%s15 + $0x144] sm:$0xf]
  %v4177 = vld [vmem:[%s15 + $0x148] sm:$0xf]
  %v4178 = vld [vmem:[%s15 + $0x14c] sm:$0xf]
  %v4179 = vld [vmem:[%s15 + $0x150] sm:$0xf]
  %v4180 = vld [vmem:[%s15 + $0x154] sm:$0xf]
  %v4181 = vld [vmem:[%s15 + $0x158] sm:$0xf]
  %v4182 = vld [vmem:[%s15 + $0x15c] sm:$0xf]
  %v4183 = vld [vmem:[%s15 + $0x160] sm:$0xf]
  %v4184 = vld [vmem:[%s15 + $0x164] sm:$0xf]
  %v4185 = vld [vmem:[%s15 + $0x168] sm:$0xf]
  %v4186 = vld [vmem:[%s15 + $0x16c] sm:$0xf]
  %v4187 = vld [vmem:[%s15 + $0x170] sm:$0xf]
  %v4188 = vld [vmem:[%s15 + $0x174] sm:$0xf]
  %v4189 = vld [vmem:[%s15 + $0x178] sm:$0xf]
  %v4190 = vld [vmem:[%s15 + $0x17c] sm:$0xf]
  %v4191 = vld [vmem:[%s15 + $0x180] sm:$0xf]
  %v4192 = vld [vmem:[%s15 + $0x184] sm:$0xf]
  %v4193 = vld [vmem:[%s15 + $0x188] sm:$0xf]
  %v4194 = vld [vmem:[%s15 + $0x18c] sm:$0xf]
  %v4195 = vld [vmem:[%s15 + $0x190] sm:$0xf]
  %v4196 = vld [vmem:[%s15 + $0x194] sm:$0xf]
  %v4197 = vld [vmem:[%s15 + $0x198] sm:$0xf]
  %v4198 = vld [vmem:[%s15 + $0x19c] sm:$0xf]
  %v4199 = vld [vmem:[%s15 + $0x1a0] sm:$0xf]
  %v4200 = vld [vmem:[%s15 + $0x1a4] sm:$0xf]
  %v4201 = vld [vmem:[%s15 + $0x1a8] sm:$0xf]
  %v4202 = vld [vmem:[%s15 + $0x1ac] sm:$0xf]
  %v4203 = vld [vmem:[%s15 + $0x1b0] sm:$0xf]
  %v4204 = vld [vmem:[%s15 + $0x1b4] sm:$0xf]
  %v4205 = vld [vmem:[%s15 + $0x1b8] sm:$0xf]
  %v4206 = vld [vmem:[%s15 + $0x1bc] sm:$0xf]
  %v4207 = vld [vmem:[%s15 + $0x1c0] sm:$0xf]
  %v4208 = vld [vmem:[%s15 + $0x1c4] sm:$0xf]
  %v4209 = vld [vmem:[%s15 + $0x1c8] sm:$0xf]
  %v4210 = vld [vmem:[%s15 + $0x1cc] sm:$0xf]
  %v4211 = vld [vmem:[%s15 + $0x1d0] sm:$0xf]
  %v4212 = vld [vmem:[%s15 + $0x1d4] sm:$0xf]
  %v4213 = vld [vmem:[%s15 + $0x1d8] sm:$0xf]
  %v4214 = vld [vmem:[%s15 + $0x1dc] sm:$0xf]
  %v4215 = vld [vmem:[%s15 + $0x1e0] sm:$0xf]
  %v4216 = vld [vmem:[%s15 + $0x1e4] sm:$0xf]
  %v4217 = vld [vmem:[%s15 + $0x1e8] sm:$0xf]
  %v4218 = vld [vmem:[%s15 + $0x1ec] sm:$0xf]
  %v4219 = vld [vmem:[%s15 + $0x1f0] sm:$0xf]
  %v4220 = vld [vmem:[%s15 + $0x1f4] sm:$0xf]
  %v4221 = vld [vmem:[%s15 + $0x1f8] sm:$0xf]
  %v4222 = vld [vmem:[%s15 + $0x1fc] sm:$0xf]
  %v4287 = vunpack.c.l.b16 %v4159
  %v4288 = vunpack.c.l.b16 %v4160
  %v4289 = vunpack.c.l.b16 %v4161
  %v4290 = vunpack.c.l.b16 %v4162
  %v4291 = vunpack.c.l.b16 %v4163
  %v4292 = vunpack.c.l.b16 %v4164
  %v4293 = vunpack.c.l.b16 %v4165
  %v4294 = vunpack.c.l.b16 %v4166
  %v4295 = vunpack.c.l.b16 %v4167
  %v4296 = vunpack.c.l.b16 %v4168
  %v4297 = vunpack.c.l.b16 %v4169
  %v4298 = vunpack.c.l.b16 %v4170
  %v4299 = vunpack.c.l.b16 %v4171
  %v4300 = vunpack.c.l.b16 %v4172
  %v4301 = vunpack.c.l.b16 %v4173
  %v4302 = vunpack.c.l.b16 %v4174
  %v4303 = vunpack.c.l.b16 %v4175
  %v4304 = vunpack.c.l.b16 %v4176
  %v4305 = vunpack.c.l.b16 %v4177
  %v4306 = vunpack.c.l.b16 %v4178
  %v4307 = vunpack.c.l.b16 %v4179
  %v4308 = vunpack.c.l.b16 %v4180
  %v4309 = vunpack.c.l.b16 %v4181
  %v4310 = vunpack.c.l.b16 %v4182
  %v4311 = vunpack.c.l.b16 %v4183
  %v4312 = vunpack.c.l.b16 %v4184
  %v4313 = vunpack.c.l.b16 %v4185
  %v4314 = vunpack.c.l.b16 %v4186
  %v4315 = vunpack.c.l.b16 %v4187
  %v4316 = vunpack.c.l.b16 %v4188
  %v4317 = vunpack.c.l.b16 %v4189
  %v4318 = vunpack.c.l.b16 %v4190
  %v4319 = vunpack.c.l.b16 %v4191
  %v4320 = vunpack.c.l.b16 %v4192
  %v4321 = vunpack.c.l.b16 %v4193
  %v4322 = vunpack.c.l.b16 %v4194
  %v4323 = vunpack.c.l.b16 %v4195
  %v4324 = vunpack.c.l.b16 %v4196
  %v4325 = vunpack.c.l.b16 %v4197
  %v4326 = vunpack.c.l.b16 %v4198
  %v4327 = vunpack.c.l.b16 %v4199
  %v4328 = vunpack.c.l.b16 %v4200
  %v4329 = vunpack.c.l.b16 %v4201
  %v4330 = vunpack.c.l.b16 %v4202
  %v4331 = vunpack.c.l.b16 %v4203
  %v4332 = vunpack.c.l.b16 %v4204
  %v4333 = vunpack.c.l.b16 %v4205
  %v4334 = vunpack.c.l.b16 %v4206
  %v4335 = vunpack.c.l.b16 %v4207
  %v4336 = vunpack.c.l.b16 %v4208
  %v4337 = vunpack.c.l.b16 %v4209
  %v4338 = vunpack.c.l.b16 %v4210
  %v4339 = vunpack.c.l.b16 %v4211
  %v4340 = vunpack.c.l.b16 %v4212
  %v4341 = vunpack.c.l.b16 %v4213
  %v4342 = vunpack.c.l.b16 %v4214
  %v4343 = vunpack.c.l.b16 %v4215
  %v4344 = vunpack.c.l.b16 %v4216
  %v4345 = vunpack.c.l.b16 %v4217
  %v4346 = vunpack.c.l.b16 %v4218
  %v4347 = vunpack.c.l.b16 %v4219
  %v4348 = vunpack.c.l.b16 %v4220
  %v4349 = vunpack.c.l.b16 %v4221
  %v4350 = vunpack.c.l.b16 %v4222
  %v4351 = vpack.c.b16 %v4288, %v4287
  %v4352 = vpack.c.b16 %v4290, %v4289
  %v4353 = vpack.c.b16 %v4292, %v4291
  %v4354 = vpack.c.b16 %v4294, %v4293
  %v4355 = vpack.c.b16 %v4296, %v4295
  %v4356 = vpack.c.b16 %v4298, %v4297
  %v4357 = vpack.c.b16 %v4300, %v4299
  %v4358 = vpack.c.b16 %v4302, %v4301
  %v4359 = vpack.c.b16 %v4304, %v4303
  %v4360 = vpack.c.b16 %v4306, %v4305
  %v4361 = vpack.c.b16 %v4308, %v4307
  %v4362 = vpack.c.b16 %v4310, %v4309
  %v4363 = vpack.c.b16 %v4312, %v4311
  %v4364 = vpack.c.b16 %v4314, %v4313
  %v4365 = vpack.c.b16 %v4316, %v4315
  %v4366 = vpack.c.b16 %v4318, %v4317
  %v4367 = vpack.c.b16 %v4320, %v4319
  %v4368 = vpack.c.b16 %v4322, %v4321
  %v4369 = vpack.c.b16 %v4324, %v4323
  %v4370 = vpack.c.b16 %v4326, %v4325
  %v4371 = vpack.c.b16 %v4328, %v4327
  %v4372 = vpack.c.b16 %v4330, %v4329
  %v4373 = vpack.c.b16 %v4332, %v4331
  %v4374 = vpack.c.b16 %v4334, %v4333
  %v4375 = vpack.c.b16 %v4336, %v4335
  %v4376 = vpack.c.b16 %v4338, %v4337
  %v4377 = vpack.c.b16 %v4340, %v4339
  %v4378 = vpack.c.b16 %v4342, %v4341
  %v4379 = vpack.c.b16 %v4344, %v4343
  %v4380 = vpack.c.b16 %v4346, %v4345
  %v4381 = vpack.c.b16 %v4348, %v4347
  %v4382 = vpack.c.b16 %v4350, %v4349
  %4415 = vmatpush.bf16.msra.mxu0 %v4358
  %4416 = vmatpush.bf16.msra.mxu0 %v4357
  %4417 = vmatpush.bf16.msra.mxu0 %v4356
  %4418 = vmatpush.bf16.msra.mxu0 %v4355
  %4419 = vmatpush.bf16.msra.mxu0 %v4354
  %4420 = vmatpush.bf16.msra.mxu0 %v4353
  %4421 = vmatpush.bf16.msra.mxu0 %v4352
  %4422 = vmatpush.bf16.msra.mxu0 %v4351
  %4423 = vmatmul.bf16.gmra.mxu0 %v4143
  %v4424 = vpop.f32.mrf.mxu0
  %v4425 = vadd.f32 0.0, %v4424
  %v4426 = vpop.f32.mrf.mxu0
  %v4427 = vadd.f32 0.0, %v4426
  %4428 = vmatmul.bf16.gmra.mxu0 %v4147
  %v4429 = vpop.f32.mrf.mxu0
  %v4430 = vadd.f32 0.0, %v4429
  %v4431 = vpop.f32.mrf.mxu0
  %v4432 = vadd.f32 0.0, %v4431
  %4433 = vmatmul.bf16.gmra.mxu0 %v4151
  %v4434 = vpop.f32.mrf.mxu0
  %v4435 = vadd.f32 0.0, %v4434
  %v4436 = vpop.f32.mrf.mxu0
  %v4437 = vadd.f32 0.0, %v4436
  %4438 = vmatmul.bf16.gmra.mxu0 %v4155
  %v4439 = vpop.f32.mrf.mxu0
  %v4440 = vadd.f32 0.0, %v4439
  %v4441 = vpop.f32.mrf.mxu0
  %v4442 = vadd.f32 0.0, %v4441
  %4443 = vdwg.mxu0
  %4444 = vmatpush.bf16.msra.mxu0 %v4366
  %4445 = vmatpush.bf16.msra.mxu0 %v4365
  %4446 = vmatpush.bf16.msra.mxu0 %v4364
  %4447 = vmatpush.bf16.msra.mxu0 %v4363
  %4448 = vmatpush.bf16.msra.mxu0 %v4362
  %4449 = vmatpush.bf16.msra.mxu0 %v4361
  %4450 = vmatpush.bf16.msra.mxu0 %v4360
  %4451 = vmatpush.bf16.msra.mxu0 %v4359
  %4452 = vmatmul.bf16.gmra.mxu0 %v4144
  %v4453 = vpop.f32.mrf.mxu0
  %v4454 = vadd.f32 %v4425, %v4453
  %v4455 = vpop.f32.mrf.mxu0
  %v4456 = vadd.f32 %v4427, %v4455
  %4457 = vmatmul.bf16.gmra.mxu0 %v4148
  %v4458 = vpop.f32.mrf.mxu0
  %v4459 = vadd.f32 %v4430, %v4458
  %v4460 = vpop.f32.mrf.mxu0
  %v4461 = vadd.f32 %v4432, %v4460
  %4462 = vmatmul.bf16.gmra.mxu0 %v4152
  %v4463 = vpop.f32.mrf.mxu0
  %v4464 = vadd.f32 %v4435, %v4463
  %v4465 = vpop.f32.mrf.mxu0
  %v4466 = vadd.f32 %v4437, %v4465
  %4467 = vmatmul.bf16.gmra.mxu0 %v4156
  %v4468 = vpop.f32.mrf.mxu0
  %v4469 = vadd.f32 %v4440, %v4468
  %v4470 = vpop.f32.mrf.mxu0
  %v4471 = vadd.f32 %v4442, %v4470
  %4472 = vdwg.mxu0
  %4473 = vmatpush.bf16.msra.mxu0 %v4374
  %4474 = vmatpush.bf16.msra.mxu0 %v4373
  %4475 = vmatpush.bf16.msra.mxu0 %v4372
  %4476 = vmatpush.bf16.msra.mxu0 %v4371
  %4477 = vmatpush.bf16.msra.mxu0 %v4370
  %4478 = vmatpush.bf16.msra.mxu0 %v4369
  %4479 = vmatpush.bf16.msra.mxu0 %v4368
  %4480 = vmatpush.bf16.msra.mxu0 %v4367
  %4481 = vmatmul.bf16.gmra.mxu0 %v4145
  %v4482 = vpop.f32.mrf.mxu0
  %v4483 = vadd.f32 %v4454, %v4482
  %v4484 = vpop.f32.mrf.mxu0
  %v4485 = vadd.f32 %v4456, %v4484
  %4486 = vmatmul.bf16.gmra.mxu0 %v4149
  %v4487 = vpop.f32.mrf.mxu0
  %v4488 = vadd.f32 %v4459, %v4487
  %v4489 = vpop.f32.mrf.mxu0
  %v4490 = vadd.f32 %v4461, %v4489
  %4491 = vmatmul.bf16.gmra.mxu0 %v4153
  %v4492 = vpop.f32.mrf.mxu0
  %v4493 = vadd.f32 %v4464, %v4492
  %v4494 = vpop.f32.mrf.mxu0
  %v4495 = vadd.f32 %v4466, %v4494
  %4496 = vmatmul.bf16.gmra.mxu0 %v4157
  %v4497 = vpop.f32.mrf.mxu0
  %v4498 = vadd.f32 %v4469, %v4497
  %v4499 = vpop.f32.mrf.mxu0
  %v4500 = vadd.f32 %v4471, %v4499
  %4501 = vdwg.mxu0
  %4502 = vmatpush.bf16.msra.mxu0 %v4382
  %4503 = vmatpush.bf16.msra.mxu0 %v4381
  %4504 = vmatpush.bf16.msra.mxu0 %v4380
  %4505 = vmatpush.bf16.msra.mxu0 %v4379
  %4506 = vmatpush.bf16.msra.mxu0 %v4378
  %4507 = vmatpush.bf16.msra.mxu0 %v4377
  %4508 = vmatpush.bf16.msra.mxu0 %v4376
  %4509 = vmatpush.bf16.msra.mxu0 %v4375
  %4510 = vmatmul.bf16.gmra.mxu0 %v4146
  %v4511 = vpop.f32.mrf.mxu0
  %v4512 = vadd.f32 %v4483, %v4511
  %v4513 = vpop.f32.mrf.mxu0
  %v4514 = vadd.f32 %v4485, %v4513
  %4515 = vmatmul.bf16.gmra.mxu0 %v4150
  %v4516 = vpop.f32.mrf.mxu0
  %v4517 = vadd.f32 %v4488, %v4516
  %v4518 = vpop.f32.mrf.mxu0
  %v4519 = vadd.f32 %v4490, %v4518
  %4520 = vmatmul.bf16.gmra.mxu0 %v4154
  %v4521 = vpop.f32.mrf.mxu0
  %v4522 = vadd.f32 %v4493, %v4521
  %v4523 = vpop.f32.mrf.mxu0
  %v4524 = vadd.f32 %v4495, %v4523
  %4525 = vmatmul.bf16.gmra.mxu0 %v4158
  %v4526 = vpop.f32.mrf.mxu0
  %v4527 = vadd.f32 %v4498, %v4526
  %v4528 = vpop.f32.mrf.mxu0
  %v4529 = vadd.f32 %v4500, %v4528
  %4530 = vdwg.mxu0
  %v4595 = vunpack.c.l.b16 %v3897
  %v4596 = vunpack.c.l.b16 %v3898
  %v4597 = vunpack.c.l.b16 %v3899
  %v4598 = vunpack.c.l.b16 %v3900
  %v4599 = vunpack.c.l.b16 %v3901
  %v4600 = vunpack.c.l.b16 %v3902
  %v4601 = vunpack.c.l.b16 %v3903
  %v4602 = vunpack.c.l.b16 %v3904
  %v4603 = vunpack.c.l.b16 %v3905
  %v4604 = vunpack.c.l.b16 %v3906
  %v4605 = vunpack.c.l.b16 %v3907
  %v4606 = vunpack.c.l.b16 %v3908
  %v4607 = vunpack.c.l.b16 %v3909
  %v4608 = vunpack.c.l.b16 %v3910
  %v4609 = vunpack.c.l.b16 %v3911
  %v4610 = vunpack.c.l.b16 %v3912
  %v4611 = vunpack.c.l.b16 %v3913
  %v4612 = vunpack.c.l.b16 %v3914
  %v4613 = vunpack.c.l.b16 %v3915
  %v4614 = vunpack.c.l.b16 %v3916
  %v4615 = vunpack.c.l.b16 %v3917
  %v4616 = vunpack.c.l.b16 %v3918
  %v4617 = vunpack.c.l.b16 %v3919
  %v4618 = vunpack.c.l.b16 %v3920
  %v4619 = vunpack.c.l.b16 %v3921
  %v4620 = vunpack.c.l.b16 %v3922
  %v4621 = vunpack.c.l.b16 %v3923
  %v4622 = vunpack.c.l.b16 %v3924
  %v4623 = vunpack.c.l.b16 %v3925
  %v4624 = vunpack.c.l.b16 %v3926
  %v4625 = vunpack.c.l.b16 %v3927
  %v4626 = vunpack.c.l.b16 %v3928
  %v4627 = vunpack.c.l.b16 %v3929
  %v4628 = vunpack.c.l.b16 %v3930
  %v4629 = vunpack.c.l.b16 %v3931
  %v4630 = vunpack.c.l.b16 %v3932
  %v4631 = vunpack.c.l.b16 %v3933
  %v4632 = vunpack.c.l.b16 %v3934
  %v4633 = vunpack.c.l.b16 %v3935
  %v4634 = vunpack.c.l.b16 %v3936
  %v4635 = vunpack.c.l.b16 %v3937
  %v4636 = vunpack.c.l.b16 %v3938
  %v4637 = vunpack.c.l.b16 %v3939
  %v4638 = vunpack.c.l.b16 %v3940
  %v4639 = vunpack.c.l.b16 %v3941
  %v4640 = vunpack.c.l.b16 %v3942
  %v4641 = vunpack.c.l.b16 %v3943
  %v4642 = vunpack.c.l.b16 %v3944
  %v4643 = vunpack.c.l.b16 %v3945
  %v4644 = vunpack.c.l.b16 %v3946
  %v4645 = vunpack.c.l.b16 %v3947
  %v4646 = vunpack.c.l.b16 %v3948
  %v4647 = vunpack.c.l.b16 %v3949
  %v4648 = vunpack.c.l.b16 %v3950
  %v4649 = vunpack.c.l.b16 %v3951
  %v4650 = vunpack.c.l.b16 %v3952
  %v4651 = vunpack.c.l.b16 %v3953
  %v4652 = vunpack.c.l.b16 %v3954
  %v4653 = vunpack.c.l.b16 %v3955
  %v4654 = vunpack.c.l.b16 %v3956
  %v4655 = vunpack.c.l.b16 %v3957
  %v4656 = vunpack.c.l.b16 %v3958
  %v4657 = vunpack.c.l.b16 %v3959
  %v4658 = vunpack.c.l.b16 %v3960
  %v4659 = vpack.c.b16 %v4596, %v4595
  %v4660 = vpack.c.b16 %v4598, %v4597
  %v4661 = vpack.c.b16 %v4600, %v4599
  %v4662 = vpack.c.b16 %v4602, %v4601
  %v4663 = vpack.c.b16 %v4604, %v4603
  %v4664 = vpack.c.b16 %v4606, %v4605
  %v4665 = vpack.c.b16 %v4608, %v4607
  %v4666 = vpack.c.b16 %v4610, %v4609
  %v4667 = vpack.c.b16 %v4612, %v4611
  %v4668 = vpack.c.b16 %v4614, %v4613
  %v4669 = vpack.c.b16 %v4616, %v4615
  %v4670 = vpack.c.b16 %v4618, %v4617
  %v4671 = vpack.c.b16 %v4620, %v4619
  %v4672 = vpack.c.b16 %v4622, %v4621
  %v4673 = vpack.c.b16 %v4624, %v4623
  %v4674 = vpack.c.b16 %v4626, %v4625
  %v4675 = vpack.c.b16 %v4628, %v4627
  %v4676 = vpack.c.b16 %v4630, %v4629
  %v4677 = vpack.c.b16 %v4632, %v4631
  %v4678 = vpack.c.b16 %v4634, %v4633
  %v4679 = vpack.c.b16 %v4636, %v4635
  %v4680 = vpack.c.b16 %v4638, %v4637
  %v4681 = vpack.c.b16 %v4640, %v4639
  %v4682 = vpack.c.b16 %v4642, %v4641
  %v4683 = vpack.c.b16 %v4644, %v4643
  %v4684 = vpack.c.b16 %v4646, %v4645
  %v4685 = vpack.c.b16 %v4648, %v4647
  %v4686 = vpack.c.b16 %v4650, %v4649
  %v4687 = vpack.c.b16 %v4652, %v4651
  %v4688 = vpack.c.b16 %v4654, %v4653
  %v4689 = vpack.c.b16 %v4656, %v4655
  %v4690 = vpack.c.b16 %v4658, %v4657
  %4723 = vmatpush.bf16.msra.mxu0 %v4666
  %4724 = vmatpush.bf16.msra.mxu0 %v4665
  %4725 = vmatpush.bf16.msra.mxu0 %v4664
  %4726 = vmatpush.bf16.msra.mxu0 %v4663
  %4727 = vmatpush.bf16.msra.mxu0 %v4662
  %4728 = vmatpush.bf16.msra.mxu0 %v4661
  %4729 = vmatpush.bf16.msra.mxu0 %v4660
  %4730 = vmatpush.bf16.msra.mxu0 %v4659
  %4731 = vmatmul.bf16.gmra.mxu0 %v3881
  %v4732 = vpop.f32.mrf.mxu0
  %v4733 = vadd.f32 %v4512, %v4732
  %v4734 = vpop.f32.mrf.mxu0
  %v4735 = vadd.f32 %v4514, %v4734
  %4736 = vmatmul.bf16.gmra.mxu0 %v3885
  %v4737 = vpop.f32.mrf.mxu0
  %v4738 = vadd.f32 %v4517, %v4737
  %v4739 = vpop.f32.mrf.mxu0
  %v4740 = vadd.f32 %v4519, %v4739
  %4741 = vmatmul.bf16.gmra.mxu0 %v3889
  %v4742 = vpop.f32.mrf.mxu0
  %v4743 = vadd.f32 %v4522, %v4742
  %v4744 = vpop.f32.mrf.mxu0
  %v4745 = vadd.f32 %v4524, %v4744
  %4746 = vmatmul.bf16.gmra.mxu0 %v3893
  %v4747 = vpop.f32.mrf.mxu0
  %v4748 = vadd.f32 %v4527, %v4747
  %v4749 = vpop.f32.mrf.mxu0
  %v4750 = vadd.f32 %v4529, %v4749
  %4751 = vdwg.mxu0
  %4752 = vmatpush.bf16.msra.mxu0 %v4674
  %4753 = vmatpush.bf16.msra.mxu0 %v4673
  %4754 = vmatpush.bf16.msra.mxu0 %v4672
  %4755 = vmatpush.bf16.msra.mxu0 %v4671
  %4756 = vmatpush.bf16.msra.mxu0 %v4670
  %4757 = vmatpush.bf16.msra.mxu0 %v4669
  %4758 = vmatpush.bf16.msra.mxu0 %v4668
  %4759 = vmatpush.bf16.msra.mxu0 %v4667
  %4760 = vmatmul.bf16.gmra.mxu0 %v3882
  %v4761 = vpop.f32.mrf.mxu0
  %v4762 = vadd.f32 %v4733, %v4761
  %v4763 = vpop.f32.mrf.mxu0
  %v4764 = vadd.f32 %v4735, %v4763
  %4765 = vmatmul.bf16.gmra.mxu0 %v3886
  %v4766 = vpop.f32.mrf.mxu0
  %v4767 = vadd.f32 %v4738, %v4766
  %v4768 = vpop.f32.mrf.mxu0
  %v4769 = vadd.f32 %v4740, %v4768
  %4770 = vmatmul.bf16.gmra.mxu0 %v3890
  %v4771 = vpop.f32.mrf.mxu0
  %v4772 = vadd.f32 %v4743, %v4771
  %v4773 = vpop.f32.mrf.mxu0
  %v4774 = vadd.f32 %v4745, %v4773
  %4775 = vmatmul.bf16.gmra.mxu0 %v3894
  %v4776 = vpop.f32.mrf.mxu0
  %v4777 = vadd.f32 %v4748, %v4776
  %v4778 = vpop.f32.mrf.mxu0
  %v4779 = vadd.f32 %v4750, %v4778
  %4780 = vdwg.mxu0
  %4781 = vmatpush.bf16.msra.mxu0 %v4682
  %4782 = vmatpush.bf16.msra.mxu0 %v4681
  %4783 = vmatpush.bf16.msra.mxu0 %v4680
  %4784 = vmatpush.bf16.msra.mxu0 %v4679
  %4785 = vmatpush.bf16.msra.mxu0 %v4678
  %4786 = vmatpush.bf16.msra.mxu0 %v4677
  %4787 = vmatpush.bf16.msra.mxu0 %v4676
  %4788 = vmatpush.bf16.msra.mxu0 %v4675
  %4789 = vmatmul.bf16.gmra.mxu0 %v3883
  %v4790 = vpop.f32.mrf.mxu0
  %v4791 = vadd.f32 %v4762, %v4790
  %v4792 = vpop.f32.mrf.mxu0
  %v4793 = vadd.f32 %v4764, %v4792
  %4794 = vmatmul.bf16.gmra.mxu0 %v3887
  %v4795 = vpop.f32.mrf.mxu0
  %v4796 = vadd.f32 %v4767, %v4795
  %v4797 = vpop.f32.mrf.mxu0
  %v4798 = vadd.f32 %v4769, %v4797
  %4799 = vmatmul.bf16.gmra.mxu0 %v3891
  %v4800 = vpop.f32.mrf.mxu0
  %v4801 = vadd.f32 %v4772, %v4800
  %v4802 = vpop.f32.mrf.mxu0
  %v4803 = vadd.f32 %v4774, %v4802
  %4804 = vmatmul.bf16.gmra.mxu0 %v3895
  %v4805 = vpop.f32.mrf.mxu0
  %v4806 = vadd.f32 %v4777, %v4805
  %v4807 = vpop.f32.mrf.mxu0
  %v4808 = vadd.f32 %v4779, %v4807
  %4809 = vdwg.mxu0
  %4810 = vmatpush.bf16.msra.mxu0 %v4690
  %4811 = vmatpush.bf16.msra.mxu0 %v4689
  %4812 = vmatpush.bf16.msra.mxu0 %v4688
  %4813 = vmatpush.bf16.msra.mxu0 %v4687
  %4814 = vmatpush.bf16.msra.mxu0 %v4686
  %4815 = vmatpush.bf16.msra.mxu0 %v4685
  %4816 = vmatpush.bf16.msra.mxu0 %v4684
  %4817 = vmatpush.bf16.msra.mxu0 %v4683
  %4818 = vmatmul.bf16.gmra.mxu0 %v3884
  %v4819 = vpop.f32.mrf.mxu0
  %v4820 = vadd.f32 %v4791, %v4819
  %v4821 = vpop.f32.mrf.mxu0
  %v4822 = vadd.f32 %v4793, %v4821
  %4823 = vmatmul.bf16.gmra.mxu0 %v3888
  %v4824 = vpop.f32.mrf.mxu0
  %v4825 = vadd.f32 %v4796, %v4824
  %v4826 = vpop.f32.mrf.mxu0
  %v4827 = vadd.f32 %v4798, %v4826
  %4828 = vmatmul.bf16.gmra.mxu0 %v3892
  %v4829 = vpop.f32.mrf.mxu0
  %v4830 = vadd.f32 %v4801, %v4829
  %v4831 = vpop.f32.mrf.mxu0
  %v4832 = vadd.f32 %v4803, %v4831
  %4833 = vmatmul.bf16.gmra.mxu0 %v3896
  %v4834 = vpop.f32.mrf.mxu0
  %v4835 = vadd.f32 %v4806, %v4834
  %v4836 = vpop.f32.mrf.mxu0
  %v4837 = vadd.f32 %v4808, %v4836
  %4838 = vdwg.mxu0
  %v4839 = vld [vmem:[%s13 + $0x20] sm:$0xff]
  %v4840 = vld [vmem:[%s13 + $0x28] sm:$0xff]
  %v4841 = vld [vmem:[%s14 + $0x8] sm:$0xf]
  %v4843 = vperm.slane %v4841, 0
  %v4844 = vperm.slane %v4841, 1
  %v4845 = vperm.slane %v4841, 2
  %v4846 = vperm.slane %v4841, 3
  %v4853 = vunpack.c.l.b16 %v4839
  %v4854 = vunpack.c.h.b16 %v4839
  %v4855 = vunpack.c.l.b16 %v4840
  %v4856 = vunpack.c.h.b16 %v4840
  %v4857 = vpack.c.b16 %v4853, %v4853
  %v4858 = vpack.c.b16 %v4854, %v4854
  %v4859 = vpack.c.b16 %v4855, %v4855
  %v4860 = vpack.c.b16 %v4856, %v4856
  %v4862 = vsel %vm3720, %v4857, 0
  %v4865 = vsel %vm3720, %v4858, 0
  %v4868 = vsel %vm3720, %v4859, 0
  %v4871 = vsel %vm3720, %v4860, 0
  %4873 = vmatpush.bf16.msra.mxu0 0
  %4874 = vmatpush.bf16.msra.mxu0 0
  %4875 = vmatpush.bf16.msra.mxu0 0
  %4876 = vmatpush.bf16.msra.mxu0 0
  %4877 = vmatpush.bf16.msra.mxu0 0
  %4878 = vmatpush.bf16.msra.mxu0 0
  %4879 = vmatpush.bf16.msra.mxu0 0
  %4880 = vmatpush.bf16.msra.mxu0 %v4862
  %4881 = vmatmul.bf16.gmra.mxu0 %v3709
  %v4882 = vpop.f32.mrf.mxu0
  %v4883 = vadd.f32 %v4843, %v4882
  %v4884 = vpop.f32.mrf.mxu0
  %v4885 = vadd.f32 %v4843, %v4884
  %4886 = vmatmul.bf16.gmra.mxu0 %v3712
  %v4887 = vpop.f32.mrf.mxu0
  %v4888 = vadd.f32 %v4843, %v4887
  %v4889 = vpop.f32.mrf.mxu0
  %v4890 = vadd.f32 %v4843, %v4889
  %4891 = vmatmul.bf16.gmra.mxu0 %v3715
  %v4892 = vpop.f32.mrf.mxu0
  %v4893 = vadd.f32 %v4843, %v4892
  %v4894 = vpop.f32.mrf.mxu0
  %v4895 = vadd.f32 %v4843, %v4894
  %4896 = vmatmul.bf16.gmra.mxu0 %v3718
  %v4897 = vpop.f32.mrf.mxu0
  %v4898 = vadd.f32 %v4843, %v4897
  %v4899 = vpop.f32.mrf.mxu0
  %v4900 = vadd.f32 %v4843, %v4899
  %4901 = vdwg.mxu0
  %4902 = vmatpush.bf16.msra.mxu0 0
  %4903 = vmatpush.bf16.msra.mxu0 0
  %4904 = vmatpush.bf16.msra.mxu0 0
  %4905 = vmatpush.bf16.msra.mxu0 0
  %4906 = vmatpush.bf16.msra.mxu0 0
  %4907 = vmatpush.bf16.msra.mxu0 0
  %4908 = vmatpush.bf16.msra.mxu0 0
  %4909 = vmatpush.bf16.msra.mxu0 %v4865
  %4910 = vmatmul.bf16.gmra.mxu0 %v3709
  %v4911 = vpop.f32.mrf.mxu0
  %v4912 = vadd.f32 %v4844, %v4911
  %v4913 = vpop.f32.mrf.mxu0
  %v4914 = vadd.f32 %v4844, %v4913
  %4915 = vmatmul.bf16.gmra.mxu0 %v3712
  %v4916 = vpop.f32.mrf.mxu0
  %v4917 = vadd.f32 %v4844, %v4916
  %v4918 = vpop.f32.mrf.mxu0
  %v4919 = vadd.f32 %v4844, %v4918
  %4920 = vmatmul.bf16.gmra.mxu0 %v3715
  %v4921 = vpop.f32.mrf.mxu0
  %v4922 = vadd.f32 %v4844, %v4921
  %v4923 = vpop.f32.mrf.mxu0
  %v4924 = vadd.f32 %v4844, %v4923
  %4925 = vmatmul.bf16.gmra.mxu0 %v3718
  %v4926 = vpop.f32.mrf.mxu0
  %v4927 = vadd.f32 %v4844, %v4926
  %v4928 = vpop.f32.mrf.mxu0
  %v4929 = vadd.f32 %v4844, %v4928
  %4930 = vdwg.mxu0
  %4931 = vmatpush.bf16.msra.mxu0 0
  %4932 = vmatpush.bf16.msra.mxu0 0
  %4933 = vmatpush.bf16.msra.mxu0 0
  %4934 = vmatpush.bf16.msra.mxu0 0
  %4935 = vmatpush.bf16.msra.mxu0 0
  %4936 = vmatpush.bf16.msra.mxu0 0
  %4937 = vmatpush.bf16.msra.mxu0 0
  %4938 = vmatpush.bf16.msra.mxu0 %v4868
  %4939 = vmatmul.bf16.gmra.mxu0 %v3709
  %v4940 = vpop.f32.mrf.mxu0
  %v4941 = vadd.f32 %v4845, %v4940
  %v4942 = vpop.f32.mrf.mxu0
  %v4943 = vadd.f32 %v4845, %v4942
  %4944 = vmatmul.bf16.gmra.mxu0 %v3712
  %v4945 = vpop.f32.mrf.mxu0
  %v4946 = vadd.f32 %v4845, %v4945
  %v4947 = vpop.f32.mrf.mxu0
  %v4948 = vadd.f32 %v4845, %v4947
  %4949 = vmatmul.bf16.gmra.mxu0 %v3715
  %v4950 = vpop.f32.mrf.mxu0
  %v4951 = vadd.f32 %v4845, %v4950
  %v4952 = vpop.f32.mrf.mxu0
  %v4953 = vadd.f32 %v4845, %v4952
  %4954 = vmatmul.bf16.gmra.mxu0 %v3718
  %v4955 = vpop.f32.mrf.mxu0
  %v4956 = vadd.f32 %v4845, %v4955
  %v4957 = vpop.f32.mrf.mxu0
  %v4958 = vadd.f32 %v4845, %v4957
  %4959 = vdwg.mxu0
  %4960 = vmatpush.bf16.msra.mxu0 0
  %4961 = vmatpush.bf16.msra.mxu0 0
  %4962 = vmatpush.bf16.msra.mxu0 0
  %4963 = vmatpush.bf16.msra.mxu0 0
  %4964 = vmatpush.bf16.msra.mxu0 0
  %4965 = vmatpush.bf16.msra.mxu0 0
  %4966 = vmatpush.bf16.msra.mxu0 0
  %4967 = vmatpush.bf16.msra.mxu0 %v4871
  %4968 = vmatmul.bf16.gmra.mxu0 %v3709
  %v4969 = vpop.f32.mrf.mxu0
  %v4970 = vadd.f32 %v4846, %v4969
  %v4971 = vpop.f32.mrf.mxu0
  %v4972 = vadd.f32 %v4846, %v4971
  %4973 = vmatmul.bf16.gmra.mxu0 %v3712
  %v4974 = vpop.f32.mrf.mxu0
  %v4975 = vadd.f32 %v4846, %v4974
  %v4976 = vpop.f32.mrf.mxu0
  %v4977 = vadd.f32 %v4846, %v4976
  %4978 = vmatmul.bf16.gmra.mxu0 %v3715
  %v4979 = vpop.f32.mrf.mxu0
  %v4980 = vadd.f32 %v4846, %v4979
  %v4981 = vpop.f32.mrf.mxu0
  %v4982 = vadd.f32 %v4846, %v4981
  %4983 = vmatmul.bf16.gmra.mxu0 %v3718
  %v4984 = vpop.f32.mrf.mxu0
  %v4985 = vadd.f32 %v4846, %v4984
  %v4986 = vpop.f32.mrf.mxu0
  %v4987 = vadd.f32 %v4846, %v4986
  %4988 = vdwg.mxu0
  %v4989 = vmax.f32 %v4883, 0.0
  %v4990 = vmax.f32 %v4912, 0.0
  %v4991 = vmax.f32 %v4941, 0.0
  %v4992 = vmax.f32 %v4970, 0.0
  %v4993 = vmax.f32 %v4885, 0.0
  %v4994 = vmax.f32 %v4914, 0.0
  %v4995 = vmax.f32 %v4943, 0.0
  %v4996 = vmax.f32 %v4972, 0.0
  %v4997 = vmax.f32 %v4888, 0.0
  %v4998 = vmax.f32 %v4917, 0.0
  %v4999 = vmax.f32 %v4946, 0.0
  %v5000 = vmax.f32 %v4975, 0.0
  %v5001 = vmax.f32 %v4890, 0.0
  %v5002 = vmax.f32 %v4919, 0.0
  %v5003 = vmax.f32 %v4948, 0.0
  %v5004 = vmax.f32 %v4977, 0.0
  %v5005 = vmax.f32 %v4893, 0.0
  %v5006 = vmax.f32 %v4922, 0.0
  %v5007 = vmax.f32 %v4951, 0.0
  %v5008 = vmax.f32 %v4980, 0.0
  %v5009 = vmax.f32 %v4895, 0.0
  %v5010 = vmax.f32 %v4924, 0.0
  %v5011 = vmax.f32 %v4953, 0.0
  %v5012 = vmax.f32 %v4982, 0.0
  %v5013 = vmax.f32 %v4898, 0.0
  %v5014 = vmax.f32 %v4927, 0.0
  %v5015 = vmax.f32 %v4956, 0.0
  %v5016 = vmax.f32 %v4985, 0.0
  %v5017 = vmax.f32 %v4900, 0.0
  %v5018 = vmax.f32 %v4929, 0.0
  %v5019 = vmax.f32 %v4958, 0.0
  %v5020 = vmax.f32 %v4987, 0.0
  %v5021 = vpack.c.bf16 %v4993, %v4989
  %v5022 = vpack.c.bf16 %v4994, %v4990
  %v5023 = vpack.c.bf16 %v4995, %v4991
  %v5024 = vpack.c.bf16 %v4996, %v4992
  %v5025 = vpack.c.bf16 %v5001, %v4997
  %v5026 = vpack.c.bf16 %v5002, %v4998
  %v5027 = vpack.c.bf16 %v5003, %v4999
  %v5028 = vpack.c.bf16 %v5004, %v5000
  %v5029 = vpack.c.bf16 %v5009, %v5005
  %v5030 = vpack.c.bf16 %v5010, %v5006
  %v5031 = vpack.c.bf16 %v5011, %v5007
  %v5032 = vpack.c.bf16 %v5012, %v5008
  %v5033 = vpack.c.bf16 %v5017, %v5013
  %v5034 = vpack.c.bf16 %v5018, %v5014
  %v5035 = vpack.c.bf16 %v5019, %v5015
  %v5036 = vpack.c.bf16 %v5020, %v5016
  %v5037 = vld [vmem:[%s15 + $0x200] sm:$0xf]
  %v5038 = vld [vmem:[%s15 + $0x204] sm:$0xf]
  %v5039 = vld [vmem:[%s15 + $0x208] sm:$0xf]
  %v5040 = vld [vmem:[%s15 + $0x20c] sm:$0xf]
  %v5041 = vld [vmem:[%s15 + $0x210] sm:$0xf]
  %v5042 = vld [vmem:[%s15 + $0x214] sm:$0xf]
  %v5043 = vld [vmem:[%s15 + $0x218] sm:$0xf]
  %v5044 = vld [vmem:[%s15 + $0x21c] sm:$0xf]
  %v5045 = vld [vmem:[%s15 + $0x220] sm:$0xf]
  %v5046 = vld [vmem:[%s15 + $0x224] sm:$0xf]
  %v5047 = vld [vmem:[%s15 + $0x228] sm:$0xf]
  %v5048 = vld [vmem:[%s15 + $0x22c] sm:$0xf]
  %v5049 = vld [vmem:[%s15 + $0x230] sm:$0xf]
  %v5050 = vld [vmem:[%s15 + $0x234] sm:$0xf]
  %v5051 = vld [vmem:[%s15 + $0x238] sm:$0xf]
  %v5052 = vld [vmem:[%s15 + $0x23c] sm:$0xf]
  %v5053 = vld [vmem:[%s15 + $0x240] sm:$0xf]
  %v5054 = vld [vmem:[%s15 + $0x244] sm:$0xf]
  %v5055 = vld [vmem:[%s15 + $0x248] sm:$0xf]
  %v5056 = vld [vmem:[%s15 + $0x24c] sm:$0xf]
  %v5057 = vld [vmem:[%s15 + $0x250] sm:$0xf]
  %v5058 = vld [vmem:[%s15 + $0x254] sm:$0xf]
  %v5059 = vld [vmem:[%s15 + $0x258] sm:$0xf]
  %v5060 = vld [vmem:[%s15 + $0x25c] sm:$0xf]
  %v5061 = vld [vmem:[%s15 + $0x260] sm:$0xf]
  %v5062 = vld [vmem:[%s15 + $0x264] sm:$0xf]
  %v5063 = vld [vmem:[%s15 + $0x268] sm:$0xf]
  %v5064 = vld [vmem:[%s15 + $0x26c] sm:$0xf]
  %v5065 = vld [vmem:[%s15 + $0x270] sm:$0xf]
  %v5066 = vld [vmem:[%s15 + $0x274] sm:$0xf]
  %v5067 = vld [vmem:[%s15 + $0x278] sm:$0xf]
  %v5068 = vld [vmem:[%s15 + $0x27c] sm:$0xf]
  %v5069 = vld [vmem:[%s15 + $0x280] sm:$0xf]
  %v5070 = vld [vmem:[%s15 + $0x284] sm:$0xf]
  %v5071 = vld [vmem:[%s15 + $0x288] sm:$0xf]
  %v5072 = vld [vmem:[%s15 + $0x28c] sm:$0xf]
  %v5073 = vld [vmem:[%s15 + $0x290] sm:$0xf]
  %v5074 = vld [vmem:[%s15 + $0x294] sm:$0xf]
  %v5075 = vld [vmem:[%s15 + $0x298] sm:$0xf]
  %v5076 = vld [vmem:[%s15 + $0x29c] sm:$0xf]
  %v5077 = vld [vmem:[%s15 + $0x2a0] sm:$0xf]
  %v5078 = vld [vmem:[%s15 + $0x2a4] sm:$0xf]
  %v5079 = vld [vmem:[%s15 + $0x2a8] sm:$0xf]
  %v5080 = vld [vmem:[%s15 + $0x2ac] sm:$0xf]
  %v5081 = vld [vmem:[%s15 + $0x2b0] sm:$0xf]
  %v5082 = vld [vmem:[%s15 + $0x2b4] sm:$0xf]
  %v5083 = vld [vmem:[%s15 + $0x2b8] sm:$0xf]
  %v5084 = vld [vmem:[%s15 + $0x2bc] sm:$0xf]
  %v5085 = vld [vmem:[%s15 + $0x2c0] sm:$0xf]
  %v5086 = vld [vmem:[%s15 + $0x2c4] sm:$0xf]
  %v5087 = vld [vmem:[%s15 + $0x2c8] sm:$0xf]
  %v5088 = vld [vmem:[%s15 + $0x2cc] sm:$0xf]
  %v5089 = vld [vmem:[%s15 + $0x2d0] sm:$0xf]
  %v5090 = vld [vmem:[%s15 + $0x2d4] sm:$0xf]
  %v5091 = vld [vmem:[%s15 + $0x2d8] sm:$0xf]
  %v5092 = vld [vmem:[%s15 + $0x2dc] sm:$0xf]
  %v5093 = vld [vmem:[%s15 + $0x2e0] sm:$0xf]
  %v5094 = vld [vmem:[%s15 + $0x2e4] sm:$0xf]
  %v5095 = vld [vmem:[%s15 + $0x2e8] sm:$0xf]
  %v5096 = vld [vmem:[%s15 + $0x2ec] sm:$0xf]
  %v5097 = vld [vmem:[%s15 + $0x2f0] sm:$0xf]
  %v5098 = vld [vmem:[%s15 + $0x2f4] sm:$0xf]
  %v5099 = vld [vmem:[%s15 + $0x2f8] sm:$0xf]
  %v5100 = vld [vmem:[%s15 + $0x2fc] sm:$0xf]
  %v5165 = vunpack.c.l.b16 %v5037
  %v5166 = vunpack.c.l.b16 %v5038
  %v5167 = vunpack.c.l.b16 %v5039
  %v5168 = vunpack.c.l.b16 %v5040
  %v5169 = vunpack.c.l.b16 %v5041
  %v5170 = vunpack.c.l.b16 %v5042
  %v5171 = vunpack.c.l.b16 %v5043
  %v5172 = vunpack.c.l.b16 %v5044
  %v5173 = vunpack.c.l.b16 %v5045
  %v5174 = vunpack.c.l.b16 %v5046
  %v5175 = vunpack.c.l.b16 %v5047
  %v5176 = vunpack.c.l.b16 %v5048
  %v5177 = vunpack.c.l.b16 %v5049
  %v5178 = vunpack.c.l.b16 %v5050
  %v5179 = vunpack.c.l.b16 %v5051
  %v5180 = vunpack.c.l.b16 %v5052
  %v5181 = vunpack.c.l.b16 %v5053
  %v5182 = vunpack.c.l.b16 %v5054
  %v5183 = vunpack.c.l.b16 %v5055
  %v5184 = vunpack.c.l.b16 %v5056
  %v5185 = vunpack.c.l.b16 %v5057
  %v5186 = vunpack.c.l.b16 %v5058
  %v5187 = vunpack.c.l.b16 %v5059
  %v5188 = vunpack.c.l.b16 %v5060
  %v5189 = vunpack.c.l.b16 %v5061
  %v5190 = vunpack.c.l.b16 %v5062
  %v5191 = vunpack.c.l.b16 %v5063
  %v5192 = vunpack.c.l.b16 %v5064
  %v5193 = vunpack.c.l.b16 %v5065
  %v5194 = vunpack.c.l.b16 %v5066
  %v5195 = vunpack.c.l.b16 %v5067
  %v5196 = vunpack.c.l.b16 %v5068
  %v5197 = vunpack.c.l.b16 %v5069
  %v5198 = vunpack.c.l.b16 %v5070
  %v5199 = vunpack.c.l.b16 %v5071
  %v5200 = vunpack.c.l.b16 %v5072
  %v5201 = vunpack.c.l.b16 %v5073
  %v5202 = vunpack.c.l.b16 %v5074
  %v5203 = vunpack.c.l.b16 %v5075
  %v5204 = vunpack.c.l.b16 %v5076
  %v5205 = vunpack.c.l.b16 %v5077
  %v5206 = vunpack.c.l.b16 %v5078
  %v5207 = vunpack.c.l.b16 %v5079
  %v5208 = vunpack.c.l.b16 %v5080
  %v5209 = vunpack.c.l.b16 %v5081
  %v5210 = vunpack.c.l.b16 %v5082
  %v5211 = vunpack.c.l.b16 %v5083
  %v5212 = vunpack.c.l.b16 %v5084
  %v5213 = vunpack.c.l.b16 %v5085
  %v5214 = vunpack.c.l.b16 %v5086
  %v5215 = vunpack.c.l.b16 %v5087
  %v5216 = vunpack.c.l.b16 %v5088
  %v5217 = vunpack.c.l.b16 %v5089
  %v5218 = vunpack.c.l.b16 %v5090
  %v5219 = vunpack.c.l.b16 %v5091
  %v5220 = vunpack.c.l.b16 %v5092
  %v5221 = vunpack.c.l.b16 %v5093
  %v5222 = vunpack.c.l.b16 %v5094
  %v5223 = vunpack.c.l.b16 %v5095
  %v5224 = vunpack.c.l.b16 %v5096
  %v5225 = vunpack.c.l.b16 %v5097
  %v5226 = vunpack.c.l.b16 %v5098
  %v5227 = vunpack.c.l.b16 %v5099
  %v5228 = vunpack.c.l.b16 %v5100
  %v5229 = vpack.c.b16 %v5166, %v5165
  %v5230 = vpack.c.b16 %v5168, %v5167
  %v5231 = vpack.c.b16 %v5170, %v5169
  %v5232 = vpack.c.b16 %v5172, %v5171
  %v5233 = vpack.c.b16 %v5174, %v5173
  %v5234 = vpack.c.b16 %v5176, %v5175
  %v5235 = vpack.c.b16 %v5178, %v5177
  %v5236 = vpack.c.b16 %v5180, %v5179
  %v5237 = vpack.c.b16 %v5182, %v5181
  %v5238 = vpack.c.b16 %v5184, %v5183
  %v5239 = vpack.c.b16 %v5186, %v5185
  %v5240 = vpack.c.b16 %v5188, %v5187
  %v5241 = vpack.c.b16 %v5190, %v5189
  %v5242 = vpack.c.b16 %v5192, %v5191
  %v5243 = vpack.c.b16 %v5194, %v5193
  %v5244 = vpack.c.b16 %v5196, %v5195
  %v5245 = vpack.c.b16 %v5198, %v5197
  %v5246 = vpack.c.b16 %v5200, %v5199
  %v5247 = vpack.c.b16 %v5202, %v5201
  %v5248 = vpack.c.b16 %v5204, %v5203
  %v5249 = vpack.c.b16 %v5206, %v5205
  %v5250 = vpack.c.b16 %v5208, %v5207
  %v5251 = vpack.c.b16 %v5210, %v5209
  %v5252 = vpack.c.b16 %v5212, %v5211
  %v5253 = vpack.c.b16 %v5214, %v5213
  %v5254 = vpack.c.b16 %v5216, %v5215
  %v5255 = vpack.c.b16 %v5218, %v5217
  %v5256 = vpack.c.b16 %v5220, %v5219
  %v5257 = vpack.c.b16 %v5222, %v5221
  %v5258 = vpack.c.b16 %v5224, %v5223
  %v5259 = vpack.c.b16 %v5226, %v5225
  %v5260 = vpack.c.b16 %v5228, %v5227
  %5293 = vmatpush.bf16.msra.mxu0 %v5236
  %5294 = vmatpush.bf16.msra.mxu0 %v5235
  %5295 = vmatpush.bf16.msra.mxu0 %v5234
  %5296 = vmatpush.bf16.msra.mxu0 %v5233
  %5297 = vmatpush.bf16.msra.mxu0 %v5232
  %5298 = vmatpush.bf16.msra.mxu0 %v5231
  %5299 = vmatpush.bf16.msra.mxu0 %v5230
  %5300 = vmatpush.bf16.msra.mxu0 %v5229
  %5301 = vmatmul.bf16.gmra.mxu0 %v5021
  %v5302 = vpop.f32.mrf.mxu0
  %v5303 = vadd.f32 0.0, %v5302
  %v5304 = vpop.f32.mrf.mxu0
  %v5305 = vadd.f32 0.0, %v5304
  %5306 = vmatmul.bf16.gmra.mxu0 %v5025
  %v5307 = vpop.f32.mrf.mxu0
  %v5308 = vadd.f32 0.0, %v5307
  %v5309 = vpop.f32.mrf.mxu0
  %v5310 = vadd.f32 0.0, %v5309
  %5311 = vmatmul.bf16.gmra.mxu0 %v5029
  %v5312 = vpop.f32.mrf.mxu0
  %v5313 = vadd.f32 0.0, %v5312
  %v5314 = vpop.f32.mrf.mxu0
  %v5315 = vadd.f32 0.0, %v5314
  %5316 = vmatmul.bf16.gmra.mxu0 %v5033
  %v5317 = vpop.f32.mrf.mxu0
  %v5318 = vadd.f32 0.0, %v5317
  %v5319 = vpop.f32.mrf.mxu0
  %v5320 = vadd.f32 0.0, %v5319
  %5321 = vdwg.mxu0
  %5322 = vmatpush.bf16.msra.mxu0 %v5244
  %5323 = vmatpush.bf16.msra.mxu0 %v5243
  %5324 = vmatpush.bf16.msra.mxu0 %v5242
  %5325 = vmatpush.bf16.msra.mxu0 %v5241
  %5326 = vmatpush.bf16.msra.mxu0 %v5240
  %5327 = vmatpush.bf16.msra.mxu0 %v5239
  %5328 = vmatpush.bf16.msra.mxu0 %v5238
  %5329 = vmatpush.bf16.msra.mxu0 %v5237
  %5330 = vmatmul.bf16.gmra.mxu0 %v5022
  %v5331 = vpop.f32.mrf.mxu0
  %v5332 = vadd.f32 %v5303, %v5331
  %v5333 = vpop.f32.mrf.mxu0
  %v5334 = vadd.f32 %v5305, %v5333
  %5335 = vmatmul.bf16.gmra.mxu0 %v5026
  %v5336 = vpop.f32.mrf.mxu0
  %v5337 = vadd.f32 %v5308, %v5336
  %v5338 = vpop.f32.mrf.mxu0
  %v5339 = vadd.f32 %v5310, %v5338
  %5340 = vmatmul.bf16.gmra.mxu0 %v5030
  %v5341 = vpop.f32.mrf.mxu0
  %v5342 = vadd.f32 %v5313, %v5341
  %v5343 = vpop.f32.mrf.mxu0
  %v5344 = vadd.f32 %v5315, %v5343
  %5345 = vmatmul.bf16.gmra.mxu0 %v5034
  %v5346 = vpop.f32.mrf.mxu0
  %v5347 = vadd.f32 %v5318, %v5346
  %v5348 = vpop.f32.mrf.mxu0
  %v5349 = vadd.f32 %v5320, %v5348
  %5350 = vdwg.mxu0
  %5351 = vmatpush.bf16.msra.mxu0 %v5252
  %5352 = vmatpush.bf16.msra.mxu0 %v5251
  %5353 = vmatpush.bf16.msra.mxu0 %v5250
  %5354 = vmatpush.bf16.msra.mxu0 %v5249
  %5355 = vmatpush.bf16.msra.mxu0 %v5248
  %5356 = vmatpush.bf16.msra.mxu0 %v5247
  %5357 = vmatpush.bf16.msra.mxu0 %v5246
  %5358 = vmatpush.bf16.msra.mxu0 %v5245
  %5359 = vmatmul.bf16.gmra.mxu0 %v5023
  %v5360 = vpop.f32.mrf.mxu0
  %v5361 = vadd.f32 %v5332, %v5360
  %v5362 = vpop.f32.mrf.mxu0
  %v5363 = vadd.f32 %v5334, %v5362
  %5364 = vmatmul.bf16.gmra.mxu0 %v5027
  %v5365 = vpop.f32.mrf.mxu0
  %v5366 = vadd.f32 %v5337, %v5365
  %v5367 = vpop.f32.mrf.mxu0
  %v5368 = vadd.f32 %v5339, %v5367
  %5369 = vmatmul.bf16.gmra.mxu0 %v5031
  %v5370 = vpop.f32.mrf.mxu0
  %v5371 = vadd.f32 %v5342, %v5370
  %v5372 = vpop.f32.mrf.mxu0
  %v5373 = vadd.f32 %v5344, %v5372
  %5374 = vmatmul.bf16.gmra.mxu0 %v5035
  %v5375 = vpop.f32.mrf.mxu0
  %v5376 = vadd.f32 %v5347, %v5375
  %v5377 = vpop.f32.mrf.mxu0
  %v5378 = vadd.f32 %v5349, %v5377
  %5379 = vdwg.mxu0
  %5380 = vmatpush.bf16.msra.mxu0 %v5260
  %5381 = vmatpush.bf16.msra.mxu0 %v5259
  %5382 = vmatpush.bf16.msra.mxu0 %v5258
  %5383 = vmatpush.bf16.msra.mxu0 %v5257
  %5384 = vmatpush.bf16.msra.mxu0 %v5256
  %5385 = vmatpush.bf16.msra.mxu0 %v5255
  %5386 = vmatpush.bf16.msra.mxu0 %v5254
  %5387 = vmatpush.bf16.msra.mxu0 %v5253
  %5388 = vmatmul.bf16.gmra.mxu0 %v5024
  %v5389 = vpop.f32.mrf.mxu0
  %v5390 = vadd.f32 %v5361, %v5389
  %v5391 = vpop.f32.mrf.mxu0
  %v5392 = vadd.f32 %v5363, %v5391
  %5393 = vmatmul.bf16.gmra.mxu0 %v5028
  %v5394 = vpop.f32.mrf.mxu0
  %v5395 = vadd.f32 %v5366, %v5394
  %v5396 = vpop.f32.mrf.mxu0
  %v5397 = vadd.f32 %v5368, %v5396
  %5398 = vmatmul.bf16.gmra.mxu0 %v5032
  %v5399 = vpop.f32.mrf.mxu0
  %v5400 = vadd.f32 %v5371, %v5399
  %v5401 = vpop.f32.mrf.mxu0
  %v5402 = vadd.f32 %v5373, %v5401
  %5403 = vmatmul.bf16.gmra.mxu0 %v5036
  %v5404 = vpop.f32.mrf.mxu0
  %v5405 = vadd.f32 %v5376, %v5404
  %v5406 = vpop.f32.mrf.mxu0
  %v5407 = vadd.f32 %v5378, %v5406
  %5408 = vdwg.mxu0
  %v5409 = vadd.f32 %v4820, %v5390
  %v5410 = vadd.f32 %v4822, %v5392
  %v5411 = vadd.f32 %v4825, %v5395
  %v5412 = vadd.f32 %v4827, %v5397
  %v5413 = vadd.f32 %v4830, %v5400
  %v5414 = vadd.f32 %v4832, %v5402
  %v5415 = vadd.f32 %v4835, %v5405
  %v5416 = vadd.f32 %v4837, %v5407
  %v5417 = vld [vmem:[%s13 + $0x30] sm:$0xff]
  %v5418 = vld [vmem:[%s13 + $0x38] sm:$0xff]
  %v5419 = vld [vmem:[%s14 + $0xc] sm:$0xf]
  %v5421 = vperm.slane %v5419, 0
  %v5422 = vperm.slane %v5419, 1
  %v5423 = vperm.slane %v5419, 2
  %v5424 = vperm.slane %v5419, 3
  %v5431 = vunpack.c.l.b16 %v5417
  %v5432 = vunpack.c.h.b16 %v5417
  %v5433 = vunpack.c.l.b16 %v5418
  %v5434 = vunpack.c.h.b16 %v5418
  %v5435 = vpack.c.b16 %v5431, %v5431
  %v5436 = vpack.c.b16 %v5432, %v5432
  %v5437 = vpack.c.b16 %v5433, %v5433
  %v5438 = vpack.c.b16 %v5434, %v5434
  %v5440 = vsel %vm3720, %v5435, 0
  %v5443 = vsel %vm3720, %v5436, 0
  %v5446 = vsel %vm3720, %v5437, 0
  %v5449 = vsel %vm3720, %v5438, 0
  %5451 = vmatpush.bf16.msra.mxu0 0
  %5452 = vmatpush.bf16.msra.mxu0 0
  %5453 = vmatpush.bf16.msra.mxu0 0
  %5454 = vmatpush.bf16.msra.mxu0 0
  %5455 = vmatpush.bf16.msra.mxu0 0
  %5456 = vmatpush.bf16.msra.mxu0 0
  %5457 = vmatpush.bf16.msra.mxu0 0
  %5458 = vmatpush.bf16.msra.mxu0 %v5440
  %5459 = vmatmul.bf16.gmra.mxu0 %v3709
  %v5460 = vpop.f32.mrf.mxu0
  %v5461 = vadd.f32 %v5421, %v5460
  %v5462 = vpop.f32.mrf.mxu0
  %v5463 = vadd.f32 %v5421, %v5462
  %5464 = vmatmul.bf16.gmra.mxu0 %v3712
  %v5465 = vpop.f32.mrf.mxu0
  %v5466 = vadd.f32 %v5421, %v5465
  %v5467 = vpop.f32.mrf.mxu0
  %v5468 = vadd.f32 %v5421, %v5467
  %5469 = vmatmul.bf16.gmra.mxu0 %v3715
  %v5470 = vpop.f32.mrf.mxu0
  %v5471 = vadd.f32 %v5421, %v5470
  %v5472 = vpop.f32.mrf.mxu0
  %v5473 = vadd.f32 %v5421, %v5472
  %5474 = vmatmul.bf16.gmra.mxu0 %v3718
  %v5475 = vpop.f32.mrf.mxu0
  %v5476 = vadd.f32 %v5421, %v5475
  %v5477 = vpop.f32.mrf.mxu0
  %v5478 = vadd.f32 %v5421, %v5477
  %5479 = vdwg.mxu0
  %5480 = vmatpush.bf16.msra.mxu0 0
  %5481 = vmatpush.bf16.msra.mxu0 0
  %5482 = vmatpush.bf16.msra.mxu0 0
  %5483 = vmatpush.bf16.msra.mxu0 0
  %5484 = vmatpush.bf16.msra.mxu0 0
  %5485 = vmatpush.bf16.msra.mxu0 0
  %5486 = vmatpush.bf16.msra.mxu0 0
  %5487 = vmatpush.bf16.msra.mxu0 %v5443
  %5488 = vmatmul.bf16.gmra.mxu0 %v3709
  %v5489 = vpop.f32.mrf.mxu0
  %v5490 = vadd.f32 %v5422, %v5489
  %v5491 = vpop.f32.mrf.mxu0
  %v5492 = vadd.f32 %v5422, %v5491
  %5493 = vmatmul.bf16.gmra.mxu0 %v3712
  %v5494 = vpop.f32.mrf.mxu0
  %v5495 = vadd.f32 %v5422, %v5494
  %v5496 = vpop.f32.mrf.mxu0
  %v5497 = vadd.f32 %v5422, %v5496
  %5498 = vmatmul.bf16.gmra.mxu0 %v3715
  %v5499 = vpop.f32.mrf.mxu0
  %v5500 = vadd.f32 %v5422, %v5499
  %v5501 = vpop.f32.mrf.mxu0
  %v5502 = vadd.f32 %v5422, %v5501
  %5503 = vmatmul.bf16.gmra.mxu0 %v3718
  %v5504 = vpop.f32.mrf.mxu0
  %v5505 = vadd.f32 %v5422, %v5504
  %v5506 = vpop.f32.mrf.mxu0
  %v5507 = vadd.f32 %v5422, %v5506
  %5508 = vdwg.mxu0
  %5509 = vmatpush.bf16.msra.mxu0 0
  %5510 = vmatpush.bf16.msra.mxu0 0
  %5511 = vmatpush.bf16.msra.mxu0 0
  %5512 = vmatpush.bf16.msra.mxu0 0
  %5513 = vmatpush.bf16.msra.mxu0 0
  %5514 = vmatpush.bf16.msra.mxu0 0
  %5515 = vmatpush.bf16.msra.mxu0 0
  %5516 = vmatpush.bf16.msra.mxu0 %v5446
  %5517 = vmatmul.bf16.gmra.mxu0 %v3709
  %v5518 = vpop.f32.mrf.mxu0
  %v5519 = vadd.f32 %v5423, %v5518
  %v5520 = vpop.f32.mrf.mxu0
  %v5521 = vadd.f32 %v5423, %v5520
  %5522 = vmatmul.bf16.gmra.mxu0 %v3712
  %v5523 = vpop.f32.mrf.mxu0
  %v5524 = vadd.f32 %v5423, %v5523
  %v5525 = vpop.f32.mrf.mxu0
  %v5526 = vadd.f32 %v5423, %v5525
  %5527 = vmatmul.bf16.gmra.mxu0 %v3715
  %v5528 = vpop.f32.mrf.mxu0
  %v5529 = vadd.f32 %v5423, %v5528
  %v5530 = vpop.f32.mrf.mxu0
  %v5531 = vadd.f32 %v5423, %v5530
  %5532 = vmatmul.bf16.gmra.mxu0 %v3718
  %v5533 = vpop.f32.mrf.mxu0
  %v5534 = vadd.f32 %v5423, %v5533
  %v5535 = vpop.f32.mrf.mxu0
  %v5536 = vadd.f32 %v5423, %v5535
  %5537 = vdwg.mxu0
  %5538 = vmatpush.bf16.msra.mxu0 0
  %5539 = vmatpush.bf16.msra.mxu0 0
  %5540 = vmatpush.bf16.msra.mxu0 0
  %5541 = vmatpush.bf16.msra.mxu0 0
  %5542 = vmatpush.bf16.msra.mxu0 0
  %5543 = vmatpush.bf16.msra.mxu0 0
  %5544 = vmatpush.bf16.msra.mxu0 0
  %5545 = vmatpush.bf16.msra.mxu0 %v5449
  %5546 = vmatmul.bf16.gmra.mxu0 %v3709
  %v5547 = vpop.f32.mrf.mxu0
  %v5548 = vadd.f32 %v5424, %v5547
  %v5549 = vpop.f32.mrf.mxu0
  %v5550 = vadd.f32 %v5424, %v5549
  %5551 = vmatmul.bf16.gmra.mxu0 %v3712
  %v5552 = vpop.f32.mrf.mxu0
  %v5553 = vadd.f32 %v5424, %v5552
  %v5554 = vpop.f32.mrf.mxu0
  %v5555 = vadd.f32 %v5424, %v5554
  %5556 = vmatmul.bf16.gmra.mxu0 %v3715
  %v5557 = vpop.f32.mrf.mxu0
  %v5558 = vadd.f32 %v5424, %v5557
  %v5559 = vpop.f32.mrf.mxu0
  %v5560 = vadd.f32 %v5424, %v5559
  %5561 = vmatmul.bf16.gmra.mxu0 %v3718
  %v5562 = vpop.f32.mrf.mxu0
  %v5563 = vadd.f32 %v5424, %v5562
  %v5564 = vpop.f32.mrf.mxu0
  %v5565 = vadd.f32 %v5424, %v5564
  %5566 = vdwg.mxu0
  %v5567 = vmax.f32 %v5461, 0.0
  %v5568 = vmax.f32 %v5490, 0.0
  %v5569 = vmax.f32 %v5519, 0.0
  %v5570 = vmax.f32 %v5548, 0.0
  %v5571 = vmax.f32 %v5463, 0.0
  %v5572 = vmax.f32 %v5492, 0.0
  %v5573 = vmax.f32 %v5521, 0.0
  %v5574 = vmax.f32 %v5550, 0.0
  %v5575 = vmax.f32 %v5466, 0.0
  %v5576 = vmax.f32 %v5495, 0.0
  %v5577 = vmax.f32 %v5524, 0.0
  %v5578 = vmax.f32 %v5553, 0.0
  %v5579 = vmax.f32 %v5468, 0.0
  %v5580 = vmax.f32 %v5497, 0.0
  %v5581 = vmax.f32 %v5526, 0.0
  %v5582 = vmax.f32 %v5555, 0.0
  %v5583 = vmax.f32 %v5471, 0.0
  %v5584 = vmax.f32 %v5500, 0.0
  %v5585 = vmax.f32 %v5529, 0.0
  %v5586 = vmax.f32 %v5558, 0.0
  %v5587 = vmax.f32 %v5473, 0.0
  %v5588 = vmax.f32 %v5502, 0.0
  %v5589 = vmax.f32 %v5531, 0.0
  %v5590 = vmax.f32 %v5560, 0.0
  %v5591 = vmax.f32 %v5476, 0.0
  %v5592 = vmax.f32 %v5505, 0.0
  %v5593 = vmax.f32 %v5534, 0.0
  %v5594 = vmax.f32 %v5563, 0.0
  %v5595 = vmax.f32 %v5478, 0.0
  %v5596 = vmax.f32 %v5507, 0.0
  %v5597 = vmax.f32 %v5536, 0.0
  %v5598 = vmax.f32 %v5565, 0.0
  %v5599 = vpack.c.bf16 %v5571, %v5567
  %v5600 = vpack.c.bf16 %v5572, %v5568
  %v5601 = vpack.c.bf16 %v5573, %v5569
  %v5602 = vpack.c.bf16 %v5574, %v5570
  %v5603 = vpack.c.bf16 %v5579, %v5575
  %v5604 = vpack.c.bf16 %v5580, %v5576
  %v5605 = vpack.c.bf16 %v5581, %v5577
  %v5606 = vpack.c.bf16 %v5582, %v5578
  %v5607 = vpack.c.bf16 %v5587, %v5583
  %v5608 = vpack.c.bf16 %v5588, %v5584
  %v5609 = vpack.c.bf16 %v5589, %v5585
  %v5610 = vpack.c.bf16 %v5590, %v5586
  %v5611 = vpack.c.bf16 %v5595, %v5591
  %v5612 = vpack.c.bf16 %v5596, %v5592
  %v5613 = vpack.c.bf16 %v5597, %v5593
  %v5614 = vpack.c.bf16 %v5598, %v5594
  %v5615 = vld [vmem:[%s15 + $0x300] sm:$0xf]
  %v5616 = vld [vmem:[%s15 + $0x304] sm:$0xf]
  %v5617 = vld [vmem:[%s15 + $0x308] sm:$0xf]
  %v5618 = vld [vmem:[%s15 + $0x30c] sm:$0xf]
  %v5619 = vld [vmem:[%s15 + $0x310] sm:$0xf]
  %v5620 = vld [vmem:[%s15 + $0x314] sm:$0xf]
  %v5621 = vld [vmem:[%s15 + $0x318] sm:$0xf]
  %v5622 = vld [vmem:[%s15 + $0x31c] sm:$0xf]
  %v5623 = vld [vmem:[%s15 + $0x320] sm:$0xf]
  %v5624 = vld [vmem:[%s15 + $0x324] sm:$0xf]
  %v5625 = vld [vmem:[%s15 + $0x328] sm:$0xf]
  %v5626 = vld [vmem:[%s15 + $0x32c] sm:$0xf]
  %v5627 = vld [vmem:[%s15 + $0x330] sm:$0xf]
  %v5628 = vld [vmem:[%s15 + $0x334] sm:$0xf]
  %v5629 = vld [vmem:[%s15 + $0x338] sm:$0xf]
  %v5630 = vld [vmem:[%s15 + $0x33c] sm:$0xf]
  %v5631 = vld [vmem:[%s15 + $0x340] sm:$0xf]
  %v5632 = vld [vmem:[%s15 + $0x344] sm:$0xf]
  %v5633 = vld [vmem:[%s15 + $0x348] sm:$0xf]
  %v5634 = vld [vmem:[%s15 + $0x34c] sm:$0xf]
  %v5635 = vld [vmem:[%s15 + $0x350] sm:$0xf]
  %v5636 = vld [vmem:[%s15 + $0x354] sm:$0xf]
  %v5637 = vld [vmem:[%s15 + $0x358] sm:$0xf]
  %v5638 = vld [vmem:[%s15 + $0x35c] sm:$0xf]
  %v5639 = vld [vmem:[%s15 + $0x360] sm:$0xf]
  %v5640 = vld [vmem:[%s15 + $0x364] sm:$0xf]
  %v5641 = vld [vmem:[%s15 + $0x368] sm:$0xf]
  %v5642 = vld [vmem:[%s15 + $0x36c] sm:$0xf]
  %v5643 = vld [vmem:[%s15 + $0x370] sm:$0xf]
  %v5644 = vld [vmem:[%s15 + $0x374] sm:$0xf]
  %v5645 = vld [vmem:[%s15 + $0x378] sm:$0xf]
  %v5646 = vld [vmem:[%s15 + $0x37c] sm:$0xf]
  %v5647 = vld [vmem:[%s15 + $0x380] sm:$0xf]
  %v5648 = vld [vmem:[%s15 + $0x384] sm:$0xf]
  %v5649 = vld [vmem:[%s15 + $0x388] sm:$0xf]
  %v5650 = vld [vmem:[%s15 + $0x38c] sm:$0xf]
  %v5651 = vld [vmem:[%s15 + $0x390] sm:$0xf]
  %v5652 = vld [vmem:[%s15 + $0x394] sm:$0xf]
  %v5653 = vld [vmem:[%s15 + $0x398] sm:$0xf]
  %v5654 = vld [vmem:[%s15 + $0x39c] sm:$0xf]
  %v5655 = vld [vmem:[%s15 + $0x3a0] sm:$0xf]
  %v5656 = vld [vmem:[%s15 + $0x3a4] sm:$0xf]
  %v5657 = vld [vmem:[%s15 + $0x3a8] sm:$0xf]
  %v5658 = vld [vmem:[%s15 + $0x3ac] sm:$0xf]
  %v5659 = vld [vmem:[%s15 + $0x3b0] sm:$0xf]
  %v5660 = vld [vmem:[%s15 + $0x3b4] sm:$0xf]
  %v5661 = vld [vmem:[%s15 + $0x3b8] sm:$0xf]
  %v5662 = vld [vmem:[%s15 + $0x3bc] sm:$0xf]
  %v5663 = vld [vmem:[%s15 + $0x3c0] sm:$0xf]
  %v5664 = vld [vmem:[%s15 + $0x3c4] sm:$0xf]
  %v5665 = vld [vmem:[%s15 + $0x3c8] sm:$0xf]
  %v5666 = vld [vmem:[%s15 + $0x3cc] sm:$0xf]
  %v5667 = vld [vmem:[%s15 + $0x3d0] sm:$0xf]
  %v5668 = vld [vmem:[%s15 + $0x3d4] sm:$0xf]
  %v5669 = vld [vmem:[%s15 + $0x3d8] sm:$0xf]
  %v5670 = vld [vmem:[%s15 + $0x3dc] sm:$0xf]
  %v5671 = vld [vmem:[%s15 + $0x3e0] sm:$0xf]
  %v5672 = vld [vmem:[%s15 + $0x3e4] sm:$0xf]
  %v5673 = vld [vmem:[%s15 + $0x3e8] sm:$0xf]
  %v5674 = vld [vmem:[%s15 + $0x3ec] sm:$0xf]
  %v5675 = vld [vmem:[%s15 + $0x3f0] sm:$0xf]
  %v5676 = vld [vmem:[%s15 + $0x3f4] sm:$0xf]
  %v5677 = vld [vmem:[%s15 + $0x3f8] sm:$0xf]
  %v5678 = vld [vmem:[%s15 + $0x3fc] sm:$0xf]
  %v5743 = vunpack.c.l.b16 %v5615
  %v5744 = vunpack.c.l.b16 %v5616
  %v5745 = vunpack.c.l.b16 %v5617
  %v5746 = vunpack.c.l.b16 %v5618
  %v5747 = vunpack.c.l.b16 %v5619
  %v5748 = vunpack.c.l.b16 %v5620
  %v5749 = vunpack.c.l.b16 %v5621
  %v5750 = vunpack.c.l.b16 %v5622
  %v5751 = vunpack.c.l.b16 %v5623
  %v5752 = vunpack.c.l.b16 %v5624
  %v5753 = vunpack.c.l.b16 %v5625
  %v5754 = vunpack.c.l.b16 %v5626
  %v5755 = vunpack.c.l.b16 %v5627
  %v5756 = vunpack.c.l.b16 %v5628
  %v5757 = vunpack.c.l.b16 %v5629
  %v5758 = vunpack.c.l.b16 %v5630
  %v5759 = vunpack.c.l.b16 %v5631
  %v5760 = vunpack.c.l.b16 %v5632
  %v5761 = vunpack.c.l.b16 %v5633
  %v5762 = vunpack.c.l.b16 %v5634
  %v5763 = vunpack.c.l.b16 %v5635
  %v5764 = vunpack.c.l.b16 %v5636
  %v5765 = vunpack.c.l.b16 %v5637
  %v5766 = vunpack.c.l.b16 %v5638
  %v5767 = vunpack.c.l.b16 %v5639
  %v5768 = vunpack.c.l.b16 %v5640
  %v5769 = vunpack.c.l.b16 %v5641
  %v5770 = vunpack.c.l.b16 %v5642
  %v5771 = vunpack.c.l.b16 %v5643
  %v5772 = vunpack.c.l.b16 %v5644
  %v5773 = vunpack.c.l.b16 %v5645
  %v5774 = vunpack.c.l.b16 %v5646
  %v5775 = vunpack.c.l.b16 %v5647
  %v5776 = vunpack.c.l.b16 %v5648
  %v5777 = vunpack.c.l.b16 %v5649
  %v5778 = vunpack.c.l.b16 %v5650
  %v5779 = vunpack.c.l.b16 %v5651
  %v5780 = vunpack.c.l.b16 %v5652
  %v5781 = vunpack.c.l.b16 %v5653
  %v5782 = vunpack.c.l.b16 %v5654
  %v5783 = vunpack.c.l.b16 %v5655
  %v5784 = vunpack.c.l.b16 %v5656
  %v5785 = vunpack.c.l.b16 %v5657
  %v5786 = vunpack.c.l.b16 %v5658
  %v5787 = vunpack.c.l.b16 %v5659
  %v5788 = vunpack.c.l.b16 %v5660
  %v5789 = vunpack.c.l.b16 %v5661
  %v5790 = vunpack.c.l.b16 %v5662
  %v5791 = vunpack.c.l.b16 %v5663
  %v5792 = vunpack.c.l.b16 %v5664
  %v5793 = vunpack.c.l.b16 %v5665
  %v5794 = vunpack.c.l.b16 %v5666
  %v5795 = vunpack.c.l.b16 %v5667
  %v5796 = vunpack.c.l.b16 %v5668
  %v5797 = vunpack.c.l.b16 %v5669
  %v5798 = vunpack.c.l.b16 %v5670
  %v5799 = vunpack.c.l.b16 %v5671
  %v5800 = vunpack.c.l.b16 %v5672
  %v5801 = vunpack.c.l.b16 %v5673
  %v5802 = vunpack.c.l.b16 %v5674
  %v5803 = vunpack.c.l.b16 %v5675
  %v5804 = vunpack.c.l.b16 %v5676
  %v5805 = vunpack.c.l.b16 %v5677
  %v5806 = vunpack.c.l.b16 %v5678
  %v5807 = vpack.c.b16 %v5744, %v5743
  %v5808 = vpack.c.b16 %v5746, %v5745
  %v5809 = vpack.c.b16 %v5748, %v5747
  %v5810 = vpack.c.b16 %v5750, %v5749
  %v5811 = vpack.c.b16 %v5752, %v5751
  %v5812 = vpack.c.b16 %v5754, %v5753
  %v5813 = vpack.c.b16 %v5756, %v5755
  %v5814 = vpack.c.b16 %v5758, %v5757
  %v5815 = vpack.c.b16 %v5760, %v5759
  %v5816 = vpack.c.b16 %v5762, %v5761
  %v5817 = vpack.c.b16 %v5764, %v5763
  %v5818 = vpack.c.b16 %v5766, %v5765
  %v5819 = vpack.c.b16 %v5768, %v5767
  %v5820 = vpack.c.b16 %v5770, %v5769
  %v5821 = vpack.c.b16 %v5772, %v5771
  %v5822 = vpack.c.b16 %v5774, %v5773
  %v5823 = vpack.c.b16 %v5776, %v5775
  %v5824 = vpack.c.b16 %v5778, %v5777
  %v5825 = vpack.c.b16 %v5780, %v5779
  %v5826 = vpack.c.b16 %v5782, %v5781
  %v5827 = vpack.c.b16 %v5784, %v5783
  %v5828 = vpack.c.b16 %v5786, %v5785
  %v5829 = vpack.c.b16 %v5788, %v5787
  %v5830 = vpack.c.b16 %v5790, %v5789
  %v5831 = vpack.c.b16 %v5792, %v5791
  %v5832 = vpack.c.b16 %v5794, %v5793
  %v5833 = vpack.c.b16 %v5796, %v5795
  %v5834 = vpack.c.b16 %v5798, %v5797
  %v5835 = vpack.c.b16 %v5800, %v5799
  %v5836 = vpack.c.b16 %v5802, %v5801
  %v5837 = vpack.c.b16 %v5804, %v5803
  %v5838 = vpack.c.b16 %v5806, %v5805
  %5871 = vmatpush.bf16.msra.mxu0 %v5814
  %5872 = vmatpush.bf16.msra.mxu0 %v5813
  %5873 = vmatpush.bf16.msra.mxu0 %v5812
  %5874 = vmatpush.bf16.msra.mxu0 %v5811
  %5875 = vmatpush.bf16.msra.mxu0 %v5810
  %5876 = vmatpush.bf16.msra.mxu0 %v5809
  %5877 = vmatpush.bf16.msra.mxu0 %v5808
  %5878 = vmatpush.bf16.msra.mxu0 %v5807
  %5879 = vmatmul.bf16.gmra.mxu0 %v5599
  %v5880 = vpop.f32.mrf.mxu0
  %v5881 = vadd.f32 0.0, %v5880
  %v5882 = vpop.f32.mrf.mxu0
  %v5883 = vadd.f32 0.0, %v5882
  %5884 = vmatmul.bf16.gmra.mxu0 %v5603
  %v5885 = vpop.f32.mrf.mxu0
  %v5886 = vadd.f32 0.0, %v5885
  %v5887 = vpop.f32.mrf.mxu0
  %v5888 = vadd.f32 0.0, %v5887
  %5889 = vmatmul.bf16.gmra.mxu0 %v5607
  %v5890 = vpop.f32.mrf.mxu0
  %v5891 = vadd.f32 0.0, %v5890
  %v5892 = vpop.f32.mrf.mxu0
  %v5893 = vadd.f32 0.0, %v5892
  %5894 = vmatmul.bf16.gmra.mxu0 %v5611
  %v5895 = vpop.f32.mrf.mxu0
  %v5896 = vadd.f32 0.0, %v5895
  %v5897 = vpop.f32.mrf.mxu0
  %v5898 = vadd.f32 0.0, %v5897
  %5899 = vdwg.mxu0
  %5900 = vmatpush.bf16.msra.mxu0 %v5822
  %5901 = vmatpush.bf16.msra.mxu0 %v5821
  %5902 = vmatpush.bf16.msra.mxu0 %v5820
  %5903 = vmatpush.bf16.msra.mxu0 %v5819
  %5904 = vmatpush.bf16.msra.mxu0 %v5818
  %5905 = vmatpush.bf16.msra.mxu0 %v5817
  %5906 = vmatpush.bf16.msra.mxu0 %v5816
  %5907 = vmatpush.bf16.msra.mxu0 %v5815
  %5908 = vmatmul.bf16.gmra.mxu0 %v5600
  %v5909 = vpop.f32.mrf.mxu0
  %v5910 = vadd.f32 %v5881, %v5909
  %v5911 = vpop.f32.mrf.mxu0
  %v5912 = vadd.f32 %v5883, %v5911
  %5913 = vmatmul.bf16.gmra.mxu0 %v5604
  %v5914 = vpop.f32.mrf.mxu0
  %v5915 = vadd.f32 %v5886, %v5914
  %v5916 = vpop.f32.mrf.mxu0
  %v5917 = vadd.f32 %v5888, %v5916
  %5918 = vmatmul.bf16.gmra.mxu0 %v5608
  %v5919 = vpop.f32.mrf.mxu0
  %v5920 = vadd.f32 %v5891, %v5919
  %v5921 = vpop.f32.mrf.mxu0
  %v5922 = vadd.f32 %v5893, %v5921
  %5923 = vmatmul.bf16.gmra.mxu0 %v5612
  %v5924 = vpop.f32.mrf.mxu0
  %v5925 = vadd.f32 %v5896, %v5924
  %v5926 = vpop.f32.mrf.mxu0
  %v5927 = vadd.f32 %v5898, %v5926
  %5928 = vdwg.mxu0
  %5929 = vmatpush.bf16.msra.mxu0 %v5830
  %5930 = vmatpush.bf16.msra.mxu0 %v5829
  %5931 = vmatpush.bf16.msra.mxu0 %v5828
  %5932 = vmatpush.bf16.msra.mxu0 %v5827
  %5933 = vmatpush.bf16.msra.mxu0 %v5826
  %5934 = vmatpush.bf16.msra.mxu0 %v5825
  %5935 = vmatpush.bf16.msra.mxu0 %v5824
  %5936 = vmatpush.bf16.msra.mxu0 %v5823
  %5937 = vmatmul.bf16.gmra.mxu0 %v5601
  %v5938 = vpop.f32.mrf.mxu0
  %v5939 = vadd.f32 %v5910, %v5938
  %v5940 = vpop.f32.mrf.mxu0
  %v5941 = vadd.f32 %v5912, %v5940
  %5942 = vmatmul.bf16.gmra.mxu0 %v5605
  %v5943 = vpop.f32.mrf.mxu0
  %v5944 = vadd.f32 %v5915, %v5943
  %v5945 = vpop.f32.mrf.mxu0
  %v5946 = vadd.f32 %v5917, %v5945
  %5947 = vmatmul.bf16.gmra.mxu0 %v5609
  %v5948 = vpop.f32.mrf.mxu0
  %v5949 = vadd.f32 %v5920, %v5948
  %v5950 = vpop.f32.mrf.mxu0
  %v5951 = vadd.f32 %v5922, %v5950
  %5952 = vmatmul.bf16.gmra.mxu0 %v5613
  %v5953 = vpop.f32.mrf.mxu0
  %v5954 = vadd.f32 %v5925, %v5953
  %v5955 = vpop.f32.mrf.mxu0
  %v5956 = vadd.f32 %v5927, %v5955
  %5957 = vdwg.mxu0
  %5958 = vmatpush.bf16.msra.mxu0 %v5838
  %5959 = vmatpush.bf16.msra.mxu0 %v5837
  %5960 = vmatpush.bf16.msra.mxu0 %v5836
  %5961 = vmatpush.bf16.msra.mxu0 %v5835
  %5962 = vmatpush.bf16.msra.mxu0 %v5834
  %5963 = vmatpush.bf16.msra.mxu0 %v5833
  %5964 = vmatpush.bf16.msra.mxu0 %v5832
  %5965 = vmatpush.bf16.msra.mxu0 %v5831
  %5966 = vmatmul.bf16.gmra.mxu0 %v5602
  %v5967 = vpop.f32.mrf.mxu0
  %v5968 = vadd.f32 %v5939, %v5967
  %v5969 = vpop.f32.mrf.mxu0
  %v5970 = vadd.f32 %v5941, %v5969
  %5971 = vmatmul.bf16.gmra.mxu0 %v5606
  %v5972 = vpop.f32.mrf.mxu0
  %v5973 = vadd.f32 %v5944, %v5972
  %v5974 = vpop.f32.mrf.mxu0
  %v5975 = vadd.f32 %v5946, %v5974
  %5976 = vmatmul.bf16.gmra.mxu0 %v5610
  %v5977 = vpop.f32.mrf.mxu0
  %v5978 = vadd.f32 %v5949, %v5977
  %v5979 = vpop.f32.mrf.mxu0
  %v5980 = vadd.f32 %v5951, %v5979
  %5981 = vmatmul.bf16.gmra.mxu0 %v5614
  %v5982 = vpop.f32.mrf.mxu0
  %v5983 = vadd.f32 %v5954, %v5982
  %v5984 = vpop.f32.mrf.mxu0
  %v5985 = vadd.f32 %v5956, %v5984
  %5986 = vdwg.mxu0
  %v5987 = vadd.f32 %v5409, %v5968
  %v5988 = vadd.f32 %v5410, %v5970
  %v5989 = vadd.f32 %v5411, %v5973
  %v5990 = vadd.f32 %v5412, %v5975
  %v5991 = vadd.f32 %v5413, %v5978
  %v5992 = vadd.f32 %v5414, %v5980
  %v5993 = vadd.f32 %v5415, %v5983
  %v5994 = vadd.f32 %v5416, %v5985
  %v5995 = vld [vmem:[%s16] sm:$0x1]
  %v5997 = vperm.slane %v5995, 0
  %v5999 = vadd.f32 %v5987, %v5997
  %v6000 = vadd.f32 %v5988, %v5997
  %v6001 = vadd.f32 %v5989, %v5997
  %v6002 = vadd.f32 %v5990, %v5997
  %v6003 = vadd.f32 %v5991, %v5997
  %v6004 = vadd.f32 %v5992, %v5997
  %v6005 = vadd.f32 %v5993, %v5997
  %v6006 = vadd.f32 %v5994, %v5997
  %v6007 = vadd.f32 %v3674, %v5999
  %v6008 = vadd.f32 %v3675, %v6000
  %v6009 = vadd.f32 %v3676, %v6001
  %v6010 = vadd.f32 %v3677, %v6002
  %v6011 = vadd.f32 %v3678, %v6003
  %v6012 = vadd.f32 %v3679, %v6004
  %v6013 = vadd.f32 %v3680, %v6005
  %v6014 = vadd.f32 %v3681, %v6006
  %v6015 = vld [vmem:[%s11] sm:$0x1]
  %v6016 = vld [vmem:[%s12] sm:$0x1]
  %v6017 = vsel %vm304, %v6007, 0.0
  %6018 = vadd.xlane.f32.xlu0 %v6017
  %v6019 = vpop.xlane.xlu0 %6018
  %v6020 = vsel %vm304, %v6008, 0.0
  %6021 = vadd.xlane.f32.xlu0 %v6020
  %v6022 = vpop.xlane.xlu0 %6021
  %v6023 = vsel %vm304, %v6009, 0.0
  %6024 = vadd.xlane.f32.xlu0 %v6023
  %v6025 = vpop.xlane.xlu0 %6024
  %v6026 = vsel %vm304, %v6010, 0.0
  %6027 = vadd.xlane.f32.xlu0 %v6026
  %v6028 = vpop.xlane.xlu0 %6027
  %v6029 = vsel %vm304, %v6011, 0.0
  %6030 = vadd.xlane.f32.xlu0 %v6029
  %v6031 = vpop.xlane.xlu0 %6030
  %v6032 = vsel %vm304, %v6012, 0.0
  %6033 = vadd.xlane.f32.xlu0 %v6032
  %v6034 = vpop.xlane.xlu0 %6033
  %v6035 = vsel %vm304, %v6013, 0.0
  %6036 = vadd.xlane.f32.xlu0 %v6035
  %v6037 = vpop.xlane.xlu0 %6036
  %v6038 = vsel %vm304, %v6014, 0.0
  %6039 = vadd.xlane.f32.xlu0 %v6038
  %v6040 = vpop.xlane.xlu0 %6039
  %v6041 = vmul.f32 %v6019, %v3507
  %v6042 = vmul.f32 %v6022, %v3507
  %v6043 = vmul.f32 %v6025, %v3507
  %v6044 = vmul.f32 %v6028, %v3507
  %v6045 = vmul.f32 %v6031, %v3507
  %v6046 = vmul.f32 %v6034, %v3507
  %v6047 = vmul.f32 %v6037, %v3507
  %v6048 = vmul.f32 %v6040, %v3507
  %v6049 = vsub.f32 %v6007, %v6041
  %v6050 = vsub.f32 %v6008, %v6042
  %v6051 = vsub.f32 %v6009, %v6043
  %v6052 = vsub.f32 %v6010, %v6044
  %v6053 = vsub.f32 %v6011, %v6045
  %v6054 = vsub.f32 %v6012, %v6046
  %v6055 = vsub.f32 %v6013, %v6047
  %v6056 = vsub.f32 %v6014, %v6048
  %v6057 = vmul.f32 %v6049, %v6049
  %v6058 = vmul.f32 %v6050, %v6050
  %v6059 = vmul.f32 %v6051, %v6051
  %v6060 = vmul.f32 %v6052, %v6052
  %v6061 = vmul.f32 %v6053, %v6053
  %v6062 = vmul.f32 %v6054, %v6054
  %v6063 = vmul.f32 %v6055, %v6055
  %v6064 = vmul.f32 %v6056, %v6056
  %v6065 = vsel %vm304, %v6057, 0.0
  %6066 = vadd.xlane.f32.xlu0 %v6065
  %v6067 = vpop.xlane.xlu0 %6066
  %v6068 = vsel %vm304, %v6058, 0.0
  %6069 = vadd.xlane.f32.xlu0 %v6068
  %v6070 = vpop.xlane.xlu0 %6069
  %v6071 = vsel %vm304, %v6059, 0.0
  %6072 = vadd.xlane.f32.xlu0 %v6071
  %v6073 = vpop.xlane.xlu0 %6072
  %v6074 = vsel %vm304, %v6060, 0.0
  %6075 = vadd.xlane.f32.xlu0 %v6074
  %v6076 = vpop.xlane.xlu0 %6075
  %v6077 = vsel %vm304, %v6061, 0.0
  %6078 = vadd.xlane.f32.xlu0 %v6077
  %v6079 = vpop.xlane.xlu0 %6078
  %v6080 = vsel %vm304, %v6062, 0.0
  %6081 = vadd.xlane.f32.xlu0 %v6080
  %v6082 = vpop.xlane.xlu0 %6081
  %v6083 = vsel %vm304, %v6063, 0.0
  %6084 = vadd.xlane.f32.xlu0 %v6083
  %v6085 = vpop.xlane.xlu0 %6084
  %v6086 = vsel %vm304, %v6064, 0.0
  %6087 = vadd.xlane.f32.xlu0 %v6086
  %v6088 = vpop.xlane.xlu0 %6087
  %v6089 = vmul.f32 %v6067, %v3507
  %v6090 = vmul.f32 %v6070, %v3507
  %v6091 = vmul.f32 %v6073, %v3507
  %v6092 = vmul.f32 %v6076, %v3507
  %v6093 = vmul.f32 %v6079, %v3507
  %v6094 = vmul.f32 %v6082, %v3507
  %v6095 = vmul.f32 %v6085, %v3507
  %v6096 = vmul.f32 %v6088, %v3507
  %v6097 = vadd.f32 %v6089, 1e-05
  %v6098 = vadd.f32 %v6090, 1e-05
  %v6099 = vadd.f32 %v6091, 1e-05
  %v6100 = vadd.f32 %v6092, 1e-05
  %v6101 = vadd.f32 %v6093, 1e-05
  %v6102 = vadd.f32 %v6094, 1e-05
  %v6103 = vadd.f32 %v6095, 1e-05
  %v6104 = vadd.f32 %v6096, 1e-05
  %v6105 = vrsqrt.pop %v6097
  %v6106 = vmul.f32 %v6105, %v6097
  %v6107 = vmul.f32 %v6106, %v6105
  %v6108 = vmul.f32 0.5, %v6107
  %v6109 = vsub.f32 1.5, %v6108
  %v6110 = vmul.f32 %v6105, %v6109
  %vm6111 = vweird.f32 %v6097
  %vm6112 = vweird.f32 %v6105
  %vm6113 = vmor %vm6111, %vm6112
  %v6114 = vsel %vm6113, %v6105, %v6110
  %v6115 = vrsqrt.pop %v6098
  %v6116 = vmul.f32 %v6115, %v6098
  %v6117 = vmul.f32 %v6116, %v6115
  %v6118 = vmul.f32 0.5, %v6117
  %v6119 = vsub.f32 1.5, %v6118
  %v6120 = vmul.f32 %v6115, %v6119
  %vm6121 = vweird.f32 %v6098
  %vm6122 = vweird.f32 %v6115
  %vm6123 = vmor %vm6121, %vm6122
  %v6124 = vsel %vm6123, %v6115, %v6120
  %v6125 = vrsqrt.pop %v6099
  %v6126 = vmul.f32 %v6125, %v6099
  %v6127 = vmul.f32 %v6126, %v6125
  %v6128 = vmul.f32 0.5, %v6127
  %v6129 = vsub.f32 1.5, %v6128
  %v6130 = vmul.f32 %v6125, %v6129
  %vm6131 = vweird.f32 %v6099
  %vm6132 = vweird.f32 %v6125
  %vm6133 = vmor %vm6131, %vm6132
  %v6134 = vsel %vm6133, %v6125, %v6130
  %v6135 = vrsqrt.pop %v6100
  %v6136 = vmul.f32 %v6135, %v6100
  %v6137 = vmul.f32 %v6136, %v6135
  %v6138 = vmul.f32 0.5, %v6137
  %v6139 = vsub.f32 1.5, %v6138
  %v6140 = vmul.f32 %v6135, %v6139
  %vm6141 = vweird.f32 %v6100
  %vm6142 = vweird.f32 %v6135
  %vm6143 = vmor %vm6141, %vm6142
  %v6144 = vsel %vm6143, %v6135, %v6140
  %v6145 = vrsqrt.pop %v6101
  %v6146 = vmul.f32 %v6145, %v6101
  %v6147 = vmul.f32 %v6146, %v6145
  %v6148 = vmul.f32 0.5, %v6147
  %v6149 = vsub.f32 1.5, %v6148
  %v6150 = vmul.f32 %v6145, %v6149
  %vm6151 = vweird.f32 %v6101
  %vm6152 = vweird.f32 %v6145
  %vm6153 = vmor %vm6151, %vm6152
  %v6154 = vsel %vm6153, %v6145, %v6150
  %v6155 = vrsqrt.pop %v6102
  %v6156 = vmul.f32 %v6155, %v6102
  %v6157 = vmul.f32 %v6156, %v6155
  %v6158 = vmul.f32 0.5, %v6157
  %v6159 = vsub.f32 1.5, %v6158
  %v6160 = vmul.f32 %v6155, %v6159
  %vm6161 = vweird.f32 %v6102
  %vm6162 = vweird.f32 %v6155
  %vm6163 = vmor %vm6161, %vm6162
  %v6164 = vsel %vm6163, %v6155, %v6160
  %v6165 = vrsqrt.pop %v6103
  %v6166 = vmul.f32 %v6165, %v6103
  %v6167 = vmul.f32 %v6166, %v6165
  %v6168 = vmul.f32 0.5, %v6167
  %v6169 = vsub.f32 1.5, %v6168
  %v6170 = vmul.f32 %v6165, %v6169
  %vm6171 = vweird.f32 %v6103
  %vm6172 = vweird.f32 %v6165
  %vm6173 = vmor %vm6171, %vm6172
  %v6174 = vsel %vm6173, %v6165, %v6170
  %v6175 = vrsqrt.pop %v6104
  %v6176 = vmul.f32 %v6175, %v6104
  %v6177 = vmul.f32 %v6176, %v6175
  %v6178 = vmul.f32 0.5, %v6177
  %v6179 = vsub.f32 1.5, %v6178
  %v6180 = vmul.f32 %v6175, %v6179
  %vm6181 = vweird.f32 %v6104
  %vm6182 = vweird.f32 %v6175
  %vm6183 = vmor %vm6181, %vm6182
  %v6184 = vsel %vm6183, %v6175, %v6180
  %v6185 = vmul.f32 %v6049, %v6114
  %v6186 = vmul.f32 %v6050, %v6124
  %v6187 = vmul.f32 %v6051, %v6134
  %v6188 = vmul.f32 %v6052, %v6144
  %v6189 = vmul.f32 %v6053, %v6154
  %v6190 = vmul.f32 %v6054, %v6164
  %v6191 = vmul.f32 %v6055, %v6174
  %v6192 = vmul.f32 %v6056, %v6184
  %v6194 = vperm.slane %v6015, 0
  %v6196 = vmul.f32 %v6185, %v6194
  %v6197 = vmul.f32 %v6186, %v6194
  %v6198 = vmul.f32 %v6187, %v6194
  %v6199 = vmul.f32 %v6188, %v6194
  %v6200 = vmul.f32 %v6189, %v6194
  %v6201 = vmul.f32 %v6190, %v6194
  %v6202 = vmul.f32 %v6191, %v6194
  %v6203 = vmul.f32 %v6192, %v6194
  %v6205 = vperm.slane %v6016, 0
  %v6207 = vadd.f32 %v6196, %v6205
  %v6208 = vadd.f32 %v6197, %v6205
  %v6209 = vadd.f32 %v6198, %v6205
  %v6210 = vadd.f32 %v6199, %v6205
  %v6211 = vadd.f32 %v6200, %v6205
  %v6212 = vadd.f32 %v6201, %v6205
  %v6213 = vadd.f32 %v6202, %v6205
  %v6214 = vadd.f32 %v6203, %v6205
  %s6215 = scalar_lea.vmem %s1, 8
  %v6216 = vld [vmem:[%s6215] sm:$0xff]
  %s6217 = scalar_lea.vmem %s2, 1
  %v6218 = vld [vmem:[%s6217] sm:$0x1]
  %v6220 = vperm.slane %v6218, 0
  %v6223 = vsel %vm304, %v6207, 0
  %v6226 = vsel %vm304, %v6208, 0
  %v6229 = vsel %vm304, %v6209, 0
  %v6232 = vsel %vm304, %v6210, 0
  %v6235 = vsel %vm304, %v6211, 0
  %v6238 = vsel %vm304, %v6212, 0
  %v6241 = vsel %vm304, %v6213, 0
  %v6244 = vsel %vm304, %v6214, 0
  %6246 = vmatpush.msra.mxu0 0.0
  %6247 = vmatpush.msra.mxu0 0.0
  %6248 = vmatpush.msra.mxu0 0.0
  %6249 = vmatpush.msra.mxu0 0.0
  %6250 = vmatpush.msra.mxu0 0.0
  %6251 = vmatpush.msra.mxu0 0.0
  %6252 = vmatpush.msra.mxu0 0.0
  %6253 = vmatpush.msra.mxu0 0.0
  %6254 = vmatpush.msra.mxu0 0.0
  %6255 = vmatpush.msra.mxu0 0.0
  %6256 = vmatpush.msra.mxu0 0.0
  %6257 = vmatpush.msra.mxu0 0.0
  %6258 = vmatpush.msra.mxu0 0.0
  %6259 = vmatpush.msra.mxu0 0.0
  %6260 = vmatpush.msra.mxu0 0.0
  %6261 = vmatpush.msra.mxu0 %v6216
  %6262 = vmatmul.f32.gmra.mxu0 %v6223
  %v6263 = vpop.f32.mrf.mxu0
  %v6264 = vadd.f32 %v6220, %v6263
  %6265 = vmatmul.f32.gmra.mxu0 %v6226
  %v6266 = vpop.f32.mrf.mxu0
  %v6267 = vadd.f32 %v6220, %v6266
  %6268 = vmatmul.f32.gmra.mxu0 %v6229
  %v6269 = vpop.f32.mrf.mxu0
  %v6270 = vadd.f32 %v6220, %v6269
  %6271 = vmatmul.f32.gmra.mxu0 %v6232
  %v6272 = vpop.f32.mrf.mxu0
  %v6273 = vadd.f32 %v6220, %v6272
  %6274 = vmatmul.f32.gmra.mxu0 %v6235
  %v6275 = vpop.f32.mrf.mxu0
  %v6276 = vadd.f32 %v6220, %v6275
  %6277 = vmatmul.f32.gmra.mxu0 %v6238
  %v6278 = vpop.f32.mrf.mxu0
  %v6279 = vadd.f32 %v6220, %v6278
  %6280 = vmatmul.f32.gmra.mxu0 %v6241
  %v6281 = vpop.f32.mrf.mxu0
  %v6282 = vadd.f32 %v6220, %v6281
  %6283 = vmatmul.f32.gmra.mxu0 %v6244
  %v6284 = vpop.f32.mrf.mxu0
  %v6285 = vadd.f32 %v6220, %v6284
  %6286 = vdwg.mxu0
  %s6287 = scalar_lea.vmem %s3, 8
  %v6288 = vld [vmem:[%s6287] sm:$0xff]
  %s6289 = scalar_lea.vmem %s4, 1
  %v6290 = vld [vmem:[%s6289] sm:$0x1]
  %v6292 = vperm.slane %v6290, 0
  %6294 = vmatpush.msra.mxu0 0.0
  %6295 = vmatpush.msra.mxu0 0.0
  %6296 = vmatpush.msra.mxu0 0.0
  %6297 = vmatpush.msra.mxu0 0.0
  %6298 = vmatpush.msra.mxu0 0.0
  %6299 = vmatpush.msra.mxu0 0.0
  %6300 = vmatpush.msra.mxu0 0.0
  %6301 = vmatpush.msra.mxu0 0.0
  %6302 = vmatpush.msra.mxu0 0.0
  %6303 = vmatpush.msra.mxu0 0.0
  %6304 = vmatpush.msra.mxu0 0.0
  %6305 = vmatpush.msra.mxu0 0.0
  %6306 = vmatpush.msra.mxu0 0.0
  %6307 = vmatpush.msra.mxu0 0.0
  %6308 = vmatpush.msra.mxu0 0.0
  %6309 = vmatpush.msra.mxu0 %v6288
  %6310 = vmatmul.f32.gmra.mxu0 %v6223
  %v6311 = vpop.f32.mrf.mxu0
  %v6312 = vadd.f32 %v6292, %v6311
  %6313 = vmatmul.f32.gmra.mxu0 %v6226
  %v6314 = vpop.f32.mrf.mxu0
  %v6315 = vadd.f32 %v6292, %v6314
  %6316 = vmatmul.f32.gmra.mxu0 %v6229
  %v6317 = vpop.f32.mrf.mxu0
  %v6318 = vadd.f32 %v6292, %v6317
  %6319 = vmatmul.f32.gmra.mxu0 %v6232
  %v6320 = vpop.f32.mrf.mxu0
  %v6321 = vadd.f32 %v6292, %v6320
  %6322 = vmatmul.f32.gmra.mxu0 %v6235
  %v6323 = vpop.f32.mrf.mxu0
  %v6324 = vadd.f32 %v6292, %v6323
  %6325 = vmatmul.f32.gmra.mxu0 %v6238
  %v6326 = vpop.f32.mrf.mxu0
  %v6327 = vadd.f32 %v6292, %v6326
  %6328 = vmatmul.f32.gmra.mxu0 %v6241
  %v6329 = vpop.f32.mrf.mxu0
  %v6330 = vadd.f32 %v6292, %v6329
  %6331 = vmatmul.f32.gmra.mxu0 %v6244
  %v6332 = vpop.f32.mrf.mxu0
  %v6333 = vadd.f32 %v6292, %v6332
  %6334 = vdwg.mxu0
  %s6335 = scalar_lea.vmem %s5, 8
  %v6336 = vld [vmem:[%s6335] sm:$0xff]
  %s6337 = scalar_lea.vmem %s6, 1
  %v6338 = vld [vmem:[%s6337] sm:$0x1]
  %v6340 = vperm.slane %v6338, 0
  %6342 = vmatpush.msra.mxu0 0.0
  %6343 = vmatpush.msra.mxu0 0.0
  %6344 = vmatpush.msra.mxu0 0.0
  %6345 = vmatpush.msra.mxu0 0.0
  %6346 = vmatpush.msra.mxu0 0.0
  %6347 = vmatpush.msra.mxu0 0.0
  %6348 = vmatpush.msra.mxu0 0.0
  %6349 = vmatpush.msra.mxu0 0.0
  %6350 = vmatpush.msra.mxu0 0.0
  %6351 = vmatpush.msra.mxu0 0.0
  %6352 = vmatpush.msra.mxu0 0.0
  %6353 = vmatpush.msra.mxu0 0.0
  %6354 = vmatpush.msra.mxu0 0.0
  %6355 = vmatpush.msra.mxu0 0.0
  %6356 = vmatpush.msra.mxu0 0.0
  %6357 = vmatpush.msra.mxu0 %v6336
  %6358 = vmatmul.f32.gmra.mxu0 %v6223
  %v6359 = vpop.f32.mrf.mxu0
  %v6360 = vadd.f32 %v6340, %v6359
  %6361 = vmatmul.f32.gmra.mxu0 %v6226
  %v6362 = vpop.f32.mrf.mxu0
  %v6363 = vadd.f32 %v6340, %v6362
  %6364 = vmatmul.f32.gmra.mxu0 %v6229
  %v6365 = vpop.f32.mrf.mxu0
  %v6366 = vadd.f32 %v6340, %v6365
  %6367 = vmatmul.f32.gmra.mxu0 %v6232
  %v6368 = vpop.f32.mrf.mxu0
  %v6369 = vadd.f32 %v6340, %v6368
  %6370 = vmatmul.f32.gmra.mxu0 %v6235
  %v6371 = vpop.f32.mrf.mxu0
  %v6372 = vadd.f32 %v6340, %v6371
  %6373 = vmatmul.f32.gmra.mxu0 %v6238
  %v6374 = vpop.f32.mrf.mxu0
  %v6375 = vadd.f32 %v6340, %v6374
  %6376 = vmatmul.f32.gmra.mxu0 %v6241
  %v6377 = vpop.f32.mrf.mxu0
  %v6378 = vadd.f32 %v6340, %v6377
  %6379 = vmatmul.f32.gmra.mxu0 %v6244
  %v6380 = vpop.f32.mrf.mxu0
  %v6381 = vadd.f32 %v6340, %v6380
  %6382 = vdwg.mxu0
  %v6385 = vrot.slane %v6264, 1
  %v6386 = vrot.slane %v6264, 2
  %v6387 = vrot.slane %v6264, 3
  %v6388 = vrot.slane %v6264, 4
  %v6389 = vrot.slane %v6264, 5
  %v6390 = vrot.slane %v6264, 6
  %v6391 = vrot.slane %v6264, 7
  %v6392 = vrot.slane %v6267, 1
  %v6393 = vrot.slane %v6267, 2
  %v6394 = vrot.slane %v6267, 3
  %v6395 = vrot.slane %v6267, 4
  %v6396 = vrot.slane %v6267, 5
  %v6397 = vrot.slane %v6267, 6
  %v6398 = vrot.slane %v6267, 7
  %v6399 = vperm.slane %v6264, 0
  %v6400 = vperm.slane %v6385, 0
  %v6401 = vperm.slane %v6386, 0
  %v6402 = vperm.slane %v6387, 0
  %v6403 = vperm.slane %v6388, 0
  %v6404 = vperm.slane %v6389, 0
  %v6405 = vperm.slane %v6390, 0
  %v6406 = vperm.slane %v6391, 0
  %v6407 = vperm.slane %v6267, 0
  %v6408 = vperm.slane %v6392, 0
  %v6409 = vperm.slane %v6393, 0
  %v6410 = vperm.slane %v6394, 0
  %v6411 = vperm.slane %v6395, 0
  %v6412 = vperm.slane %v6396, 0
  %v6413 = vperm.slane %v6397, 0
  %v6414 = vperm.slane %v6398, 0
  %v6431 = vmul.f32 %v6399, %v6312
  %v6432 = vmul.f32 %v6399, %v6315
  %v6433 = vmul.f32 %v6400, %v6312
  %v6434 = vmul.f32 %v6400, %v6315
  %v6435 = vmul.f32 %v6401, %v6312
  %v6436 = vmul.f32 %v6401, %v6315
  %v6437 = vmul.f32 %v6402, %v6312
  %v6438 = vmul.f32 %v6402, %v6315
  %v6439 = vmul.f32 %v6403, %v6312
  %v6440 = vmul.f32 %v6403, %v6315
  %v6441 = vmul.f32 %v6404, %v6312
  %v6442 = vmul.f32 %v6404, %v6315
  %v6443 = vmul.f32 %v6405, %v6312
  %v6444 = vmul.f32 %v6405, %v6315
  %v6445 = vmul.f32 %v6406, %v6312
  %v6446 = vmul.f32 %v6406, %v6315
  %v6447 = vmul.f32 %v6407, %v6312
  %v6448 = vmul.f32 %v6407, %v6315
  %v6449 = vmul.f32 %v6408, %v6312
  %v6450 = vmul.f32 %v6408, %v6315
  %v6451 = vmul.f32 %v6409, %v6312
  %v6452 = vmul.f32 %v6409, %v6315
  %v6453 = vmul.f32 %v6410, %v6312
  %v6454 = vmul.f32 %v6410, %v6315
  %v6455 = vmul.f32 %v6411, %v6312
  %v6456 = vmul.f32 %v6411, %v6315
  %v6457 = vmul.f32 %v6412, %v6312
  %v6458 = vmul.f32 %v6412, %v6315
  %v6459 = vmul.f32 %v6413, %v6312
  %v6460 = vmul.f32 %v6413, %v6315
  %v6461 = vmul.f32 %v6414, %v6312
  %v6462 = vmul.f32 %v6414, %v6315
  %v6463 = vadd.f32 %v6431, %v89
  %v6464 = vadd.f32 %v6432, %v95
  %v6465 = vadd.f32 %v6433, %v102
  %v6466 = vadd.f32 %v6434, %v108
  %v6467 = vadd.f32 %v6435, %v115
  %v6468 = vadd.f32 %v6436, %v121
  %v6469 = vadd.f32 %v6437, %v128
  %v6470 = vadd.f32 %v6438, %v134
  %v6471 = vadd.f32 %v6439, %v141
  %v6472 = vadd.f32 %v6440, %v147
  %v6473 = vadd.f32 %v6441, %v154
  %v6474 = vadd.f32 %v6442, %v160
  %v6475 = vadd.f32 %v6443, %v167
  %v6476 = vadd.f32 %v6444, %v173
  %v6477 = vadd.f32 %v6445, %v180
  %v6478 = vadd.f32 %v6446, %v186
  %v6479 = vadd.f32 %v6447, %v193
  %v6480 = vadd.f32 %v6448, %v199
  %v6481 = vadd.f32 %v6449, %v206
  %v6482 = vadd.f32 %v6450, %v212
  %v6483 = vadd.f32 %v6451, %v219
  %v6484 = vadd.f32 %v6452, %v225
  %v6485 = vadd.f32 %v6453, %v232
  %v6486 = vadd.f32 %v6454, %v238
  %v6487 = vadd.f32 %v6455, %v245
  %v6488 = vadd.f32 %v6456, %v251
  %v6489 = vadd.f32 %v6457, %v258
  %v6490 = vadd.f32 %v6458, %v264
  %v6491 = vadd.f32 %v6459, %v271
  %v6492 = vadd.f32 %v6460, %v277
  %v6493 = vadd.f32 %v6461, %v284
  %v6494 = vadd.f32 %v6462, %v290
  %v6495 = vsel %vm304, %v6463, -inf
  %v6496 = vsel %vm304, %v6464, -inf
  %v6497 = vmax.f32 %v6495, %v6496
  %v6498 = vrot.slane %v6497, 4
  %v6499 = vmax.f32 %v6497, %v6498
  %v6500 = vrot.slane %v6499, 2
  %v6501 = vmax.f32 %v6499, %v6500
  %v6502 = vrot.slane %v6501, 1
  %v6503 = vmax.f32 %v6501, %v6502
  %v6504 = vsel %vm304, %v6465, -inf
  %v6505 = vsel %vm304, %v6466, -inf
  %v6506 = vmax.f32 %v6504, %v6505
  %v6507 = vrot.slane %v6506, 4
  %v6508 = vmax.f32 %v6506, %v6507
  %v6509 = vrot.slane %v6508, 2
  %v6510 = vmax.f32 %v6508, %v6509
  %v6511 = vrot.slane %v6510, 1
  %v6512 = vmax.f32 %v6510, %v6511
  %v6513 = vsel %vm304, %v6467, -inf
  %v6514 = vsel %vm304, %v6468, -inf
  %v6515 = vmax.f32 %v6513, %v6514
  %v6516 = vrot.slane %v6515, 4
  %v6517 = vmax.f32 %v6515, %v6516
  %v6518 = vrot.slane %v6517, 2
  %v6519 = vmax.f32 %v6517, %v6518
  %v6520 = vrot.slane %v6519, 1
  %v6521 = vmax.f32 %v6519, %v6520
  %v6522 = vsel %vm304, %v6469, -inf
  %v6523 = vsel %vm304, %v6470, -inf
  %v6524 = vmax.f32 %v6522, %v6523
  %v6525 = vrot.slane %v6524, 4
  %v6526 = vmax.f32 %v6524, %v6525
  %v6527 = vrot.slane %v6526, 2
  %v6528 = vmax.f32 %v6526, %v6527
  %v6529 = vrot.slane %v6528, 1
  %v6530 = vmax.f32 %v6528, %v6529
  %v6531 = vsel %vm304, %v6471, -inf
  %v6532 = vsel %vm304, %v6472, -inf
  %v6533 = vmax.f32 %v6531, %v6532
  %v6534 = vrot.slane %v6533, 4
  %v6535 = vmax.f32 %v6533, %v6534
  %v6536 = vrot.slane %v6535, 2
  %v6537 = vmax.f32 %v6535, %v6536
  %v6538 = vrot.slane %v6537, 1
  %v6539 = vmax.f32 %v6537, %v6538
  %v6540 = vsel %vm304, %v6473, -inf
  %v6541 = vsel %vm304, %v6474, -inf
  %v6542 = vmax.f32 %v6540, %v6541
  %v6543 = vrot.slane %v6542, 4
  %v6544 = vmax.f32 %v6542, %v6543
  %v6545 = vrot.slane %v6544, 2
  %v6546 = vmax.f32 %v6544, %v6545
  %v6547 = vrot.slane %v6546, 1
  %v6548 = vmax.f32 %v6546, %v6547
  %v6549 = vsel %vm304, %v6475, -inf
  %v6550 = vsel %vm304, %v6476, -inf
  %v6551 = vmax.f32 %v6549, %v6550
  %v6552 = vrot.slane %v6551, 4
  %v6553 = vmax.f32 %v6551, %v6552
  %v6554 = vrot.slane %v6553, 2
  %v6555 = vmax.f32 %v6553, %v6554
  %v6556 = vrot.slane %v6555, 1
  %v6557 = vmax.f32 %v6555, %v6556
  %v6558 = vsel %vm304, %v6477, -inf
  %v6559 = vsel %vm304, %v6478, -inf
  %v6560 = vmax.f32 %v6558, %v6559
  %v6561 = vrot.slane %v6560, 4
  %v6562 = vmax.f32 %v6560, %v6561
  %v6563 = vrot.slane %v6562, 2
  %v6564 = vmax.f32 %v6562, %v6563
  %v6565 = vrot.slane %v6564, 1
  %v6566 = vmax.f32 %v6564, %v6565
  %v6567 = vsel %vm304, %v6479, -inf
  %v6568 = vsel %vm304, %v6480, -inf
  %v6569 = vmax.f32 %v6567, %v6568
  %v6570 = vrot.slane %v6569, 4
  %v6571 = vmax.f32 %v6569, %v6570
  %v6572 = vrot.slane %v6571, 2
  %v6573 = vmax.f32 %v6571, %v6572
  %v6574 = vrot.slane %v6573, 1
  %v6575 = vmax.f32 %v6573, %v6574
  %v6576 = vsel %vm304, %v6481, -inf
  %v6577 = vsel %vm304, %v6482, -inf
  %v6578 = vmax.f32 %v6576, %v6577
  %v6579 = vrot.slane %v6578, 4
  %v6580 = vmax.f32 %v6578, %v6579
  %v6581 = vrot.slane %v6580, 2
  %v6582 = vmax.f32 %v6580, %v6581
  %v6583 = vrot.slane %v6582, 1
  %v6584 = vmax.f32 %v6582, %v6583
  %v6585 = vsel %vm304, %v6483, -inf
  %v6586 = vsel %vm304, %v6484, -inf
  %v6587 = vmax.f32 %v6585, %v6586
  %v6588 = vrot.slane %v6587, 4
  %v6589 = vmax.f32 %v6587, %v6588
  %v6590 = vrot.slane %v6589, 2
  %v6591 = vmax.f32 %v6589, %v6590
  %v6592 = vrot.slane %v6591, 1
  %v6593 = vmax.f32 %v6591, %v6592
  %v6594 = vsel %vm304, %v6485, -inf
  %v6595 = vsel %vm304, %v6486, -inf
  %v6596 = vmax.f32 %v6594, %v6595
  %v6597 = vrot.slane %v6596, 4
  %v6598 = vmax.f32 %v6596, %v6597
  %v6599 = vrot.slane %v6598, 2
  %v6600 = vmax.f32 %v6598, %v6599
  %v6601 = vrot.slane %v6600, 1
  %v6602 = vmax.f32 %v6600, %v6601
  %v6603 = vsel %vm304, %v6487, -inf
  %v6604 = vsel %vm304, %v6488, -inf
  %v6605 = vmax.f32 %v6603, %v6604
  %v6606 = vrot.slane %v6605, 4
  %v6607 = vmax.f32 %v6605, %v6606
  %v6608 = vrot.slane %v6607, 2
  %v6609 = vmax.f32 %v6607, %v6608
  %v6610 = vrot.slane %v6609, 1
  %v6611 = vmax.f32 %v6609, %v6610
  %v6612 = vsel %vm304, %v6489, -inf
  %v6613 = vsel %vm304, %v6490, -inf
  %v6614 = vmax.f32 %v6612, %v6613
  %v6615 = vrot.slane %v6614, 4
  %v6616 = vmax.f32 %v6614, %v6615
  %v6617 = vrot.slane %v6616, 2
  %v6618 = vmax.f32 %v6616, %v6617
  %v6619 = vrot.slane %v6618, 1
  %v6620 = vmax.f32 %v6618, %v6619
  %v6621 = vsel %vm304, %v6491, -inf
  %v6622 = vsel %vm304, %v6492, -inf
  %v6623 = vmax.f32 %v6621, %v6622
  %v6624 = vrot.slane %v6623, 4
  %v6625 = vmax.f32 %v6623, %v6624
  %v6626 = vrot.slane %v6625, 2
  %v6627 = vmax.f32 %v6625, %v6626
  %v6628 = vrot.slane %v6627, 1
  %v6629 = vmax.f32 %v6627, %v6628
  %v6630 = vsel %vm304, %v6493, -inf
  %v6631 = vsel %vm304, %v6494, -inf
  %v6632 = vmax.f32 %v6630, %v6631
  %v6633 = vrot.slane %v6632, 4
  %v6634 = vmax.f32 %v6632, %v6633
  %v6635 = vrot.slane %v6634, 2
  %v6636 = vmax.f32 %v6634, %v6635
  %v6637 = vrot.slane %v6636, 1
  %v6638 = vmax.f32 %v6636, %v6637
  %v6639 = vsub.f32 %v6463, %v6503
  %v6640 = vsub.f32 %v6464, %v6503
  %v6641 = vsub.f32 %v6465, %v6512
  %v6642 = vsub.f32 %v6466, %v6512
  %v6643 = vsub.f32 %v6467, %v6521
  %v6644 = vsub.f32 %v6468, %v6521
  %v6645 = vsub.f32 %v6469, %v6530
  %v6646 = vsub.f32 %v6470, %v6530
  %v6647 = vsub.f32 %v6471, %v6539
  %v6648 = vsub.f32 %v6472, %v6539
  %v6649 = vsub.f32 %v6473, %v6548
  %v6650 = vsub.f32 %v6474, %v6548
  %v6651 = vsub.f32 %v6475, %v6557
  %v6652 = vsub.f32 %v6476, %v6557
  %v6653 = vsub.f32 %v6477, %v6566
  %v6654 = vsub.f32 %v6478, %v6566
  %v6655 = vsub.f32 %v6479, %v6575
  %v6656 = vsub.f32 %v6480, %v6575
  %v6657 = vsub.f32 %v6481, %v6584
  %v6658 = vsub.f32 %v6482, %v6584
  %v6659 = vsub.f32 %v6483, %v6593
  %v6660 = vsub.f32 %v6484, %v6593
  %v6661 = vsub.f32 %v6485, %v6602
  %v6662 = vsub.f32 %v6486, %v6602
  %v6663 = vsub.f32 %v6487, %v6611
  %v6664 = vsub.f32 %v6488, %v6611
  %v6665 = vsub.f32 %v6489, %v6620
  %v6666 = vsub.f32 %v6490, %v6620
  %v6667 = vsub.f32 %v6491, %v6629
  %v6668 = vsub.f32 %v6492, %v6629
  %v6669 = vsub.f32 %v6493, %v6638
  %v6670 = vsub.f32 %v6494, %v6638
  %v6671 = vmul.f32 %v6639, 1.442695
  %v6672 = vpow.pop %v6671
  %v6673 = vmul.f32 %v6640, 1.442695
  %v6674 = vpow.pop %v6673
  %v6675 = vmul.f32 %v6641, 1.442695
  %v6676 = vpow.pop %v6675
  %v6677 = vmul.f32 %v6642, 1.442695
  %v6678 = vpow.pop %v6677
  %v6679 = vmul.f32 %v6643, 1.442695
  %v6680 = vpow.pop %v6679
  %v6681 = vmul.f32 %v6644, 1.442695
  %v6682 = vpow.pop %v6681
  %v6683 = vmul.f32 %v6645, 1.442695
  %v6684 = vpow.pop %v6683
  %v6685 = vmul.f32 %v6646, 1.442695
  %v6686 = vpow.pop %v6685
  %v6687 = vmul.f32 %v6647, 1.442695
  %v6688 = vpow.pop %v6687
  %v6689 = vmul.f32 %v6648, 1.442695
  %v6690 = vpow.pop %v6689
  %v6691 = vmul.f32 %v6649, 1.442695
  %v6692 = vpow.pop %v6691
  %v6693 = vmul.f32 %v6650, 1.442695
  %v6694 = vpow.pop %v6693
  %v6695 = vmul.f32 %v6651, 1.442695
  %v6696 = vpow.pop %v6695
  %v6697 = vmul.f32 %v6652, 1.442695
  %v6698 = vpow.pop %v6697
  %v6699 = vmul.f32 %v6653, 1.442695
  %v6700 = vpow.pop %v6699
  %v6701 = vmul.f32 %v6654, 1.442695
  %v6702 = vpow.pop %v6701
  %v6703 = vmul.f32 %v6655, 1.442695
  %v6704 = vpow.pop %v6703
  %v6705 = vmul.f32 %v6656, 1.442695
  %v6706 = vpow.pop %v6705
  %v6707 = vmul.f32 %v6657, 1.442695
  %v6708 = vpow.pop %v6707
  %v6709 = vmul.f32 %v6658, 1.442695
  %v6710 = vpow.pop %v6709
  %v6711 = vmul.f32 %v6659, 1.442695
  %v6712 = vpow.pop %v6711
  %v6713 = vmul.f32 %v6660, 1.442695
  %v6714 = vpow.pop %v6713
  %v6715 = vmul.f32 %v6661, 1.442695
  %v6716 = vpow.pop %v6715
  %v6717 = vmul.f32 %v6662, 1.442695
  %v6718 = vpow.pop %v6717
  %v6719 = vmul.f32 %v6663, 1.442695
  %v6720 = vpow.pop %v6719
  %v6721 = vmul.f32 %v6664, 1.442695
  %v6722 = vpow.pop %v6721
  %v6723 = vmul.f32 %v6665, 1.442695
  %v6724 = vpow.pop %v6723
  %v6725 = vmul.f32 %v6666, 1.442695
  %v6726 = vpow.pop %v6725
  %v6727 = vmul.f32 %v6667, 1.442695
  %v6728 = vpow.pop %v6727
  %v6729 = vmul.f32 %v6668, 1.442695
  %v6730 = vpow.pop %v6729
  %v6731 = vmul.f32 %v6669, 1.442695
  %v6732 = vpow.pop %v6731
  %v6733 = vmul.f32 %v6670, 1.442695
  %v6734 = vpow.pop %v6733
  %v6735 = vsel %vm304, %v6672, 0.0
  %v6736 = vsel %vm304, %v6674, 0.0
  %v6737 = vadd.f32 %v6735, %v6736
  %v6738 = vrot.slane %v6737, 4
  %v6739 = vadd.f32 %v6737, %v6738
  %v6740 = vrot.slane %v6739, 2
  %v6741 = vadd.f32 %v6739, %v6740
  %v6742 = vrot.slane %v6741, 1
  %v6743 = vadd.f32 %v6741, %v6742
  %v6744 = vsel %vm304, %v6676, 0.0
  %v6745 = vsel %vm304, %v6678, 0.0
  %v6746 = vadd.f32 %v6744, %v6745
  %v6747 = vrot.slane %v6746, 4
  %v6748 = vadd.f32 %v6746, %v6747
  %v6749 = vrot.slane %v6748, 2
  %v6750 = vadd.f32 %v6748, %v6749
  %v6751 = vrot.slane %v6750, 1
  %v6752 = vadd.f32 %v6750, %v6751
  %v6753 = vsel %vm304, %v6680, 0.0
  %v6754 = vsel %vm304, %v6682, 0.0
  %v6755 = vadd.f32 %v6753, %v6754
  %v6756 = vrot.slane %v6755, 4
  %v6757 = vadd.f32 %v6755, %v6756
  %v6758 = vrot.slane %v6757, 2
  %v6759 = vadd.f32 %v6757, %v6758
  %v6760 = vrot.slane %v6759, 1
  %v6761 = vadd.f32 %v6759, %v6760
  %v6762 = vsel %vm304, %v6684, 0.0
  %v6763 = vsel %vm304, %v6686, 0.0
  %v6764 = vadd.f32 %v6762, %v6763
  %v6765 = vrot.slane %v6764, 4
  %v6766 = vadd.f32 %v6764, %v6765
  %v6767 = vrot.slane %v6766, 2
  %v6768 = vadd.f32 %v6766, %v6767
  %v6769 = vrot.slane %v6768, 1
  %v6770 = vadd.f32 %v6768, %v6769
  %v6771 = vsel %vm304, %v6688, 0.0
  %v6772 = vsel %vm304, %v6690, 0.0
  %v6773 = vadd.f32 %v6771, %v6772
  %v6774 = vrot.slane %v6773, 4
  %v6775 = vadd.f32 %v6773, %v6774
  %v6776 = vrot.slane %v6775, 2
  %v6777 = vadd.f32 %v6775, %v6776
  %v6778 = vrot.slane %v6777, 1
  %v6779 = vadd.f32 %v6777, %v6778
  %v6780 = vsel %vm304, %v6692, 0.0
  %v6781 = vsel %vm304, %v6694, 0.0
  %v6782 = vadd.f32 %v6780, %v6781
  %v6783 = vrot.slane %v6782, 4
  %v6784 = vadd.f32 %v6782, %v6783
  %v6785 = vrot.slane %v6784, 2
  %v6786 = vadd.f32 %v6784, %v6785
  %v6787 = vrot.slane %v6786, 1
  %v6788 = vadd.f32 %v6786, %v6787
  %v6789 = vsel %vm304, %v6696, 0.0
  %v6790 = vsel %vm304, %v6698, 0.0
  %v6791 = vadd.f32 %v6789, %v6790
  %v6792 = vrot.slane %v6791, 4
  %v6793 = vadd.f32 %v6791, %v6792
  %v6794 = vrot.slane %v6793, 2
  %v6795 = vadd.f32 %v6793, %v6794
  %v6796 = vrot.slane %v6795, 1
  %v6797 = vadd.f32 %v6795, %v6796
  %v6798 = vsel %vm304, %v6700, 0.0
  %v6799 = vsel %vm304, %v6702, 0.0
  %v6800 = vadd.f32 %v6798, %v6799
  %v6801 = vrot.slane %v6800, 4
  %v6802 = vadd.f32 %v6800, %v6801
  %v6803 = vrot.slane %v6802, 2
  %v6804 = vadd.f32 %v6802, %v6803
  %v6805 = vrot.slane %v6804, 1
  %v6806 = vadd.f32 %v6804, %v6805
  %v6807 = vsel %vm304, %v6704, 0.0
  %v6808 = vsel %vm304, %v6706, 0.0
  %v6809 = vadd.f32 %v6807, %v6808
  %v6810 = vrot.slane %v6809, 4
  %v6811 = vadd.f32 %v6809, %v6810
  %v6812 = vrot.slane %v6811, 2
  %v6813 = vadd.f32 %v6811, %v6812
  %v6814 = vrot.slane %v6813, 1
  %v6815 = vadd.f32 %v6813, %v6814
  %v6816 = vsel %vm304, %v6708, 0.0
  %v6817 = vsel %vm304, %v6710, 0.0
  %v6818 = vadd.f32 %v6816, %v6817
  %v6819 = vrot.slane %v6818, 4
  %v6820 = vadd.f32 %v6818, %v6819
  %v6821 = vrot.slane %v6820, 2
  %v6822 = vadd.f32 %v6820, %v6821
  %v6823 = vrot.slane %v6822, 1
  %v6824 = vadd.f32 %v6822, %v6823
  %v6825 = vsel %vm304, %v6712, 0.0
  %v6826 = vsel %vm304, %v6714, 0.0
  %v6827 = vadd.f32 %v6825, %v6826
  %v6828 = vrot.slane %v6827, 4
  %v6829 = vadd.f32 %v6827, %v6828
  %v6830 = vrot.slane %v6829, 2
  %v6831 = vadd.f32 %v6829, %v6830
  %v6832 = vrot.slane %v6831, 1
  %v6833 = vadd.f32 %v6831, %v6832
  %v6834 = vsel %vm304, %v6716, 0.0
  %v6835 = vsel %vm304, %v6718, 0.0
  %v6836 = vadd.f32 %v6834, %v6835
  %v6837 = vrot.slane %v6836, 4
  %v6838 = vadd.f32 %v6836, %v6837
  %v6839 = vrot.slane %v6838, 2
  %v6840 = vadd.f32 %v6838, %v6839
  %v6841 = vrot.slane %v6840, 1
  %v6842 = vadd.f32 %v6840, %v6841
  %v6843 = vsel %vm304, %v6720, 0.0
  %v6844 = vsel %vm304, %v6722, 0.0
  %v6845 = vadd.f32 %v6843, %v6844
  %v6846 = vrot.slane %v6845, 4
  %v6847 = vadd.f32 %v6845, %v6846
  %v6848 = vrot.slane %v6847, 2
  %v6849 = vadd.f32 %v6847, %v6848
  %v6850 = vrot.slane %v6849, 1
  %v6851 = vadd.f32 %v6849, %v6850
  %v6852 = vsel %vm304, %v6724, 0.0
  %v6853 = vsel %vm304, %v6726, 0.0
  %v6854 = vadd.f32 %v6852, %v6853
  %v6855 = vrot.slane %v6854, 4
  %v6856 = vadd.f32 %v6854, %v6855
  %v6857 = vrot.slane %v6856, 2
  %v6858 = vadd.f32 %v6856, %v6857
  %v6859 = vrot.slane %v6858, 1
  %v6860 = vadd.f32 %v6858, %v6859
  %v6861 = vsel %vm304, %v6728, 0.0
  %v6862 = vsel %vm304, %v6730, 0.0
  %v6863 = vadd.f32 %v6861, %v6862
  %v6864 = vrot.slane %v6863, 4
  %v6865 = vadd.f32 %v6863, %v6864
  %v6866 = vrot.slane %v6865, 2
  %v6867 = vadd.f32 %v6865, %v6866
  %v6868 = vrot.slane %v6867, 1
  %v6869 = vadd.f32 %v6867, %v6868
  %v6870 = vsel %vm304, %v6732, 0.0
  %v6871 = vsel %vm304, %v6734, 0.0
  %v6872 = vadd.f32 %v6870, %v6871
  %v6873 = vrot.slane %v6872, 4
  %v6874 = vadd.f32 %v6872, %v6873
  %v6875 = vrot.slane %v6874, 2
  %v6876 = vadd.f32 %v6874, %v6875
  %v6877 = vrot.slane %v6876, 1
  %v6878 = vadd.f32 %v6876, %v6877
  %v6879 = vmul.f32 %v6672, %v6360
  %v6880 = vmul.f32 %v6674, %v6363
  %v6881 = vmul.f32 %v6676, %v6360
  %v6882 = vmul.f32 %v6678, %v6363
  %v6883 = vmul.f32 %v6680, %v6360
  %v6884 = vmul.f32 %v6682, %v6363
  %v6885 = vmul.f32 %v6684, %v6360
  %v6886 = vmul.f32 %v6686, %v6363
  %v6887 = vmul.f32 %v6688, %v6360
  %v6888 = vmul.f32 %v6690, %v6363
  %v6889 = vmul.f32 %v6692, %v6360
  %v6890 = vmul.f32 %v6694, %v6363
  %v6891 = vmul.f32 %v6696, %v6360
  %v6892 = vmul.f32 %v6698, %v6363
  %v6893 = vmul.f32 %v6700, %v6360
  %v6894 = vmul.f32 %v6702, %v6363
  %v6895 = vmul.f32 %v6704, %v6360
  %v6896 = vmul.f32 %v6706, %v6363
  %v6897 = vmul.f32 %v6708, %v6360
  %v6898 = vmul.f32 %v6710, %v6363
  %v6899 = vmul.f32 %v6712, %v6360
  %v6900 = vmul.f32 %v6714, %v6363
  %v6901 = vmul.f32 %v6716, %v6360
  %v6902 = vmul.f32 %v6718, %v6363
  %v6903 = vmul.f32 %v6720, %v6360
  %v6904 = vmul.f32 %v6722, %v6363
  %v6905 = vmul.f32 %v6724, %v6360
  %v6906 = vmul.f32 %v6726, %v6363
  %v6907 = vmul.f32 %v6728, %v6360
  %v6908 = vmul.f32 %v6730, %v6363
  %v6909 = vmul.f32 %v6732, %v6360
  %v6910 = vmul.f32 %v6734, %v6363
  %v6911 = vsel %vm304, %v6879, 0.0
  %v6912 = vsel %vm304, %v6880, 0.0
  %v6913 = vadd.f32 %v6911, %v6912
  %v6914 = vrot.slane %v6913, 4
  %v6915 = vadd.f32 %v6913, %v6914
  %v6916 = vrot.slane %v6915, 2
  %v6917 = vadd.f32 %v6915, %v6916
  %v6918 = vrot.slane %v6917, 1
  %v6919 = vadd.f32 %v6917, %v6918
  %v6920 = vsel %vm304, %v6881, 0.0
  %v6921 = vsel %vm304, %v6882, 0.0
  %v6922 = vadd.f32 %v6920, %v6921
  %v6923 = vrot.slane %v6922, 4
  %v6924 = vadd.f32 %v6922, %v6923
  %v6925 = vrot.slane %v6924, 2
  %v6926 = vadd.f32 %v6924, %v6925
  %v6927 = vrot.slane %v6926, 1
  %v6928 = vadd.f32 %v6926, %v6927
  %v6929 = vsel %vm304, %v6883, 0.0
  %v6930 = vsel %vm304, %v6884, 0.0
  %v6931 = vadd.f32 %v6929, %v6930
  %v6932 = vrot.slane %v6931, 4
  %v6933 = vadd.f32 %v6931, %v6932
  %v6934 = vrot.slane %v6933, 2
  %v6935 = vadd.f32 %v6933, %v6934
  %v6936 = vrot.slane %v6935, 1
  %v6937 = vadd.f32 %v6935, %v6936
  %v6938 = vsel %vm304, %v6885, 0.0
  %v6939 = vsel %vm304, %v6886, 0.0
  %v6940 = vadd.f32 %v6938, %v6939
  %v6941 = vrot.slane %v6940, 4
  %v6942 = vadd.f32 %v6940, %v6941
  %v6943 = vrot.slane %v6942, 2
  %v6944 = vadd.f32 %v6942, %v6943
  %v6945 = vrot.slane %v6944, 1
  %v6946 = vadd.f32 %v6944, %v6945
  %v6947 = vsel %vm304, %v6887, 0.0
  %v6948 = vsel %vm304, %v6888, 0.0
  %v6949 = vadd.f32 %v6947, %v6948
  %v6950 = vrot.slane %v6949, 4
  %v6951 = vadd.f32 %v6949, %v6950
  %v6952 = vrot.slane %v6951, 2
  %v6953 = vadd.f32 %v6951, %v6952
  %v6954 = vrot.slane %v6953, 1
  %v6955 = vadd.f32 %v6953, %v6954
  %v6956 = vsel %vm304, %v6889, 0.0
  %v6957 = vsel %vm304, %v6890, 0.0
  %v6958 = vadd.f32 %v6956, %v6957
  %v6959 = vrot.slane %v6958, 4
  %v6960 = vadd.f32 %v6958, %v6959
  %v6961 = vrot.slane %v6960, 2
  %v6962 = vadd.f32 %v6960, %v6961
  %v6963 = vrot.slane %v6962, 1
  %v6964 = vadd.f32 %v6962, %v6963
  %v6965 = vsel %vm304, %v6891, 0.0
  %v6966 = vsel %vm304, %v6892, 0.0
  %v6967 = vadd.f32 %v6965, %v6966
  %v6968 = vrot.slane %v6967, 4
  %v6969 = vadd.f32 %v6967, %v6968
  %v6970 = vrot.slane %v6969, 2
  %v6971 = vadd.f32 %v6969, %v6970
  %v6972 = vrot.slane %v6971, 1
  %v6973 = vadd.f32 %v6971, %v6972
  %v6974 = vsel %vm304, %v6893, 0.0
  %v6975 = vsel %vm304, %v6894, 0.0
  %v6976 = vadd.f32 %v6974, %v6975
  %v6977 = vrot.slane %v6976, 4
  %v6978 = vadd.f32 %v6976, %v6977
  %v6979 = vrot.slane %v6978, 2
  %v6980 = vadd.f32 %v6978, %v6979
  %v6981 = vrot.slane %v6980, 1
  %v6982 = vadd.f32 %v6980, %v6981
  %v6983 = vsel %vm304, %v6895, 0.0
  %v6984 = vsel %vm304, %v6896, 0.0
  %v6985 = vadd.f32 %v6983, %v6984
  %v6986 = vrot.slane %v6985, 4
  %v6987 = vadd.f32 %v6985, %v6986
  %v6988 = vrot.slane %v6987, 2
  %v6989 = vadd.f32 %v6987, %v6988
  %v6990 = vrot.slane %v6989, 1
  %v6991 = vadd.f32 %v6989, %v6990
  %v6992 = vsel %vm304, %v6897, 0.0
  %v6993 = vsel %vm304, %v6898, 0.0
  %v6994 = vadd.f32 %v6992, %v6993
  %v6995 = vrot.slane %v6994, 4
  %v6996 = vadd.f32 %v6994, %v6995
  %v6997 = vrot.slane %v6996, 2
  %v6998 = vadd.f32 %v6996, %v6997
  %v6999 = vrot.slane %v6998, 1
  %v7000 = vadd.f32 %v6998, %v6999
  %v7001 = vsel %vm304, %v6899, 0.0
  %v7002 = vsel %vm304, %v6900, 0.0
  %v7003 = vadd.f32 %v7001, %v7002
  %v7004 = vrot.slane %v7003, 4
  %v7005 = vadd.f32 %v7003, %v7004
  %v7006 = vrot.slane %v7005, 2
  %v7007 = vadd.f32 %v7005, %v7006
  %v7008 = vrot.slane %v7007, 1
  %v7009 = vadd.f32 %v7007, %v7008
  %v7010 = vsel %vm304, %v6901, 0.0
  %v7011 = vsel %vm304, %v6902, 0.0
  %v7012 = vadd.f32 %v7010, %v7011
  %v7013 = vrot.slane %v7012, 4
  %v7014 = vadd.f32 %v7012, %v7013
  %v7015 = vrot.slane %v7014, 2
  %v7016 = vadd.f32 %v7014, %v7015
  %v7017 = vrot.slane %v7016, 1
  %v7018 = vadd.f32 %v7016, %v7017
  %v7019 = vsel %vm304, %v6903, 0.0
  %v7020 = vsel %vm304, %v6904, 0.0
  %v7021 = vadd.f32 %v7019, %v7020
  %v7022 = vrot.slane %v7021, 4
  %v7023 = vadd.f32 %v7021, %v7022
  %v7024 = vrot.slane %v7023, 2
  %v7025 = vadd.f32 %v7023, %v7024
  %v7026 = vrot.slane %v7025, 1
  %v7027 = vadd.f32 %v7025, %v7026
  %v7028 = vsel %vm304, %v6905, 0.0
  %v7029 = vsel %vm304, %v6906, 0.0
  %v7030 = vadd.f32 %v7028, %v7029
  %v7031 = vrot.slane %v7030, 4
  %v7032 = vadd.f32 %v7030, %v7031
  %v7033 = vrot.slane %v7032, 2
  %v7034 = vadd.f32 %v7032, %v7033
  %v7035 = vrot.slane %v7034, 1
  %v7036 = vadd.f32 %v7034, %v7035
  %v7037 = vsel %vm304, %v6907, 0.0
  %v7038 = vsel %vm304, %v6908, 0.0
  %v7039 = vadd.f32 %v7037, %v7038
  %v7040 = vrot.slane %v7039, 4
  %v7041 = vadd.f32 %v7039, %v7040
  %v7042 = vrot.slane %v7041, 2
  %v7043 = vadd.f32 %v7041, %v7042
  %v7044 = vrot.slane %v7043, 1
  %v7045 = vadd.f32 %v7043, %v7044
  %v7046 = vsel %vm304, %v6909, 0.0
  %v7047 = vsel %vm304, %v6910, 0.0
  %v7048 = vadd.f32 %v7046, %v7047
  %v7049 = vrot.slane %v7048, 4
  %v7050 = vadd.f32 %v7048, %v7049
  %v7051 = vrot.slane %v7050, 2
  %v7052 = vadd.f32 %v7050, %v7051
  %v7053 = vrot.slane %v7052, 1
  %v7054 = vadd.f32 %v7052, %v7053
  %v7055 = vrcp.pop %v6743
  %v7056 = vrcp.pop %v6752
  %v7057 = vrcp.pop %v6761
  %v7058 = vrcp.pop %v6770
  %v7059 = vrcp.pop %v6779
  %v7060 = vrcp.pop %v6788
  %v7061 = vrcp.pop %v6797
  %v7062 = vrcp.pop %v6806
  %v7063 = vrcp.pop %v6815
  %v7064 = vrcp.pop %v6824
  %v7065 = vrcp.pop %v6833
  %v7066 = vrcp.pop %v6842
  %v7067 = vrcp.pop %v6851
  %v7068 = vrcp.pop %v6860
  %v7069 = vrcp.pop %v6869
  %v7070 = vrcp.pop %v6878
  %v7071 = vmul.f32 %v6919, %v7055
  %v7072 = vmul.f32 %v6928, %v7056
  %v7073 = vmul.f32 %v6937, %v7057
  %v7074 = vmul.f32 %v6946, %v7058
  %v7075 = vmul.f32 %v6955, %v7059
  %v7076 = vmul.f32 %v6964, %v7060
  %v7077 = vmul.f32 %v6973, %v7061
  %v7078 = vmul.f32 %v6982, %v7062
  %v7079 = vmul.f32 %v6991, %v7063
  %v7080 = vmul.f32 %v7000, %v7064
  %v7081 = vmul.f32 %v7009, %v7065
  %v7082 = vmul.f32 %v7018, %v7066
  %v7083 = vmul.f32 %v7027, %v7067
  %v7084 = vmul.f32 %v7036, %v7068
  %v7085 = vmul.f32 %v7045, %v7069
  %v7086 = vmul.f32 %v7054, %v7070
  %v7089 = vrot.slane %v6270, 1
  %v7090 = vrot.slane %v6270, 2
  %v7091 = vrot.slane %v6270, 3
  %v7092 = vrot.slane %v6270, 4
  %v7093 = vrot.slane %v6270, 5
  %v7094 = vrot.slane %v6270, 6
  %v7095 = vrot.slane %v6270, 7
  %v7096 = vrot.slane %v6273, 1
  %v7097 = vrot.slane %v6273, 2
  %v7098 = vrot.slane %v6273, 3
  %v7099 = vrot.slane %v6273, 4
  %v7100 = vrot.slane %v6273, 5
  %v7101 = vrot.slane %v6273, 6
  %v7102 = vrot.slane %v6273, 7
  %v7103 = vperm.slane %v6270, 0
  %v7104 = vperm.slane %v7089, 0
  %v7105 = vperm.slane %v7090, 0
  %v7106 = vperm.slane %v7091, 0
  %v7107 = vperm.slane %v7092, 0
  %v7108 = vperm.slane %v7093, 0
  %v7109 = vperm.slane %v7094, 0
  %v7110 = vperm.slane %v7095, 0
  %v7111 = vperm.slane %v6273, 0
  %v7112 = vperm.slane %v7096, 0
  %v7113 = vperm.slane %v7097, 0
  %v7114 = vperm.slane %v7098, 0
  %v7115 = vperm.slane %v7099, 0
  %v7116 = vperm.slane %v7100, 0
  %v7117 = vperm.slane %v7101, 0
  %v7118 = vperm.slane %v7102, 0
  %v7135 = vmul.f32 %v7103, %v6318
  %v7136 = vmul.f32 %v7103, %v6321
  %v7137 = vmul.f32 %v7104, %v6318
  %v7138 = vmul.f32 %v7104, %v6321
  %v7139 = vmul.f32 %v7105, %v6318
  %v7140 = vmul.f32 %v7105, %v6321
  %v7141 = vmul.f32 %v7106, %v6318
  %v7142 = vmul.f32 %v7106, %v6321
  %v7143 = vmul.f32 %v7107, %v6318
  %v7144 = vmul.f32 %v7107, %v6321
  %v7145 = vmul.f32 %v7108, %v6318
  %v7146 = vmul.f32 %v7108, %v6321
  %v7147 = vmul.f32 %v7109, %v6318
  %v7148 = vmul.f32 %v7109, %v6321
  %v7149 = vmul.f32 %v7110, %v6318
  %v7150 = vmul.f32 %v7110, %v6321
  %v7151 = vmul.f32 %v7111, %v6318
  %v7152 = vmul.f32 %v7111, %v6321
  %v7153 = vmul.f32 %v7112, %v6318
  %v7154 = vmul.f32 %v7112, %v6321
  %v7155 = vmul.f32 %v7113, %v6318
  %v7156 = vmul.f32 %v7113, %v6321
  %v7157 = vmul.f32 %v7114, %v6318
  %v7158 = vmul.f32 %v7114, %v6321
  %v7159 = vmul.f32 %v7115, %v6318
  %v7160 = vmul.f32 %v7115, %v6321
  %v7161 = vmul.f32 %v7116, %v6318
  %v7162 = vmul.f32 %v7116, %v6321
  %v7163 = vmul.f32 %v7117, %v6318
  %v7164 = vmul.f32 %v7117, %v6321
  %v7165 = vmul.f32 %v7118, %v6318
  %v7166 = vmul.f32 %v7118, %v6321
  %v7167 = vadd.f32 %v7135, %v89
  %v7168 = vadd.f32 %v7136, %v95
  %v7169 = vadd.f32 %v7137, %v102
  %v7170 = vadd.f32 %v7138, %v108
  %v7171 = vadd.f32 %v7139, %v115
  %v7172 = vadd.f32 %v7140, %v121
  %v7173 = vadd.f32 %v7141, %v128
  %v7174 = vadd.f32 %v7142, %v134
  %v7175 = vadd.f32 %v7143, %v141
  %v7176 = vadd.f32 %v7144, %v147
  %v7177 = vadd.f32 %v7145, %v154
  %v7178 = vadd.f32 %v7146, %v160
  %v7179 = vadd.f32 %v7147, %v167
  %v7180 = vadd.f32 %v7148, %v173
  %v7181 = vadd.f32 %v7149, %v180
  %v7182 = vadd.f32 %v7150, %v186
  %v7183 = vadd.f32 %v7151, %v193
  %v7184 = vadd.f32 %v7152, %v199
  %v7185 = vadd.f32 %v7153, %v206
  %v7186 = vadd.f32 %v7154, %v212
  %v7187 = vadd.f32 %v7155, %v219
  %v7188 = vadd.f32 %v7156, %v225
  %v7189 = vadd.f32 %v7157, %v232
  %v7190 = vadd.f32 %v7158, %v238
  %v7191 = vadd.f32 %v7159, %v245
  %v7192 = vadd.f32 %v7160, %v251
  %v7193 = vadd.f32 %v7161, %v258
  %v7194 = vadd.f32 %v7162, %v264
  %v7195 = vadd.f32 %v7163, %v271
  %v7196 = vadd.f32 %v7164, %v277
  %v7197 = vadd.f32 %v7165, %v284
  %v7198 = vadd.f32 %v7166, %v290
  %v7199 = vsel %vm304, %v7167, -inf
  %v7200 = vsel %vm304, %v7168, -inf
  %v7201 = vmax.f32 %v7199, %v7200
  %v7202 = vrot.slane %v7201, 4
  %v7203 = vmax.f32 %v7201, %v7202
  %v7204 = vrot.slane %v7203, 2
  %v7205 = vmax.f32 %v7203, %v7204
  %v7206 = vrot.slane %v7205, 1
  %v7207 = vmax.f32 %v7205, %v7206
  %v7208 = vsel %vm304, %v7169, -inf
  %v7209 = vsel %vm304, %v7170, -inf
  %v7210 = vmax.f32 %v7208, %v7209
  %v7211 = vrot.slane %v7210, 4
  %v7212 = vmax.f32 %v7210, %v7211
  %v7213 = vrot.slane %v7212, 2
  %v7214 = vmax.f32 %v7212, %v7213
  %v7215 = vrot.slane %v7214, 1
  %v7216 = vmax.f32 %v7214, %v7215
  %v7217 = vsel %vm304, %v7171, -inf
  %v7218 = vsel %vm304, %v7172, -inf
  %v7219 = vmax.f32 %v7217, %v7218
  %v7220 = vrot.slane %v7219, 4
  %v7221 = vmax.f32 %v7219, %v7220
  %v7222 = vrot.slane %v7221, 2
  %v7223 = vmax.f32 %v7221, %v7222
  %v7224 = vrot.slane %v7223, 1
  %v7225 = vmax.f32 %v7223, %v7224
  %v7226 = vsel %vm304, %v7173, -inf
  %v7227 = vsel %vm304, %v7174, -inf
  %v7228 = vmax.f32 %v7226, %v7227
  %v7229 = vrot.slane %v7228, 4
  %v7230 = vmax.f32 %v7228, %v7229
  %v7231 = vrot.slane %v7230, 2
  %v7232 = vmax.f32 %v7230, %v7231
  %v7233 = vrot.slane %v7232, 1
  %v7234 = vmax.f32 %v7232, %v7233
  %v7235 = vsel %vm304, %v7175, -inf
  %v7236 = vsel %vm304, %v7176, -inf
  %v7237 = vmax.f32 %v7235, %v7236
  %v7238 = vrot.slane %v7237, 4
  %v7239 = vmax.f32 %v7237, %v7238
  %v7240 = vrot.slane %v7239, 2
  %v7241 = vmax.f32 %v7239, %v7240
  %v7242 = vrot.slane %v7241, 1
  %v7243 = vmax.f32 %v7241, %v7242
  %v7244 = vsel %vm304, %v7177, -inf
  %v7245 = vsel %vm304, %v7178, -inf
  %v7246 = vmax.f32 %v7244, %v7245
  %v7247 = vrot.slane %v7246, 4
  %v7248 = vmax.f32 %v7246, %v7247
  %v7249 = vrot.slane %v7248, 2
  %v7250 = vmax.f32 %v7248, %v7249
  %v7251 = vrot.slane %v7250, 1
  %v7252 = vmax.f32 %v7250, %v7251
  %v7253 = vsel %vm304, %v7179, -inf
  %v7254 = vsel %vm304, %v7180, -inf
  %v7255 = vmax.f32 %v7253, %v7254
  %v7256 = vrot.slane %v7255, 4
  %v7257 = vmax.f32 %v7255, %v7256
  %v7258 = vrot.slane %v7257, 2
  %v7259 = vmax.f32 %v7257, %v7258
  %v7260 = vrot.slane %v7259, 1
  %v7261 = vmax.f32 %v7259, %v7260
  %v7262 = vsel %vm304, %v7181, -inf
  %v7263 = vsel %vm304, %v7182, -inf
  %v7264 = vmax.f32 %v7262, %v7263
  %v7265 = vrot.slane %v7264, 4
  %v7266 = vmax.f32 %v7264, %v7265
  %v7267 = vrot.slane %v7266, 2
  %v7268 = vmax.f32 %v7266, %v7267
  %v7269 = vrot.slane %v7268, 1
  %v7270 = vmax.f32 %v7268, %v7269
  %v7271 = vsel %vm304, %v7183, -inf
  %v7272 = vsel %vm304, %v7184, -inf
  %v7273 = vmax.f32 %v7271, %v7272
  %v7274 = vrot.slane %v7273, 4
  %v7275 = vmax.f32 %v7273, %v7274
  %v7276 = vrot.slane %v7275, 2
  %v7277 = vmax.f32 %v7275, %v7276
  %v7278 = vrot.slane %v7277, 1
  %v7279 = vmax.f32 %v7277, %v7278
  %v7280 = vsel %vm304, %v7185, -inf
  %v7281 = vsel %vm304, %v7186, -inf
  %v7282 = vmax.f32 %v7280, %v7281
  %v7283 = vrot.slane %v7282, 4
  %v7284 = vmax.f32 %v7282, %v7283
  %v7285 = vrot.slane %v7284, 2
  %v7286 = vmax.f32 %v7284, %v7285
  %v7287 = vrot.slane %v7286, 1
  %v7288 = vmax.f32 %v7286, %v7287
  %v7289 = vsel %vm304, %v7187, -inf
  %v7290 = vsel %vm304, %v7188, -inf
  %v7291 = vmax.f32 %v7289, %v7290
  %v7292 = vrot.slane %v7291, 4
  %v7293 = vmax.f32 %v7291, %v7292
  %v7294 = vrot.slane %v7293, 2
  %v7295 = vmax.f32 %v7293, %v7294
  %v7296 = vrot.slane %v7295, 1
  %v7297 = vmax.f32 %v7295, %v7296
  %v7298 = vsel %vm304, %v7189, -inf
  %v7299 = vsel %vm304, %v7190, -inf
  %v7300 = vmax.f32 %v7298, %v7299
  %v7301 = vrot.slane %v7300, 4
  %v7302 = vmax.f32 %v7300, %v7301
  %v7303 = vrot.slane %v7302, 2
  %v7304 = vmax.f32 %v7302, %v7303
  %v7305 = vrot.slane %v7304, 1
  %v7306 = vmax.f32 %v7304, %v7305
  %v7307 = vsel %vm304, %v7191, -inf
  %v7308 = vsel %vm304, %v7192, -inf
  %v7309 = vmax.f32 %v7307, %v7308
  %v7310 = vrot.slane %v7309, 4
  %v7311 = vmax.f32 %v7309, %v7310
  %v7312 = vrot.slane %v7311, 2
  %v7313 = vmax.f32 %v7311, %v7312
  %v7314 = vrot.slane %v7313, 1
  %v7315 = vmax.f32 %v7313, %v7314
  %v7316 = vsel %vm304, %v7193, -inf
  %v7317 = vsel %vm304, %v7194, -inf
  %v7318 = vmax.f32 %v7316, %v7317
  %v7319 = vrot.slane %v7318, 4
  %v7320 = vmax.f32 %v7318, %v7319
  %v7321 = vrot.slane %v7320, 2
  %v7322 = vmax.f32 %v7320, %v7321
  %v7323 = vrot.slane %v7322, 1
  %v7324 = vmax.f32 %v7322, %v7323
  %v7325 = vsel %vm304, %v7195, -inf
  %v7326 = vsel %vm304, %v7196, -inf
  %v7327 = vmax.f32 %v7325, %v7326
  %v7328 = vrot.slane %v7327, 4
  %v7329 = vmax.f32 %v7327, %v7328
  %v7330 = vrot.slane %v7329, 2
  %v7331 = vmax.f32 %v7329, %v7330
  %v7332 = vrot.slane %v7331, 1
  %v7333 = vmax.f32 %v7331, %v7332
  %v7334 = vsel %vm304, %v7197, -inf
  %v7335 = vsel %vm304, %v7198, -inf
  %v7336 = vmax.f32 %v7334, %v7335
  %v7337 = vrot.slane %v7336, 4
  %v7338 = vmax.f32 %v7336, %v7337
  %v7339 = vrot.slane %v7338, 2
  %v7340 = vmax.f32 %v7338, %v7339
  %v7341 = vrot.slane %v7340, 1
  %v7342 = vmax.f32 %v7340, %v7341
  %v7343 = vsub.f32 %v7167, %v7207
  %v7344 = vsub.f32 %v7168, %v7207
  %v7345 = vsub.f32 %v7169, %v7216
  %v7346 = vsub.f32 %v7170, %v7216
  %v7347 = vsub.f32 %v7171, %v7225
  %v7348 = vsub.f32 %v7172, %v7225
  %v7349 = vsub.f32 %v7173, %v7234
  %v7350 = vsub.f32 %v7174, %v7234
  %v7351 = vsub.f32 %v7175, %v7243
  %v7352 = vsub.f32 %v7176, %v7243
  %v7353 = vsub.f32 %v7177, %v7252
  %v7354 = vsub.f32 %v7178, %v7252
  %v7355 = vsub.f32 %v7179, %v7261
  %v7356 = vsub.f32 %v7180, %v7261
  %v7357 = vsub.f32 %v7181, %v7270
  %v7358 = vsub.f32 %v7182, %v7270
  %v7359 = vsub.f32 %v7183, %v7279
  %v7360 = vsub.f32 %v7184, %v7279
  %v7361 = vsub.f32 %v7185, %v7288
  %v7362 = vsub.f32 %v7186, %v7288
  %v7363 = vsub.f32 %v7187, %v7297
  %v7364 = vsub.f32 %v7188, %v7297
  %v7365 = vsub.f32 %v7189, %v7306
  %v7366 = vsub.f32 %v7190, %v7306
  %v7367 = vsub.f32 %v7191, %v7315
  %v7368 = vsub.f32 %v7192, %v7315
  %v7369 = vsub.f32 %v7193, %v7324
  %v7370 = vsub.f32 %v7194, %v7324
  %v7371 = vsub.f32 %v7195, %v7333
  %v7372 = vsub.f32 %v7196, %v7333
  %v7373 = vsub.f32 %v7197, %v7342
  %v7374 = vsub.f32 %v7198, %v7342
  %v7375 = vmul.f32 %v7343, 1.442695
  %v7376 = vpow.pop %v7375
  %v7377 = vmul.f32 %v7344, 1.442695
  %v7378 = vpow.pop %v7377
  %v7379 = vmul.f32 %v7345, 1.442695
  %v7380 = vpow.pop %v7379
  %v7381 = vmul.f32 %v7346, 1.442695
  %v7382 = vpow.pop %v7381
  %v7383 = vmul.f32 %v7347, 1.442695
  %v7384 = vpow.pop %v7383
  %v7385 = vmul.f32 %v7348, 1.442695
  %v7386 = vpow.pop %v7385
  %v7387 = vmul.f32 %v7349, 1.442695
  %v7388 = vpow.pop %v7387
  %v7389 = vmul.f32 %v7350, 1.442695
  %v7390 = vpow.pop %v7389
  %v7391 = vmul.f32 %v7351, 1.442695
  %v7392 = vpow.pop %v7391
  %v7393 = vmul.f32 %v7352, 1.442695
  %v7394 = vpow.pop %v7393
  %v7395 = vmul.f32 %v7353, 1.442695
  %v7396 = vpow.pop %v7395
  %v7397 = vmul.f32 %v7354, 1.442695
  %v7398 = vpow.pop %v7397
  %v7399 = vmul.f32 %v7355, 1.442695
  %v7400 = vpow.pop %v7399
  %v7401 = vmul.f32 %v7356, 1.442695
  %v7402 = vpow.pop %v7401
  %v7403 = vmul.f32 %v7357, 1.442695
  %v7404 = vpow.pop %v7403
  %v7405 = vmul.f32 %v7358, 1.442695
  %v7406 = vpow.pop %v7405
  %v7407 = vmul.f32 %v7359, 1.442695
  %v7408 = vpow.pop %v7407
  %v7409 = vmul.f32 %v7360, 1.442695
  %v7410 = vpow.pop %v7409
  %v7411 = vmul.f32 %v7361, 1.442695
  %v7412 = vpow.pop %v7411
  %v7413 = vmul.f32 %v7362, 1.442695
  %v7414 = vpow.pop %v7413
  %v7415 = vmul.f32 %v7363, 1.442695
  %v7416 = vpow.pop %v7415
  %v7417 = vmul.f32 %v7364, 1.442695
  %v7418 = vpow.pop %v7417
  %v7419 = vmul.f32 %v7365, 1.442695
  %v7420 = vpow.pop %v7419
  %v7421 = vmul.f32 %v7366, 1.442695
  %v7422 = vpow.pop %v7421
  %v7423 = vmul.f32 %v7367, 1.442695
  %v7424 = vpow.pop %v7423
  %v7425 = vmul.f32 %v7368, 1.442695
  %v7426 = vpow.pop %v7425
  %v7427 = vmul.f32 %v7369, 1.442695
  %v7428 = vpow.pop %v7427
  %v7429 = vmul.f32 %v7370, 1.442695
  %v7430 = vpow.pop %v7429
  %v7431 = vmul.f32 %v7371, 1.442695
  %v7432 = vpow.pop %v7431
  %v7433 = vmul.f32 %v7372, 1.442695
  %v7434 = vpow.pop %v7433
  %v7435 = vmul.f32 %v7373, 1.442695
  %v7436 = vpow.pop %v7435
  %v7437 = vmul.f32 %v7374, 1.442695
  %v7438 = vpow.pop %v7437
  %v7439 = vsel %vm304, %v7376, 0.0
  %v7440 = vsel %vm304, %v7378, 0.0
  %v7441 = vadd.f32 %v7439, %v7440
  %v7442 = vrot.slane %v7441, 4
  %v7443 = vadd.f32 %v7441, %v7442
  %v7444 = vrot.slane %v7443, 2
  %v7445 = vadd.f32 %v7443, %v7444
  %v7446 = vrot.slane %v7445, 1
  %v7447 = vadd.f32 %v7445, %v7446
  %v7448 = vsel %vm304, %v7380, 0.0
  %v7449 = vsel %vm304, %v7382, 0.0
  %v7450 = vadd.f32 %v7448, %v7449
  %v7451 = vrot.slane %v7450, 4
  %v7452 = vadd.f32 %v7450, %v7451
  %v7453 = vrot.slane %v7452, 2
  %v7454 = vadd.f32 %v7452, %v7453
  %v7455 = vrot.slane %v7454, 1
  %v7456 = vadd.f32 %v7454, %v7455
  %v7457 = vsel %vm304, %v7384, 0.0
  %v7458 = vsel %vm304, %v7386, 0.0
  %v7459 = vadd.f32 %v7457, %v7458
  %v7460 = vrot.slane %v7459, 4
  %v7461 = vadd.f32 %v7459, %v7460
  %v7462 = vrot.slane %v7461, 2
  %v7463 = vadd.f32 %v7461, %v7462
  %v7464 = vrot.slane %v7463, 1
  %v7465 = vadd.f32 %v7463, %v7464
  %v7466 = vsel %vm304, %v7388, 0.0
  %v7467 = vsel %vm304, %v7390, 0.0
  %v7468 = vadd.f32 %v7466, %v7467
  %v7469 = vrot.slane %v7468, 4
  %v7470 = vadd.f32 %v7468, %v7469
  %v7471 = vrot.slane %v7470, 2
  %v7472 = vadd.f32 %v7470, %v7471
  %v7473 = vrot.slane %v7472, 1
  %v7474 = vadd.f32 %v7472, %v7473
  %v7475 = vsel %vm304, %v7392, 0.0
  %v7476 = vsel %vm304, %v7394, 0.0
  %v7477 = vadd.f32 %v7475, %v7476
  %v7478 = vrot.slane %v7477, 4
  %v7479 = vadd.f32 %v7477, %v7478
  %v7480 = vrot.slane %v7479, 2
  %v7481 = vadd.f32 %v7479, %v7480
  %v7482 = vrot.slane %v7481, 1
  %v7483 = vadd.f32 %v7481, %v7482
  %v7484 = vsel %vm304, %v7396, 0.0
  %v7485 = vsel %vm304, %v7398, 0.0
  %v7486 = vadd.f32 %v7484, %v7485
  %v7487 = vrot.slane %v7486, 4
  %v7488 = vadd.f32 %v7486, %v7487
  %v7489 = vrot.slane %v7488, 2
  %v7490 = vadd.f32 %v7488, %v7489
  %v7491 = vrot.slane %v7490, 1
  %v7492 = vadd.f32 %v7490, %v7491
  %v7493 = vsel %vm304, %v7400, 0.0
  %v7494 = vsel %vm304, %v7402, 0.0
  %v7495 = vadd.f32 %v7493, %v7494
  %v7496 = vrot.slane %v7495, 4
  %v7497 = vadd.f32 %v7495, %v7496
  %v7498 = vrot.slane %v7497, 2
  %v7499 = vadd.f32 %v7497, %v7498
  %v7500 = vrot.slane %v7499, 1
  %v7501 = vadd.f32 %v7499, %v7500
  %v7502 = vsel %vm304, %v7404, 0.0
  %v7503 = vsel %vm304, %v7406, 0.0
  %v7504 = vadd.f32 %v7502, %v7503
  %v7505 = vrot.slane %v7504, 4
  %v7506 = vadd.f32 %v7504, %v7505
  %v7507 = vrot.slane %v7506, 2
  %v7508 = vadd.f32 %v7506, %v7507
  %v7509 = vrot.slane %v7508, 1
  %v7510 = vadd.f32 %v7508, %v7509
  %v7511 = vsel %vm304, %v7408, 0.0
  %v7512 = vsel %vm304, %v7410, 0.0
  %v7513 = vadd.f32 %v7511, %v7512
  %v7514 = vrot.slane %v7513, 4
  %v7515 = vadd.f32 %v7513, %v7514
  %v7516 = vrot.slane %v7515, 2
  %v7517 = vadd.f32 %v7515, %v7516
  %v7518 = vrot.slane %v7517, 1
  %v7519 = vadd.f32 %v7517, %v7518
  %v7520 = vsel %vm304, %v7412, 0.0
  %v7521 = vsel %vm304, %v7414, 0.0
  %v7522 = vadd.f32 %v7520, %v7521
  %v7523 = vrot.slane %v7522, 4
  %v7524 = vadd.f32 %v7522, %v7523
  %v7525 = vrot.slane %v7524, 2
  %v7526 = vadd.f32 %v7524, %v7525
  %v7527 = vrot.slane %v7526, 1
  %v7528 = vadd.f32 %v7526, %v7527
  %v7529 = vsel %vm304, %v7416, 0.0
  %v7530 = vsel %vm304, %v7418, 0.0
  %v7531 = vadd.f32 %v7529, %v7530
  %v7532 = vrot.slane %v7531, 4
  %v7533 = vadd.f32 %v7531, %v7532
  %v7534 = vrot.slane %v7533, 2
  %v7535 = vadd.f32 %v7533, %v7534
  %v7536 = vrot.slane %v7535, 1
  %v7537 = vadd.f32 %v7535, %v7536
  %v7538 = vsel %vm304, %v7420, 0.0
  %v7539 = vsel %vm304, %v7422, 0.0
  %v7540 = vadd.f32 %v7538, %v7539
  %v7541 = vrot.slane %v7540, 4
  %v7542 = vadd.f32 %v7540, %v7541
  %v7543 = vrot.slane %v7542, 2
  %v7544 = vadd.f32 %v7542, %v7543
  %v7545 = vrot.slane %v7544, 1
  %v7546 = vadd.f32 %v7544, %v7545
  %v7547 = vsel %vm304, %v7424, 0.0
  %v7548 = vsel %vm304, %v7426, 0.0
  %v7549 = vadd.f32 %v7547, %v7548
  %v7550 = vrot.slane %v7549, 4
  %v7551 = vadd.f32 %v7549, %v7550
  %v7552 = vrot.slane %v7551, 2
  %v7553 = vadd.f32 %v7551, %v7552
  %v7554 = vrot.slane %v7553, 1
  %v7555 = vadd.f32 %v7553, %v7554
  %v7556 = vsel %vm304, %v7428, 0.0
  %v7557 = vsel %vm304, %v7430, 0.0
  %v7558 = vadd.f32 %v7556, %v7557
  %v7559 = vrot.slane %v7558, 4
  %v7560 = vadd.f32 %v7558, %v7559
  %v7561 = vrot.slane %v7560, 2
  %v7562 = vadd.f32 %v7560, %v7561
  %v7563 = vrot.slane %v7562, 1
  %v7564 = vadd.f32 %v7562, %v7563
  %v7565 = vsel %vm304, %v7432, 0.0
  %v7566 = vsel %vm304, %v7434, 0.0
  %v7567 = vadd.f32 %v7565, %v7566
  %v7568 = vrot.slane %v7567, 4
  %v7569 = vadd.f32 %v7567, %v7568
  %v7570 = vrot.slane %v7569, 2
  %v7571 = vadd.f32 %v7569, %v7570
  %v7572 = vrot.slane %v7571, 1
  %v7573 = vadd.f32 %v7571, %v7572
  %v7574 = vsel %vm304, %v7436, 0.0
  %v7575 = vsel %vm304, %v7438, 0.0
  %v7576 = vadd.f32 %v7574, %v7575
  %v7577 = vrot.slane %v7576, 4
  %v7578 = vadd.f32 %v7576, %v7577
  %v7579 = vrot.slane %v7578, 2
  %v7580 = vadd.f32 %v7578, %v7579
  %v7581 = vrot.slane %v7580, 1
  %v7582 = vadd.f32 %v7580, %v7581
  %v7583 = vmul.f32 %v7376, %v6366
  %v7584 = vmul.f32 %v7378, %v6369
  %v7585 = vmul.f32 %v7380, %v6366
  %v7586 = vmul.f32 %v7382, %v6369
  %v7587 = vmul.f32 %v7384, %v6366
  %v7588 = vmul.f32 %v7386, %v6369
  %v7589 = vmul.f32 %v7388, %v6366
  %v7590 = vmul.f32 %v7390, %v6369
  %v7591 = vmul.f32 %v7392, %v6366
  %v7592 = vmul.f32 %v7394, %v6369
  %v7593 = vmul.f32 %v7396, %v6366
  %v7594 = vmul.f32 %v7398, %v6369
  %v7595 = vmul.f32 %v7400, %v6366
  %v7596 = vmul.f32 %v7402, %v6369
  %v7597 = vmul.f32 %v7404, %v6366
  %v7598 = vmul.f32 %v7406, %v6369
  %v7599 = vmul.f32 %v7408, %v6366
  %v7600 = vmul.f32 %v7410, %v6369
  %v7601 = vmul.f32 %v7412, %v6366
  %v7602 = vmul.f32 %v7414, %v6369
  %v7603 = vmul.f32 %v7416, %v6366
  %v7604 = vmul.f32 %v7418, %v6369
  %v7605 = vmul.f32 %v7420, %v6366
  %v7606 = vmul.f32 %v7422, %v6369
  %v7607 = vmul.f32 %v7424, %v6366
  %v7608 = vmul.f32 %v7426, %v6369
  %v7609 = vmul.f32 %v7428, %v6366
  %v7610 = vmul.f32 %v7430, %v6369
  %v7611 = vmul.f32 %v7432, %v6366
  %v7612 = vmul.f32 %v7434, %v6369
  %v7613 = vmul.f32 %v7436, %v6366
  %v7614 = vmul.f32 %v7438, %v6369
  %v7615 = vsel %vm304, %v7583, 0.0
  %v7616 = vsel %vm304, %v7584, 0.0
  %v7617 = vadd.f32 %v7615, %v7616
  %v7618 = vrot.slane %v7617, 4
  %v7619 = vadd.f32 %v7617, %v7618
  %v7620 = vrot.slane %v7619, 2
  %v7621 = vadd.f32 %v7619, %v7620
  %v7622 = vrot.slane %v7621, 1
  %v7623 = vadd.f32 %v7621, %v7622
  %v7624 = vsel %vm304, %v7585, 0.0
  %v7625 = vsel %vm304, %v7586, 0.0
  %v7626 = vadd.f32 %v7624, %v7625
  %v7627 = vrot.slane %v7626, 4
  %v7628 = vadd.f32 %v7626, %v7627
  %v7629 = vrot.slane %v7628, 2
  %v7630 = vadd.f32 %v7628, %v7629
  %v7631 = vrot.slane %v7630, 1
  %v7632 = vadd.f32 %v7630, %v7631
  %v7633 = vsel %vm304, %v7587, 0.0
  %v7634 = vsel %vm304, %v7588, 0.0
  %v7635 = vadd.f32 %v7633, %v7634
  %v7636 = vrot.slane %v7635, 4
  %v7637 = vadd.f32 %v7635, %v7636
  %v7638 = vrot.slane %v7637, 2
  %v7639 = vadd.f32 %v7637, %v7638
  %v7640 = vrot.slane %v7639, 1
  %v7641 = vadd.f32 %v7639, %v7640
  %v7642 = vsel %vm304, %v7589, 0.0
  %v7643 = vsel %vm304, %v7590, 0.0
  %v7644 = vadd.f32 %v7642, %v7643
  %v7645 = vrot.slane %v7644, 4
  %v7646 = vadd.f32 %v7644, %v7645
  %v7647 = vrot.slane %v7646, 2
  %v7648 = vadd.f32 %v7646, %v7647
  %v7649 = vrot.slane %v7648, 1
  %v7650 = vadd.f32 %v7648, %v7649
  %v7651 = vsel %vm304, %v7591, 0.0
  %v7652 = vsel %vm304, %v7592, 0.0
  %v7653 = vadd.f32 %v7651, %v7652
  %v7654 = vrot.slane %v7653, 4
  %v7655 = vadd.f32 %v7653, %v7654
  %v7656 = vrot.slane %v7655, 2
  %v7657 = vadd.f32 %v7655, %v7656
  %v7658 = vrot.slane %v7657, 1
  %v7659 = vadd.f32 %v7657, %v7658
  %v7660 = vsel %vm304, %v7593, 0.0
  %v7661 = vsel %vm304, %v7594, 0.0
  %v7662 = vadd.f32 %v7660, %v7661
  %v7663 = vrot.slane %v7662, 4
  %v7664 = vadd.f32 %v7662, %v7663
  %v7665 = vrot.slane %v7664, 2
  %v7666 = vadd.f32 %v7664, %v7665
  %v7667 = vrot.slane %v7666, 1
  %v7668 = vadd.f32 %v7666, %v7667
  %v7669 = vsel %vm304, %v7595, 0.0
  %v7670 = vsel %vm304, %v7596, 0.0
  %v7671 = vadd.f32 %v7669, %v7670
  %v7672 = vrot.slane %v7671, 4
  %v7673 = vadd.f32 %v7671, %v7672
  %v7674 = vrot.slane %v7673, 2
  %v7675 = vadd.f32 %v7673, %v7674
  %v7676 = vrot.slane %v7675, 1
  %v7677 = vadd.f32 %v7675, %v7676
  %v7678 = vsel %vm304, %v7597, 0.0
  %v7679 = vsel %vm304, %v7598, 0.0
  %v7680 = vadd.f32 %v7678, %v7679
  %v7681 = vrot.slane %v7680, 4
  %v7682 = vadd.f32 %v7680, %v7681
  %v7683 = vrot.slane %v7682, 2
  %v7684 = vadd.f32 %v7682, %v7683
  %v7685 = vrot.slane %v7684, 1
  %v7686 = vadd.f32 %v7684, %v7685
  %v7687 = vsel %vm304, %v7599, 0.0
  %v7688 = vsel %vm304, %v7600, 0.0
  %v7689 = vadd.f32 %v7687, %v7688
  %v7690 = vrot.slane %v7689, 4
  %v7691 = vadd.f32 %v7689, %v7690
  %v7692 = vrot.slane %v7691, 2
  %v7693 = vadd.f32 %v7691, %v7692
  %v7694 = vrot.slane %v7693, 1
  %v7695 = vadd.f32 %v7693, %v7694
  %v7696 = vsel %vm304, %v7601, 0.0
  %v7697 = vsel %vm304, %v7602, 0.0
  %v7698 = vadd.f32 %v7696, %v7697
  %v7699 = vrot.slane %v7698, 4
  %v7700 = vadd.f32 %v7698, %v7699
  %v7701 = vrot.slane %v7700, 2
  %v7702 = vadd.f32 %v7700, %v7701
  %v7703 = vrot.slane %v7702, 1
  %v7704 = vadd.f32 %v7702, %v7703
  %v7705 = vsel %vm304, %v7603, 0.0
  %v7706 = vsel %vm304, %v7604, 0.0
  %v7707 = vadd.f32 %v7705, %v7706
  %v7708 = vrot.slane %v7707, 4
  %v7709 = vadd.f32 %v7707, %v7708
  %v7710 = vrot.slane %v7709, 2
  %v7711 = vadd.f32 %v7709, %v7710
  %v7712 = vrot.slane %v7711, 1
  %v7713 = vadd.f32 %v7711, %v7712
  %v7714 = vsel %vm304, %v7605, 0.0
  %v7715 = vsel %vm304, %v7606, 0.0
  %v7716 = vadd.f32 %v7714, %v7715
  %v7717 = vrot.slane %v7716, 4
  %v7718 = vadd.f32 %v7716, %v7717
  %v7719 = vrot.slane %v7718, 2
  %v7720 = vadd.f32 %v7718, %v7719
  %v7721 = vrot.slane %v7720, 1
  %v7722 = vadd.f32 %v7720, %v7721
  %v7723 = vsel %vm304, %v7607, 0.0
  %v7724 = vsel %vm304, %v7608, 0.0
  %v7725 = vadd.f32 %v7723, %v7724
  %v7726 = vrot.slane %v7725, 4
  %v7727 = vadd.f32 %v7725, %v7726
  %v7728 = vrot.slane %v7727, 2
  %v7729 = vadd.f32 %v7727, %v7728
  %v7730 = vrot.slane %v7729, 1
  %v7731 = vadd.f32 %v7729, %v7730
  %v7732 = vsel %vm304, %v7609, 0.0
  %v7733 = vsel %vm304, %v7610, 0.0
  %v7734 = vadd.f32 %v7732, %v7733
  %v7735 = vrot.slane %v7734, 4
  %v7736 = vadd.f32 %v7734, %v7735
  %v7737 = vrot.slane %v7736, 2
  %v7738 = vadd.f32 %v7736, %v7737
  %v7739 = vrot.slane %v7738, 1
  %v7740 = vadd.f32 %v7738, %v7739
  %v7741 = vsel %vm304, %v7611, 0.0
  %v7742 = vsel %vm304, %v7612, 0.0
  %v7743 = vadd.f32 %v7741, %v7742
  %v7744 = vrot.slane %v7743, 4
  %v7745 = vadd.f32 %v7743, %v7744
  %v7746 = vrot.slane %v7745, 2
  %v7747 = vadd.f32 %v7745, %v7746
  %v7748 = vrot.slane %v7747, 1
  %v7749 = vadd.f32 %v7747, %v7748
  %v7750 = vsel %vm304, %v7613, 0.0
  %v7751 = vsel %vm304, %v7614, 0.0
  %v7752 = vadd.f32 %v7750, %v7751
  %v7753 = vrot.slane %v7752, 4
  %v7754 = vadd.f32 %v7752, %v7753
  %v7755 = vrot.slane %v7754, 2
  %v7756 = vadd.f32 %v7754, %v7755
  %v7757 = vrot.slane %v7756, 1
  %v7758 = vadd.f32 %v7756, %v7757
  %v7759 = vrcp.pop %v7447
  %v7760 = vrcp.pop %v7456
  %v7761 = vrcp.pop %v7465
  %v7762 = vrcp.pop %v7474
  %v7763 = vrcp.pop %v7483
  %v7764 = vrcp.pop %v7492
  %v7765 = vrcp.pop %v7501
  %v7766 = vrcp.pop %v7510
  %v7767 = vrcp.pop %v7519
  %v7768 = vrcp.pop %v7528
  %v7769 = vrcp.pop %v7537
  %v7770 = vrcp.pop %v7546
  %v7771 = vrcp.pop %v7555
  %v7772 = vrcp.pop %v7564
  %v7773 = vrcp.pop %v7573
  %v7774 = vrcp.pop %v7582
  %v7775 = vmul.f32 %v7623, %v7759
  %v7776 = vmul.f32 %v7632, %v7760
  %v7777 = vmul.f32 %v7641, %v7761
  %v7778 = vmul.f32 %v7650, %v7762
  %v7779 = vmul.f32 %v7659, %v7763
  %v7780 = vmul.f32 %v7668, %v7764
  %v7781 = vmul.f32 %v7677, %v7765
  %v7782 = vmul.f32 %v7686, %v7766
  %v7783 = vmul.f32 %v7695, %v7767
  %v7784 = vmul.f32 %v7704, %v7768
  %v7785 = vmul.f32 %v7713, %v7769
  %v7786 = vmul.f32 %v7722, %v7770
  %v7787 = vmul.f32 %v7731, %v7771
  %v7788 = vmul.f32 %v7740, %v7772
  %v7789 = vmul.f32 %v7749, %v7773
  %v7790 = vmul.f32 %v7758, %v7774
  %v7793 = vrot.slane %v6276, 1
  %v7794 = vrot.slane %v6276, 2
  %v7795 = vrot.slane %v6276, 3
  %v7796 = vrot.slane %v6276, 4
  %v7797 = vrot.slane %v6276, 5
  %v7798 = vrot.slane %v6276, 6
  %v7799 = vrot.slane %v6276, 7
  %v7800 = vrot.slane %v6279, 1
  %v7801 = vrot.slane %v6279, 2
  %v7802 = vrot.slane %v6279, 3
  %v7803 = vrot.slane %v6279, 4
  %v7804 = vrot.slane %v6279, 5
  %v7805 = vrot.slane %v6279, 6
  %v7806 = vrot.slane %v6279, 7
  %v7807 = vperm.slane %v6276, 0
  %v7808 = vperm.slane %v7793, 0
  %v7809 = vperm.slane %v7794, 0
  %v7810 = vperm.slane %v7795, 0
  %v7811 = vperm.slane %v7796, 0
  %v7812 = vperm.slane %v7797, 0
  %v7813 = vperm.slane %v7798, 0
  %v7814 = vperm.slane %v7799, 0
  %v7815 = vperm.slane %v6279, 0
  %v7816 = vperm.slane %v7800, 0
  %v7817 = vperm.slane %v7801, 0
  %v7818 = vperm.slane %v7802, 0
  %v7819 = vperm.slane %v7803, 0
  %v7820 = vperm.slane %v7804, 0
  %v7821 = vperm.slane %v7805, 0
  %v7822 = vperm.slane %v7806, 0
  %v7839 = vmul.f32 %v7807, %v6324
  %v7840 = vmul.f32 %v7807, %v6327
  %v7841 = vmul.f32 %v7808, %v6324
  %v7842 = vmul.f32 %v7808, %v6327
  %v7843 = vmul.f32 %v7809, %v6324
  %v7844 = vmul.f32 %v7809, %v6327
  %v7845 = vmul.f32 %v7810, %v6324
  %v7846 = vmul.f32 %v7810, %v6327
  %v7847 = vmul.f32 %v7811, %v6324
  %v7848 = vmul.f32 %v7811, %v6327
  %v7849 = vmul.f32 %v7812, %v6324
  %v7850 = vmul.f32 %v7812, %v6327
  %v7851 = vmul.f32 %v7813, %v6324
  %v7852 = vmul.f32 %v7813, %v6327
  %v7853 = vmul.f32 %v7814, %v6324
  %v7854 = vmul.f32 %v7814, %v6327
  %v7855 = vmul.f32 %v7815, %v6324
  %v7856 = vmul.f32 %v7815, %v6327
  %v7857 = vmul.f32 %v7816, %v6324
  %v7858 = vmul.f32 %v7816, %v6327
  %v7859 = vmul.f32 %v7817, %v6324
  %v7860 = vmul.f32 %v7817, %v6327
  %v7861 = vmul.f32 %v7818, %v6324
  %v7862 = vmul.f32 %v7818, %v6327
  %v7863 = vmul.f32 %v7819, %v6324
  %v7864 = vmul.f32 %v7819, %v6327
  %v7865 = vmul.f32 %v7820, %v6324
  %v7866 = vmul.f32 %v7820, %v6327
  %v7867 = vmul.f32 %v7821, %v6324
  %v7868 = vmul.f32 %v7821, %v6327
  %v7869 = vmul.f32 %v7822, %v6324
  %v7870 = vmul.f32 %v7822, %v6327
  %v7871 = vadd.f32 %v7839, %v89
  %v7872 = vadd.f32 %v7840, %v95
  %v7873 = vadd.f32 %v7841, %v102
  %v7874 = vadd.f32 %v7842, %v108
  %v7875 = vadd.f32 %v7843, %v115
  %v7876 = vadd.f32 %v7844, %v121
  %v7877 = vadd.f32 %v7845, %v128
  %v7878 = vadd.f32 %v7846, %v134
  %v7879 = vadd.f32 %v7847, %v141
  %v7880 = vadd.f32 %v7848, %v147
  %v7881 = vadd.f32 %v7849, %v154
  %v7882 = vadd.f32 %v7850, %v160
  %v7883 = vadd.f32 %v7851, %v167
  %v7884 = vadd.f32 %v7852, %v173
  %v7885 = vadd.f32 %v7853, %v180
  %v7886 = vadd.f32 %v7854, %v186
  %v7887 = vadd.f32 %v7855, %v193
  %v7888 = vadd.f32 %v7856, %v199
  %v7889 = vadd.f32 %v7857, %v206
  %v7890 = vadd.f32 %v7858, %v212
  %v7891 = vadd.f32 %v7859, %v219
  %v7892 = vadd.f32 %v7860, %v225
  %v7893 = vadd.f32 %v7861, %v232
  %v7894 = vadd.f32 %v7862, %v238
  %v7895 = vadd.f32 %v7863, %v245
  %v7896 = vadd.f32 %v7864, %v251
  %v7897 = vadd.f32 %v7865, %v258
  %v7898 = vadd.f32 %v7866, %v264
  %v7899 = vadd.f32 %v7867, %v271
  %v7900 = vadd.f32 %v7868, %v277
  %v7901 = vadd.f32 %v7869, %v284
  %v7902 = vadd.f32 %v7870, %v290
  %v7903 = vsel %vm304, %v7871, -inf
  %v7904 = vsel %vm304, %v7872, -inf
  %v7905 = vmax.f32 %v7903, %v7904
  %v7906 = vrot.slane %v7905, 4
  %v7907 = vmax.f32 %v7905, %v7906
  %v7908 = vrot.slane %v7907, 2
  %v7909 = vmax.f32 %v7907, %v7908
  %v7910 = vrot.slane %v7909, 1
  %v7911 = vmax.f32 %v7909, %v7910
  %v7912 = vsel %vm304, %v7873, -inf
  %v7913 = vsel %vm304, %v7874, -inf
  %v7914 = vmax.f32 %v7912, %v7913
  %v7915 = vrot.slane %v7914, 4
  %v7916 = vmax.f32 %v7914, %v7915
  %v7917 = vrot.slane %v7916, 2
  %v7918 = vmax.f32 %v7916, %v7917
  %v7919 = vrot.slane %v7918, 1
  %v7920 = vmax.f32 %v7918, %v7919
  %v7921 = vsel %vm304, %v7875, -inf
  %v7922 = vsel %vm304, %v7876, -inf
  %v7923 = vmax.f32 %v7921, %v7922
  %v7924 = vrot.slane %v7923, 4
  %v7925 = vmax.f32 %v7923, %v7924
  %v7926 = vrot.slane %v7925, 2
  %v7927 = vmax.f32 %v7925, %v7926
  %v7928 = vrot.slane %v7927, 1
  %v7929 = vmax.f32 %v7927, %v7928
  %v7930 = vsel %vm304, %v7877, -inf
  %v7931 = vsel %vm304, %v7878, -inf
  %v7932 = vmax.f32 %v7930, %v7931
  %v7933 = vrot.slane %v7932, 4
  %v7934 = vmax.f32 %v7932, %v7933
  %v7935 = vrot.slane %v7934, 2
  %v7936 = vmax.f32 %v7934, %v7935
  %v7937 = vrot.slane %v7936, 1
  %v7938 = vmax.f32 %v7936, %v7937
  %v7939 = vsel %vm304, %v7879, -inf
  %v7940 = vsel %vm304, %v7880, -inf
  %v7941 = vmax.f32 %v7939, %v7940
  %v7942 = vrot.slane %v7941, 4
  %v7943 = vmax.f32 %v7941, %v7942
  %v7944 = vrot.slane %v7943, 2
  %v7945 = vmax.f32 %v7943, %v7944
  %v7946 = vrot.slane %v7945, 1
  %v7947 = vmax.f32 %v7945, %v7946
  %v7948 = vsel %vm304, %v7881, -inf
  %v7949 = vsel %vm304, %v7882, -inf
  %v7950 = vmax.f32 %v7948, %v7949
  %v7951 = vrot.slane %v7950, 4
  %v7952 = vmax.f32 %v7950, %v7951
  %v7953 = vrot.slane %v7952, 2
  %v7954 = vmax.f32 %v7952, %v7953
  %v7955 = vrot.slane %v7954, 1
  %v7956 = vmax.f32 %v7954, %v7955
  %v7957 = vsel %vm304, %v7883, -inf
  %v7958 = vsel %vm304, %v7884, -inf
  %v7959 = vmax.f32 %v7957, %v7958
  %v7960 = vrot.slane %v7959, 4
  %v7961 = vmax.f32 %v7959, %v7960
  %v7962 = vrot.slane %v7961, 2
  %v7963 = vmax.f32 %v7961, %v7962
  %v7964 = vrot.slane %v7963, 1
  %v7965 = vmax.f32 %v7963, %v7964
  %v7966 = vsel %vm304, %v7885, -inf
  %v7967 = vsel %vm304, %v7886, -inf
  %v7968 = vmax.f32 %v7966, %v7967
  %v7969 = vrot.slane %v7968, 4
  %v7970 = vmax.f32 %v7968, %v7969
  %v7971 = vrot.slane %v7970, 2
  %v7972 = vmax.f32 %v7970, %v7971
  %v7973 = vrot.slane %v7972, 1
  %v7974 = vmax.f32 %v7972, %v7973
  %v7975 = vsel %vm304, %v7887, -inf
  %v7976 = vsel %vm304, %v7888, -inf
  %v7977 = vmax.f32 %v7975, %v7976
  %v7978 = vrot.slane %v7977, 4
  %v7979 = vmax.f32 %v7977, %v7978
  %v7980 = vrot.slane %v7979, 2
  %v7981 = vmax.f32 %v7979, %v7980
  %v7982 = vrot.slane %v7981, 1
  %v7983 = vmax.f32 %v7981, %v7982
  %v7984 = vsel %vm304, %v7889, -inf
  %v7985 = vsel %vm304, %v7890, -inf
  %v7986 = vmax.f32 %v7984, %v7985
  %v7987 = vrot.slane %v7986, 4
  %v7988 = vmax.f32 %v7986, %v7987
  %v7989 = vrot.slane %v7988, 2
  %v7990 = vmax.f32 %v7988, %v7989
  %v7991 = vrot.slane %v7990, 1
  %v7992 = vmax.f32 %v7990, %v7991
  %v7993 = vsel %vm304, %v7891, -inf
  %v7994 = vsel %vm304, %v7892, -inf
  %v7995 = vmax.f32 %v7993, %v7994
  %v7996 = vrot.slane %v7995, 4
  %v7997 = vmax.f32 %v7995, %v7996
  %v7998 = vrot.slane %v7997, 2
  %v7999 = vmax.f32 %v7997, %v7998
  %v8000 = vrot.slane %v7999, 1
  %v8001 = vmax.f32 %v7999, %v8000
  %v8002 = vsel %vm304, %v7893, -inf
  %v8003 = vsel %vm304, %v7894, -inf
  %v8004 = vmax.f32 %v8002, %v8003
  %v8005 = vrot.slane %v8004, 4
  %v8006 = vmax.f32 %v8004, %v8005
  %v8007 = vrot.slane %v8006, 2
  %v8008 = vmax.f32 %v8006, %v8007
  %v8009 = vrot.slane %v8008, 1
  %v8010 = vmax.f32 %v8008, %v8009
  %v8011 = vsel %vm304, %v7895, -inf
  %v8012 = vsel %vm304, %v7896, -inf
  %v8013 = vmax.f32 %v8011, %v8012
  %v8014 = vrot.slane %v8013, 4
  %v8015 = vmax.f32 %v8013, %v8014
  %v8016 = vrot.slane %v8015, 2
  %v8017 = vmax.f32 %v8015, %v8016
  %v8018 = vrot.slane %v8017, 1
  %v8019 = vmax.f32 %v8017, %v8018
  %v8020 = vsel %vm304, %v7897, -inf
  %v8021 = vsel %vm304, %v7898, -inf
  %v8022 = vmax.f32 %v8020, %v8021
  %v8023 = vrot.slane %v8022, 4
  %v8024 = vmax.f32 %v8022, %v8023
  %v8025 = vrot.slane %v8024, 2
  %v8026 = vmax.f32 %v8024, %v8025
  %v8027 = vrot.slane %v8026, 1
  %v8028 = vmax.f32 %v8026, %v8027
  %v8029 = vsel %vm304, %v7899, -inf
  %v8030 = vsel %vm304, %v7900, -inf
  %v8031 = vmax.f32 %v8029, %v8030
  %v8032 = vrot.slane %v8031, 4
  %v8033 = vmax.f32 %v8031, %v8032
  %v8034 = vrot.slane %v8033, 2
  %v8035 = vmax.f32 %v8033, %v8034
  %v8036 = vrot.slane %v8035, 1
  %v8037 = vmax.f32 %v8035, %v8036
  %v8038 = vsel %vm304, %v7901, -inf
  %v8039 = vsel %vm304, %v7902, -inf
  %v8040 = vmax.f32 %v8038, %v8039
  %v8041 = vrot.slane %v8040, 4
  %v8042 = vmax.f32 %v8040, %v8041
  %v8043 = vrot.slane %v8042, 2
  %v8044 = vmax.f32 %v8042, %v8043
  %v8045 = vrot.slane %v8044, 1
  %v8046 = vmax.f32 %v8044, %v8045
  %v8047 = vsub.f32 %v7871, %v7911
  %v8048 = vsub.f32 %v7872, %v7911
  %v8049 = vsub.f32 %v7873, %v7920
  %v8050 = vsub.f32 %v7874, %v7920
  %v8051 = vsub.f32 %v7875, %v7929
  %v8052 = vsub.f32 %v7876, %v7929
  %v8053 = vsub.f32 %v7877, %v7938
  %v8054 = vsub.f32 %v7878, %v7938
  %v8055 = vsub.f32 %v7879, %v7947
  %v8056 = vsub.f32 %v7880, %v7947
  %v8057 = vsub.f32 %v7881, %v7956
  %v8058 = vsub.f32 %v7882, %v7956
  %v8059 = vsub.f32 %v7883, %v7965
  %v8060 = vsub.f32 %v7884, %v7965
  %v8061 = vsub.f32 %v7885, %v7974
  %v8062 = vsub.f32 %v7886, %v7974
  %v8063 = vsub.f32 %v7887, %v7983
  %v8064 = vsub.f32 %v7888, %v7983
  %v8065 = vsub.f32 %v7889, %v7992
  %v8066 = vsub.f32 %v7890, %v7992
  %v8067 = vsub.f32 %v7891, %v8001
  %v8068 = vsub.f32 %v7892, %v8001
  %v8069 = vsub.f32 %v7893, %v8010
  %v8070 = vsub.f32 %v7894, %v8010
  %v8071 = vsub.f32 %v7895, %v8019
  %v8072 = vsub.f32 %v7896, %v8019
  %v8073 = vsub.f32 %v7897, %v8028
  %v8074 = vsub.f32 %v7898, %v8028
  %v8075 = vsub.f32 %v7899, %v8037
  %v8076 = vsub.f32 %v7900, %v8037
  %v8077 = vsub.f32 %v7901, %v8046
  %v8078 = vsub.f32 %v7902, %v8046
  %v8079 = vmul.f32 %v8047, 1.442695
  %v8080 = vpow.pop %v8079
  %v8081 = vmul.f32 %v8048, 1.442695
  %v8082 = vpow.pop %v8081
  %v8083 = vmul.f32 %v8049, 1.442695
  %v8084 = vpow.pop %v8083
  %v8085 = vmul.f32 %v8050, 1.442695
  %v8086 = vpow.pop %v8085
  %v8087 = vmul.f32 %v8051, 1.442695
  %v8088 = vpow.pop %v8087
  %v8089 = vmul.f32 %v8052, 1.442695
  %v8090 = vpow.pop %v8089
  %v8091 = vmul.f32 %v8053, 1.442695
  %v8092 = vpow.pop %v8091
  %v8093 = vmul.f32 %v8054, 1.442695
  %v8094 = vpow.pop %v8093
  %v8095 = vmul.f32 %v8055, 1.442695
  %v8096 = vpow.pop %v8095
  %v8097 = vmul.f32 %v8056, 1.442695
  %v8098 = vpow.pop %v8097
  %v8099 = vmul.f32 %v8057, 1.442695
  %v8100 = vpow.pop %v8099
  %v8101 = vmul.f32 %v8058, 1.442695
  %v8102 = vpow.pop %v8101
  %v8103 = vmul.f32 %v8059, 1.442695
  %v8104 = vpow.pop %v8103
  %v8105 = vmul.f32 %v8060, 1.442695
  %v8106 = vpow.pop %v8105
  %v8107 = vmul.f32 %v8061, 1.442695
  %v8108 = vpow.pop %v8107
  %v8109 = vmul.f32 %v8062, 1.442695
  %v8110 = vpow.pop %v8109
  %v8111 = vmul.f32 %v8063, 1.442695
  %v8112 = vpow.pop %v8111
  %v8113 = vmul.f32 %v8064, 1.442695
  %v8114 = vpow.pop %v8113
  %v8115 = vmul.f32 %v8065, 1.442695
  %v8116 = vpow.pop %v8115
  %v8117 = vmul.f32 %v8066, 1.442695
  %v8118 = vpow.pop %v8117
  %v8119 = vmul.f32 %v8067, 1.442695
  %v8120 = vpow.pop %v8119
  %v8121 = vmul.f32 %v8068, 1.442695
  %v8122 = vpow.pop %v8121
  %v8123 = vmul.f32 %v8069, 1.442695
  %v8124 = vpow.pop %v8123
  %v8125 = vmul.f32 %v8070, 1.442695
  %v8126 = vpow.pop %v8125
  %v8127 = vmul.f32 %v8071, 1.442695
  %v8128 = vpow.pop %v8127
  %v8129 = vmul.f32 %v8072, 1.442695
  %v8130 = vpow.pop %v8129
  %v8131 = vmul.f32 %v8073, 1.442695
  %v8132 = vpow.pop %v8131
  %v8133 = vmul.f32 %v8074, 1.442695
  %v8134 = vpow.pop %v8133
  %v8135 = vmul.f32 %v8075, 1.442695
  %v8136 = vpow.pop %v8135
  %v8137 = vmul.f32 %v8076, 1.442695
  %v8138 = vpow.pop %v8137
  %v8139 = vmul.f32 %v8077, 1.442695
  %v8140 = vpow.pop %v8139
  %v8141 = vmul.f32 %v8078, 1.442695
  %v8142 = vpow.pop %v8141
  %v8143 = vsel %vm304, %v8080, 0.0
  %v8144 = vsel %vm304, %v8082, 0.0
  %v8145 = vadd.f32 %v8143, %v8144
  %v8146 = vrot.slane %v8145, 4
  %v8147 = vadd.f32 %v8145, %v8146
  %v8148 = vrot.slane %v8147, 2
  %v8149 = vadd.f32 %v8147, %v8148
  %v8150 = vrot.slane %v8149, 1
  %v8151 = vadd.f32 %v8149, %v8150
  %v8152 = vsel %vm304, %v8084, 0.0
  %v8153 = vsel %vm304, %v8086, 0.0
  %v8154 = vadd.f32 %v8152, %v8153
  %v8155 = vrot.slane %v8154, 4
  %v8156 = vadd.f32 %v8154, %v8155
  %v8157 = vrot.slane %v8156, 2
  %v8158 = vadd.f32 %v8156, %v8157
  %v8159 = vrot.slane %v8158, 1
  %v8160 = vadd.f32 %v8158, %v8159
  %v8161 = vsel %vm304, %v8088, 0.0
  %v8162 = vsel %vm304, %v8090, 0.0
  %v8163 = vadd.f32 %v8161, %v8162
  %v8164 = vrot.slane %v8163, 4
  %v8165 = vadd.f32 %v8163, %v8164
  %v8166 = vrot.slane %v8165, 2
  %v8167 = vadd.f32 %v8165, %v8166
  %v8168 = vrot.slane %v8167, 1
  %v8169 = vadd.f32 %v8167, %v8168
  %v8170 = vsel %vm304, %v8092, 0.0
  %v8171 = vsel %vm304, %v8094, 0.0
  %v8172 = vadd.f32 %v8170, %v8171
  %v8173 = vrot.slane %v8172, 4
  %v8174 = vadd.f32 %v8172, %v8173
  %v8175 = vrot.slane %v8174, 2
  %v8176 = vadd.f32 %v8174, %v8175
  %v8177 = vrot.slane %v8176, 1
  %v8178 = vadd.f32 %v8176, %v8177
  %v8179 = vsel %vm304, %v8096, 0.0
  %v8180 = vsel %vm304, %v8098, 0.0
  %v8181 = vadd.f32 %v8179, %v8180
  %v8182 = vrot.slane %v8181, 4
  %v8183 = vadd.f32 %v8181, %v8182
  %v8184 = vrot.slane %v8183, 2
  %v8185 = vadd.f32 %v8183, %v8184
  %v8186 = vrot.slane %v8185, 1
  %v8187 = vadd.f32 %v8185, %v8186
  %v8188 = vsel %vm304, %v8100, 0.0
  %v8189 = vsel %vm304, %v8102, 0.0
  %v8190 = vadd.f32 %v8188, %v8189
  %v8191 = vrot.slane %v8190, 4
  %v8192 = vadd.f32 %v8190, %v8191
  %v8193 = vrot.slane %v8192, 2
  %v8194 = vadd.f32 %v8192, %v8193
  %v8195 = vrot.slane %v8194, 1
  %v8196 = vadd.f32 %v8194, %v8195
  %v8197 = vsel %vm304, %v8104, 0.0
  %v8198 = vsel %vm304, %v8106, 0.0
  %v8199 = vadd.f32 %v8197, %v8198
  %v8200 = vrot.slane %v8199, 4
  %v8201 = vadd.f32 %v8199, %v8200
  %v8202 = vrot.slane %v8201, 2
  %v8203 = vadd.f32 %v8201, %v8202
  %v8204 = vrot.slane %v8203, 1
  %v8205 = vadd.f32 %v8203, %v8204
  %v8206 = vsel %vm304, %v8108, 0.0
  %v8207 = vsel %vm304, %v8110, 0.0
  %v8208 = vadd.f32 %v8206, %v8207
  %v8209 = vrot.slane %v8208, 4
  %v8210 = vadd.f32 %v8208, %v8209
  %v8211 = vrot.slane %v8210, 2
  %v8212 = vadd.f32 %v8210, %v8211
  %v8213 = vrot.slane %v8212, 1
  %v8214 = vadd.f32 %v8212, %v8213
  %v8215 = vsel %vm304, %v8112, 0.0
  %v8216 = vsel %vm304, %v8114, 0.0
  %v8217 = vadd.f32 %v8215, %v8216
  %v8218 = vrot.slane %v8217, 4
  %v8219 = vadd.f32 %v8217, %v8218
  %v8220 = vrot.slane %v8219, 2
  %v8221 = vadd.f32 %v8219, %v8220
  %v8222 = vrot.slane %v8221, 1
  %v8223 = vadd.f32 %v8221, %v8222
  %v8224 = vsel %vm304, %v8116, 0.0
  %v8225 = vsel %vm304, %v8118, 0.0
  %v8226 = vadd.f32 %v8224, %v8225
  %v8227 = vrot.slane %v8226, 4
  %v8228 = vadd.f32 %v8226, %v8227
  %v8229 = vrot.slane %v8228, 2
  %v8230 = vadd.f32 %v8228, %v8229
  %v8231 = vrot.slane %v8230, 1
  %v8232 = vadd.f32 %v8230, %v8231
  %v8233 = vsel %vm304, %v8120, 0.0
  %v8234 = vsel %vm304, %v8122, 0.0
  %v8235 = vadd.f32 %v8233, %v8234
  %v8236 = vrot.slane %v8235, 4
  %v8237 = vadd.f32 %v8235, %v8236
  %v8238 = vrot.slane %v8237, 2
  %v8239 = vadd.f32 %v8237, %v8238
  %v8240 = vrot.slane %v8239, 1
  %v8241 = vadd.f32 %v8239, %v8240
  %v8242 = vsel %vm304, %v8124, 0.0
  %v8243 = vsel %vm304, %v8126, 0.0
  %v8244 = vadd.f32 %v8242, %v8243
  %v8245 = vrot.slane %v8244, 4
  %v8246 = vadd.f32 %v8244, %v8245
  %v8247 = vrot.slane %v8246, 2
  %v8248 = vadd.f32 %v8246, %v8247
  %v8249 = vrot.slane %v8248, 1
  %v8250 = vadd.f32 %v8248, %v8249
  %v8251 = vsel %vm304, %v8128, 0.0
  %v8252 = vsel %vm304, %v8130, 0.0
  %v8253 = vadd.f32 %v8251, %v8252
  %v8254 = vrot.slane %v8253, 4
  %v8255 = vadd.f32 %v8253, %v8254
  %v8256 = vrot.slane %v8255, 2
  %v8257 = vadd.f32 %v8255, %v8256
  %v8258 = vrot.slane %v8257, 1
  %v8259 = vadd.f32 %v8257, %v8258
  %v8260 = vsel %vm304, %v8132, 0.0
  %v8261 = vsel %vm304, %v8134, 0.0
  %v8262 = vadd.f32 %v8260, %v8261
  %v8263 = vrot.slane %v8262, 4
  %v8264 = vadd.f32 %v8262, %v8263
  %v8265 = vrot.slane %v8264, 2
  %v8266 = vadd.f32 %v8264, %v8265
  %v8267 = vrot.slane %v8266, 1
  %v8268 = vadd.f32 %v8266, %v8267
  %v8269 = vsel %vm304, %v8136, 0.0
  %v8270 = vsel %vm304, %v8138, 0.0
  %v8271 = vadd.f32 %v8269, %v8270
  %v8272 = vrot.slane %v8271, 4
  %v8273 = vadd.f32 %v8271, %v8272
  %v8274 = vrot.slane %v8273, 2
  %v8275 = vadd.f32 %v8273, %v8274
  %v8276 = vrot.slane %v8275, 1
  %v8277 = vadd.f32 %v8275, %v8276
  %v8278 = vsel %vm304, %v8140, 0.0
  %v8279 = vsel %vm304, %v8142, 0.0
  %v8280 = vadd.f32 %v8278, %v8279
  %v8281 = vrot.slane %v8280, 4
  %v8282 = vadd.f32 %v8280, %v8281
  %v8283 = vrot.slane %v8282, 2
  %v8284 = vadd.f32 %v8282, %v8283
  %v8285 = vrot.slane %v8284, 1
  %v8286 = vadd.f32 %v8284, %v8285
  %v8287 = vmul.f32 %v8080, %v6372
  %v8288 = vmul.f32 %v8082, %v6375
  %v8289 = vmul.f32 %v8084, %v6372
  %v8290 = vmul.f32 %v8086, %v6375
  %v8291 = vmul.f32 %v8088, %v6372
  %v8292 = vmul.f32 %v8090, %v6375
  %v8293 = vmul.f32 %v8092, %v6372
  %v8294 = vmul.f32 %v8094, %v6375
  %v8295 = vmul.f32 %v8096, %v6372
  %v8296 = vmul.f32 %v8098, %v6375
  %v8297 = vmul.f32 %v8100, %v6372
  %v8298 = vmul.f32 %v8102, %v6375
  %v8299 = vmul.f32 %v8104, %v6372
  %v8300 = vmul.f32 %v8106, %v6375
  %v8301 = vmul.f32 %v8108, %v6372
  %v8302 = vmul.f32 %v8110, %v6375
  %v8303 = vmul.f32 %v8112, %v6372
  %v8304 = vmul.f32 %v8114, %v6375
  %v8305 = vmul.f32 %v8116, %v6372
  %v8306 = vmul.f32 %v8118, %v6375
  %v8307 = vmul.f32 %v8120, %v6372
  %v8308 = vmul.f32 %v8122, %v6375
  %v8309 = vmul.f32 %v8124, %v6372
  %v8310 = vmul.f32 %v8126, %v6375
  %v8311 = vmul.f32 %v8128, %v6372
  %v8312 = vmul.f32 %v8130, %v6375
  %v8313 = vmul.f32 %v8132, %v6372
  %v8314 = vmul.f32 %v8134, %v6375
  %v8315 = vmul.f32 %v8136, %v6372
  %v8316 = vmul.f32 %v8138, %v6375
  %v8317 = vmul.f32 %v8140, %v6372
  %v8318 = vmul.f32 %v8142, %v6375
  %v8319 = vsel %vm304, %v8287, 0.0
  %v8320 = vsel %vm304, %v8288, 0.0
  %v8321 = vadd.f32 %v8319, %v8320
  %v8322 = vrot.slane %v8321, 4
  %v8323 = vadd.f32 %v8321, %v8322
  %v8324 = vrot.slane %v8323, 2
  %v8325 = vadd.f32 %v8323, %v8324
  %v8326 = vrot.slane %v8325, 1
  %v8327 = vadd.f32 %v8325, %v8326
  %v8328 = vsel %vm304, %v8289, 0.0
  %v8329 = vsel %vm304, %v8290, 0.0
  %v8330 = vadd.f32 %v8328, %v8329
  %v8331 = vrot.slane %v8330, 4
  %v8332 = vadd.f32 %v8330, %v8331
  %v8333 = vrot.slane %v8332, 2
  %v8334 = vadd.f32 %v8332, %v8333
  %v8335 = vrot.slane %v8334, 1
  %v8336 = vadd.f32 %v8334, %v8335
  %v8337 = vsel %vm304, %v8291, 0.0
  %v8338 = vsel %vm304, %v8292, 0.0
  %v8339 = vadd.f32 %v8337, %v8338
  %v8340 = vrot.slane %v8339, 4
  %v8341 = vadd.f32 %v8339, %v8340
  %v8342 = vrot.slane %v8341, 2
  %v8343 = vadd.f32 %v8341, %v8342
  %v8344 = vrot.slane %v8343, 1
  %v8345 = vadd.f32 %v8343, %v8344
  %v8346 = vsel %vm304, %v8293, 0.0
  %v8347 = vsel %vm304, %v8294, 0.0
  %v8348 = vadd.f32 %v8346, %v8347
  %v8349 = vrot.slane %v8348, 4
  %v8350 = vadd.f32 %v8348, %v8349
  %v8351 = vrot.slane %v8350, 2
  %v8352 = vadd.f32 %v8350, %v8351
  %v8353 = vrot.slane %v8352, 1
  %v8354 = vadd.f32 %v8352, %v8353
  %v8355 = vsel %vm304, %v8295, 0.0
  %v8356 = vsel %vm304, %v8296, 0.0
  %v8357 = vadd.f32 %v8355, %v8356
  %v8358 = vrot.slane %v8357, 4
  %v8359 = vadd.f32 %v8357, %v8358
  %v8360 = vrot.slane %v8359, 2
  %v8361 = vadd.f32 %v8359, %v8360
  %v8362 = vrot.slane %v8361, 1
  %v8363 = vadd.f32 %v8361, %v8362
  %v8364 = vsel %vm304, %v8297, 0.0
  %v8365 = vsel %vm304, %v8298, 0.0
  %v8366 = vadd.f32 %v8364, %v8365
  %v8367 = vrot.slane %v8366, 4
  %v8368 = vadd.f32 %v8366, %v8367
  %v8369 = vrot.slane %v8368, 2
  %v8370 = vadd.f32 %v8368, %v8369
  %v8371 = vrot.slane %v8370, 1
  %v8372 = vadd.f32 %v8370, %v8371
  %v8373 = vsel %vm304, %v8299, 0.0
  %v8374 = vsel %vm304, %v8300, 0.0
  %v8375 = vadd.f32 %v8373, %v8374
  %v8376 = vrot.slane %v8375, 4
  %v8377 = vadd.f32 %v8375, %v8376
  %v8378 = vrot.slane %v8377, 2
  %v8379 = vadd.f32 %v8377, %v8378
  %v8380 = vrot.slane %v8379, 1
  %v8381 = vadd.f32 %v8379, %v8380
  %v8382 = vsel %vm304, %v8301, 0.0
  %v8383 = vsel %vm304, %v8302, 0.0
  %v8384 = vadd.f32 %v8382, %v8383
  %v8385 = vrot.slane %v8384, 4
  %v8386 = vadd.f32 %v8384, %v8385
  %v8387 = vrot.slane %v8386, 2
  %v8388 = vadd.f32 %v8386, %v8387
  %v8389 = vrot.slane %v8388, 1
  %v8390 = vadd.f32 %v8388, %v8389
  %v8391 = vsel %vm304, %v8303, 0.0
  %v8392 = vsel %vm304, %v8304, 0.0
  %v8393 = vadd.f32 %v8391, %v8392
  %v8394 = vrot.slane %v8393, 4
  %v8395 = vadd.f32 %v8393, %v8394
  %v8396 = vrot.slane %v8395, 2
  %v8397 = vadd.f32 %v8395, %v8396
  %v8398 = vrot.slane %v8397, 1
  %v8399 = vadd.f32 %v8397, %v8398
  %v8400 = vsel %vm304, %v8305, 0.0
  %v8401 = vsel %vm304, %v8306, 0.0
  %v8402 = vadd.f32 %v8400, %v8401
  %v8403 = vrot.slane %v8402, 4
  %v8404 = vadd.f32 %v8402, %v8403
  %v8405 = vrot.slane %v8404, 2
  %v8406 = vadd.f32 %v8404, %v8405
  %v8407 = vrot.slane %v8406, 1
  %v8408 = vadd.f32 %v8406, %v8407
  %v8409 = vsel %vm304, %v8307, 0.0
  %v8410 = vsel %vm304, %v8308, 0.0
  %v8411 = vadd.f32 %v8409, %v8410
  %v8412 = vrot.slane %v8411, 4
  %v8413 = vadd.f32 %v8411, %v8412
  %v8414 = vrot.slane %v8413, 2
  %v8415 = vadd.f32 %v8413, %v8414
  %v8416 = vrot.slane %v8415, 1
  %v8417 = vadd.f32 %v8415, %v8416
  %v8418 = vsel %vm304, %v8309, 0.0
  %v8419 = vsel %vm304, %v8310, 0.0
  %v8420 = vadd.f32 %v8418, %v8419
  %v8421 = vrot.slane %v8420, 4
  %v8422 = vadd.f32 %v8420, %v8421
  %v8423 = vrot.slane %v8422, 2
  %v8424 = vadd.f32 %v8422, %v8423
  %v8425 = vrot.slane %v8424, 1
  %v8426 = vadd.f32 %v8424, %v8425
  %v8427 = vsel %vm304, %v8311, 0.0
  %v8428 = vsel %vm304, %v8312, 0.0
  %v8429 = vadd.f32 %v8427, %v8428
  %v8430 = vrot.slane %v8429, 4
  %v8431 = vadd.f32 %v8429, %v8430
  %v8432 = vrot.slane %v8431, 2
  %v8433 = vadd.f32 %v8431, %v8432
  %v8434 = vrot.slane %v8433, 1
  %v8435 = vadd.f32 %v8433, %v8434
  %v8436 = vsel %vm304, %v8313, 0.0
  %v8437 = vsel %vm304, %v8314, 0.0
  %v8438 = vadd.f32 %v8436, %v8437
  %v8439 = vrot.slane %v8438, 4
  %v8440 = vadd.f32 %v8438, %v8439
  %v8441 = vrot.slane %v8440, 2
  %v8442 = vadd.f32 %v8440, %v8441
  %v8443 = vrot.slane %v8442, 1
  %v8444 = vadd.f32 %v8442, %v8443
  %v8445 = vsel %vm304, %v8315, 0.0
  %v8446 = vsel %vm304, %v8316, 0.0
  %v8447 = vadd.f32 %v8445, %v8446
  %v8448 = vrot.slane %v8447, 4
  %v8449 = vadd.f32 %v8447, %v8448
  %v8450 = vrot.slane %v8449, 2
  %v8451 = vadd.f32 %v8449, %v8450
  %v8452 = vrot.slane %v8451, 1
  %v8453 = vadd.f32 %v8451, %v8452
  %v8454 = vsel %vm304, %v8317, 0.0
  %v8455 = vsel %vm304, %v8318, 0.0
  %v8456 = vadd.f32 %v8454, %v8455
  %v8457 = vrot.slane %v8456, 4
  %v8458 = vadd.f32 %v8456, %v8457
  %v8459 = vrot.slane %v8458, 2
  %v8460 = vadd.f32 %v8458, %v8459
  %v8461 = vrot.slane %v8460, 1
  %v8462 = vadd.f32 %v8460, %v8461
  %v8463 = vrcp.pop %v8151
  %v8464 = vrcp.pop %v8160
  %v8465 = vrcp.pop %v8169
  %v8466 = vrcp.pop %v8178
  %v8467 = vrcp.pop %v8187
  %v8468 = vrcp.pop %v8196
  %v8469 = vrcp.pop %v8205
  %v8470 = vrcp.pop %v8214
  %v8471 = vrcp.pop %v8223
  %v8472 = vrcp.pop %v8232
  %v8473 = vrcp.pop %v8241
  %v8474 = vrcp.pop %v8250
  %v8475 = vrcp.pop %v8259
  %v8476 = vrcp.pop %v8268
  %v8477 = vrcp.pop %v8277
  %v8478 = vrcp.pop %v8286
  %v8479 = vmul.f32 %v8327, %v8463
  %v8480 = vmul.f32 %v8336, %v8464
  %v8481 = vmul.f32 %v8345, %v8465
  %v8482 = vmul.f32 %v8354, %v8466
  %v8483 = vmul.f32 %v8363, %v8467
  %v8484 = vmul.f32 %v8372, %v8468
  %v8485 = vmul.f32 %v8381, %v8469
  %v8486 = vmul.f32 %v8390, %v8470
  %v8487 = vmul.f32 %v8399, %v8471
  %v8488 = vmul.f32 %v8408, %v8472
  %v8489 = vmul.f32 %v8417, %v8473
  %v8490 = vmul.f32 %v8426, %v8474
  %v8491 = vmul.f32 %v8435, %v8475
  %v8492 = vmul.f32 %v8444, %v8476
  %v8493 = vmul.f32 %v8453, %v8477
  %v8494 = vmul.f32 %v8462, %v8478
  %v8497 = vrot.slane %v6282, 1
  %v8498 = vrot.slane %v6282, 2
  %v8499 = vrot.slane %v6282, 3
  %v8500 = vrot.slane %v6282, 4
  %v8501 = vrot.slane %v6282, 5
  %v8502 = vrot.slane %v6282, 6
  %v8503 = vrot.slane %v6282, 7
  %v8504 = vrot.slane %v6285, 1
  %v8505 = vrot.slane %v6285, 2
  %v8506 = vrot.slane %v6285, 3
  %v8507 = vrot.slane %v6285, 4
  %v8508 = vrot.slane %v6285, 5
  %v8509 = vrot.slane %v6285, 6
  %v8510 = vrot.slane %v6285, 7
  %v8511 = vperm.slane %v6282, 0
  %v8512 = vperm.slane %v8497, 0
  %v8513 = vperm.slane %v8498, 0
  %v8514 = vperm.slane %v8499, 0
  %v8515 = vperm.slane %v8500, 0
  %v8516 = vperm.slane %v8501, 0
  %v8517 = vperm.slane %v8502, 0
  %v8518 = vperm.slane %v8503, 0
  %v8519 = vperm.slane %v6285, 0
  %v8520 = vperm.slane %v8504, 0
  %v8521 = vperm.slane %v8505, 0
  %v8522 = vperm.slane %v8506, 0
  %v8523 = vperm.slane %v8507, 0
  %v8524 = vperm.slane %v8508, 0
  %v8525 = vperm.slane %v8509, 0
  %v8526 = vperm.slane %v8510, 0
  %v8543 = vmul.f32 %v8511, %v6330
  %v8544 = vmul.f32 %v8511, %v6333
  %v8545 = vmul.f32 %v8512, %v6330
  %v8546 = vmul.f32 %v8512, %v6333
  %v8547 = vmul.f32 %v8513, %v6330
  %v8548 = vmul.f32 %v8513, %v6333
  %v8549 = vmul.f32 %v8514, %v6330
  %v8550 = vmul.f32 %v8514, %v6333
  %v8551 = vmul.f32 %v8515, %v6330
  %v8552 = vmul.f32 %v8515, %v6333
  %v8553 = vmul.f32 %v8516, %v6330
  %v8554 = vmul.f32 %v8516, %v6333
  %v8555 = vmul.f32 %v8517, %v6330
  %v8556 = vmul.f32 %v8517, %v6333
  %v8557 = vmul.f32 %v8518, %v6330
  %v8558 = vmul.f32 %v8518, %v6333
  %v8559 = vmul.f32 %v8519, %v6330
  %v8560 = vmul.f32 %v8519, %v6333
  %v8561 = vmul.f32 %v8520, %v6330
  %v8562 = vmul.f32 %v8520, %v6333
  %v8563 = vmul.f32 %v8521, %v6330
  %v8564 = vmul.f32 %v8521, %v6333
  %v8565 = vmul.f32 %v8522, %v6330
  %v8566 = vmul.f32 %v8522, %v6333
  %v8567 = vmul.f32 %v8523, %v6330
  %v8568 = vmul.f32 %v8523, %v6333
  %v8569 = vmul.f32 %v8524, %v6330
  %v8570 = vmul.f32 %v8524, %v6333
  %v8571 = vmul.f32 %v8525, %v6330
  %v8572 = vmul.f32 %v8525, %v6333
  %v8573 = vmul.f32 %v8526, %v6330
  %v8574 = vmul.f32 %v8526, %v6333
  %v8575 = vadd.f32 %v8543, %v89
  %v8576 = vadd.f32 %v8544, %v95
  %v8577 = vadd.f32 %v8545, %v102
  %v8578 = vadd.f32 %v8546, %v108
  %v8579 = vadd.f32 %v8547, %v115
  %v8580 = vadd.f32 %v8548, %v121
  %v8581 = vadd.f32 %v8549, %v128
  %v8582 = vadd.f32 %v8550, %v134
  %v8583 = vadd.f32 %v8551, %v141
  %v8584 = vadd.f32 %v8552, %v147
  %v8585 = vadd.f32 %v8553, %v154
  %v8586 = vadd.f32 %v8554, %v160
  %v8587 = vadd.f32 %v8555, %v167
  %v8588 = vadd.f32 %v8556, %v173
  %v8589 = vadd.f32 %v8557, %v180
  %v8590 = vadd.f32 %v8558, %v186
  %v8591 = vadd.f32 %v8559, %v193
  %v8592 = vadd.f32 %v8560, %v199
  %v8593 = vadd.f32 %v8561, %v206
  %v8594 = vadd.f32 %v8562, %v212
  %v8595 = vadd.f32 %v8563, %v219
  %v8596 = vadd.f32 %v8564, %v225
  %v8597 = vadd.f32 %v8565, %v232
  %v8598 = vadd.f32 %v8566, %v238
  %v8599 = vadd.f32 %v8567, %v245
  %v8600 = vadd.f32 %v8568, %v251
  %v8601 = vadd.f32 %v8569, %v258
  %v8602 = vadd.f32 %v8570, %v264
  %v8603 = vadd.f32 %v8571, %v271
  %v8604 = vadd.f32 %v8572, %v277
  %v8605 = vadd.f32 %v8573, %v284
  %v8606 = vadd.f32 %v8574, %v290
  %v8607 = vsel %vm304, %v8575, -inf
  %v8608 = vsel %vm304, %v8576, -inf
  %v8609 = vmax.f32 %v8607, %v8608
  %v8610 = vrot.slane %v8609, 4
  %v8611 = vmax.f32 %v8609, %v8610
  %v8612 = vrot.slane %v8611, 2
  %v8613 = vmax.f32 %v8611, %v8612
  %v8614 = vrot.slane %v8613, 1
  %v8615 = vmax.f32 %v8613, %v8614
  %v8616 = vsel %vm304, %v8577, -inf
  %v8617 = vsel %vm304, %v8578, -inf
  %v8618 = vmax.f32 %v8616, %v8617
  %v8619 = vrot.slane %v8618, 4
  %v8620 = vmax.f32 %v8618, %v8619
  %v8621 = vrot.slane %v8620, 2
  %v8622 = vmax.f32 %v8620, %v8621
  %v8623 = vrot.slane %v8622, 1
  %v8624 = vmax.f32 %v8622, %v8623
  %v8625 = vsel %vm304, %v8579, -inf
  %v8626 = vsel %vm304, %v8580, -inf
  %v8627 = vmax.f32 %v8625, %v8626
  %v8628 = vrot.slane %v8627, 4
  %v8629 = vmax.f32 %v8627, %v8628
  %v8630 = vrot.slane %v8629, 2
  %v8631 = vmax.f32 %v8629, %v8630
  %v8632 = vrot.slane %v8631, 1
  %v8633 = vmax.f32 %v8631, %v8632
  %v8634 = vsel %vm304, %v8581, -inf
  %v8635 = vsel %vm304, %v8582, -inf
  %v8636 = vmax.f32 %v8634, %v8635
  %v8637 = vrot.slane %v8636, 4
  %v8638 = vmax.f32 %v8636, %v8637
  %v8639 = vrot.slane %v8638, 2
  %v8640 = vmax.f32 %v8638, %v8639
  %v8641 = vrot.slane %v8640, 1
  %v8642 = vmax.f32 %v8640, %v8641
  %v8643 = vsel %vm304, %v8583, -inf
  %v8644 = vsel %vm304, %v8584, -inf
  %v8645 = vmax.f32 %v8643, %v8644
  %v8646 = vrot.slane %v8645, 4
  %v8647 = vmax.f32 %v8645, %v8646
  %v8648 = vrot.slane %v8647, 2
  %v8649 = vmax.f32 %v8647, %v8648
  %v8650 = vrot.slane %v8649, 1
  %v8651 = vmax.f32 %v8649, %v8650
  %v8652 = vsel %vm304, %v8585, -inf
  %v8653 = vsel %vm304, %v8586, -inf
  %v8654 = vmax.f32 %v8652, %v8653
  %v8655 = vrot.slane %v8654, 4
  %v8656 = vmax.f32 %v8654, %v8655
  %v8657 = vrot.slane %v8656, 2
  %v8658 = vmax.f32 %v8656, %v8657
  %v8659 = vrot.slane %v8658, 1
  %v8660 = vmax.f32 %v8658, %v8659
  %v8661 = vsel %vm304, %v8587, -inf
  %v8662 = vsel %vm304, %v8588, -inf
  %v8663 = vmax.f32 %v8661, %v8662
  %v8664 = vrot.slane %v8663, 4
  %v8665 = vmax.f32 %v8663, %v8664
  %v8666 = vrot.slane %v8665, 2
  %v8667 = vmax.f32 %v8665, %v8666
  %v8668 = vrot.slane %v8667, 1
  %v8669 = vmax.f32 %v8667, %v8668
  %v8670 = vsel %vm304, %v8589, -inf
  %v8671 = vsel %vm304, %v8590, -inf
  %v8672 = vmax.f32 %v8670, %v8671
  %v8673 = vrot.slane %v8672, 4
  %v8674 = vmax.f32 %v8672, %v8673
  %v8675 = vrot.slane %v8674, 2
  %v8676 = vmax.f32 %v8674, %v8675
  %v8677 = vrot.slane %v8676, 1
  %v8678 = vmax.f32 %v8676, %v8677
  %v8679 = vsel %vm304, %v8591, -inf
  %v8680 = vsel %vm304, %v8592, -inf
  %v8681 = vmax.f32 %v8679, %v8680
  %v8682 = vrot.slane %v8681, 4
  %v8683 = vmax.f32 %v8681, %v8682
  %v8684 = vrot.slane %v8683, 2
  %v8685 = vmax.f32 %v8683, %v8684
  %v8686 = vrot.slane %v8685, 1
  %v8687 = vmax.f32 %v8685, %v8686
  %v8688 = vsel %vm304, %v8593, -inf
  %v8689 = vsel %vm304, %v8594, -inf
  %v8690 = vmax.f32 %v8688, %v8689
  %v8691 = vrot.slane %v8690, 4
  %v8692 = vmax.f32 %v8690, %v8691
  %v8693 = vrot.slane %v8692, 2
  %v8694 = vmax.f32 %v8692, %v8693
  %v8695 = vrot.slane %v8694, 1
  %v8696 = vmax.f32 %v8694, %v8695
  %v8697 = vsel %vm304, %v8595, -inf
  %v8698 = vsel %vm304, %v8596, -inf
  %v8699 = vmax.f32 %v8697, %v8698
  %v8700 = vrot.slane %v8699, 4
  %v8701 = vmax.f32 %v8699, %v8700
  %v8702 = vrot.slane %v8701, 2
  %v8703 = vmax.f32 %v8701, %v8702
  %v8704 = vrot.slane %v8703, 1
  %v8705 = vmax.f32 %v8703, %v8704
  %v8706 = vsel %vm304, %v8597, -inf
  %v8707 = vsel %vm304, %v8598, -inf
  %v8708 = vmax.f32 %v8706, %v8707
  %v8709 = vrot.slane %v8708, 4
  %v8710 = vmax.f32 %v8708, %v8709
  %v8711 = vrot.slane %v8710, 2
  %v8712 = vmax.f32 %v8710, %v8711
  %v8713 = vrot.slane %v8712, 1
  %v8714 = vmax.f32 %v8712, %v8713
  %v8715 = vsel %vm304, %v8599, -inf
  %v8716 = vsel %vm304, %v8600, -inf
  %v8717 = vmax.f32 %v8715, %v8716
  %v8718 = vrot.slane %v8717, 4
  %v8719 = vmax.f32 %v8717, %v8718
  %v8720 = vrot.slane %v8719, 2
  %v8721 = vmax.f32 %v8719, %v8720
  %v8722 = vrot.slane %v8721, 1
  %v8723 = vmax.f32 %v8721, %v8722
  %v8724 = vsel %vm304, %v8601, -inf
  %v8725 = vsel %vm304, %v8602, -inf
  %v8726 = vmax.f32 %v8724, %v8725
  %v8727 = vrot.slane %v8726, 4
  %v8728 = vmax.f32 %v8726, %v8727
  %v8729 = vrot.slane %v8728, 2
  %v8730 = vmax.f32 %v8728, %v8729
  %v8731 = vrot.slane %v8730, 1
  %v8732 = vmax.f32 %v8730, %v8731
  %v8733 = vsel %vm304, %v8603, -inf
  %v8734 = vsel %vm304, %v8604, -inf
  %v8735 = vmax.f32 %v8733, %v8734
  %v8736 = vrot.slane %v8735, 4
  %v8737 = vmax.f32 %v8735, %v8736
  %v8738 = vrot.slane %v8737, 2
  %v8739 = vmax.f32 %v8737, %v8738
  %v8740 = vrot.slane %v8739, 1
  %v8741 = vmax.f32 %v8739, %v8740
  %v8742 = vsel %vm304, %v8605, -inf
  %v8743 = vsel %vm304, %v8606, -inf
  %v8744 = vmax.f32 %v8742, %v8743
  %v8745 = vrot.slane %v8744, 4
  %v8746 = vmax.f32 %v8744, %v8745
  %v8747 = vrot.slane %v8746, 2
  %v8748 = vmax.f32 %v8746, %v8747
  %v8749 = vrot.slane %v8748, 1
  %v8750 = vmax.f32 %v8748, %v8749
  %v8751 = vsub.f32 %v8575, %v8615
  %v8752 = vsub.f32 %v8576, %v8615
  %v8753 = vsub.f32 %v8577, %v8624
  %v8754 = vsub.f32 %v8578, %v8624
  %v8755 = vsub.f32 %v8579, %v8633
  %v8756 = vsub.f32 %v8580, %v8633
  %v8757 = vsub.f32 %v8581, %v8642
  %v8758 = vsub.f32 %v8582, %v8642
  %v8759 = vsub.f32 %v8583, %v8651
  %v8760 = vsub.f32 %v8584, %v8651
  %v8761 = vsub.f32 %v8585, %v8660
  %v8762 = vsub.f32 %v8586, %v8660
  %v8763 = vsub.f32 %v8587, %v8669
  %v8764 = vsub.f32 %v8588, %v8669
  %v8765 = vsub.f32 %v8589, %v8678
  %v8766 = vsub.f32 %v8590, %v8678
  %v8767 = vsub.f32 %v8591, %v8687
  %v8768 = vsub.f32 %v8592, %v8687
  %v8769 = vsub.f32 %v8593, %v8696
  %v8770 = vsub.f32 %v8594, %v8696
  %v8771 = vsub.f32 %v8595, %v8705
  %v8772 = vsub.f32 %v8596, %v8705
  %v8773 = vsub.f32 %v8597, %v8714
  %v8774 = vsub.f32 %v8598, %v8714
  %v8775 = vsub.f32 %v8599, %v8723
  %v8776 = vsub.f32 %v8600, %v8723
  %v8777 = vsub.f32 %v8601, %v8732
  %v8778 = vsub.f32 %v8602, %v8732
  %v8779 = vsub.f32 %v8603, %v8741
  %v8780 = vsub.f32 %v8604, %v8741
  %v8781 = vsub.f32 %v8605, %v8750
  %v8782 = vsub.f32 %v8606, %v8750
  %v8783 = vmul.f32 %v8751, 1.442695
  %v8784 = vpow.pop %v8783
  %v8785 = vmul.f32 %v8752, 1.442695
  %v8786 = vpow.pop %v8785
  %v8787 = vmul.f32 %v8753, 1.442695
  %v8788 = vpow.pop %v8787
  %v8789 = vmul.f32 %v8754, 1.442695
  %v8790 = vpow.pop %v8789
  %v8791 = vmul.f32 %v8755, 1.442695
  %v8792 = vpow.pop %v8791
  %v8793 = vmul.f32 %v8756, 1.442695
  %v8794 = vpow.pop %v8793
  %v8795 = vmul.f32 %v8757, 1.442695
  %v8796 = vpow.pop %v8795
  %v8797 = vmul.f32 %v8758, 1.442695
  %v8798 = vpow.pop %v8797
  %v8799 = vmul.f32 %v8759, 1.442695
  %v8800 = vpow.pop %v8799
  %v8801 = vmul.f32 %v8760, 1.442695
  %v8802 = vpow.pop %v8801
  %v8803 = vmul.f32 %v8761, 1.442695
  %v8804 = vpow.pop %v8803
  %v8805 = vmul.f32 %v8762, 1.442695
  %v8806 = vpow.pop %v8805
  %v8807 = vmul.f32 %v8763, 1.442695
  %v8808 = vpow.pop %v8807
  %v8809 = vmul.f32 %v8764, 1.442695
  %v8810 = vpow.pop %v8809
  %v8811 = vmul.f32 %v8765, 1.442695
  %v8812 = vpow.pop %v8811
  %v8813 = vmul.f32 %v8766, 1.442695
  %v8814 = vpow.pop %v8813
  %v8815 = vmul.f32 %v8767, 1.442695
  %v8816 = vpow.pop %v8815
  %v8817 = vmul.f32 %v8768, 1.442695
  %v8818 = vpow.pop %v8817
  %v8819 = vmul.f32 %v8769, 1.442695
  %v8820 = vpow.pop %v8819
  %v8821 = vmul.f32 %v8770, 1.442695
  %v8822 = vpow.pop %v8821
  %v8823 = vmul.f32 %v8771, 1.442695
  %v8824 = vpow.pop %v8823
  %v8825 = vmul.f32 %v8772, 1.442695
  %v8826 = vpow.pop %v8825
  %v8827 = vmul.f32 %v8773, 1.442695
  %v8828 = vpow.pop %v8827
  %v8829 = vmul.f32 %v8774, 1.442695
  %v8830 = vpow.pop %v8829
  %v8831 = vmul.f32 %v8775, 1.442695
  %v8832 = vpow.pop %v8831
  %v8833 = vmul.f32 %v8776, 1.442695
  %v8834 = vpow.pop %v8833
  %v8835 = vmul.f32 %v8777, 1.442695
  %v8836 = vpow.pop %v8835
  %v8837 = vmul.f32 %v8778, 1.442695
  %v8838 = vpow.pop %v8837
  %v8839 = vmul.f32 %v8779, 1.442695
  %v8840 = vpow.pop %v8839
  %v8841 = vmul.f32 %v8780, 1.442695
  %v8842 = vpow.pop %v8841
  %v8843 = vmul.f32 %v8781, 1.442695
  %v8844 = vpow.pop %v8843
  %v8845 = vmul.f32 %v8782, 1.442695
  %v8846 = vpow.pop %v8845
  %v8847 = vsel %vm304, %v8784, 0.0
  %v8848 = vsel %vm304, %v8786, 0.0
  %v8849 = vadd.f32 %v8847, %v8848
  %v8850 = vrot.slane %v8849, 4
  %v8851 = vadd.f32 %v8849, %v8850
  %v8852 = vrot.slane %v8851, 2
  %v8853 = vadd.f32 %v8851, %v8852
  %v8854 = vrot.slane %v8853, 1
  %v8855 = vadd.f32 %v8853, %v8854
  %v8856 = vsel %vm304, %v8788, 0.0
  %v8857 = vsel %vm304, %v8790, 0.0
  %v8858 = vadd.f32 %v8856, %v8857
  %v8859 = vrot.slane %v8858, 4
  %v8860 = vadd.f32 %v8858, %v8859
  %v8861 = vrot.slane %v8860, 2
  %v8862 = vadd.f32 %v8860, %v8861
  %v8863 = vrot.slane %v8862, 1
  %v8864 = vadd.f32 %v8862, %v8863
  %v8865 = vsel %vm304, %v8792, 0.0
  %v8866 = vsel %vm304, %v8794, 0.0
  %v8867 = vadd.f32 %v8865, %v8866
  %v8868 = vrot.slane %v8867, 4
  %v8869 = vadd.f32 %v8867, %v8868
  %v8870 = vrot.slane %v8869, 2
  %v8871 = vadd.f32 %v8869, %v8870
  %v8872 = vrot.slane %v8871, 1
  %v8873 = vadd.f32 %v8871, %v8872
  %v8874 = vsel %vm304, %v8796, 0.0
  %v8875 = vsel %vm304, %v8798, 0.0
  %v8876 = vadd.f32 %v8874, %v8875
  %v8877 = vrot.slane %v8876, 4
  %v8878 = vadd.f32 %v8876, %v8877
  %v8879 = vrot.slane %v8878, 2
  %v8880 = vadd.f32 %v8878, %v8879
  %v8881 = vrot.slane %v8880, 1
  %v8882 = vadd.f32 %v8880, %v8881
  %v8883 = vsel %vm304, %v8800, 0.0
  %v8884 = vsel %vm304, %v8802, 0.0
  %v8885 = vadd.f32 %v8883, %v8884
  %v8886 = vrot.slane %v8885, 4
  %v8887 = vadd.f32 %v8885, %v8886
  %v8888 = vrot.slane %v8887, 2
  %v8889 = vadd.f32 %v8887, %v8888
  %v8890 = vrot.slane %v8889, 1
  %v8891 = vadd.f32 %v8889, %v8890
  %v8892 = vsel %vm304, %v8804, 0.0
  %v8893 = vsel %vm304, %v8806, 0.0
  %v8894 = vadd.f32 %v8892, %v8893
  %v8895 = vrot.slane %v8894, 4
  %v8896 = vadd.f32 %v8894, %v8895
  %v8897 = vrot.slane %v8896, 2
  %v8898 = vadd.f32 %v8896, %v8897
  %v8899 = vrot.slane %v8898, 1
  %v8900 = vadd.f32 %v8898, %v8899
  %v8901 = vsel %vm304, %v8808, 0.0
  %v8902 = vsel %vm304, %v8810, 0.0
  %v8903 = vadd.f32 %v8901, %v8902
  %v8904 = vrot.slane %v8903, 4
  %v8905 = vadd.f32 %v8903, %v8904
  %v8906 = vrot.slane %v8905, 2
  %v8907 = vadd.f32 %v8905, %v8906
  %v8908 = vrot.slane %v8907, 1
  %v8909 = vadd.f32 %v8907, %v8908
  %v8910 = vsel %vm304, %v8812, 0.0
  %v8911 = vsel %vm304, %v8814, 0.0
  %v8912 = vadd.f32 %v8910, %v8911
  %v8913 = vrot.slane %v8912, 4
  %v8914 = vadd.f32 %v8912, %v8913
  %v8915 = vrot.slane %v8914, 2
  %v8916 = vadd.f32 %v8914, %v8915
  %v8917 = vrot.slane %v8916, 1
  %v8918 = vadd.f32 %v8916, %v8917
  %v8919 = vsel %vm304, %v8816, 0.0
  %v8920 = vsel %vm304, %v8818, 0.0
  %v8921 = vadd.f32 %v8919, %v8920
  %v8922 = vrot.slane %v8921, 4
  %v8923 = vadd.f32 %v8921, %v8922
  %v8924 = vrot.slane %v8923, 2
  %v8925 = vadd.f32 %v8923, %v8924
  %v8926 = vrot.slane %v8925, 1
  %v8927 = vadd.f32 %v8925, %v8926
  %v8928 = vsel %vm304, %v8820, 0.0
  %v8929 = vsel %vm304, %v8822, 0.0
  %v8930 = vadd.f32 %v8928, %v8929
  %v8931 = vrot.slane %v8930, 4
  %v8932 = vadd.f32 %v8930, %v8931
  %v8933 = vrot.slane %v8932, 2
  %v8934 = vadd.f32 %v8932, %v8933
  %v8935 = vrot.slane %v8934, 1
  %v8936 = vadd.f32 %v8934, %v8935
  %v8937 = vsel %vm304, %v8824, 0.0
  %v8938 = vsel %vm304, %v8826, 0.0
  %v8939 = vadd.f32 %v8937, %v8938
  %v8940 = vrot.slane %v8939, 4
  %v8941 = vadd.f32 %v8939, %v8940
  %v8942 = vrot.slane %v8941, 2
  %v8943 = vadd.f32 %v8941, %v8942
  %v8944 = vrot.slane %v8943, 1
  %v8945 = vadd.f32 %v8943, %v8944
  %v8946 = vsel %vm304, %v8828, 0.0
  %v8947 = vsel %vm304, %v8830, 0.0
  %v8948 = vadd.f32 %v8946, %v8947
  %v8949 = vrot.slane %v8948, 4
  %v8950 = vadd.f32 %v8948, %v8949
  %v8951 = vrot.slane %v8950, 2
  %v8952 = vadd.f32 %v8950, %v8951
  %v8953 = vrot.slane %v8952, 1
  %v8954 = vadd.f32 %v8952, %v8953
  %v8955 = vsel %vm304, %v8832, 0.0
  %v8956 = vsel %vm304, %v8834, 0.0
  %v8957 = vadd.f32 %v8955, %v8956
  %v8958 = vrot.slane %v8957, 4
  %v8959 = vadd.f32 %v8957, %v8958
  %v8960 = vrot.slane %v8959, 2
  %v8961 = vadd.f32 %v8959, %v8960
  %v8962 = vrot.slane %v8961, 1
  %v8963 = vadd.f32 %v8961, %v8962
  %v8964 = vsel %vm304, %v8836, 0.0
  %v8965 = vsel %vm304, %v8838, 0.0
  %v8966 = vadd.f32 %v8964, %v8965
  %v8967 = vrot.slane %v8966, 4
  %v8968 = vadd.f32 %v8966, %v8967
  %v8969 = vrot.slane %v8968, 2
  %v8970 = vadd.f32 %v8968, %v8969
  %v8971 = vrot.slane %v8970, 1
  %v8972 = vadd.f32 %v8970, %v8971
  %v8973 = vsel %vm304, %v8840, 0.0
  %v8974 = vsel %vm304, %v8842, 0.0
  %v8975 = vadd.f32 %v8973, %v8974
  %v8976 = vrot.slane %v8975, 4
  %v8977 = vadd.f32 %v8975, %v8976
  %v8978 = vrot.slane %v8977, 2
  %v8979 = vadd.f32 %v8977, %v8978
  %v8980 = vrot.slane %v8979, 1
  %v8981 = vadd.f32 %v8979, %v8980
  %v8982 = vsel %vm304, %v8844, 0.0
  %v8983 = vsel %vm304, %v8846, 0.0
  %v8984 = vadd.f32 %v8982, %v8983
  %v8985 = vrot.slane %v8984, 4
  %v8986 = vadd.f32 %v8984, %v8985
  %v8987 = vrot.slane %v8986, 2
  %v8988 = vadd.f32 %v8986, %v8987
  %v8989 = vrot.slane %v8988, 1
  %v8990 = vadd.f32 %v8988, %v8989
  %v8991 = vmul.f32 %v8784, %v6378
  %v8992 = vmul.f32 %v8786, %v6381
  %v8993 = vmul.f32 %v8788, %v6378
  %v8994 = vmul.f32 %v8790, %v6381
  %v8995 = vmul.f32 %v8792, %v6378
  %v8996 = vmul.f32 %v8794, %v6381
  %v8997 = vmul.f32 %v8796, %v6378
  %v8998 = vmul.f32 %v8798, %v6381
  %v8999 = vmul.f32 %v8800, %v6378
  %v9000 = vmul.f32 %v8802, %v6381
  %v9001 = vmul.f32 %v8804, %v6378
  %v9002 = vmul.f32 %v8806, %v6381
  %v9003 = vmul.f32 %v8808, %v6378
  %v9004 = vmul.f32 %v8810, %v6381
  %v9005 = vmul.f32 %v8812, %v6378
  %v9006 = vmul.f32 %v8814, %v6381
  %v9007 = vmul.f32 %v8816, %v6378
  %v9008 = vmul.f32 %v8818, %v6381
  %v9009 = vmul.f32 %v8820, %v6378
  %v9010 = vmul.f32 %v8822, %v6381
  %v9011 = vmul.f32 %v8824, %v6378
  %v9012 = vmul.f32 %v8826, %v6381
  %v9013 = vmul.f32 %v8828, %v6378
  %v9014 = vmul.f32 %v8830, %v6381
  %v9015 = vmul.f32 %v8832, %v6378
  %v9016 = vmul.f32 %v8834, %v6381
  %v9017 = vmul.f32 %v8836, %v6378
  %v9018 = vmul.f32 %v8838, %v6381
  %v9019 = vmul.f32 %v8840, %v6378
  %v9020 = vmul.f32 %v8842, %v6381
  %v9021 = vmul.f32 %v8844, %v6378
  %v9022 = vmul.f32 %v8846, %v6381
  %v9023 = vsel %vm304, %v8991, 0.0
  %v9024 = vsel %vm304, %v8992, 0.0
  %v9025 = vadd.f32 %v9023, %v9024
  %v9026 = vrot.slane %v9025, 4
  %v9027 = vadd.f32 %v9025, %v9026
  %v9028 = vrot.slane %v9027, 2
  %v9029 = vadd.f32 %v9027, %v9028
  %v9030 = vrot.slane %v9029, 1
  %v9031 = vadd.f32 %v9029, %v9030
  %v9032 = vsel %vm304, %v8993, 0.0
  %v9033 = vsel %vm304, %v8994, 0.0
  %v9034 = vadd.f32 %v9032, %v9033
  %v9035 = vrot.slane %v9034, 4
  %v9036 = vadd.f32 %v9034, %v9035
  %v9037 = vrot.slane %v9036, 2
  %v9038 = vadd.f32 %v9036, %v9037
  %v9039 = vrot.slane %v9038, 1
  %v9040 = vadd.f32 %v9038, %v9039
  %v9041 = vsel %vm304, %v8995, 0.0
  %v9042 = vsel %vm304, %v8996, 0.0
  %v9043 = vadd.f32 %v9041, %v9042
  %v9044 = vrot.slane %v9043, 4
  %v9045 = vadd.f32 %v9043, %v9044
  %v9046 = vrot.slane %v9045, 2
  %v9047 = vadd.f32 %v9045, %v9046
  %v9048 = vrot.slane %v9047, 1
  %v9049 = vadd.f32 %v9047, %v9048
  %v9050 = vsel %vm304, %v8997, 0.0
  %v9051 = vsel %vm304, %v8998, 0.0
  %v9052 = vadd.f32 %v9050, %v9051
  %v9053 = vrot.slane %v9052, 4
  %v9054 = vadd.f32 %v9052, %v9053
  %v9055 = vrot.slane %v9054, 2
  %v9056 = vadd.f32 %v9054, %v9055
  %v9057 = vrot.slane %v9056, 1
  %v9058 = vadd.f32 %v9056, %v9057
  %v9059 = vsel %vm304, %v8999, 0.0
  %v9060 = vsel %vm304, %v9000, 0.0
  %v9061 = vadd.f32 %v9059, %v9060
  %v9062 = vrot.slane %v9061, 4
  %v9063 = vadd.f32 %v9061, %v9062
  %v9064 = vrot.slane %v9063, 2
  %v9065 = vadd.f32 %v9063, %v9064
  %v9066 = vrot.slane %v9065, 1
  %v9067 = vadd.f32 %v9065, %v9066
  %v9068 = vsel %vm304, %v9001, 0.0
  %v9069 = vsel %vm304, %v9002, 0.0
  %v9070 = vadd.f32 %v9068, %v9069
  %v9071 = vrot.slane %v9070, 4
  %v9072 = vadd.f32 %v9070, %v9071
  %v9073 = vrot.slane %v9072, 2
  %v9074 = vadd.f32 %v9072, %v9073
  %v9075 = vrot.slane %v9074, 1
  %v9076 = vadd.f32 %v9074, %v9075
  %v9077 = vsel %vm304, %v9003, 0.0
  %v9078 = vsel %vm304, %v9004, 0.0
  %v9079 = vadd.f32 %v9077, %v9078
  %v9080 = vrot.slane %v9079, 4
  %v9081 = vadd.f32 %v9079, %v9080
  %v9082 = vrot.slane %v9081, 2
  %v9083 = vadd.f32 %v9081, %v9082
  %v9084 = vrot.slane %v9083, 1
  %v9085 = vadd.f32 %v9083, %v9084
  %v9086 = vsel %vm304, %v9005, 0.0
  %v9087 = vsel %vm304, %v9006, 0.0
  %v9088 = vadd.f32 %v9086, %v9087
  %v9089 = vrot.slane %v9088, 4
  %v9090 = vadd.f32 %v9088, %v9089
  %v9091 = vrot.slane %v9090, 2
  %v9092 = vadd.f32 %v9090, %v9091
  %v9093 = vrot.slane %v9092, 1
  %v9094 = vadd.f32 %v9092, %v9093
  %v9095 = vsel %vm304, %v9007, 0.0
  %v9096 = vsel %vm304, %v9008, 0.0
  %v9097 = vadd.f32 %v9095, %v9096
  %v9098 = vrot.slane %v9097, 4
  %v9099 = vadd.f32 %v9097, %v9098
  %v9100 = vrot.slane %v9099, 2
  %v9101 = vadd.f32 %v9099, %v9100
  %v9102 = vrot.slane %v9101, 1
  %v9103 = vadd.f32 %v9101, %v9102
  %v9104 = vsel %vm304, %v9009, 0.0
  %v9105 = vsel %vm304, %v9010, 0.0
  %v9106 = vadd.f32 %v9104, %v9105
  %v9107 = vrot.slane %v9106, 4
  %v9108 = vadd.f32 %v9106, %v9107
  %v9109 = vrot.slane %v9108, 2
  %v9110 = vadd.f32 %v9108, %v9109
  %v9111 = vrot.slane %v9110, 1
  %v9112 = vadd.f32 %v9110, %v9111
  %v9113 = vsel %vm304, %v9011, 0.0
  %v9114 = vsel %vm304, %v9012, 0.0
  %v9115 = vadd.f32 %v9113, %v9114
  %v9116 = vrot.slane %v9115, 4
  %v9117 = vadd.f32 %v9115, %v9116
  %v9118 = vrot.slane %v9117, 2
  %v9119 = vadd.f32 %v9117, %v9118
  %v9120 = vrot.slane %v9119, 1
  %v9121 = vadd.f32 %v9119, %v9120
  %v9122 = vsel %vm304, %v9013, 0.0
  %v9123 = vsel %vm304, %v9014, 0.0
  %v9124 = vadd.f32 %v9122, %v9123
  %v9125 = vrot.slane %v9124, 4
  %v9126 = vadd.f32 %v9124, %v9125
  %v9127 = vrot.slane %v9126, 2
  %v9128 = vadd.f32 %v9126, %v9127
  %v9129 = vrot.slane %v9128, 1
  %v9130 = vadd.f32 %v9128, %v9129
  %v9131 = vsel %vm304, %v9015, 0.0
  %v9132 = vsel %vm304, %v9016, 0.0
  %v9133 = vadd.f32 %v9131, %v9132
  %v9134 = vrot.slane %v9133, 4
  %v9135 = vadd.f32 %v9133, %v9134
  %v9136 = vrot.slane %v9135, 2
  %v9137 = vadd.f32 %v9135, %v9136
  %v9138 = vrot.slane %v9137, 1
  %v9139 = vadd.f32 %v9137, %v9138
  %v9140 = vsel %vm304, %v9017, 0.0
  %v9141 = vsel %vm304, %v9018, 0.0
  %v9142 = vadd.f32 %v9140, %v9141
  %v9143 = vrot.slane %v9142, 4
  %v9144 = vadd.f32 %v9142, %v9143
  %v9145 = vrot.slane %v9144, 2
  %v9146 = vadd.f32 %v9144, %v9145
  %v9147 = vrot.slane %v9146, 1
  %v9148 = vadd.f32 %v9146, %v9147
  %v9149 = vsel %vm304, %v9019, 0.0
  %v9150 = vsel %vm304, %v9020, 0.0
  %v9151 = vadd.f32 %v9149, %v9150
  %v9152 = vrot.slane %v9151, 4
  %v9153 = vadd.f32 %v9151, %v9152
  %v9154 = vrot.slane %v9153, 2
  %v9155 = vadd.f32 %v9153, %v9154
  %v9156 = vrot.slane %v9155, 1
  %v9157 = vadd.f32 %v9155, %v9156
  %v9158 = vsel %vm304, %v9021, 0.0
  %v9159 = vsel %vm304, %v9022, 0.0
  %v9160 = vadd.f32 %v9158, %v9159
  %v9161 = vrot.slane %v9160, 4
  %v9162 = vadd.f32 %v9160, %v9161
  %v9163 = vrot.slane %v9162, 2
  %v9164 = vadd.f32 %v9162, %v9163
  %v9165 = vrot.slane %v9164, 1
  %v9166 = vadd.f32 %v9164, %v9165
  %v9167 = vrcp.pop %v8855
  %v9168 = vrcp.pop %v8864
  %v9169 = vrcp.pop %v8873
  %v9170 = vrcp.pop %v8882
  %v9171 = vrcp.pop %v8891
  %v9172 = vrcp.pop %v8900
  %v9173 = vrcp.pop %v8909
  %v9174 = vrcp.pop %v8918
  %v9175 = vrcp.pop %v8927
  %v9176 = vrcp.pop %v8936
  %v9177 = vrcp.pop %v8945
  %v9178 = vrcp.pop %v8954
  %v9179 = vrcp.pop %v8963
  %v9180 = vrcp.pop %v8972
  %v9181 = vrcp.pop %v8981
  %v9182 = vrcp.pop %v8990
  %v9183 = vmul.f32 %v9031, %v9167
  %v9184 = vmul.f32 %v9040, %v9168
  %v9185 = vmul.f32 %v9049, %v9169
  %v9186 = vmul.f32 %v9058, %v9170
  %v9187 = vmul.f32 %v9067, %v9171
  %v9188 = vmul.f32 %v9076, %v9172
  %v9189 = vmul.f32 %v9085, %v9173
  %v9190 = vmul.f32 %v9094, %v9174
  %v9191 = vmul.f32 %v9103, %v9175
  %v9192 = vmul.f32 %v9112, %v9176
  %v9193 = vmul.f32 %v9121, %v9177
  %v9194 = vmul.f32 %v9130, %v9178
  %v9195 = vmul.f32 %v9139, %v9179
  %v9196 = vmul.f32 %v9148, %v9180
  %v9197 = vmul.f32 %v9157, %v9181
  %v9198 = vmul.f32 %v9166, %v9182
  %v9215 = vsel %vm3294, %v7072, %v7071
  %v9216 = vsel %vm3296, %v7073, %v9215
  %v9217 = vsel %vm3298, %v7074, %v9216
  %v9218 = vsel %vm3300, %v7075, %v9217
  %v9219 = vsel %vm3302, %v7076, %v9218
  %v9220 = vsel %vm3304, %v7077, %v9219
  %v9221 = vsel %vm3306, %v7078, %v9220
  %v9222 = vsel %vm3294, %v7080, %v7079
  %v9223 = vsel %vm3296, %v7081, %v9222
  %v9224 = vsel %vm3298, %v7082, %v9223
  %v9225 = vsel %vm3300, %v7083, %v9224
  %v9226 = vsel %vm3302, %v7084, %v9225
  %v9227 = vsel %vm3304, %v7085, %v9226
  %v9228 = vsel %vm3306, %v7086, %v9227
  %v9245 = vsel %vm3294, %v7776, %v7775
  %v9246 = vsel %vm3296, %v7777, %v9245
  %v9247 = vsel %vm3298, %v7778, %v9246
  %v9248 = vsel %vm3300, %v7779, %v9247
  %v9249 = vsel %vm3302, %v7780, %v9248
  %v9250 = vsel %vm3304, %v7781, %v9249
  %v9251 = vsel %vm3306, %v7782, %v9250
  %v9252 = vsel %vm3294, %v7784, %v7783
  %v9253 = vsel %vm3296, %v7785, %v9252
  %v9254 = vsel %vm3298, %v7786, %v9253
  %v9255 = vsel %vm3300, %v7787, %v9254
  %v9256 = vsel %vm3302, %v7788, %v9255
  %v9257 = vsel %vm3304, %v7789, %v9256
  %v9258 = vsel %vm3306, %v7790, %v9257
  %v9275 = vsel %vm3294, %v8480, %v8479
  %v9276 = vsel %vm3296, %v8481, %v9275
  %v9277 = vsel %vm3298, %v8482, %v9276
  %v9278 = vsel %vm3300, %v8483, %v9277
  %v9279 = vsel %vm3302, %v8484, %v9278
  %v9280 = vsel %vm3304, %v8485, %v9279
  %v9281 = vsel %vm3306, %v8486, %v9280
  %v9282 = vsel %vm3294, %v8488, %v8487
  %v9283 = vsel %vm3296, %v8489, %v9282
  %v9284 = vsel %vm3298, %v8490, %v9283
  %v9285 = vsel %vm3300, %v8491, %v9284
  %v9286 = vsel %vm3302, %v8492, %v9285
  %v9287 = vsel %vm3304, %v8493, %v9286
  %v9288 = vsel %vm3306, %v8494, %v9287
  %v9305 = vsel %vm3294, %v9184, %v9183
  %v9306 = vsel %vm3296, %v9185, %v9305
  %v9307 = vsel %vm3298, %v9186, %v9306
  %v9308 = vsel %vm3300, %v9187, %v9307
  %v9309 = vsel %vm3302, %v9188, %v9308
  %v9310 = vsel %vm3304, %v9189, %v9309
  %v9311 = vsel %vm3306, %v9190, %v9310
  %v9312 = vsel %vm3294, %v9192, %v9191
  %v9313 = vsel %vm3296, %v9193, %v9312
  %v9314 = vsel %vm3298, %v9194, %v9313
  %v9315 = vsel %vm3300, %v9195, %v9314
  %v9316 = vsel %vm3302, %v9196, %v9315
  %v9317 = vsel %vm3304, %v9197, %v9316
  %v9318 = vsel %vm3306, %v9198, %v9317
  %s9319 = scalar_lea.vmem %s7, 8
  %v9320 = vld [vmem:[%s9319] sm:$0xff]
  %s9321 = scalar_lea.vmem %s8, 1
  %v9322 = vld [vmem:[%s9321] sm:$0x1]
  %v9324 = vperm.slane %v9322, 0
  %v9326 = vsel %vm304, %v9221, 0
  %v9328 = vsel %vm304, %v9228, 0
  %v9330 = vsel %vm304, %v9251, 0
  %v9332 = vsel %vm304, %v9258, 0
  %v9334 = vsel %vm304, %v9281, 0
  %v9336 = vsel %vm304, %v9288, 0
  %v9338 = vsel %vm304, %v9311, 0
  %v9340 = vsel %vm304, %v9318, 0
  %9342 = vmatpush.msra.mxu0 0.0
  %9343 = vmatpush.msra.mxu0 0.0
  %9344 = vmatpush.msra.mxu0 0.0
  %9345 = vmatpush.msra.mxu0 0.0
  %9346 = vmatpush.msra.mxu0 0.0
  %9347 = vmatpush.msra.mxu0 0.0
  %9348 = vmatpush.msra.mxu0 0.0
  %9349 = vmatpush.msra.mxu0 0.0
  %9350 = vmatpush.msra.mxu0 0.0
  %9351 = vmatpush.msra.mxu0 0.0
  %9352 = vmatpush.msra.mxu0 0.0
  %9353 = vmatpush.msra.mxu0 0.0
  %9354 = vmatpush.msra.mxu0 0.0
  %9355 = vmatpush.msra.mxu0 0.0
  %9356 = vmatpush.msra.mxu0 0.0
  %9357 = vmatpush.msra.mxu0 %v9320
  %9358 = vmatmul.f32.gmra.mxu0 %v9326
  %v9359 = vpop.f32.mrf.mxu0
  %v9360 = vadd.f32 %v9324, %v9359
  %9361 = vmatmul.f32.gmra.mxu0 %v9328
  %v9362 = vpop.f32.mrf.mxu0
  %v9363 = vadd.f32 %v9324, %v9362
  %9364 = vmatmul.f32.gmra.mxu0 %v9330
  %v9365 = vpop.f32.mrf.mxu0
  %v9366 = vadd.f32 %v9324, %v9365
  %9367 = vmatmul.f32.gmra.mxu0 %v9332
  %v9368 = vpop.f32.mrf.mxu0
  %v9369 = vadd.f32 %v9324, %v9368
  %9370 = vmatmul.f32.gmra.mxu0 %v9334
  %v9371 = vpop.f32.mrf.mxu0
  %v9372 = vadd.f32 %v9324, %v9371
  %9373 = vmatmul.f32.gmra.mxu0 %v9336
  %v9374 = vpop.f32.mrf.mxu0
  %v9375 = vadd.f32 %v9324, %v9374
  %9376 = vmatmul.f32.gmra.mxu0 %v9338
  %v9377 = vpop.f32.mrf.mxu0
  %v9378 = vadd.f32 %v9324, %v9377
  %9379 = vmatmul.f32.gmra.mxu0 %v9340
  %v9380 = vpop.f32.mrf.mxu0
  %v9381 = vadd.f32 %v9324, %v9380
  %9382 = vdwg.mxu0
  %v9383 = vadd.f32 %v6207, %v9360
  %v9384 = vadd.f32 %v6208, %v9363
  %v9385 = vadd.f32 %v6209, %v9366
  %v9386 = vadd.f32 %v6210, %v9369
  %v9387 = vadd.f32 %v6211, %v9372
  %v9388 = vadd.f32 %v6212, %v9375
  %v9389 = vadd.f32 %v6213, %v9378
  %v9390 = vadd.f32 %v6214, %v9381
  %s9391 = scalar_lea.vmem %s9, 1
  %v9392 = vld [vmem:[%s9391] sm:$0x1]
  %s9393 = scalar_lea.vmem %s10, 1
  %v9394 = vld [vmem:[%s9393] sm:$0x1]
  %v9395 = vsel %vm304, %v9383, 0.0
  %9396 = vadd.xlane.f32.xlu0 %v9395
  %v9397 = vpop.xlane.xlu0 %9396
  %v9398 = vsel %vm304, %v9384, 0.0
  %9399 = vadd.xlane.f32.xlu0 %v9398
  %v9400 = vpop.xlane.xlu0 %9399
  %v9401 = vsel %vm304, %v9385, 0.0
  %9402 = vadd.xlane.f32.xlu0 %v9401
  %v9403 = vpop.xlane.xlu0 %9402
  %v9404 = vsel %vm304, %v9386, 0.0
  %9405 = vadd.xlane.f32.xlu0 %v9404
  %v9406 = vpop.xlane.xlu0 %9405
  %v9407 = vsel %vm304, %v9387, 0.0
  %9408 = vadd.xlane.f32.xlu0 %v9407
  %v9409 = vpop.xlane.xlu0 %9408
  %v9410 = vsel %vm304, %v9388, 0.0
  %9411 = vadd.xlane.f32.xlu0 %v9410
  %v9412 = vpop.xlane.xlu0 %9411
  %v9413 = vsel %vm304, %v9389, 0.0
  %9414 = vadd.xlane.f32.xlu0 %v9413
  %v9415 = vpop.xlane.xlu0 %9414
  %v9416 = vsel %vm304, %v9390, 0.0
  %9417 = vadd.xlane.f32.xlu0 %v9416
  %v9418 = vpop.xlane.xlu0 %9417
  %v9419 = vmul.f32 %v9397, %v3507
  %v9420 = vmul.f32 %v9400, %v3507
  %v9421 = vmul.f32 %v9403, %v3507
  %v9422 = vmul.f32 %v9406, %v3507
  %v9423 = vmul.f32 %v9409, %v3507
  %v9424 = vmul.f32 %v9412, %v3507
  %v9425 = vmul.f32 %v9415, %v3507
  %v9426 = vmul.f32 %v9418, %v3507
  %v9427 = vsub.f32 %v9383, %v9419
  %v9428 = vsub.f32 %v9384, %v9420
  %v9429 = vsub.f32 %v9385, %v9421
  %v9430 = vsub.f32 %v9386, %v9422
  %v9431 = vsub.f32 %v9387, %v9423
  %v9432 = vsub.f32 %v9388, %v9424
  %v9433 = vsub.f32 %v9389, %v9425
  %v9434 = vsub.f32 %v9390, %v9426
  %v9435 = vmul.f32 %v9427, %v9427
  %v9436 = vmul.f32 %v9428, %v9428
  %v9437 = vmul.f32 %v9429, %v9429
  %v9438 = vmul.f32 %v9430, %v9430
  %v9439 = vmul.f32 %v9431, %v9431
  %v9440 = vmul.f32 %v9432, %v9432
  %v9441 = vmul.f32 %v9433, %v9433
  %v9442 = vmul.f32 %v9434, %v9434
  %v9443 = vsel %vm304, %v9435, 0.0
  %9444 = vadd.xlane.f32.xlu0 %v9443
  %v9445 = vpop.xlane.xlu0 %9444
  %v9446 = vsel %vm304, %v9436, 0.0
  %9447 = vadd.xlane.f32.xlu0 %v9446
  %v9448 = vpop.xlane.xlu0 %9447
  %v9449 = vsel %vm304, %v9437, 0.0
  %9450 = vadd.xlane.f32.xlu0 %v9449
  %v9451 = vpop.xlane.xlu0 %9450
  %v9452 = vsel %vm304, %v9438, 0.0
  %9453 = vadd.xlane.f32.xlu0 %v9452
  %v9454 = vpop.xlane.xlu0 %9453
  %v9455 = vsel %vm304, %v9439, 0.0
  %9456 = vadd.xlane.f32.xlu0 %v9455
  %v9457 = vpop.xlane.xlu0 %9456
  %v9458 = vsel %vm304, %v9440, 0.0
  %9459 = vadd.xlane.f32.xlu0 %v9458
  %v9460 = vpop.xlane.xlu0 %9459
  %v9461 = vsel %vm304, %v9441, 0.0
  %9462 = vadd.xlane.f32.xlu0 %v9461
  %v9463 = vpop.xlane.xlu0 %9462
  %v9464 = vsel %vm304, %v9442, 0.0
  %9465 = vadd.xlane.f32.xlu0 %v9464
  %v9466 = vpop.xlane.xlu0 %9465
  %v9467 = vmul.f32 %v9445, %v3507
  %v9468 = vmul.f32 %v9448, %v3507
  %v9469 = vmul.f32 %v9451, %v3507
  %v9470 = vmul.f32 %v9454, %v3507
  %v9471 = vmul.f32 %v9457, %v3507
  %v9472 = vmul.f32 %v9460, %v3507
  %v9473 = vmul.f32 %v9463, %v3507
  %v9474 = vmul.f32 %v9466, %v3507
  %v9475 = vadd.f32 %v9467, 1e-05
  %v9476 = vadd.f32 %v9468, 1e-05
  %v9477 = vadd.f32 %v9469, 1e-05
  %v9478 = vadd.f32 %v9470, 1e-05
  %v9479 = vadd.f32 %v9471, 1e-05
  %v9480 = vadd.f32 %v9472, 1e-05
  %v9481 = vadd.f32 %v9473, 1e-05
  %v9482 = vadd.f32 %v9474, 1e-05
  %v9483 = vrsqrt.pop %v9475
  %v9484 = vmul.f32 %v9483, %v9475
  %v9485 = vmul.f32 %v9484, %v9483
  %v9486 = vmul.f32 0.5, %v9485
  %v9487 = vsub.f32 1.5, %v9486
  %v9488 = vmul.f32 %v9483, %v9487
  %vm9489 = vweird.f32 %v9475
  %vm9490 = vweird.f32 %v9483
  %vm9491 = vmor %vm9489, %vm9490
  %v9492 = vsel %vm9491, %v9483, %v9488
  %v9493 = vrsqrt.pop %v9476
  %v9494 = vmul.f32 %v9493, %v9476
  %v9495 = vmul.f32 %v9494, %v9493
  %v9496 = vmul.f32 0.5, %v9495
  %v9497 = vsub.f32 1.5, %v9496
  %v9498 = vmul.f32 %v9493, %v9497
  %vm9499 = vweird.f32 %v9476
  %vm9500 = vweird.f32 %v9493
  %vm9501 = vmor %vm9499, %vm9500
  %v9502 = vsel %vm9501, %v9493, %v9498
  %v9503 = vrsqrt.pop %v9477
  %v9504 = vmul.f32 %v9503, %v9477
  %v9505 = vmul.f32 %v9504, %v9503
  %v9506 = vmul.f32 0.5, %v9505
  %v9507 = vsub.f32 1.5, %v9506
  %v9508 = vmul.f32 %v9503, %v9507
  %vm9509 = vweird.f32 %v9477
  %vm9510 = vweird.f32 %v9503
  %vm9511 = vmor %vm9509, %vm9510
  %v9512 = vsel %vm9511, %v9503, %v9508
  %v9513 = vrsqrt.pop %v9478
  %v9514 = vmul.f32 %v9513, %v9478
  %v9515 = vmul.f32 %v9514, %v9513
  %v9516 = vmul.f32 0.5, %v9515
  %v9517 = vsub.f32 1.5, %v9516
  %v9518 = vmul.f32 %v9513, %v9517
  %vm9519 = vweird.f32 %v9478
  %vm9520 = vweird.f32 %v9513
  %vm9521 = vmor %vm9519, %vm9520
  %v9522 = vsel %vm9521, %v9513, %v9518
  %v9523 = vrsqrt.pop %v9479
  %v9524 = vmul.f32 %v9523, %v9479
  %v9525 = vmul.f32 %v9524, %v9523
  %v9526 = vmul.f32 0.5, %v9525
  %v9527 = vsub.f32 1.5, %v9526
  %v9528 = vmul.f32 %v9523, %v9527
  %vm9529 = vweird.f32 %v9479
  %vm9530 = vweird.f32 %v9523
  %vm9531 = vmor %vm9529, %vm9530
  %v9532 = vsel %vm9531, %v9523, %v9528
  %v9533 = vrsqrt.pop %v9480
  %v9534 = vmul.f32 %v9533, %v9480
  %v9535 = vmul.f32 %v9534, %v9533
  %v9536 = vmul.f32 0.5, %v9535
  %v9537 = vsub.f32 1.5, %v9536
  %v9538 = vmul.f32 %v9533, %v9537
  %vm9539 = vweird.f32 %v9480
  %vm9540 = vweird.f32 %v9533
  %vm9541 = vmor %vm9539, %vm9540
  %v9542 = vsel %vm9541, %v9533, %v9538
  %v9543 = vrsqrt.pop %v9481
  %v9544 = vmul.f32 %v9543, %v9481
  %v9545 = vmul.f32 %v9544, %v9543
  %v9546 = vmul.f32 0.5, %v9545
  %v9547 = vsub.f32 1.5, %v9546
  %v9548 = vmul.f32 %v9543, %v9547
  %vm9549 = vweird.f32 %v9481
  %vm9550 = vweird.f32 %v9543
  %vm9551 = vmor %vm9549, %vm9550
  %v9552 = vsel %vm9551, %v9543, %v9548
  %v9553 = vrsqrt.pop %v9482
  %v9554 = vmul.f32 %v9553, %v9482
  %v9555 = vmul.f32 %v9554, %v9553
  %v9556 = vmul.f32 0.5, %v9555
  %v9557 = vsub.f32 1.5, %v9556
  %v9558 = vmul.f32 %v9553, %v9557
  %vm9559 = vweird.f32 %v9482
  %vm9560 = vweird.f32 %v9553
  %vm9561 = vmor %vm9559, %vm9560
  %v9562 = vsel %vm9561, %v9553, %v9558
  %v9563 = vmul.f32 %v9427, %v9492
  %v9564 = vmul.f32 %v9428, %v9502
  %v9565 = vmul.f32 %v9429, %v9512
  %v9566 = vmul.f32 %v9430, %v9522
  %v9567 = vmul.f32 %v9431, %v9532
  %v9568 = vmul.f32 %v9432, %v9542
  %v9569 = vmul.f32 %v9433, %v9552
  %v9570 = vmul.f32 %v9434, %v9562
  %v9572 = vperm.slane %v9392, 0
  %v9574 = vmul.f32 %v9563, %v9572
  %v9575 = vmul.f32 %v9564, %v9572
  %v9576 = vmul.f32 %v9565, %v9572
  %v9577 = vmul.f32 %v9566, %v9572
  %v9578 = vmul.f32 %v9567, %v9572
  %v9579 = vmul.f32 %v9568, %v9572
  %v9580 = vmul.f32 %v9569, %v9572
  %v9581 = vmul.f32 %v9570, %v9572
  %v9583 = vperm.slane %v9394, 0
  %v9585 = vadd.f32 %v9574, %v9583
  %v9586 = vadd.f32 %v9575, %v9583
  %v9587 = vadd.f32 %v9576, %v9583
  %v9588 = vadd.f32 %v9577, %v9583
  %v9589 = vadd.f32 %v9578, %v9583
  %v9590 = vadd.f32 %v9579, %v9583
  %v9591 = vadd.f32 %v9580, %v9583
  %v9592 = vadd.f32 %v9581, %v9583
  %v9593 = vpack.c.bf16 %v9586, %v9585
  %v9594 = vpack.c.bf16 %v9588, %v9587
  %v9595 = vpack.c.bf16 %v9590, %v9589
  %v9596 = vpack.c.bf16 %v9592, %v9591
  %s9597 = scalar_lea.vmem %s13, 64
  %v9598 = vld [vmem:[%s9597] sm:$0xff]
  %v9599 = vld [vmem:[%s9597 + $0x8] sm:$0xff]
  %s9600 = scalar_lea.vmem %s14, 16
  %v9601 = vld [vmem:[%s9600] sm:$0xf]
  %v9603 = vperm.slane %v9601, 0
  %v9604 = vperm.slane %v9601, 1
  %v9605 = vperm.slane %v9601, 2
  %v9606 = vperm.slane %v9601, 3
  %v9613 = vunpack.c.l.b16 %v9598
  %v9614 = vunpack.c.h.b16 %v9598
  %v9615 = vunpack.c.l.b16 %v9599
  %v9616 = vunpack.c.h.b16 %v9599
  %v9617 = vpack.c.b16 %v9613, %v9613
  %v9618 = vpack.c.b16 %v9614, %v9614
  %v9619 = vpack.c.b16 %v9615, %v9615
  %v9620 = vpack.c.b16 %v9616, %v9616
  %v9622 = vsel %vm304, %v9593, 0
  %v9625 = vsel %vm304, %v9594, 0
  %v9628 = vsel %vm304, %v9595, 0
  %v9631 = vsel %vm304, %v9596, 0
  %v9634 = vsel %vm3720, %v9617, 0
  %v9637 = vsel %vm3720, %v9618, 0
  %v9640 = vsel %vm3720, %v9619, 0
  %v9643 = vsel %vm3720, %v9620, 0
  %9645 = vmatpush.bf16.msra.mxu0 0
  %9646 = vmatpush.bf16.msra.mxu0 0
  %9647 = vmatpush.bf16.msra.mxu0 0
  %9648 = vmatpush.bf16.msra.mxu0 0
  %9649 = vmatpush.bf16.msra.mxu0 0
  %9650 = vmatpush.bf16.msra.mxu0 0
  %9651 = vmatpush.bf16.msra.mxu0 0
  %9652 = vmatpush.bf16.msra.mxu0 %v9634
  %9653 = vmatmul.bf16.gmra.mxu0 %v9622
  %v9654 = vpop.f32.mrf.mxu0
  %v9655 = vadd.f32 %v9603, %v9654
  %v9656 = vpop.f32.mrf.mxu0
  %v9657 = vadd.f32 %v9603, %v9656
  %9658 = vmatmul.bf16.gmra.mxu0 %v9625
  %v9659 = vpop.f32.mrf.mxu0
  %v9660 = vadd.f32 %v9603, %v9659
  %v9661 = vpop.f32.mrf.mxu0
  %v9662 = vadd.f32 %v9603, %v9661
  %9663 = vmatmul.bf16.gmra.mxu0 %v9628
  %v9664 = vpop.f32.mrf.mxu0
  %v9665 = vadd.f32 %v9603, %v9664
  %v9666 = vpop.f32.mrf.mxu0
  %v9667 = vadd.f32 %v9603, %v9666
  %9668 = vmatmul.bf16.gmra.mxu0 %v9631
  %v9669 = vpop.f32.mrf.mxu0
  %v9670 = vadd.f32 %v9603, %v9669
  %v9671 = vpop.f32.mrf.mxu0
  %v9672 = vadd.f32 %v9603, %v9671
  %9673 = vdwg.mxu0
  %9674 = vmatpush.bf16.msra.mxu0 0
  %9675 = vmatpush.bf16.msra.mxu0 0
  %9676 = vmatpush.bf16.msra.mxu0 0
  %9677 = vmatpush.bf16.msra.mxu0 0
  %9678 = vmatpush.bf16.msra.mxu0 0
  %9679 = vmatpush.bf16.msra.mxu0 0
  %9680 = vmatpush.bf16.msra.mxu0 0
  %9681 = vmatpush.bf16.msra.mxu0 %v9637
  %9682 = vmatmul.bf16.gmra.mxu0 %v9622
  %v9683 = vpop.f32.mrf.mxu0
  %v9684 = vadd.f32 %v9604, %v9683
  %v9685 = vpop.f32.mrf.mxu0
  %v9686 = vadd.f32 %v9604, %v9685
  %9687 = vmatmul.bf16.gmra.mxu0 %v9625
  %v9688 = vpop.f32.mrf.mxu0
  %v9689 = vadd.f32 %v9604, %v9688
  %v9690 = vpop.f32.mrf.mxu0
  %v9691 = vadd.f32 %v9604, %v9690
  %9692 = vmatmul.bf16.gmra.mxu0 %v9628
  %v9693 = vpop.f32.mrf.mxu0
  %v9694 = vadd.f32 %v9604, %v9693
  %v9695 = vpop.f32.mrf.mxu0
  %v9696 = vadd.f32 %v9604, %v9695
  %9697 = vmatmul.bf16.gmra.mxu0 %v9631
  %v9698 = vpop.f32.mrf.mxu0
  %v9699 = vadd.f32 %v9604, %v9698
  %v9700 = vpop.f32.mrf.mxu0
  %v9701 = vadd.f32 %v9604, %v9700
  %9702 = vdwg.mxu0
  %9703 = vmatpush.bf16.msra.mxu0 0
  %9704 = vmatpush.bf16.msra.mxu0 0
  %9705 = vmatpush.bf16.msra.mxu0 0
  %9706 = vmatpush.bf16.msra.mxu0 0
  %9707 = vmatpush.bf16.msra.mxu0 0
  %9708 = vmatpush.bf16.msra.mxu0 0
  %9709 = vmatpush.bf16.msra.mxu0 0
  %9710 = vmatpush.bf16.msra.mxu0 %v9640
  %9711 = vmatmul.bf16.gmra.mxu0 %v9622
  %v9712 = vpop.f32.mrf.mxu0
  %v9713 = vadd.f32 %v9605, %v9712
  %v9714 = vpop.f32.mrf.mxu0
  %v9715 = vadd.f32 %v9605, %v9714
  %9716 = vmatmul.bf16.gmra.mxu0 %v9625
  %v9717 = vpop.f32.mrf.mxu0
  %v9718 = vadd.f32 %v9605, %v9717
  %v9719 = vpop.f32.mrf.mxu0
  %v9720 = vadd.f32 %v9605, %v9719
  %9721 = vmatmul.bf16.gmra.mxu0 %v9628
  %v9722 = vpop.f32.mrf.mxu0
  %v9723 = vadd.f32 %v9605, %v9722
  %v9724 = vpop.f32.mrf.mxu0
  %v9725 = vadd.f32 %v9605, %v9724
  %9726 = vmatmul.bf16.gmra.mxu0 %v9631
  %v9727 = vpop.f32.mrf.mxu0
  %v9728 = vadd.f32 %v9605, %v9727
  %v9729 = vpop.f32.mrf.mxu0
  %v9730 = vadd.f32 %v9605, %v9729
  %9731 = vdwg.mxu0
  %9732 = vmatpush.bf16.msra.mxu0 0
  %9733 = vmatpush.bf16.msra.mxu0 0
  %9734 = vmatpush.bf16.msra.mxu0 0
  %9735 = vmatpush.bf16.msra.mxu0 0
  %9736 = vmatpush.bf16.msra.mxu0 0
  %9737 = vmatpush.bf16.msra.mxu0 0
  %9738 = vmatpush.bf16.msra.mxu0 0
  %9739 = vmatpush.bf16.msra.mxu0 %v9643
  %9740 = vmatmul.bf16.gmra.mxu0 %v9622
  %v9741 = vpop.f32.mrf.mxu0
  %v9742 = vadd.f32 %v9606, %v9741
  %v9743 = vpop.f32.mrf.mxu0
  %v9744 = vadd.f32 %v9606, %v9743
  %9745 = vmatmul.bf16.gmra.mxu0 %v9625
  %v9746 = vpop.f32.mrf.mxu0
  %v9747 = vadd.f32 %v9606, %v9746
  %v9748 = vpop.f32.mrf.mxu0
  %v9749 = vadd.f32 %v9606, %v9748
  %9750 = vmatmul.bf16.gmra.mxu0 %v9628
  %v9751 = vpop.f32.mrf.mxu0
  %v9752 = vadd.f32 %v9606, %v9751
  %v9753 = vpop.f32.mrf.mxu0
  %v9754 = vadd.f32 %v9606, %v9753
  %9755 = vmatmul.bf16.gmra.mxu0 %v9631
  %v9756 = vpop.f32.mrf.mxu0
  %v9757 = vadd.f32 %v9606, %v9756
  %v9758 = vpop.f32.mrf.mxu0
  %v9759 = vadd.f32 %v9606, %v9758
  %9760 = vdwg.mxu0
  %v9761 = vmax.f32 %v9655, 0.0
  %v9762 = vmax.f32 %v9684, 0.0
  %v9763 = vmax.f32 %v9713, 0.0
  %v9764 = vmax.f32 %v9742, 0.0
  %v9765 = vmax.f32 %v9657, 0.0
  %v9766 = vmax.f32 %v9686, 0.0
  %v9767 = vmax.f32 %v9715, 0.0
  %v9768 = vmax.f32 %v9744, 0.0
  %v9769 = vmax.f32 %v9660, 0.0
  %v9770 = vmax.f32 %v9689, 0.0
  %v9771 = vmax.f32 %v9718, 0.0
  %v9772 = vmax.f32 %v9747, 0.0
  %v9773 = vmax.f32 %v9662, 0.0
  %v9774 = vmax.f32 %v9691, 0.0
  %v9775 = vmax.f32 %v9720, 0.0
  %v9776 = vmax.f32 %v9749, 0.0
  %v9777 = vmax.f32 %v9665, 0.0
  %v9778 = vmax.f32 %v9694, 0.0
  %v9779 = vmax.f32 %v9723, 0.0
  %v9780 = vmax.f32 %v9752, 0.0
  %v9781 = vmax.f32 %v9667, 0.0
  %v9782 = vmax.f32 %v9696, 0.0
  %v9783 = vmax.f32 %v9725, 0.0
  %v9784 = vmax.f32 %v9754, 0.0
  %v9785 = vmax.f32 %v9670, 0.0
  %v9786 = vmax.f32 %v9699, 0.0
  %v9787 = vmax.f32 %v9728, 0.0
  %v9788 = vmax.f32 %v9757, 0.0
  %v9789 = vmax.f32 %v9672, 0.0
  %v9790 = vmax.f32 %v9701, 0.0
  %v9791 = vmax.f32 %v9730, 0.0
  %v9792 = vmax.f32 %v9759, 0.0
  %v9793 = vpack.c.bf16 %v9765, %v9761
  %v9794 = vpack.c.bf16 %v9766, %v9762
  %v9795 = vpack.c.bf16 %v9767, %v9763
  %v9796 = vpack.c.bf16 %v9768, %v9764
  %v9797 = vpack.c.bf16 %v9773, %v9769
  %v9798 = vpack.c.bf16 %v9774, %v9770
  %v9799 = vpack.c.bf16 %v9775, %v9771
  %v9800 = vpack.c.bf16 %v9776, %v9772
  %v9801 = vpack.c.bf16 %v9781, %v9777
  %v9802 = vpack.c.bf16 %v9782, %v9778
  %v9803 = vpack.c.bf16 %v9783, %v9779
  %v9804 = vpack.c.bf16 %v9784, %v9780
  %v9805 = vpack.c.bf16 %v9789, %v9785
  %v9806 = vpack.c.bf16 %v9790, %v9786
  %v9807 = vpack.c.bf16 %v9791, %v9787
  %v9808 = vpack.c.bf16 %v9792, %v9788
  %s9809 = scalar_lea.vmem %s15, 1024
  %v9810 = vld [vmem:[%s9809] sm:$0xf]
  %v9811 = vld [vmem:[%s9809 + $0x4] sm:$0xf]
  %v9812 = vld [vmem:[%s9809 + $0x8] sm:$0xf]
  %v9813 = vld [vmem:[%s9809 + $0xc] sm:$0xf]
  %v9814 = vld [vmem:[%s9809 + $0x10] sm:$0xf]
  %v9815 = vld [vmem:[%s9809 + $0x14] sm:$0xf]
  %v9816 = vld [vmem:[%s9809 + $0x18] sm:$0xf]
  %v9817 = vld [vmem:[%s9809 + $0x1c] sm:$0xf]
  %v9818 = vld [vmem:[%s9809 + $0x20] sm:$0xf]
  %v9819 = vld [vmem:[%s9809 + $0x24] sm:$0xf]
  %v9820 = vld [vmem:[%s9809 + $0x28] sm:$0xf]
  %v9821 = vld [vmem:[%s9809 + $0x2c] sm:$0xf]
  %v9822 = vld [vmem:[%s9809 + $0x30] sm:$0xf]
  %v9823 = vld [vmem:[%s9809 + $0x34] sm:$0xf]
  %v9824 = vld [vmem:[%s9809 + $0x38] sm:$0xf]
  %v9825 = vld [vmem:[%s9809 + $0x3c] sm:$0xf]
  %v9826 = vld [vmem:[%s9809 + $0x40] sm:$0xf]
  %v9827 = vld [vmem:[%s9809 + $0x44] sm:$0xf]
  %v9828 = vld [vmem:[%s9809 + $0x48] sm:$0xf]
  %v9829 = vld [vmem:[%s9809 + $0x4c] sm:$0xf]
  %v9830 = vld [vmem:[%s9809 + $0x50] sm:$0xf]
  %v9831 = vld [vmem:[%s9809 + $0x54] sm:$0xf]
  %v9832 = vld [vmem:[%s9809 + $0x58] sm:$0xf]
  %v9833 = vld [vmem:[%s9809 + $0x5c] sm:$0xf]
  %v9834 = vld [vmem:[%s9809 + $0x60] sm:$0xf]
  %v9835 = vld [vmem:[%s9809 + $0x64] sm:$0xf]
  %v9836 = vld [vmem:[%s9809 + $0x68] sm:$0xf]
  %v9837 = vld [vmem:[%s9809 + $0x6c] sm:$0xf]
  %v9838 = vld [vmem:[%s9809 + $0x70] sm:$0xf]
  %v9839 = vld [vmem:[%s9809 + $0x74] sm:$0xf]
  %v9840 = vld [vmem:[%s9809 + $0x78] sm:$0xf]
  %v9841 = vld [vmem:[%s9809 + $0x7c] sm:$0xf]
  %v9842 = vld [vmem:[%s9809 + $0x80] sm:$0xf]
  %v9843 = vld [vmem:[%s9809 + $0x84] sm:$0xf]
  %v9844 = vld [vmem:[%s9809 + $0x88] sm:$0xf]
  %v9845 = vld [vmem:[%s9809 + $0x8c] sm:$0xf]
  %v9846 = vld [vmem:[%s9809 + $0x90] sm:$0xf]
  %v9847 = vld [vmem:[%s9809 + $0x94] sm:$0xf]
  %v9848 = vld [vmem:[%s9809 + $0x98] sm:$0xf]
  %v9849 = vld [vmem:[%s9809 + $0x9c] sm:$0xf]
  %v9850 = vld [vmem:[%s9809 + $0xa0] sm:$0xf]
  %v9851 = vld [vmem:[%s9809 + $0xa4] sm:$0xf]
  %v9852 = vld [vmem:[%s9809 + $0xa8] sm:$0xf]
  %v9853 = vld [vmem:[%s9809 + $0xac] sm:$0xf]
  %v9854 = vld [vmem:[%s9809 + $0xb0] sm:$0xf]
  %v9855 = vld [vmem:[%s9809 + $0xb4] sm:$0xf]
  %v9856 = vld [vmem:[%s9809 + $0xb8] sm:$0xf]
  %v9857 = vld [vmem:[%s9809 + $0xbc] sm:$0xf]
  %v9858 = vld [vmem:[%s9809 + $0xc0] sm:$0xf]
  %v9859 = vld [vmem:[%s9809 + $0xc4] sm:$0xf]
  %v9860 = vld [vmem:[%s9809 + $0xc8] sm:$0xf]
  %v9861 = vld [vmem:[%s9809 + $0xcc] sm:$0xf]
  %v9862 = vld [vmem:[%s9809 + $0xd0] sm:$0xf]
  %v9863 = vld [vmem:[%s9809 + $0xd4] sm:$0xf]
  %v9864 = vld [vmem:[%s9809 + $0xd8] sm:$0xf]
  %v9865 = vld [vmem:[%s9809 + $0xdc] sm:$0xf]
  %v9866 = vld [vmem:[%s9809 + $0xe0] sm:$0xf]
  %v9867 = vld [vmem:[%s9809 + $0xe4] sm:$0xf]
  %v9868 = vld [vmem:[%s9809 + $0xe8] sm:$0xf]
  %v9869 = vld [vmem:[%s9809 + $0xec] sm:$0xf]
  %v9870 = vld [vmem:[%s9809 + $0xf0] sm:$0xf]
  %v9871 = vld [vmem:[%s9809 + $0xf4] sm:$0xf]
  %v9872 = vld [vmem:[%s9809 + $0xf8] sm:$0xf]
  %v9873 = vld [vmem:[%s9809 + $0xfc] sm:$0xf]
  %v9874 = vld [vmem:[%s9597 + $0x10] sm:$0xff]
  %v9875 = vld [vmem:[%s9597 + $0x18] sm:$0xff]
  %v9876 = vld [vmem:[%s9600 + $0x4] sm:$0xf]
  %v9878 = vperm.slane %v9876, 0
  %v9879 = vperm.slane %v9876, 1
  %v9880 = vperm.slane %v9876, 2
  %v9881 = vperm.slane %v9876, 3
  %v9888 = vunpack.c.l.b16 %v9874
  %v9889 = vunpack.c.h.b16 %v9874
  %v9890 = vunpack.c.l.b16 %v9875
  %v9891 = vunpack.c.h.b16 %v9875
  %v9892 = vpack.c.b16 %v9888, %v9888
  %v9893 = vpack.c.b16 %v9889, %v9889
  %v9894 = vpack.c.b16 %v9890, %v9890
  %v9895 = vpack.c.b16 %v9891, %v9891
  %v9897 = vsel %vm3720, %v9892, 0
  %v9900 = vsel %vm3720, %v9893, 0
  %v9903 = vsel %vm3720, %v9894, 0
  %v9906 = vsel %vm3720, %v9895, 0
  %9908 = vmatpush.bf16.msra.mxu0 0
  %9909 = vmatpush.bf16.msra.mxu0 0
  %9910 = vmatpush.bf16.msra.mxu0 0
  %9911 = vmatpush.bf16.msra.mxu0 0
  %9912 = vmatpush.bf16.msra.mxu0 0
  %9913 = vmatpush.bf16.msra.mxu0 0
  %9914 = vmatpush.bf16.msra.mxu0 0
  %9915 = vmatpush.bf16.msra.mxu0 %v9897
  %9916 = vmatmul.bf16.gmra.mxu0 %v9622
  %v9917 = vpop.f32.mrf.mxu0
  %v9918 = vadd.f32 %v9878, %v9917
  %v9919 = vpop.f32.mrf.mxu0
  %v9920 = vadd.f32 %v9878, %v9919
  %9921 = vmatmul.bf16.gmra.mxu0 %v9625
  %v9922 = vpop.f32.mrf.mxu0
  %v9923 = vadd.f32 %v9878, %v9922
  %v9924 = vpop.f32.mrf.mxu0
  %v9925 = vadd.f32 %v9878, %v9924
  %9926 = vmatmul.bf16.gmra.mxu0 %v9628
  %v9927 = vpop.f32.mrf.mxu0
  %v9928 = vadd.f32 %v9878, %v9927
  %v9929 = vpop.f32.mrf.mxu0
  %v9930 = vadd.f32 %v9878, %v9929
  %9931 = vmatmul.bf16.gmra.mxu0 %v9631
  %v9932 = vpop.f32.mrf.mxu0
  %v9933 = vadd.f32 %v9878, %v9932
  %v9934 = vpop.f32.mrf.mxu0
  %v9935 = vadd.f32 %v9878, %v9934
  %9936 = vdwg.mxu0
  %9937 = vmatpush.bf16.msra.mxu0 0
  %9938 = vmatpush.bf16.msra.mxu0 0
  %9939 = vmatpush.bf16.msra.mxu0 0
  %9940 = vmatpush.bf16.msra.mxu0 0
  %9941 = vmatpush.bf16.msra.mxu0 0
  %9942 = vmatpush.bf16.msra.mxu0 0
  %9943 = vmatpush.bf16.msra.mxu0 0
  %9944 = vmatpush.bf16.msra.mxu0 %v9900
  %9945 = vmatmul.bf16.gmra.mxu0 %v9622
  %v9946 = vpop.f32.mrf.mxu0
  %v9947 = vadd.f32 %v9879, %v9946
  %v9948 = vpop.f32.mrf.mxu0
  %v9949 = vadd.f32 %v9879, %v9948
  %9950 = vmatmul.bf16.gmra.mxu0 %v9625
  %v9951 = vpop.f32.mrf.mxu0
  %v9952 = vadd.f32 %v9879, %v9951
  %v9953 = vpop.f32.mrf.mxu0
  %v9954 = vadd.f32 %v9879, %v9953
  %9955 = vmatmul.bf16.gmra.mxu0 %v9628
  %v9956 = vpop.f32.mrf.mxu0
  %v9957 = vadd.f32 %v9879, %v9956
  %v9958 = vpop.f32.mrf.mxu0
  %v9959 = vadd.f32 %v9879, %v9958
  %9960 = vmatmul.bf16.gmra.mxu0 %v9631
  %v9961 = vpop.f32.mrf.mxu0
  %v9962 = vadd.f32 %v9879, %v9961
  %v9963 = vpop.f32.mrf.mxu0
  %v9964 = vadd.f32 %v9879, %v9963
  %9965 = vdwg.mxu0
  %9966 = vmatpush.bf16.msra.mxu0 0
  %9967 = vmatpush.bf16.msra.mxu0 0
  %9968 = vmatpush.bf16.msra.mxu0 0
  %9969 = vmatpush.bf16.msra.mxu0 0
  %9970 = vmatpush.bf16.msra.mxu0 0
  %9971 = vmatpush.bf16.msra.mxu0 0
  %9972 = vmatpush.bf16.msra.mxu0 0
  %9973 = vmatpush.bf16.msra.mxu0 %v9903
  %9974 = vmatmul.bf16.gmra.mxu0 %v9622
  %v9975 = vpop.f32.mrf.mxu0
  %v9976 = vadd.f32 %v9880, %v9975
  %v9977 = vpop.f32.mrf.mxu0
  %v9978 = vadd.f32 %v9880, %v9977
  %9979 = vmatmul.bf16.gmra.mxu0 %v9625
  %v9980 = vpop.f32.mrf.mxu0
  %v9981 = vadd.f32 %v9880, %v9980
  %v9982 = vpop.f32.mrf.mxu0
  %v9983 = vadd.f32 %v9880, %v9982
  %9984 = vmatmul.bf16.gmra.mxu0 %v9628
  %v9985 = vpop.f32.mrf.mxu0
  %v9986 = vadd.f32 %v9880, %v9985
  %v9987 = vpop.f32.mrf.mxu0
  %v9988 = vadd.f32 %v9880, %v9987
  %9989 = vmatmul.bf16.gmra.mxu0 %v9631
  %v9990 = vpop.f32.mrf.mxu0
  %v9991 = vadd.f32 %v9880, %v9990
  %v9992 = vpop.f32.mrf.mxu0
  %v9993 = vadd.f32 %v9880, %v9992
  %9994 = vdwg.mxu0
  %9995 = vmatpush.bf16.msra.mxu0 0
  %9996 = vmatpush.bf16.msra.mxu0 0
  %9997 = vmatpush.bf16.msra.mxu0 0
  %9998 = vmatpush.bf16.msra.mxu0 0
  %9999 = vmatpush.bf16.msra.mxu0 0
  %10000 = vmatpush.bf16.msra.mxu0 0
  %10001 = vmatpush.bf16.msra.mxu0 0
  %10002 = vmatpush.bf16.msra.mxu0 %v9906
  %10003 = vmatmul.bf16.gmra.mxu0 %v9622
  %v10004 = vpop.f32.mrf.mxu0
  %v10005 = vadd.f32 %v9881, %v10004
  %v10006 = vpop.f32.mrf.mxu0
  %v10007 = vadd.f32 %v9881, %v10006
  %10008 = vmatmul.bf16.gmra.mxu0 %v9625
  %v10009 = vpop.f32.mrf.mxu0
  %v10010 = vadd.f32 %v9881, %v10009
  %v10011 = vpop.f32.mrf.mxu0
  %v10012 = vadd.f32 %v9881, %v10011
  %10013 = vmatmul.bf16.gmra.mxu0 %v9628
  %v10014 = vpop.f32.mrf.mxu0
  %v10015 = vadd.f32 %v9881, %v10014
  %v10016 = vpop.f32.mrf.mxu0
  %v10017 = vadd.f32 %v9881, %v10016
  %10018 = vmatmul.bf16.gmra.mxu0 %v9631
  %v10019 = vpop.f32.mrf.mxu0
  %v10020 = vadd.f32 %v9881, %v10019
  %v10021 = vpop.f32.mrf.mxu0
  %v10022 = vadd.f32 %v9881, %v10021
  %10023 = vdwg.mxu0
  %v10024 = vmax.f32 %v9918, 0.0
  %v10025 = vmax.f32 %v9947, 0.0
  %v10026 = vmax.f32 %v9976, 0.0
  %v10027 = vmax.f32 %v10005, 0.0
  %v10028 = vmax.f32 %v9920, 0.0
  %v10029 = vmax.f32 %v9949, 0.0
  %v10030 = vmax.f32 %v9978, 0.0
  %v10031 = vmax.f32 %v10007, 0.0
  %v10032 = vmax.f32 %v9923, 0.0
  %v10033 = vmax.f32 %v9952, 0.0
  %v10034 = vmax.f32 %v9981, 0.0
  %v10035 = vmax.f32 %v10010, 0.0
  %v10036 = vmax.f32 %v9925, 0.0
  %v10037 = vmax.f32 %v9954, 0.0
  %v10038 = vmax.f32 %v9983, 0.0
  %v10039 = vmax.f32 %v10012, 0.0
  %v10040 = vmax.f32 %v9928, 0.0
  %v10041 = vmax.f32 %v9957, 0.0
  %v10042 = vmax.f32 %v9986, 0.0
  %v10043 = vmax.f32 %v10015, 0.0
  %v10044 = vmax.f32 %v9930, 0.0
  %v10045 = vmax.f32 %v9959, 0.0
  %v10046 = vmax.f32 %v9988, 0.0
  %v10047 = vmax.f32 %v10017, 0.0
  %v10048 = vmax.f32 %v9933, 0.0
  %v10049 = vmax.f32 %v9962, 0.0
  %v10050 = vmax.f32 %v9991, 0.0
  %v10051 = vmax.f32 %v10020, 0.0
  %v10052 = vmax.f32 %v9935, 0.0
  %v10053 = vmax.f32 %v9964, 0.0
  %v10054 = vmax.f32 %v9993, 0.0
  %v10055 = vmax.f32 %v10022, 0.0
  %v10056 = vpack.c.bf16 %v10028, %v10024
  %v10057 = vpack.c.bf16 %v10029, %v10025
  %v10058 = vpack.c.bf16 %v10030, %v10026
  %v10059 = vpack.c.bf16 %v10031, %v10027
  %v10060 = vpack.c.bf16 %v10036, %v10032
  %v10061 = vpack.c.bf16 %v10037, %v10033
  %v10062 = vpack.c.bf16 %v10038, %v10034
  %v10063 = vpack.c.bf16 %v10039, %v10035
  %v10064 = vpack.c.bf16 %v10044, %v10040
  %v10065 = vpack.c.bf16 %v10045, %v10041
  %v10066 = vpack.c.bf16 %v10046, %v10042
  %v10067 = vpack.c.bf16 %v10047, %v10043
  %v10068 = vpack.c.bf16 %v10052, %v10048
  %v10069 = vpack.c.bf16 %v10053, %v10049
  %v10070 = vpack.c.bf16 %v10054, %v10050
  %v10071 = vpack.c.bf16 %v10055, %v10051
  %v10072 = vld [vmem:[%s9809 + $0x100] sm:$0xf]
  %v10073 = vld [vmem:[%s9809 + $0x104] sm:$0xf]
  %v10074 = vld [vmem:[%s9809 + $0x108] sm:$0xf]
  %v10075 = vld [vmem:[%s9809 + $0x10c] sm:$0xf]
  %v10076 = vld [vmem:[%s9809 + $0x110] sm:$0xf]
  %v10077 = vld [vmem:[%s9809 + $0x114] sm:$0xf]
  %v10078 = vld [vmem:[%s9809 + $0x118] sm:$0xf]
  %v10079 = vld [vmem:[%s9809 + $0x11c] sm:$0xf]
  %v10080 = vld [vmem:[%s9809 + $0x120] sm:$0xf]
  %v10081 = vld [vmem:[%s9809 + $0x124] sm:$0xf]
  %v10082 = vld [vmem:[%s9809 + $0x128] sm:$0xf]
  %v10083 = vld [vmem:[%s9809 + $0x12c] sm:$0xf]
  %v10084 = vld [vmem:[%s9809 + $0x130] sm:$0xf]
  %v10085 = vld [vmem:[%s9809 + $0x134] sm:$0xf]
  %v10086 = vld [vmem:[%s9809 + $0x138] sm:$0xf]
  %v10087 = vld [vmem:[%s9809 + $0x13c] sm:$0xf]
  %v10088 = vld [vmem:[%s9809 + $0x140] sm:$0xf]
  %v10089 = vld [vmem:[%s9809 + $0x144] sm:$0xf]
  %v10090 = vld [vmem:[%s9809 + $0x148] sm:$0xf]
  %v10091 = vld [vmem:[%s9809 + $0x14c] sm:$0xf]
  %v10092 = vld [vmem:[%s9809 + $0x150] sm:$0xf]
  %v10093 = vld [vmem:[%s9809 + $0x154] sm:$0xf]
  %v10094 = vld [vmem:[%s9809 + $0x158] sm:$0xf]
  %v10095 = vld [vmem:[%s9809 + $0x15c] sm:$0xf]
  %v10096 = vld [vmem:[%s9809 + $0x160] sm:$0xf]
  %v10097 = vld [vmem:[%s9809 + $0x164] sm:$0xf]
  %v10098 = vld [vmem:[%s9809 + $0x168] sm:$0xf]
  %v10099 = vld [vmem:[%s9809 + $0x16c] sm:$0xf]
  %v10100 = vld [vmem:[%s9809 + $0x170] sm:$0xf]
  %v10101 = vld [vmem:[%s9809 + $0x174] sm:$0xf]
  %v10102 = vld [vmem:[%s9809 + $0x178] sm:$0xf]
  %v10103 = vld [vmem:[%s9809 + $0x17c] sm:$0xf]
  %v10104 = vld [vmem:[%s9809 + $0x180] sm:$0xf]
  %v10105 = vld [vmem:[%s9809 + $0x184] sm:$0xf]
  %v10106 = vld [vmem:[%s9809 + $0x188] sm:$0xf]
  %v10107 = vld [vmem:[%s9809 + $0x18c] sm:$0xf]
  %v10108 = vld [vmem:[%s9809 + $0x190] sm:$0xf]
  %v10109 = vld [vmem:[%s9809 + $0x194] sm:$0xf]
  %v10110 = vld [vmem:[%s9809 + $0x198] sm:$0xf]
  %v10111 = vld [vmem:[%s9809 + $0x19c] sm:$0xf]
  %v10112 = vld [vmem:[%s9809 + $0x1a0] sm:$0xf]
  %v10113 = vld [vmem:[%s9809 + $0x1a4] sm:$0xf]
  %v10114 = vld [vmem:[%s9809 + $0x1a8] sm:$0xf]
  %v10115 = vld [vmem:[%s9809 + $0x1ac] sm:$0xf]
  %v10116 = vld [vmem:[%s9809 + $0x1b0] sm:$0xf]
  %v10117 = vld [vmem:[%s9809 + $0x1b4] sm:$0xf]
  %v10118 = vld [vmem:[%s9809 + $0x1b8] sm:$0xf]
  %v10119 = vld [vmem:[%s9809 + $0x1bc] sm:$0xf]
  %v10120 = vld [vmem:[%s9809 + $0x1c0] sm:$0xf]
  %v10121 = vld [vmem:[%s9809 + $0x1c4] sm:$0xf]
  %v10122 = vld [vmem:[%s9809 + $0x1c8] sm:$0xf]
  %v10123 = vld [vmem:[%s9809 + $0x1cc] sm:$0xf]
  %v10124 = vld [vmem:[%s9809 + $0x1d0] sm:$0xf]
  %v10125 = vld [vmem:[%s9809 + $0x1d4] sm:$0xf]
  %v10126 = vld [vmem:[%s9809 + $0x1d8] sm:$0xf]
  %v10127 = vld [vmem:[%s9809 + $0x1dc] sm:$0xf]
  %v10128 = vld [vmem:[%s9809 + $0x1e0] sm:$0xf]
  %v10129 = vld [vmem:[%s9809 + $0x1e4] sm:$0xf]
  %v10130 = vld [vmem:[%s9809 + $0x1e8] sm:$0xf]
  %v10131 = vld [vmem:[%s9809 + $0x1ec] sm:$0xf]
  %v10132 = vld [vmem:[%s9809 + $0x1f0] sm:$0xf]
  %v10133 = vld [vmem:[%s9809 + $0x1f4] sm:$0xf]
  %v10134 = vld [vmem:[%s9809 + $0x1f8] sm:$0xf]
  %v10135 = vld [vmem:[%s9809 + $0x1fc] sm:$0xf]
  %v10200 = vunpack.c.l.b16 %v10072
  %v10201 = vunpack.c.l.b16 %v10073
  %v10202 = vunpack.c.l.b16 %v10074
  %v10203 = vunpack.c.l.b16 %v10075
  %v10204 = vunpack.c.l.b16 %v10076
  %v10205 = vunpack.c.l.b16 %v10077
  %v10206 = vunpack.c.l.b16 %v10078
  %v10207 = vunpack.c.l.b16 %v10079
  %v10208 = vunpack.c.l.b16 %v10080
  %v10209 = vunpack.c.l.b16 %v10081
  %v10210 = vunpack.c.l.b16 %v10082
  %v10211 = vunpack.c.l.b16 %v10083
  %v10212 = vunpack.c.l.b16 %v10084
  %v10213 = vunpack.c.l.b16 %v10085
  %v10214 = vunpack.c.l.b16 %v10086
  %v10215 = vunpack.c.l.b16 %v10087
  %v10216 = vunpack.c.l.b16 %v10088
  %v10217 = vunpack.c.l.b16 %v10089
  %v10218 = vunpack.c.l.b16 %v10090
  %v10219 = vunpack.c.l.b16 %v10091
  %v10220 = vunpack.c.l.b16 %v10092
  %v10221 = vunpack.c.l.b16 %v10093
  %v10222 = vunpack.c.l.b16 %v10094
  %v10223 = vunpack.c.l.b16 %v10095
  %v10224 = vunpack.c.l.b16 %v10096
  %v10225 = vunpack.c.l.b16 %v10097
  %v10226 = vunpack.c.l.b16 %v10098
  %v10227 = vunpack.c.l.b16 %v10099
  %v10228 = vunpack.c.l.b16 %v10100
  %v10229 = vunpack.c.l.b16 %v10101
  %v10230 = vunpack.c.l.b16 %v10102
  %v10231 = vunpack.c.l.b16 %v10103
  %v10232 = vunpack.c.l.b16 %v10104
  %v10233 = vunpack.c.l.b16 %v10105
  %v10234 = vunpack.c.l.b16 %v10106
  %v10235 = vunpack.c.l.b16 %v10107
  %v10236 = vunpack.c.l.b16 %v10108
  %v10237 = vunpack.c.l.b16 %v10109
  %v10238 = vunpack.c.l.b16 %v10110
  %v10239 = vunpack.c.l.b16 %v10111
  %v10240 = vunpack.c.l.b16 %v10112
  %v10241 = vunpack.c.l.b16 %v10113
  %v10242 = vunpack.c.l.b16 %v10114
  %v10243 = vunpack.c.l.b16 %v10115
  %v10244 = vunpack.c.l.b16 %v10116
  %v10245 = vunpack.c.l.b16 %v10117
  %v10246 = vunpack.c.l.b16 %v10118
  %v10247 = vunpack.c.l.b16 %v10119
  %v10248 = vunpack.c.l.b16 %v10120
  %v10249 = vunpack.c.l.b16 %v10121
  %v10250 = vunpack.c.l.b16 %v10122
  %v10251 = vunpack.c.l.b16 %v10123
  %v10252 = vunpack.c.l.b16 %v10124
  %v10253 = vunpack.c.l.b16 %v10125
  %v10254 = vunpack.c.l.b16 %v10126
  %v10255 = vunpack.c.l.b16 %v10127
  %v10256 = vunpack.c.l.b16 %v10128
  %v10257 = vunpack.c.l.b16 %v10129
  %v10258 = vunpack.c.l.b16 %v10130
  %v10259 = vunpack.c.l.b16 %v10131
  %v10260 = vunpack.c.l.b16 %v10132
  %v10261 = vunpack.c.l.b16 %v10133
  %v10262 = vunpack.c.l.b16 %v10134
  %v10263 = vunpack.c.l.b16 %v10135
  %v10264 = vpack.c.b16 %v10201, %v10200
  %v10265 = vpack.c.b16 %v10203, %v10202
  %v10266 = vpack.c.b16 %v10205, %v10204
  %v10267 = vpack.c.b16 %v10207, %v10206
  %v10268 = vpack.c.b16 %v10209, %v10208
  %v10269 = vpack.c.b16 %v10211, %v10210
  %v10270 = vpack.c.b16 %v10213, %v10212
  %v10271 = vpack.c.b16 %v10215, %v10214
  %v10272 = vpack.c.b16 %v10217, %v10216
  %v10273 = vpack.c.b16 %v10219, %v10218
  %v10274 = vpack.c.b16 %v10221, %v10220
  %v10275 = vpack.c.b16 %v10223, %v10222
  %v10276 = vpack.c.b16 %v10225, %v10224
  %v10277 = vpack.c.b16 %v10227, %v10226
  %v10278 = vpack.c.b16 %v10229, %v10228
  %v10279 = vpack.c.b16 %v10231, %v10230
  %v10280 = vpack.c.b16 %v10233, %v10232
  %v10281 = vpack.c.b16 %v10235, %v10234
  %v10282 = vpack.c.b16 %v10237, %v10236
  %v10283 = vpack.c.b16 %v10239, %v10238
  %v10284 = vpack.c.b16 %v10241, %v10240
  %v10285 = vpack.c.b16 %v10243, %v10242
  %v10286 = vpack.c.b16 %v10245, %v10244
  %v10287 = vpack.c.b16 %v10247, %v10246
  %v10288 = vpack.c.b16 %v10249, %v10248
  %v10289 = vpack.c.b16 %v10251, %v10250
  %v10290 = vpack.c.b16 %v10253, %v10252
  %v10291 = vpack.c.b16 %v10255, %v10254
  %v10292 = vpack.c.b16 %v10257, %v10256
  %v10293 = vpack.c.b16 %v10259, %v10258
  %v10294 = vpack.c.b16 %v10261, %v10260
  %v10295 = vpack.c.b16 %v10263, %v10262
  %10328 = vmatpush.bf16.msra.mxu0 %v10271
  %10329 = vmatpush.bf16.msra.mxu0 %v10270
  %10330 = vmatpush.bf16.msra.mxu0 %v10269
  %10331 = vmatpush.bf16.msra.mxu0 %v10268
  %10332 = vmatpush.bf16.msra.mxu0 %v10267
  %10333 = vmatpush.bf16.msra.mxu0 %v10266
  %10334 = vmatpush.bf16.msra.mxu0 %v10265
  %10335 = vmatpush.bf16.msra.mxu0 %v10264
  %10336 = vmatmul.bf16.gmra.mxu0 %v10056
  %v10337 = vpop.f32.mrf.mxu0
  %v10338 = vadd.f32 0.0, %v10337
  %v10339 = vpop.f32.mrf.mxu0
  %v10340 = vadd.f32 0.0, %v10339
  %10341 = vmatmul.bf16.gmra.mxu0 %v10060
  %v10342 = vpop.f32.mrf.mxu0
  %v10343 = vadd.f32 0.0, %v10342
  %v10344 = vpop.f32.mrf.mxu0
  %v10345 = vadd.f32 0.0, %v10344
  %10346 = vmatmul.bf16.gmra.mxu0 %v10064
  %v10347 = vpop.f32.mrf.mxu0
  %v10348 = vadd.f32 0.0, %v10347
  %v10349 = vpop.f32.mrf.mxu0
  %v10350 = vadd.f32 0.0, %v10349
  %10351 = vmatmul.bf16.gmra.mxu0 %v10068
  %v10352 = vpop.f32.mrf.mxu0
  %v10353 = vadd.f32 0.0, %v10352
  %v10354 = vpop.f32.mrf.mxu0
  %v10355 = vadd.f32 0.0, %v10354
  %10356 = vdwg.mxu0
  %10357 = vmatpush.bf16.msra.mxu0 %v10279
  %10358 = vmatpush.bf16.msra.mxu0 %v10278
  %10359 = vmatpush.bf16.msra.mxu0 %v10277
  %10360 = vmatpush.bf16.msra.mxu0 %v10276
  %10361 = vmatpush.bf16.msra.mxu0 %v10275
  %10362 = vmatpush.bf16.msra.mxu0 %v10274
  %10363 = vmatpush.bf16.msra.mxu0 %v10273
  %10364 = vmatpush.bf16.msra.mxu0 %v10272
  %10365 = vmatmul.bf16.gmra.mxu0 %v10057
  %v10366 = vpop.f32.mrf.mxu0
  %v10367 = vadd.f32 %v10338, %v10366
  %v10368 = vpop.f32.mrf.mxu0
  %v10369 = vadd.f32 %v10340, %v10368
  %10370 = vmatmul.bf16.gmra.mxu0 %v10061
  %v10371 = vpop.f32.mrf.mxu0
  %v10372 = vadd.f32 %v10343, %v10371
  %v10373 = vpop.f32.mrf.mxu0
  %v10374 = vadd.f32 %v10345, %v10373
  %10375 = vmatmul.bf16.gmra.mxu0 %v10065
  %v10376 = vpop.f32.mrf.mxu0
  %v10377 = vadd.f32 %v10348, %v10376
  %v10378 = vpop.f32.mrf.mxu0
  %v10379 = vadd.f32 %v10350, %v10378
  %10380 = vmatmul.bf16.gmra.mxu0 %v10069
  %v10381 = vpop.f32.mrf.mxu0
  %v10382 = vadd.f32 %v10353, %v10381
  %v10383 = vpop.f32.mrf.mxu0
  %v10384 = vadd.f32 %v10355, %v10383
  %10385 = vdwg.mxu0
  %10386 = vmatpush.bf16.msra.mxu0 %v10287
  %10387 = vmatpush.bf16.msra.mxu0 %v10286
  %10388 = vmatpush.bf16.msra.mxu0 %v10285
  %10389 = vmatpush.bf16.msra.mxu0 %v10284
  %10390 = vmatpush.bf16.msra.mxu0 %v10283
  %10391 = vmatpush.bf16.msra.mxu0 %v10282
  %10392 = vmatpush.bf16.msra.mxu0 %v10281
  %10393 = vmatpush.bf16.msra.mxu0 %v10280
  %10394 = vmatmul.bf16.gmra.mxu0 %v10058
  %v10395 = vpop.f32.mrf.mxu0
  %v10396 = vadd.f32 %v10367, %v10395
  %v10397 = vpop.f32.mrf.mxu0
  %v10398 = vadd.f32 %v10369, %v10397
  %10399 = vmatmul.bf16.gmra.mxu0 %v10062
  %v10400 = vpop.f32.mrf.mxu0
  %v10401 = vadd.f32 %v10372, %v10400
  %v10402 = vpop.f32.mrf.mxu0
  %v10403 = vadd.f32 %v10374, %v10402
  %10404 = vmatmul.bf16.gmra.mxu0 %v10066
  %v10405 = vpop.f32.mrf.mxu0
  %v10406 = vadd.f32 %v10377, %v10405
  %v10407 = vpop.f32.mrf.mxu0
  %v10408 = vadd.f32 %v10379, %v10407
  %10409 = vmatmul.bf16.gmra.mxu0 %v10070
  %v10410 = vpop.f32.mrf.mxu0
  %v10411 = vadd.f32 %v10382, %v10410
  %v10412 = vpop.f32.mrf.mxu0
  %v10413 = vadd.f32 %v10384, %v10412
  %10414 = vdwg.mxu0
  %10415 = vmatpush.bf16.msra.mxu0 %v10295
  %10416 = vmatpush.bf16.msra.mxu0 %v10294
  %10417 = vmatpush.bf16.msra.mxu0 %v10293
  %10418 = vmatpush.bf16.msra.mxu0 %v10292
  %10419 = vmatpush.bf16.msra.mxu0 %v10291
  %10420 = vmatpush.bf16.msra.mxu0 %v10290
  %10421 = vmatpush.bf16.msra.mxu0 %v10289
  %10422 = vmatpush.bf16.msra.mxu0 %v10288
  %10423 = vmatmul.bf16.gmra.mxu0 %v10059
  %v10424 = vpop.f32.mrf.mxu0
  %v10425 = vadd.f32 %v10396, %v10424
  %v10426 = vpop.f32.mrf.mxu0
  %v10427 = vadd.f32 %v10398, %v10426
  %10428 = vmatmul.bf16.gmra.mxu0 %v10063
  %v10429 = vpop.f32.mrf.mxu0
  %v10430 = vadd.f32 %v10401, %v10429
  %v10431 = vpop.f32.mrf.mxu0
  %v10432 = vadd.f32 %v10403, %v10431
  %10433 = vmatmul.bf16.gmra.mxu0 %v10067
  %v10434 = vpop.f32.mrf.mxu0
  %v10435 = vadd.f32 %v10406, %v10434
  %v10436 = vpop.f32.mrf.mxu0
  %v10437 = vadd.f32 %v10408, %v10436
  %10438 = vmatmul.bf16.gmra.mxu0 %v10071
  %v10439 = vpop.f32.mrf.mxu0
  %v10440 = vadd.f32 %v10411, %v10439
  %v10441 = vpop.f32.mrf.mxu0
  %v10442 = vadd.f32 %v10413, %v10441
  %10443 = vdwg.mxu0
  %v10508 = vunpack.c.l.b16 %v9810
  %v10509 = vunpack.c.l.b16 %v9811
  %v10510 = vunpack.c.l.b16 %v9812
  %v10511 = vunpack.c.l.b16 %v9813
  %v10512 = vunpack.c.l.b16 %v9814
  %v10513 = vunpack.c.l.b16 %v9815
  %v10514 = vunpack.c.l.b16 %v9816
  %v10515 = vunpack.c.l.b16 %v9817
  %v10516 = vunpack.c.l.b16 %v9818
  %v10517 = vunpack.c.l.b16 %v9819
  %v10518 = vunpack.c.l.b16 %v9820
  %v10519 = vunpack.c.l.b16 %v9821
  %v10520 = vunpack.c.l.b16 %v9822
  %v10521 = vunpack.c.l.b16 %v9823
  %v10522 = vunpack.c.l.b16 %v9824
  %v10523 = vunpack.c.l.b16 %v9825
  %v10524 = vunpack.c.l.b16 %v9826
  %v10525 = vunpack.c.l.b16 %v9827
  %v10526 = vunpack.c.l.b16 %v9828
  %v10527 = vunpack.c.l.b16 %v9829
  %v10528 = vunpack.c.l.b16 %v9830
  %v10529 = vunpack.c.l.b16 %v9831
  %v10530 = vunpack.c.l.b16 %v9832
  %v10531 = vunpack.c.l.b16 %v9833
  %v10532 = vunpack.c.l.b16 %v9834
  %v10533 = vunpack.c.l.b16 %v9835
  %v10534 = vunpack.c.l.b16 %v9836
  %v10535 = vunpack.c.l.b16 %v9837
  %v10536 = vunpack.c.l.b16 %v9838
  %v10537 = vunpack.c.l.b16 %v9839
  %v10538 = vunpack.c.l.b16 %v9840
  %v10539 = vunpack.c.l.b16 %v9841
  %v10540 = vunpack.c.l.b16 %v9842
  %v10541 = vunpack.c.l.b16 %v9843
  %v10542 = vunpack.c.l.b16 %v9844
  %v10543 = vunpack.c.l.b16 %v9845
  %v10544 = vunpack.c.l.b16 %v9846
  %v10545 = vunpack.c.l.b16 %v9847
  %v10546 = vunpack.c.l.b16 %v9848
  %v10547 = vunpack.c.l.b16 %v9849
  %v10548 = vunpack.c.l.b16 %v9850
  %v10549 = vunpack.c.l.b16 %v9851
  %v10550 = vunpack.c.l.b16 %v9852
  %v10551 = vunpack.c.l.b16 %v9853
  %v10552 = vunpack.c.l.b16 %v9854
  %v10553 = vunpack.c.l.b16 %v9855
  %v10554 = vunpack.c.l.b16 %v9856
  %v10555 = vunpack.c.l.b16 %v9857
  %v10556 = vunpack.c.l.b16 %v9858
  %v10557 = vunpack.c.l.b16 %v9859
  %v10558 = vunpack.c.l.b16 %v9860
  %v10559 = vunpack.c.l.b16 %v9861
  %v10560 = vunpack.c.l.b16 %v9862
  %v10561 = vunpack.c.l.b16 %v9863
  %v10562 = vunpack.c.l.b16 %v9864
  %v10563 = vunpack.c.l.b16 %v9865
  %v10564 = vunpack.c.l.b16 %v9866
  %v10565 = vunpack.c.l.b16 %v9867
  %v10566 = vunpack.c.l.b16 %v9868
  %v10567 = vunpack.c.l.b16 %v9869
  %v10568 = vunpack.c.l.b16 %v9870
  %v10569 = vunpack.c.l.b16 %v9871
  %v10570 = vunpack.c.l.b16 %v9872
  %v10571 = vunpack.c.l.b16 %v9873
  %v10572 = vpack.c.b16 %v10509, %v10508
  %v10573 = vpack.c.b16 %v10511, %v10510
  %v10574 = vpack.c.b16 %v10513, %v10512
  %v10575 = vpack.c.b16 %v10515, %v10514
  %v10576 = vpack.c.b16 %v10517, %v10516
  %v10577 = vpack.c.b16 %v10519, %v10518
  %v10578 = vpack.c.b16 %v10521, %v10520
  %v10579 = vpack.c.b16 %v10523, %v10522
  %v10580 = vpack.c.b16 %v10525, %v10524
  %v10581 = vpack.c.b16 %v10527, %v10526
  %v10582 = vpack.c.b16 %v10529, %v10528
  %v10583 = vpack.c.b16 %v10531, %v10530
  %v10584 = vpack.c.b16 %v10533, %v10532
  %v10585 = vpack.c.b16 %v10535, %v10534
  %v10586 = vpack.c.b16 %v10537, %v10536
  %v10587 = vpack.c.b16 %v10539, %v10538
  %v10588 = vpack.c.b16 %v10541, %v10540
  %v10589 = vpack.c.b16 %v10543, %v10542
  %v10590 = vpack.c.b16 %v10545, %v10544
  %v10591 = vpack.c.b16 %v10547, %v10546
  %v10592 = vpack.c.b16 %v10549, %v10548
  %v10593 = vpack.c.b16 %v10551, %v10550
  %v10594 = vpack.c.b16 %v10553, %v10552
  %v10595 = vpack.c.b16 %v10555, %v10554
  %v10596 = vpack.c.b16 %v10557, %v10556
  %v10597 = vpack.c.b16 %v10559, %v10558
  %v10598 = vpack.c.b16 %v10561, %v10560
  %v10599 = vpack.c.b16 %v10563, %v10562
  %v10600 = vpack.c.b16 %v10565, %v10564
  %v10601 = vpack.c.b16 %v10567, %v10566
  %v10602 = vpack.c.b16 %v10569, %v10568
  %v10603 = vpack.c.b16 %v10571, %v10570
  %10636 = vmatpush.bf16.msra.mxu0 %v10579
  %10637 = vmatpush.bf16.msra.mxu0 %v10578
  %10638 = vmatpush.bf16.msra.mxu0 %v10577
  %10639 = vmatpush.bf16.msra.mxu0 %v10576
  %10640 = vmatpush.bf16.msra.mxu0 %v10575
  %10641 = vmatpush.bf16.msra.mxu0 %v10574
  %10642 = vmatpush.bf16.msra.mxu0 %v10573
  %10643 = vmatpush.bf16.msra.mxu0 %v10572
  %10644 = vmatmul.bf16.gmra.mxu0 %v9793
  %v10645 = vpop.f32.mrf.mxu0
  %v10646 = vadd.f32 %v10425, %v10645
  %v10647 = vpop.f32.mrf.mxu0
  %v10648 = vadd.f32 %v10427, %v10647
  %10649 = vmatmul.bf16.gmra.mxu0 %v9797
  %v10650 = vpop.f32.mrf.mxu0
  %v10651 = vadd.f32 %v10430, %v10650
  %v10652 = vpop.f32.mrf.mxu0
  %v10653 = vadd.f32 %v10432, %v10652
  %10654 = vmatmul.bf16.gmra.mxu0 %v9801
  %v10655 = vpop.f32.mrf.mxu0
  %v10656 = vadd.f32 %v10435, %v10655
  %v10657 = vpop.f32.mrf.mxu0
  %v10658 = vadd.f32 %v10437, %v10657
  %10659 = vmatmul.bf16.gmra.mxu0 %v9805
  %v10660 = vpop.f32.mrf.mxu0
  %v10661 = vadd.f32 %v10440, %v10660
  %v10662 = vpop.f32.mrf.mxu0
  %v10663 = vadd.f32 %v10442, %v10662
  %10664 = vdwg.mxu0
  %10665 = vmatpush.bf16.msra.mxu0 %v10587
  %10666 = vmatpush.bf16.msra.mxu0 %v10586
  %10667 = vmatpush.bf16.msra.mxu0 %v10585
  %10668 = vmatpush.bf16.msra.mxu0 %v10584
  %10669 = vmatpush.bf16.msra.mxu0 %v10583
  %10670 = vmatpush.bf16.msra.mxu0 %v10582
  %10671 = vmatpush.bf16.msra.mxu0 %v10581
  %10672 = vmatpush.bf16.msra.mxu0 %v10580
  %10673 = vmatmul.bf16.gmra.mxu0 %v9794
  %v10674 = vpop.f32.mrf.mxu0
  %v10675 = vadd.f32 %v10646, %v10674
  %v10676 = vpop.f32.mrf.mxu0
  %v10677 = vadd.f32 %v10648, %v10676
  %10678 = vmatmul.bf16.gmra.mxu0 %v9798
  %v10679 = vpop.f32.mrf.mxu0
  %v10680 = vadd.f32 %v10651, %v10679
  %v10681 = vpop.f32.mrf.mxu0
  %v10682 = vadd.f32 %v10653, %v10681
  %10683 = vmatmul.bf16.gmra.mxu0 %v9802
  %v10684 = vpop.f32.mrf.mxu0
  %v10685 = vadd.f32 %v10656, %v10684
  %v10686 = vpop.f32.mrf.mxu0
  %v10687 = vadd.f32 %v10658, %v10686
  %10688 = vmatmul.bf16.gmra.mxu0 %v9806
  %v10689 = vpop.f32.mrf.mxu0
  %v10690 = vadd.f32 %v10661, %v10689
  %v10691 = vpop.f32.mrf.mxu0
  %v10692 = vadd.f32 %v10663, %v10691
  %10693 = vdwg.mxu0
  %10694 = vmatpush.bf16.msra.mxu0 %v10595
  %10695 = vmatpush.bf16.msra.mxu0 %v10594
  %10696 = vmatpush.bf16.msra.mxu0 %v10593
  %10697 = vmatpush.bf16.msra.mxu0 %v10592
  %10698 = vmatpush.bf16.msra.mxu0 %v10591
  %10699 = vmatpush.bf16.msra.mxu0 %v10590
  %10700 = vmatpush.bf16.msra.mxu0 %v10589
  %10701 = vmatpush.bf16.msra.mxu0 %v10588
  %10702 = vmatmul.bf16.gmra.mxu0 %v9795
  %v10703 = vpop.f32.mrf.mxu0
  %v10704 = vadd.f32 %v10675, %v10703
  %v10705 = vpop.f32.mrf.mxu0
  %v10706 = vadd.f32 %v10677, %v10705
  %10707 = vmatmul.bf16.gmra.mxu0 %v9799
  %v10708 = vpop.f32.mrf.mxu0
  %v10709 = vadd.f32 %v10680, %v10708
  %v10710 = vpop.f32.mrf.mxu0
  %v10711 = vadd.f32 %v10682, %v10710
  %10712 = vmatmul.bf16.gmra.mxu0 %v9803
  %v10713 = vpop.f32.mrf.mxu0
  %v10714 = vadd.f32 %v10685, %v10713
  %v10715 = vpop.f32.mrf.mxu0
  %v10716 = vadd.f32 %v10687, %v10715
  %10717 = vmatmul.bf16.gmra.mxu0 %v9807
  %v10718 = vpop.f32.mrf.mxu0
  %v10719 = vadd.f32 %v10690, %v10718
  %v10720 = vpop.f32.mrf.mxu0
  %v10721 = vadd.f32 %v10692, %v10720
  %10722 = vdwg.mxu0
  %10723 = vmatpush.bf16.msra.mxu0 %v10603
  %10724 = vmatpush.bf16.msra.mxu0 %v10602
  %10725 = vmatpush.bf16.msra.mxu0 %v10601
  %10726 = vmatpush.bf16.msra.mxu0 %v10600
  %10727 = vmatpush.bf16.msra.mxu0 %v10599
  %10728 = vmatpush.bf16.msra.mxu0 %v10598
  %10729 = vmatpush.bf16.msra.mxu0 %v10597
  %10730 = vmatpush.bf16.msra.mxu0 %v10596
  %10731 = vmatmul.bf16.gmra.mxu0 %v9796
  %v10732 = vpop.f32.mrf.mxu0
  %v10733 = vadd.f32 %v10704, %v10732
  %v10734 = vpop.f32.mrf.mxu0
  %v10735 = vadd.f32 %v10706, %v10734
  %10736 = vmatmul.bf16.gmra.mxu0 %v9800
  %v10737 = vpop.f32.mrf.mxu0
  %v10738 = vadd.f32 %v10709, %v10737
  %v10739 = vpop.f32.mrf.mxu0
  %v10740 = vadd.f32 %v10711, %v10739
  %10741 = vmatmul.bf16.gmra.mxu0 %v9804
  %v10742 = vpop.f32.mrf.mxu0
  %v10743 = vadd.f32 %v10714, %v10742
  %v10744 = vpop.f32.mrf.mxu0
  %v10745 = vadd.f32 %v10716, %v10744
  %10746 = vmatmul.bf16.gmra.mxu0 %v9808
  %v10747 = vpop.f32.mrf.mxu0
  %v10748 = vadd.f32 %v10719, %v10747
  %v10749 = vpop.f32.mrf.mxu0
  %v10750 = vadd.f32 %v10721, %v10749
  %10751 = vdwg.mxu0
  %v10752 = vld [vmem:[%s9597 + $0x20] sm:$0xff]
  %v10753 = vld [vmem:[%s9597 + $0x28] sm:$0xff]
  %v10754 = vld [vmem:[%s9600 + $0x8] sm:$0xf]
  %v10756 = vperm.slane %v10754, 0
  %v10757 = vperm.slane %v10754, 1
  %v10758 = vperm.slane %v10754, 2
  %v10759 = vperm.slane %v10754, 3
  %v10766 = vunpack.c.l.b16 %v10752
  %v10767 = vunpack.c.h.b16 %v10752
  %v10768 = vunpack.c.l.b16 %v10753
  %v10769 = vunpack.c.h.b16 %v10753
  %v10770 = vpack.c.b16 %v10766, %v10766
  %v10771 = vpack.c.b16 %v10767, %v10767
  %v10772 = vpack.c.b16 %v10768, %v10768
  %v10773 = vpack.c.b16 %v10769, %v10769
  %v10775 = vsel %vm3720, %v10770, 0
  %v10778 = vsel %vm3720, %v10771, 0
  %v10781 = vsel %vm3720, %v10772, 0
  %v10784 = vsel %vm3720, %v10773, 0
  %10786 = vmatpush.bf16.msra.mxu0 0
  %10787 = vmatpush.bf16.msra.mxu0 0
  %10788 = vmatpush.bf16.msra.mxu0 0
  %10789 = vmatpush.bf16.msra.mxu0 0
  %10790 = vmatpush.bf16.msra.mxu0 0
  %10791 = vmatpush.bf16.msra.mxu0 0
  %10792 = vmatpush.bf16.msra.mxu0 0
  %10793 = vmatpush.bf16.msra.mxu0 %v10775
  %10794 = vmatmul.bf16.gmra.mxu0 %v9622
  %v10795 = vpop.f32.mrf.mxu0
  %v10796 = vadd.f32 %v10756, %v10795
  %v10797 = vpop.f32.mrf.mxu0
  %v10798 = vadd.f32 %v10756, %v10797
  %10799 = vmatmul.bf16.gmra.mxu0 %v9625
  %v10800 = vpop.f32.mrf.mxu0
  %v10801 = vadd.f32 %v10756, %v10800
  %v10802 = vpop.f32.mrf.mxu0
  %v10803 = vadd.f32 %v10756, %v10802
  %10804 = vmatmul.bf16.gmra.mxu0 %v9628
  %v10805 = vpop.f32.mrf.mxu0
  %v10806 = vadd.f32 %v10756, %v10805
  %v10807 = vpop.f32.mrf.mxu0
  %v10808 = vadd.f32 %v10756, %v10807
  %10809 = vmatmul.bf16.gmra.mxu0 %v9631
  %v10810 = vpop.f32.mrf.mxu0
  %v10811 = vadd.f32 %v10756, %v10810
  %v10812 = vpop.f32.mrf.mxu0
  %v10813 = vadd.f32 %v10756, %v10812
  %10814 = vdwg.mxu0
  %10815 = vmatpush.bf16.msra.mxu0 0
  %10816 = vmatpush.bf16.msra.mxu0 0
  %10817 = vmatpush.bf16.msra.mxu0 0
  %10818 = vmatpush.bf16.msra.mxu0 0
  %10819 = vmatpush.bf16.msra.mxu0 0
  %10820 = vmatpush.bf16.msra.mxu0 0
  %10821 = vmatpush.bf16.msra.mxu0 0
  %10822 = vmatpush.bf16.msra.mxu0 %v10778
  %10823 = vmatmul.bf16.gmra.mxu0 %v9622
  %v10824 = vpop.f32.mrf.mxu0
  %v10825 = vadd.f32 %v10757, %v10824
  %v10826 = vpop.f32.mrf.mxu0
  %v10827 = vadd.f32 %v10757, %v10826
  %10828 = vmatmul.bf16.gmra.mxu0 %v9625
  %v10829 = vpop.f32.mrf.mxu0
  %v10830 = vadd.f32 %v10757, %v10829
  %v10831 = vpop.f32.mrf.mxu0
  %v10832 = vadd.f32 %v10757, %v10831
  %10833 = vmatmul.bf16.gmra.mxu0 %v9628
  %v10834 = vpop.f32.mrf.mxu0
  %v10835 = vadd.f32 %v10757, %v10834
  %v10836 = vpop.f32.mrf.mxu0
  %v10837 = vadd.f32 %v10757, %v10836
  %10838 = vmatmul.bf16.gmra.mxu0 %v9631
  %v10839 = vpop.f32.mrf.mxu0
  %v10840 = vadd.f32 %v10757, %v10839
  %v10841 = vpop.f32.mrf.mxu0
  %v10842 = vadd.f32 %v10757, %v10841
  %10843 = vdwg.mxu0
  %10844 = vmatpush.bf16.msra.mxu0 0
  %10845 = vmatpush.bf16.msra.mxu0 0
  %10846 = vmatpush.bf16.msra.mxu0 0
  %10847 = vmatpush.bf16.msra.mxu0 0
  %10848 = vmatpush.bf16.msra.mxu0 0
  %10849 = vmatpush.bf16.msra.mxu0 0
  %10850 = vmatpush.bf16.msra.mxu0 0
  %10851 = vmatpush.bf16.msra.mxu0 %v10781
  %10852 = vmatmul.bf16.gmra.mxu0 %v9622
  %v10853 = vpop.f32.mrf.mxu0
  %v10854 = vadd.f32 %v10758, %v10853
  %v10855 = vpop.f32.mrf.mxu0
  %v10856 = vadd.f32 %v10758, %v10855
  %10857 = vmatmul.bf16.gmra.mxu0 %v9625
  %v10858 = vpop.f32.mrf.mxu0
  %v10859 = vadd.f32 %v10758, %v10858
  %v10860 = vpop.f32.mrf.mxu0
  %v10861 = vadd.f32 %v10758, %v10860
  %10862 = vmatmul.bf16.gmra.mxu0 %v9628
  %v10863 = vpop.f32.mrf.mxu0
  %v10864 = vadd.f32 %v10758, %v10863
  %v10865 = vpop.f32.mrf.mxu0
  %v10866 = vadd.f32 %v10758, %v10865
  %10867 = vmatmul.bf16.gmra.mxu0 %v9631
  %v10868 = vpop.f32.mrf.mxu0
  %v10869 = vadd.f32 %v10758, %v10868
  %v10870 = vpop.f32.mrf.mxu0
  %v10871 = vadd.f32 %v10758, %v10870
  %10872 = vdwg.mxu0
  %10873 = vmatpush.bf16.msra.mxu0 0
  %10874 = vmatpush.bf16.msra.mxu0 0
  %10875 = vmatpush.bf16.msra.mxu0 0
  %10876 = vmatpush.bf16.msra.mxu0 0
  %10877 = vmatpush.bf16.msra.mxu0 0
  %10878 = vmatpush.bf16.msra.mxu0 0
  %10879 = vmatpush.bf16.msra.mxu0 0
  %10880 = vmatpush.bf16.msra.mxu0 %v10784
  %10881 = vmatmul.bf16.gmra.mxu0 %v9622
  %v10882 = vpop.f32.mrf.mxu0
  %v10883 = vadd.f32 %v10759, %v10882
  %v10884 = vpop.f32.mrf.mxu0
  %v10885 = vadd.f32 %v10759, %v10884
  %10886 = vmatmul.bf16.gmra.mxu0 %v9625
  %v10887 = vpop.f32.mrf.mxu0
  %v10888 = vadd.f32 %v10759, %v10887
  %v10889 = vpop.f32.mrf.mxu0
  %v10890 = vadd.f32 %v10759, %v10889
  %10891 = vmatmul.bf16.gmra.mxu0 %v9628
  %v10892 = vpop.f32.mrf.mxu0
  %v10893 = vadd.f32 %v10759, %v10892
  %v10894 = vpop.f32.mrf.mxu0
  %v10895 = vadd.f32 %v10759, %v10894
  %10896 = vmatmul.bf16.gmra.mxu0 %v9631
  %v10897 = vpop.f32.mrf.mxu0
  %v10898 = vadd.f32 %v10759, %v10897
  %v10899 = vpop.f32.mrf.mxu0
  %v10900 = vadd.f32 %v10759, %v10899
  %10901 = vdwg.mxu0
  %v10902 = vmax.f32 %v10796, 0.0
  %v10903 = vmax.f32 %v10825, 0.0
  %v10904 = vmax.f32 %v10854, 0.0
  %v10905 = vmax.f32 %v10883, 0.0
  %v10906 = vmax.f32 %v10798, 0.0
  %v10907 = vmax.f32 %v10827, 0.0
  %v10908 = vmax.f32 %v10856, 0.0
  %v10909 = vmax.f32 %v10885, 0.0
  %v10910 = vmax.f32 %v10801, 0.0
  %v10911 = vmax.f32 %v10830, 0.0
  %v10912 = vmax.f32 %v10859, 0.0
  %v10913 = vmax.f32 %v10888, 0.0
  %v10914 = vmax.f32 %v10803, 0.0
  %v10915 = vmax.f32 %v10832, 0.0
  %v10916 = vmax.f32 %v10861, 0.0
  %v10917 = vmax.f32 %v10890, 0.0
  %v10918 = vmax.f32 %v10806, 0.0
  %v10919 = vmax.f32 %v10835, 0.0
  %v10920 = vmax.f32 %v10864, 0.0
  %v10921 = vmax.f32 %v10893, 0.0
  %v10922 = vmax.f32 %v10808, 0.0
  %v10923 = vmax.f32 %v10837, 0.0
  %v10924 = vmax.f32 %v10866, 0.0
  %v10925 = vmax.f32 %v10895, 0.0
  %v10926 = vmax.f32 %v10811, 0.0
  %v10927 = vmax.f32 %v10840, 0.0
  %v10928 = vmax.f32 %v10869, 0.0
  %v10929 = vmax.f32 %v10898, 0.0
  %v10930 = vmax.f32 %v10813, 0.0
  %v10931 = vmax.f32 %v10842, 0.0
  %v10932 = vmax.f32 %v10871, 0.0
  %v10933 = vmax.f32 %v10900, 0.0
  %v10934 = vpack.c.bf16 %v10906, %v10902
  %v10935 = vpack.c.bf16 %v10907, %v10903
  %v10936 = vpack.c.bf16 %v10908, %v10904
  %v10937 = vpack.c.bf16 %v10909, %v10905
  %v10938 = vpack.c.bf16 %v10914, %v10910
  %v10939 = vpack.c.bf16 %v10915, %v10911
  %v10940 = vpack.c.bf16 %v10916, %v10912
  %v10941 = vpack.c.bf16 %v10917, %v10913
  %v10942 = vpack.c.bf16 %v10922, %v10918
  %v10943 = vpack.c.bf16 %v10923, %v10919
  %v10944 = vpack.c.bf16 %v10924, %v10920
  %v10945 = vpack.c.bf16 %v10925, %v10921
  %v10946 = vpack.c.bf16 %v10930, %v10926
  %v10947 = vpack.c.bf16 %v10931, %v10927
  %v10948 = vpack.c.bf16 %v10932, %v10928
  %v10949 = vpack.c.bf16 %v10933, %v10929
  %v10950 = vld [vmem:[%s9809 + $0x200] sm:$0xf]
  %v10951 = vld [vmem:[%s9809 + $0x204] sm:$0xf]
  %v10952 = vld [vmem:[%s9809 + $0x208] sm:$0xf]
  %v10953 = vld [vmem:[%s9809 + $0x20c] sm:$0xf]
  %v10954 = vld [vmem:[%s9809 + $0x210] sm:$0xf]
  %v10955 = vld [vmem:[%s9809 + $0x214] sm:$0xf]
  %v10956 = vld [vmem:[%s9809 + $0x218] sm:$0xf]
  %v10957 = vld [vmem:[%s9809 + $0x21c] sm:$0xf]
  %v10958 = vld [vmem:[%s9809 + $0x220] sm:$0xf]
  %v10959 = vld [vmem:[%s9809 + $0x224] sm:$0xf]
  %v10960 = vld [vmem:[%s9809 + $0x228] sm:$0xf]
  %v10961 = vld [vmem:[%s9809 + $0x22c] sm:$0xf]
  %v10962 = vld [vmem:[%s9809 + $0x230] sm:$0xf]
  %v10963 = vld [vmem:[%s9809 + $0x234] sm:$0xf]
  %v10964 = vld [vmem:[%s9809 + $0x238] sm:$0xf]
  %v10965 = vld [vmem:[%s9809 + $0x23c] sm:$0xf]
  %v10966 = vld [vmem:[%s9809 + $0x240] sm:$0xf]
  %v10967 = vld [vmem:[%s9809 + $0x244] sm:$0xf]
  %v10968 = vld [vmem:[%s9809 + $0x248] sm:$0xf]
  %v10969 = vld [vmem:[%s9809 + $0x24c] sm:$0xf]
  %v10970 = vld [vmem:[%s9809 + $0x250] sm:$0xf]
  %v10971 = vld [vmem:[%s9809 + $0x254] sm:$0xf]
  %v10972 = vld [vmem:[%s9809 + $0x258] sm:$0xf]
  %v10973 = vld [vmem:[%s9809 + $0x25c] sm:$0xf]
  %v10974 = vld [vmem:[%s9809 + $0x260] sm:$0xf]
  %v10975 = vld [vmem:[%s9809 + $0x264] sm:$0xf]
  %v10976 = vld [vmem:[%s9809 + $0x268] sm:$0xf]
  %v10977 = vld [vmem:[%s9809 + $0x26c] sm:$0xf]
  %v10978 = vld [vmem:[%s9809 + $0x270] sm:$0xf]
  %v10979 = vld [vmem:[%s9809 + $0x274] sm:$0xf]
  %v10980 = vld [vmem:[%s9809 + $0x278] sm:$0xf]
  %v10981 = vld [vmem:[%s9809 + $0x27c] sm:$0xf]
  %v10982 = vld [vmem:[%s9809 + $0x280] sm:$0xf]
  %v10983 = vld [vmem:[%s9809 + $0x284] sm:$0xf]
  %v10984 = vld [vmem:[%s9809 + $0x288] sm:$0xf]
  %v10985 = vld [vmem:[%s9809 + $0x28c] sm:$0xf]
  %v10986 = vld [vmem:[%s9809 + $0x290] sm:$0xf]
  %v10987 = vld [vmem:[%s9809 + $0x294] sm:$0xf]
  %v10988 = vld [vmem:[%s9809 + $0x298] sm:$0xf]
  %v10989 = vld [vmem:[%s9809 + $0x29c] sm:$0xf]
  %v10990 = vld [vmem:[%s9809 + $0x2a0] sm:$0xf]
  %v10991 = vld [vmem:[%s9809 + $0x2a4] sm:$0xf]
  %v10992 = vld [vmem:[%s9809 + $0x2a8] sm:$0xf]
  %v10993 = vld [vmem:[%s9809 + $0x2ac] sm:$0xf]
  %v10994 = vld [vmem:[%s9809 + $0x2b0] sm:$0xf]
  %v10995 = vld [vmem:[%s9809 + $0x2b4] sm:$0xf]
  %v10996 = vld [vmem:[%s9809 + $0x2b8] sm:$0xf]
  %v10997 = vld [vmem:[%s9809 + $0x2bc] sm:$0xf]
  %v10998 = vld [vmem:[%s9809 + $0x2c0] sm:$0xf]
  %v10999 = vld [vmem:[%s9809 + $0x2c4] sm:$0xf]
  %v11000 = vld [vmem:[%s9809 + $0x2c8] sm:$0xf]
  %v11001 = vld [vmem:[%s9809 + $0x2cc] sm:$0xf]
  %v11002 = vld [vmem:[%s9809 + $0x2d0] sm:$0xf]
  %v11003 = vld [vmem:[%s9809 + $0x2d4] sm:$0xf]
  %v11004 = vld [vmem:[%s9809 + $0x2d8] sm:$0xf]
  %v11005 = vld [vmem:[%s9809 + $0x2dc] sm:$0xf]
  %v11006 = vld [vmem:[%s9809 + $0x2e0] sm:$0xf]
  %v11007 = vld [vmem:[%s9809 + $0x2e4] sm:$0xf]
  %v11008 = vld [vmem:[%s9809 + $0x2e8] sm:$0xf]
  %v11009 = vld [vmem:[%s9809 + $0x2ec] sm:$0xf]
  %v11010 = vld [vmem:[%s9809 + $0x2f0] sm:$0xf]
  %v11011 = vld [vmem:[%s9809 + $0x2f4] sm:$0xf]
  %v11012 = vld [vmem:[%s9809 + $0x2f8] sm:$0xf]
  %v11013 = vld [vmem:[%s9809 + $0x2fc] sm:$0xf]
  %v11078 = vunpack.c.l.b16 %v10950
  %v11079 = vunpack.c.l.b16 %v10951
  %v11080 = vunpack.c.l.b16 %v10952
  %v11081 = vunpack.c.l.b16 %v10953
  %v11082 = vunpack.c.l.b16 %v10954
  %v11083 = vunpack.c.l.b16 %v10955
  %v11084 = vunpack.c.l.b16 %v10956
  %v11085 = vunpack.c.l.b16 %v10957
  %v11086 = vunpack.c.l.b16 %v10958
  %v11087 = vunpack.c.l.b16 %v10959
  %v11088 = vunpack.c.l.b16 %v10960
  %v11089 = vunpack.c.l.b16 %v10961
  %v11090 = vunpack.c.l.b16 %v10962
  %v11091 = vunpack.c.l.b16 %v10963
  %v11092 = vunpack.c.l.b16 %v10964
  %v11093 = vunpack.c.l.b16 %v10965
  %v11094 = vunpack.c.l.b16 %v10966
  %v11095 = vunpack.c.l.b16 %v10967
  %v11096 = vunpack.c.l.b16 %v10968
  %v11097 = vunpack.c.l.b16 %v10969
  %v11098 = vunpack.c.l.b16 %v10970
  %v11099 = vunpack.c.l.b16 %v10971
  %v11100 = vunpack.c.l.b16 %v10972
  %v11101 = vunpack.c.l.b16 %v10973
  %v11102 = vunpack.c.l.b16 %v10974
  %v11103 = vunpack.c.l.b16 %v10975
  %v11104 = vunpack.c.l.b16 %v10976
  %v11105 = vunpack.c.l.b16 %v10977
  %v11106 = vunpack.c.l.b16 %v10978
  %v11107 = vunpack.c.l.b16 %v10979
  %v11108 = vunpack.c.l.b16 %v10980
  %v11109 = vunpack.c.l.b16 %v10981
  %v11110 = vunpack.c.l.b16 %v10982
  %v11111 = vunpack.c.l.b16 %v10983
  %v11112 = vunpack.c.l.b16 %v10984
  %v11113 = vunpack.c.l.b16 %v10985
  %v11114 = vunpack.c.l.b16 %v10986
  %v11115 = vunpack.c.l.b16 %v10987
  %v11116 = vunpack.c.l.b16 %v10988
  %v11117 = vunpack.c.l.b16 %v10989
  %v11118 = vunpack.c.l.b16 %v10990
  %v11119 = vunpack.c.l.b16 %v10991
  %v11120 = vunpack.c.l.b16 %v10992
  %v11121 = vunpack.c.l.b16 %v10993
  %v11122 = vunpack.c.l.b16 %v10994
  %v11123 = vunpack.c.l.b16 %v10995
  %v11124 = vunpack.c.l.b16 %v10996
  %v11125 = vunpack.c.l.b16 %v10997
  %v11126 = vunpack.c.l.b16 %v10998
  %v11127 = vunpack.c.l.b16 %v10999
  %v11128 = vunpack.c.l.b16 %v11000
  %v11129 = vunpack.c.l.b16 %v11001
  %v11130 = vunpack.c.l.b16 %v11002
  %v11131 = vunpack.c.l.b16 %v11003
  %v11132 = vunpack.c.l.b16 %v11004
  %v11133 = vunpack.c.l.b16 %v11005
  %v11134 = vunpack.c.l.b16 %v11006
  %v11135 = vunpack.c.l.b16 %v11007
  %v11136 = vunpack.c.l.b16 %v11008
  %v11137 = vunpack.c.l.b16 %v11009
  %v11138 = vunpack.c.l.b16 %v11010
  %v11139 = vunpack.c.l.b16 %v11011
  %v11140 = vunpack.c.l.b16 %v11012
  %v11141 = vunpack.c.l.b16 %v11013
  %v11142 = vpack.c.b16 %v11079, %v11078
  %v11143 = vpack.c.b16 %v11081, %v11080
  %v11144 = vpack.c.b16 %v11083, %v11082
  %v11145 = vpack.c.b16 %v11085, %v11084
  %v11146 = vpack.c.b16 %v11087, %v11086
  %v11147 = vpack.c.b16 %v11089, %v11088
  %v11148 = vpack.c.b16 %v11091, %v11090
  %v11149 = vpack.c.b16 %v11093, %v11092
  %v11150 = vpack.c.b16 %v11095, %v11094
  %v11151 = vpack.c.b16 %v11097, %v11096
  %v11152 = vpack.c.b16 %v11099, %v11098
  %v11153 = vpack.c.b16 %v11101, %v11100
  %v11154 = vpack.c.b16 %v11103, %v11102
  %v11155 = vpack.c.b16 %v11105, %v11104
  %v11156 = vpack.c.b16 %v11107, %v11106
  %v11157 = vpack.c.b16 %v11109, %v11108
  %v11158 = vpack.c.b16 %v11111, %v11110
  %v11159 = vpack.c.b16 %v11113, %v11112
  %v11160 = vpack.c.b16 %v11115, %v11114
  %v11161 = vpack.c.b16 %v11117, %v11116
  %v11162 = vpack.c.b16 %v11119, %v11118
  %v11163 = vpack.c.b16 %v11121, %v11120
  %v11164 = vpack.c.b16 %v11123, %v11122
  %v11165 = vpack.c.b16 %v11125, %v11124
  %v11166 = vpack.c.b16 %v11127, %v11126
  %v11167 = vpack.c.b16 %v11129, %v11128
  %v11168 = vpack.c.b16 %v11131, %v11130
  %v11169 = vpack.c.b16 %v11133, %v11132
  %v11170 = vpack.c.b16 %v11135, %v11134
  %v11171 = vpack.c.b16 %v11137, %v11136
  %v11172 = vpack.c.b16 %v11139, %v11138
  %v11173 = vpack.c.b16 %v11141, %v11140
  %11206 = vmatpush.bf16.msra.mxu0 %v11149
  %11207 = vmatpush.bf16.msra.mxu0 %v11148
  %11208 = vmatpush.bf16.msra.mxu0 %v11147
  %11209 = vmatpush.bf16.msra.mxu0 %v11146
  %11210 = vmatpush.bf16.msra.mxu0 %v11145
  %11211 = vmatpush.bf16.msra.mxu0 %v11144
  %11212 = vmatpush.bf16.msra.mxu0 %v11143
  %11213 = vmatpush.bf16.msra.mxu0 %v11142
  %11214 = vmatmul.bf16.gmra.mxu0 %v10934
  %v11215 = vpop.f32.mrf.mxu0
  %v11216 = vadd.f32 0.0, %v11215
  %v11217 = vpop.f32.mrf.mxu0
  %v11218 = vadd.f32 0.0, %v11217
  %11219 = vmatmul.bf16.gmra.mxu0 %v10938
  %v11220 = vpop.f32.mrf.mxu0
  %v11221 = vadd.f32 0.0, %v11220
  %v11222 = vpop.f32.mrf.mxu0
  %v11223 = vadd.f32 0.0, %v11222
  %11224 = vmatmul.bf16.gmra.mxu0 %v10942
  %v11225 = vpop.f32.mrf.mxu0
  %v11226 = vadd.f32 0.0, %v11225
  %v11227 = vpop.f32.mrf.mxu0
  %v11228 = vadd.f32 0.0, %v11227
  %11229 = vmatmul.bf16.gmra.mxu0 %v10946
  %v11230 = vpop.f32.mrf.mxu0
  %v11231 = vadd.f32 0.0, %v11230
  %v11232 = vpop.f32.mrf.mxu0
  %v11233 = vadd.f32 0.0, %v11232
  %11234 = vdwg.mxu0
  %11235 = vmatpush.bf16.msra.mxu0 %v11157
  %11236 = vmatpush.bf16.msra.mxu0 %v11156
  %11237 = vmatpush.bf16.msra.mxu0 %v11155
  %11238 = vmatpush.bf16.msra.mxu0 %v11154
  %11239 = vmatpush.bf16.msra.mxu0 %v11153
  %11240 = vmatpush.bf16.msra.mxu0 %v11152
  %11241 = vmatpush.bf16.msra.mxu0 %v11151
  %11242 = vmatpush.bf16.msra.mxu0 %v11150
  %11243 = vmatmul.bf16.gmra.mxu0 %v10935
  %v11244 = vpop.f32.mrf.mxu0
  %v11245 = vadd.f32 %v11216, %v11244
  %v11246 = vpop.f32.mrf.mxu0
  %v11247 = vadd.f32 %v11218, %v11246
  %11248 = vmatmul.bf16.gmra.mxu0 %v10939
  %v11249 = vpop.f32.mrf.mxu0
  %v11250 = vadd.f32 %v11221, %v11249
  %v11251 = vpop.f32.mrf.mxu0
  %v11252 = vadd.f32 %v11223, %v11251
  %11253 = vmatmul.bf16.gmra.mxu0 %v10943
  %v11254 = vpop.f32.mrf.mxu0
  %v11255 = vadd.f32 %v11226, %v11254
  %v11256 = vpop.f32.mrf.mxu0
  %v11257 = vadd.f32 %v11228, %v11256
  %11258 = vmatmul.bf16.gmra.mxu0 %v10947
  %v11259 = vpop.f32.mrf.mxu0
  %v11260 = vadd.f32 %v11231, %v11259
  %v11261 = vpop.f32.mrf.mxu0
  %v11262 = vadd.f32 %v11233, %v11261
  %11263 = vdwg.mxu0
  %11264 = vmatpush.bf16.msra.mxu0 %v11165
  %11265 = vmatpush.bf16.msra.mxu0 %v11164
  %11266 = vmatpush.bf16.msra.mxu0 %v11163
  %11267 = vmatpush.bf16.msra.mxu0 %v11162
  %11268 = vmatpush.bf16.msra.mxu0 %v11161
  %11269 = vmatpush.bf16.msra.mxu0 %v11160
  %11270 = vmatpush.bf16.msra.mxu0 %v11159
  %11271 = vmatpush.bf16.msra.mxu0 %v11158
  %11272 = vmatmul.bf16.gmra.mxu0 %v10936
  %v11273 = vpop.f32.mrf.mxu0
  %v11274 = vadd.f32 %v11245, %v11273
  %v11275 = vpop.f32.mrf.mxu0
  %v11276 = vadd.f32 %v11247, %v11275
  %11277 = vmatmul.bf16.gmra.mxu0 %v10940
  %v11278 = vpop.f32.mrf.mxu0
  %v11279 = vadd.f32 %v11250, %v11278
  %v11280 = vpop.f32.mrf.mxu0
  %v11281 = vadd.f32 %v11252, %v11280
  %11282 = vmatmul.bf16.gmra.mxu0 %v10944
  %v11283 = vpop.f32.mrf.mxu0
  %v11284 = vadd.f32 %v11255, %v11283
  %v11285 = vpop.f32.mrf.mxu0
  %v11286 = vadd.f32 %v11257, %v11285
  %11287 = vmatmul.bf16.gmra.mxu0 %v10948
  %v11288 = vpop.f32.mrf.mxu0
  %v11289 = vadd.f32 %v11260, %v11288
  %v11290 = vpop.f32.mrf.mxu0
  %v11291 = vadd.f32 %v11262, %v11290
  %11292 = vdwg.mxu0
  %11293 = vmatpush.bf16.msra.mxu0 %v11173
  %11294 = vmatpush.bf16.msra.mxu0 %v11172
  %11295 = vmatpush.bf16.msra.mxu0 %v11171
  %11296 = vmatpush.bf16.msra.mxu0 %v11170
  %11297 = vmatpush.bf16.msra.mxu0 %v11169
  %11298 = vmatpush.bf16.msra.mxu0 %v11168
  %11299 = vmatpush.bf16.msra.mxu0 %v11167
  %11300 = vmatpush.bf16.msra.mxu0 %v11166
  %11301 = vmatmul.bf16.gmra.mxu0 %v10937
  %v11302 = vpop.f32.mrf.mxu0
  %v11303 = vadd.f32 %v11274, %v11302
  %v11304 = vpop.f32.mrf.mxu0
  %v11305 = vadd.f32 %v11276, %v11304
  %11306 = vmatmul.bf16.gmra.mxu0 %v10941
  %v11307 = vpop.f32.mrf.mxu0
  %v11308 = vadd.f32 %v11279, %v11307
  %v11309 = vpop.f32.mrf.mxu0
  %v11310 = vadd.f32 %v11281, %v11309
  %11311 = vmatmul.bf16.gmra.mxu0 %v10945
  %v11312 = vpop.f32.mrf.mxu0
  %v11313 = vadd.f32 %v11284, %v11312
  %v11314 = vpop.f32.mrf.mxu0
  %v11315 = vadd.f32 %v11286, %v11314
  %11316 = vmatmul.bf16.gmra.mxu0 %v10949
  %v11317 = vpop.f32.mrf.mxu0
  %v11318 = vadd.f32 %v11289, %v11317
  %v11319 = vpop.f32.mrf.mxu0
  %v11320 = vadd.f32 %v11291, %v11319
  %11321 = vdwg.mxu0
  %v11322 = vadd.f32 %v10733, %v11303
  %v11323 = vadd.f32 %v10735, %v11305
  %v11324 = vadd.f32 %v10738, %v11308
  %v11325 = vadd.f32 %v10740, %v11310
  %v11326 = vadd.f32 %v10743, %v11313
  %v11327 = vadd.f32 %v10745, %v11315
  %v11328 = vadd.f32 %v10748, %v11318
  %v11329 = vadd.f32 %v10750, %v11320
  %v11330 = vld [vmem:[%s9597 + $0x30] sm:$0xff]
  %v11331 = vld [vmem:[%s9597 + $0x38] sm:$0xff]
  %v11332 = vld [vmem:[%s9600 + $0xc] sm:$0xf]
  %v11334 = vperm.slane %v11332, 0
  %v11335 = vperm.slane %v11332, 1
  %v11336 = vperm.slane %v11332, 2
  %v11337 = vperm.slane %v11332, 3
  %v11344 = vunpack.c.l.b16 %v11330
  %v11345 = vunpack.c.h.b16 %v11330
  %v11346 = vunpack.c.l.b16 %v11331
  %v11347 = vunpack.c.h.b16 %v11331
  %v11348 = vpack.c.b16 %v11344, %v11344
  %v11349 = vpack.c.b16 %v11345, %v11345
  %v11350 = vpack.c.b16 %v11346, %v11346
  %v11351 = vpack.c.b16 %v11347, %v11347
  %v11353 = vsel %vm3720, %v11348, 0
  %v11356 = vsel %vm3720, %v11349, 0
  %v11359 = vsel %vm3720, %v11350, 0
  %v11362 = vsel %vm3720, %v11351, 0
  %11364 = vmatpush.bf16.msra.mxu0 0
  %11365 = vmatpush.bf16.msra.mxu0 0
  %11366 = vmatpush.bf16.msra.mxu0 0
  %11367 = vmatpush.bf16.msra.mxu0 0
  %11368 = vmatpush.bf16.msra.mxu0 0
  %11369 = vmatpush.bf16.msra.mxu0 0
  %11370 = vmatpush.bf16.msra.mxu0 0
  %11371 = vmatpush.bf16.msra.mxu0 %v11353
  %11372 = vmatmul.bf16.gmra.mxu0 %v9622
  %v11373 = vpop.f32.mrf.mxu0
  %v11374 = vadd.f32 %v11334, %v11373
  %v11375 = vpop.f32.mrf.mxu0
  %v11376 = vadd.f32 %v11334, %v11375
  %11377 = vmatmul.bf16.gmra.mxu0 %v9625
  %v11378 = vpop.f32.mrf.mxu0
  %v11379 = vadd.f32 %v11334, %v11378
  %v11380 = vpop.f32.mrf.mxu0
  %v11381 = vadd.f32 %v11334, %v11380
  %11382 = vmatmul.bf16.gmra.mxu0 %v9628
  %v11383 = vpop.f32.mrf.mxu0
  %v11384 = vadd.f32 %v11334, %v11383
  %v11385 = vpop.f32.mrf.mxu0
  %v11386 = vadd.f32 %v11334, %v11385
  %11387 = vmatmul.bf16.gmra.mxu0 %v9631
  %v11388 = vpop.f32.mrf.mxu0
  %v11389 = vadd.f32 %v11334, %v11388
  %v11390 = vpop.f32.mrf.mxu0
  %v11391 = vadd.f32 %v11334, %v11390
  %11392 = vdwg.mxu0
  %11393 = vmatpush.bf16.msra.mxu0 0
  %11394 = vmatpush.bf16.msra.mxu0 0
  %11395 = vmatpush.bf16.msra.mxu0 0
  %11396 = vmatpush.bf16.msra.mxu0 0
  %11397 = vmatpush.bf16.msra.mxu0 0
  %11398 = vmatpush.bf16.msra.mxu0 0
  %11399 = vmatpush.bf16.msra.mxu0 0
  %11400 = vmatpush.bf16.msra.mxu0 %v11356
  %11401 = vmatmul.bf16.gmra.mxu0 %v9622
  %v11402 = vpop.f32.mrf.mxu0
  %v11403 = vadd.f32 %v11335, %v11402
  %v11404 = vpop.f32.mrf.mxu0
  %v11405 = vadd.f32 %v11335, %v11404
  %11406 = vmatmul.bf16.gmra.mxu0 %v9625
  %v11407 = vpop.f32.mrf.mxu0
  %v11408 = vadd.f32 %v11335, %v11407
  %v11409 = vpop.f32.mrf.mxu0
  %v11410 = vadd.f32 %v11335, %v11409
  %11411 = vmatmul.bf16.gmra.mxu0 %v9628
  %v11412 = vpop.f32.mrf.mxu0
  %v11413 = vadd.f32 %v11335, %v11412
  %v11414 = vpop.f32.mrf.mxu0
  %v11415 = vadd.f32 %v11335, %v11414
  %11416 = vmatmul.bf16.gmra.mxu0 %v9631
  %v11417 = vpop.f32.mrf.mxu0
  %v11418 = vadd.f32 %v11335, %v11417
  %v11419 = vpop.f32.mrf.mxu0
  %v11420 = vadd.f32 %v11335, %v11419
  %11421 = vdwg.mxu0
  %11422 = vmatpush.bf16.msra.mxu0 0
  %11423 = vmatpush.bf16.msra.mxu0 0
  %11424 = vmatpush.bf16.msra.mxu0 0
  %11425 = vmatpush.bf16.msra.mxu0 0
  %11426 = vmatpush.bf16.msra.mxu0 0
  %11427 = vmatpush.bf16.msra.mxu0 0
  %11428 = vmatpush.bf16.msra.mxu0 0
  %11429 = vmatpush.bf16.msra.mxu0 %v11359
  %11430 = vmatmul.bf16.gmra.mxu0 %v9622
  %v11431 = vpop.f32.mrf.mxu0
  %v11432 = vadd.f32 %v11336, %v11431
  %v11433 = vpop.f32.mrf.mxu0
  %v11434 = vadd.f32 %v11336, %v11433
  %11435 = vmatmul.bf16.gmra.mxu0 %v9625
  %v11436 = vpop.f32.mrf.mxu0
  %v11437 = vadd.f32 %v11336, %v11436
  %v11438 = vpop.f32.mrf.mxu0
  %v11439 = vadd.f32 %v11336, %v11438
  %11440 = vmatmul.bf16.gmra.mxu0 %v9628
  %v11441 = vpop.f32.mrf.mxu0
  %v11442 = vadd.f32 %v11336, %v11441
  %v11443 = vpop.f32.mrf.mxu0
  %v11444 = vadd.f32 %v11336, %v11443
  %11445 = vmatmul.bf16.gmra.mxu0 %v9631
  %v11446 = vpop.f32.mrf.mxu0
  %v11447 = vadd.f32 %v11336, %v11446
  %v11448 = vpop.f32.mrf.mxu0
  %v11449 = vadd.f32 %v11336, %v11448
  %11450 = vdwg.mxu0
  %11451 = vmatpush.bf16.msra.mxu0 0
  %11452 = vmatpush.bf16.msra.mxu0 0
  %11453 = vmatpush.bf16.msra.mxu0 0
  %11454 = vmatpush.bf16.msra.mxu0 0
  %11455 = vmatpush.bf16.msra.mxu0 0
  %11456 = vmatpush.bf16.msra.mxu0 0
  %11457 = vmatpush.bf16.msra.mxu0 0
  %11458 = vmatpush.bf16.msra.mxu0 %v11362
  %11459 = vmatmul.bf16.gmra.mxu0 %v9622
  %v11460 = vpop.f32.mrf.mxu0
  %v11461 = vadd.f32 %v11337, %v11460
  %v11462 = vpop.f32.mrf.mxu0
  %v11463 = vadd.f32 %v11337, %v11462
  %11464 = vmatmul.bf16.gmra.mxu0 %v9625
  %v11465 = vpop.f32.mrf.mxu0
  %v11466 = vadd.f32 %v11337, %v11465
  %v11467 = vpop.f32.mrf.mxu0
  %v11468 = vadd.f32 %v11337, %v11467
  %11469 = vmatmul.bf16.gmra.mxu0 %v9628
  %v11470 = vpop.f32.mrf.mxu0
  %v11471 = vadd.f32 %v11337, %v11470
  %v11472 = vpop.f32.mrf.mxu0
  %v11473 = vadd.f32 %v11337, %v11472
  %11474 = vmatmul.bf16.gmra.mxu0 %v9631
  %v11475 = vpop.f32.mrf.mxu0
  %v11476 = vadd.f32 %v11337, %v11475
  %v11477 = vpop.f32.mrf.mxu0
  %v11478 = vadd.f32 %v11337, %v11477
  %11479 = vdwg.mxu0
  %v11480 = vmax.f32 %v11374, 0.0
  %v11481 = vmax.f32 %v11403, 0.0
  %v11482 = vmax.f32 %v11432, 0.0
  %v11483 = vmax.f32 %v11461, 0.0
  %v11484 = vmax.f32 %v11376, 0.0
  %v11485 = vmax.f32 %v11405, 0.0
  %v11486 = vmax.f32 %v11434, 0.0
  %v11487 = vmax.f32 %v11463, 0.0
  %v11488 = vmax.f32 %v11379, 0.0
  %v11489 = vmax.f32 %v11408, 0.0
  %v11490 = vmax.f32 %v11437, 0.0
  %v11491 = vmax.f32 %v11466, 0.0
  %v11492 = vmax.f32 %v11381, 0.0
  %v11493 = vmax.f32 %v11410, 0.0
  %v11494 = vmax.f32 %v11439, 0.0
  %v11495 = vmax.f32 %v11468, 0.0
  %v11496 = vmax.f32 %v11384, 0.0
  %v11497 = vmax.f32 %v11413, 0.0
  %v11498 = vmax.f32 %v11442, 0.0
  %v11499 = vmax.f32 %v11471, 0.0
  %v11500 = vmax.f32 %v11386, 0.0
  %v11501 = vmax.f32 %v11415, 0.0
  %v11502 = vmax.f32 %v11444, 0.0
  %v11503 = vmax.f32 %v11473, 0.0
  %v11504 = vmax.f32 %v11389, 0.0
  %v11505 = vmax.f32 %v11418, 0.0
  %v11506 = vmax.f32 %v11447, 0.0
  %v11507 = vmax.f32 %v11476, 0.0
  %v11508 = vmax.f32 %v11391, 0.0
  %v11509 = vmax.f32 %v11420, 0.0
  %v11510 = vmax.f32 %v11449, 0.0
  %v11511 = vmax.f32 %v11478, 0.0
  %v11512 = vpack.c.bf16 %v11484, %v11480
  %v11513 = vpack.c.bf16 %v11485, %v11481
  %v11514 = vpack.c.bf16 %v11486, %v11482
  %v11515 = vpack.c.bf16 %v11487, %v11483
  %v11516 = vpack.c.bf16 %v11492, %v11488
  %v11517 = vpack.c.bf16 %v11493, %v11489
  %v11518 = vpack.c.bf16 %v11494, %v11490
  %v11519 = vpack.c.bf16 %v11495, %v11491
  %v11520 = vpack.c.bf16 %v11500, %v11496
  %v11521 = vpack.c.bf16 %v11501, %v11497
  %v11522 = vpack.c.bf16 %v11502, %v11498
  %v11523 = vpack.c.bf16 %v11503, %v11499
  %v11524 = vpack.c.bf16 %v11508, %v11504
  %v11525 = vpack.c.bf16 %v11509, %v11505
  %v11526 = vpack.c.bf16 %v11510, %v11506
  %v11527 = vpack.c.bf16 %v11511, %v11507
  %v11528 = vld [vmem:[%s9809 + $0x300] sm:$0xf]
  %v11529 = vld [vmem:[%s9809 + $0x304] sm:$0xf]
  %v11530 = vld [vmem:[%s9809 + $0x308] sm:$0xf]
  %v11531 = vld [vmem:[%s9809 + $0x30c] sm:$0xf]
  %v11532 = vld [vmem:[%s9809 + $0x310] sm:$0xf]
  %v11533 = vld [vmem:[%s9809 + $0x314] sm:$0xf]
  %v11534 = vld [vmem:[%s9809 + $0x318] sm:$0xf]
  %v11535 = vld [vmem:[%s9809 + $0x31c] sm:$0xf]
  %v11536 = vld [vmem:[%s9809 + $0x320] sm:$0xf]
  %v11537 = vld [vmem:[%s9809 + $0x324] sm:$0xf]
  %v11538 = vld [vmem:[%s9809 + $0x328] sm:$0xf]
  %v11539 = vld [vmem:[%s9809 + $0x32c] sm:$0xf]
  %v11540 = vld [vmem:[%s9809 + $0x330] sm:$0xf]
  %v11541 = vld [vmem:[%s9809 + $0x334] sm:$0xf]
  %v11542 = vld [vmem:[%s9809 + $0x338] sm:$0xf]
  %v11543 = vld [vmem:[%s9809 + $0x33c] sm:$0xf]
  %v11544 = vld [vmem:[%s9809 + $0x340] sm:$0xf]
  %v11545 = vld [vmem:[%s9809 + $0x344] sm:$0xf]
  %v11546 = vld [vmem:[%s9809 + $0x348] sm:$0xf]
  %v11547 = vld [vmem:[%s9809 + $0x34c] sm:$0xf]
  %v11548 = vld [vmem:[%s9809 + $0x350] sm:$0xf]
  %v11549 = vld [vmem:[%s9809 + $0x354] sm:$0xf]
  %v11550 = vld [vmem:[%s9809 + $0x358] sm:$0xf]
  %v11551 = vld [vmem:[%s9809 + $0x35c] sm:$0xf]
  %v11552 = vld [vmem:[%s9809 + $0x360] sm:$0xf]
  %v11553 = vld [vmem:[%s9809 + $0x364] sm:$0xf]
  %v11554 = vld [vmem:[%s9809 + $0x368] sm:$0xf]
  %v11555 = vld [vmem:[%s9809 + $0x36c] sm:$0xf]
  %v11556 = vld [vmem:[%s9809 + $0x370] sm:$0xf]
  %v11557 = vld [vmem:[%s9809 + $0x374] sm:$0xf]
  %v11558 = vld [vmem:[%s9809 + $0x378] sm:$0xf]
  %v11559 = vld [vmem:[%s9809 + $0x37c] sm:$0xf]
  %v11560 = vld [vmem:[%s9809 + $0x380] sm:$0xf]
  %v11561 = vld [vmem:[%s9809 + $0x384] sm:$0xf]
  %v11562 = vld [vmem:[%s9809 + $0x388] sm:$0xf]
  %v11563 = vld [vmem:[%s9809 + $0x38c] sm:$0xf]
  %v11564 = vld [vmem:[%s9809 + $0x390] sm:$0xf]
  %v11565 = vld [vmem:[%s9809 + $0x394] sm:$0xf]
  %v11566 = vld [vmem:[%s9809 + $0x398] sm:$0xf]
  %v11567 = vld [vmem:[%s9809 + $0x39c] sm:$0xf]
  %v11568 = vld [vmem:[%s9809 + $0x3a0] sm:$0xf]
  %v11569 = vld [vmem:[%s9809 + $0x3a4] sm:$0xf]
  %v11570 = vld [vmem:[%s9809 + $0x3a8] sm:$0xf]
  %v11571 = vld [vmem:[%s9809 + $0x3ac] sm:$0xf]
  %v11572 = vld [vmem:[%s9809 + $0x3b0] sm:$0xf]
  %v11573 = vld [vmem:[%s9809 + $0x3b4] sm:$0xf]
  %v11574 = vld [vmem:[%s9809 + $0x3b8] sm:$0xf]
  %v11575 = vld [vmem:[%s9809 + $0x3bc] sm:$0xf]
  %v11576 = vld [vmem:[%s9809 + $0x3c0] sm:$0xf]
  %v11577 = vld [vmem:[%s9809 + $0x3c4] sm:$0xf]
  %v11578 = vld [vmem:[%s9809 + $0x3c8] sm:$0xf]
  %v11579 = vld [vmem:[%s9809 + $0x3cc] sm:$0xf]
  %v11580 = vld [vmem:[%s9809 + $0x3d0] sm:$0xf]
  %v11581 = vld [vmem:[%s9809 + $0x3d4] sm:$0xf]
  %v11582 = vld [vmem:[%s9809 + $0x3d8] sm:$0xf]
  %v11583 = vld [vmem:[%s9809 + $0x3dc] sm:$0xf]
  %v11584 = vld [vmem:[%s9809 + $0x3e0] sm:$0xf]
  %v11585 = vld [vmem:[%s9809 + $0x3e4] sm:$0xf]
  %v11586 = vld [vmem:[%s9809 + $0x3e8] sm:$0xf]
  %v11587 = vld [vmem:[%s9809 + $0x3ec] sm:$0xf]
  %v11588 = vld [vmem:[%s9809 + $0x3f0] sm:$0xf]
  %v11589 = vld [vmem:[%s9809 + $0x3f4] sm:$0xf]
  %v11590 = vld [vmem:[%s9809 + $0x3f8] sm:$0xf]
  %v11591 = vld [vmem:[%s9809 + $0x3fc] sm:$0xf]
  %v11656 = vunpack.c.l.b16 %v11528
  %v11657 = vunpack.c.l.b16 %v11529
  %v11658 = vunpack.c.l.b16 %v11530
  %v11659 = vunpack.c.l.b16 %v11531
  %v11660 = vunpack.c.l.b16 %v11532
  %v11661 = vunpack.c.l.b16 %v11533
  %v11662 = vunpack.c.l.b16 %v11534
  %v11663 = vunpack.c.l.b16 %v11535
  %v11664 = vunpack.c.l.b16 %v11536
  %v11665 = vunpack.c.l.b16 %v11537
  %v11666 = vunpack.c.l.b16 %v11538
  %v11667 = vunpack.c.l.b16 %v11539
  %v11668 = vunpack.c.l.b16 %v11540
  %v11669 = vunpack.c.l.b16 %v11541
  %v11670 = vunpack.c.l.b16 %v11542
  %v11671 = vunpack.c.l.b16 %v11543
  %v11672 = vunpack.c.l.b16 %v11544
  %v11673 = vunpack.c.l.b16 %v11545
  %v11674 = vunpack.c.l.b16 %v11546
  %v11675 = vunpack.c.l.b16 %v11547
  %v11676 = vunpack.c.l.b16 %v11548
  %v11677 = vunpack.c.l.b16 %v11549
  %v11678 = vunpack.c.l.b16 %v11550
  %v11679 = vunpack.c.l.b16 %v11551
  %v11680 = vunpack.c.l.b16 %v11552
  %v11681 = vunpack.c.l.b16 %v11553
  %v11682 = vunpack.c.l.b16 %v11554
  %v11683 = vunpack.c.l.b16 %v11555
  %v11684 = vunpack.c.l.b16 %v11556
  %v11685 = vunpack.c.l.b16 %v11557
  %v11686 = vunpack.c.l.b16 %v11558
  %v11687 = vunpack.c.l.b16 %v11559
  %v11688 = vunpack.c.l.b16 %v11560
  %v11689 = vunpack.c.l.b16 %v11561
  %v11690 = vunpack.c.l.b16 %v11562
  %v11691 = vunpack.c.l.b16 %v11563
  %v11692 = vunpack.c.l.b16 %v11564
  %v11693 = vunpack.c.l.b16 %v11565
  %v11694 = vunpack.c.l.b16 %v11566
  %v11695 = vunpack.c.l.b16 %v11567
  %v11696 = vunpack.c.l.b16 %v11568
  %v11697 = vunpack.c.l.b16 %v11569
  %v11698 = vunpack.c.l.b16 %v11570
  %v11699 = vunpack.c.l.b16 %v11571
  %v11700 = vunpack.c.l.b16 %v11572
  %v11701 = vunpack.c.l.b16 %v11573
  %v11702 = vunpack.c.l.b16 %v11574
  %v11703 = vunpack.c.l.b16 %v11575
  %v11704 = vunpack.c.l.b16 %v11576
  %v11705 = vunpack.c.l.b16 %v11577
  %v11706 = vunpack.c.l.b16 %v11578
  %v11707 = vunpack.c.l.b16 %v11579
  %v11708 = vunpack.c.l.b16 %v11580
  %v11709 = vunpack.c.l.b16 %v11581
  %v11710 = vunpack.c.l.b16 %v11582
  %v11711 = vunpack.c.l.b16 %v11583
  %v11712 = vunpack.c.l.b16 %v11584
  %v11713 = vunpack.c.l.b16 %v11585
  %v11714 = vunpack.c.l.b16 %v11586
  %v11715 = vunpack.c.l.b16 %v11587
  %v11716 = vunpack.c.l.b16 %v11588
  %v11717 = vunpack.c.l.b16 %v11589
  %v11718 = vunpack.c.l.b16 %v11590
  %v11719 = vunpack.c.l.b16 %v11591
  %v11720 = vpack.c.b16 %v11657, %v11656
  %v11721 = vpack.c.b16 %v11659, %v11658
  %v11722 = vpack.c.b16 %v11661, %v11660
  %v11723 = vpack.c.b16 %v11663, %v11662
  %v11724 = vpack.c.b16 %v11665, %v11664
  %v11725 = vpack.c.b16 %v11667, %v11666
  %v11726 = vpack.c.b16 %v11669, %v11668
  %v11727 = vpack.c.b16 %v11671, %v11670
  %v11728 = vpack.c.b16 %v11673, %v11672
  %v11729 = vpack.c.b16 %v11675, %v11674
  %v11730 = vpack.c.b16 %v11677, %v11676
  %v11731 = vpack.c.b16 %v11679, %v11678
  %v11732 = vpack.c.b16 %v11681, %v11680
  %v11733 = vpack.c.b16 %v11683, %v11682
  %v11734 = vpack.c.b16 %v11685, %v11684
  %v11735 = vpack.c.b16 %v11687, %v11686
  %v11736 = vpack.c.b16 %v11689, %v11688
  %v11737 = vpack.c.b16 %v11691, %v11690
  %v11738 = vpack.c.b16 %v11693, %v11692
  %v11739 = vpack.c.b16 %v11695, %v11694
  %v11740 = vpack.c.b16 %v11697, %v11696
  %v11741 = vpack.c.b16 %v11699, %v11698
  %v11742 = vpack.c.b16 %v11701, %v11700
  %v11743 = vpack.c.b16 %v11703, %v11702
  %v11744 = vpack.c.b16 %v11705, %v11704
  %v11745 = vpack.c.b16 %v11707, %v11706
  %v11746 = vpack.c.b16 %v11709, %v11708
  %v11747 = vpack.c.b16 %v11711, %v11710
  %v11748 = vpack.c.b16 %v11713, %v11712
  %v11749 = vpack.c.b16 %v11715, %v11714
  %v11750 = vpack.c.b16 %v11717, %v11716
  %v11751 = vpack.c.b16 %v11719, %v11718
  %11784 = vmatpush.bf16.msra.mxu0 %v11727
  %11785 = vmatpush.bf16.msra.mxu0 %v11726
  %11786 = vmatpush.bf16.msra.mxu0 %v11725
  %11787 = vmatpush.bf16.msra.mxu0 %v11724
  %11788 = vmatpush.bf16.msra.mxu0 %v11723
  %11789 = vmatpush.bf16.msra.mxu0 %v11722
  %11790 = vmatpush.bf16.msra.mxu0 %v11721
  %11791 = vmatpush.bf16.msra.mxu0 %v11720
  %11792 = vmatmul.bf16.gmra.mxu0 %v11512
  %v11793 = vpop.f32.mrf.mxu0
  %v11794 = vadd.f32 0.0, %v11793
  %v11795 = vpop.f32.mrf.mxu0
  %v11796 = vadd.f32 0.0, %v11795
  %11797 = vmatmul.bf16.gmra.mxu0 %v11516
  %v11798 = vpop.f32.mrf.mxu0
  %v11799 = vadd.f32 0.0, %v11798
  %v11800 = vpop.f32.mrf.mxu0
  %v11801 = vadd.f32 0.0, %v11800
  %11802 = vmatmul.bf16.gmra.mxu0 %v11520
  %v11803 = vpop.f32.mrf.mxu0
  %v11804 = vadd.f32 0.0, %v11803
  %v11805 = vpop.f32.mrf.mxu0
  %v11806 = vadd.f32 0.0, %v11805
  %11807 = vmatmul.bf16.gmra.mxu0 %v11524
  %v11808 = vpop.f32.mrf.mxu0
  %v11809 = vadd.f32 0.0, %v11808
  %v11810 = vpop.f32.mrf.mxu0
  %v11811 = vadd.f32 0.0, %v11810
  %11812 = vdwg.mxu0
  %11813 = vmatpush.bf16.msra.mxu0 %v11735
  %11814 = vmatpush.bf16.msra.mxu0 %v11734
  %11815 = vmatpush.bf16.msra.mxu0 %v11733
  %11816 = vmatpush.bf16.msra.mxu0 %v11732
  %11817 = vmatpush.bf16.msra.mxu0 %v11731
  %11818 = vmatpush.bf16.msra.mxu0 %v11730
  %11819 = vmatpush.bf16.msra.mxu0 %v11729
  %11820 = vmatpush.bf16.msra.mxu0 %v11728
  %11821 = vmatmul.bf16.gmra.mxu0 %v11513
  %v11822 = vpop.f32.mrf.mxu0
  %v11823 = vadd.f32 %v11794, %v11822
  %v11824 = vpop.f32.mrf.mxu0
  %v11825 = vadd.f32 %v11796, %v11824
  %11826 = vmatmul.bf16.gmra.mxu0 %v11517
  %v11827 = vpop.f32.mrf.mxu0
  %v11828 = vadd.f32 %v11799, %v11827
  %v11829 = vpop.f32.mrf.mxu0
  %v11830 = vadd.f32 %v11801, %v11829
  %11831 = vmatmul.bf16.gmra.mxu0 %v11521
  %v11832 = vpop.f32.mrf.mxu0
  %v11833 = vadd.f32 %v11804, %v11832
  %v11834 = vpop.f32.mrf.mxu0
  %v11835 = vadd.f32 %v11806, %v11834
  %11836 = vmatmul.bf16.gmra.mxu0 %v11525
  %v11837 = vpop.f32.mrf.mxu0
  %v11838 = vadd.f32 %v11809, %v11837
  %v11839 = vpop.f32.mrf.mxu0
  %v11840 = vadd.f32 %v11811, %v11839
  %11841 = vdwg.mxu0
  %11842 = vmatpush.bf16.msra.mxu0 %v11743
  %11843 = vmatpush.bf16.msra.mxu0 %v11742
  %11844 = vmatpush.bf16.msra.mxu0 %v11741
  %11845 = vmatpush.bf16.msra.mxu0 %v11740
  %11846 = vmatpush.bf16.msra.mxu0 %v11739
  %11847 = vmatpush.bf16.msra.mxu0 %v11738
  %11848 = vmatpush.bf16.msra.mxu0 %v11737
  %11849 = vmatpush.bf16.msra.mxu0 %v11736
  %11850 = vmatmul.bf16.gmra.mxu0 %v11514
  %v11851 = vpop.f32.mrf.mxu0
  %v11852 = vadd.f32 %v11823, %v11851
  %v11853 = vpop.f32.mrf.mxu0
  %v11854 = vadd.f32 %v11825, %v11853
  %11855 = vmatmul.bf16.gmra.mxu0 %v11518
  %v11856 = vpop.f32.mrf.mxu0
  %v11857 = vadd.f32 %v11828, %v11856
  %v11858 = vpop.f32.mrf.mxu0
  %v11859 = vadd.f32 %v11830, %v11858
  %11860 = vmatmul.bf16.gmra.mxu0 %v11522
  %v11861 = vpop.f32.mrf.mxu0
  %v11862 = vadd.f32 %v11833, %v11861
  %v11863 = vpop.f32.mrf.mxu0
  %v11864 = vadd.f32 %v11835, %v11863
  %11865 = vmatmul.bf16.gmra.mxu0 %v11526
  %v11866 = vpop.f32.mrf.mxu0
  %v11867 = vadd.f32 %v11838, %v11866
  %v11868 = vpop.f32.mrf.mxu0
  %v11869 = vadd.f32 %v11840, %v11868
  %11870 = vdwg.mxu0
  %11871 = vmatpush.bf16.msra.mxu0 %v11751
  %11872 = vmatpush.bf16.msra.mxu0 %v11750
  %11873 = vmatpush.bf16.msra.mxu0 %v11749
  %11874 = vmatpush.bf16.msra.mxu0 %v11748
  %11875 = vmatpush.bf16.msra.mxu0 %v11747
  %11876 = vmatpush.bf16.msra.mxu0 %v11746
  %11877 = vmatpush.bf16.msra.mxu0 %v11745
  %11878 = vmatpush.bf16.msra.mxu0 %v11744
  %11879 = vmatmul.bf16.gmra.mxu0 %v11515
  %v11880 = vpop.f32.mrf.mxu0
  %v11881 = vadd.f32 %v11852, %v11880
  %v11882 = vpop.f32.mrf.mxu0
  %v11883 = vadd.f32 %v11854, %v11882
  %11884 = vmatmul.bf16.gmra.mxu0 %v11519
  %v11885 = vpop.f32.mrf.mxu0
  %v11886 = vadd.f32 %v11857, %v11885
  %v11887 = vpop.f32.mrf.mxu0
  %v11888 = vadd.f32 %v11859, %v11887
  %11889 = vmatmul.bf16.gmra.mxu0 %v11523
  %v11890 = vpop.f32.mrf.mxu0
  %v11891 = vadd.f32 %v11862, %v11890
  %v11892 = vpop.f32.mrf.mxu0
  %v11893 = vadd.f32 %v11864, %v11892
  %11894 = vmatmul.bf16.gmra.mxu0 %v11527
  %v11895 = vpop.f32.mrf.mxu0
  %v11896 = vadd.f32 %v11867, %v11895
  %v11897 = vpop.f32.mrf.mxu0
  %v11898 = vadd.f32 %v11869, %v11897
  %11899 = vdwg.mxu0
  %v11900 = vadd.f32 %v11322, %v11881
  %v11901 = vadd.f32 %v11323, %v11883
  %v11902 = vadd.f32 %v11324, %v11886
  %v11903 = vadd.f32 %v11325, %v11888
  %v11904 = vadd.f32 %v11326, %v11891
  %v11905 = vadd.f32 %v11327, %v11893
  %v11906 = vadd.f32 %v11328, %v11896
  %v11907 = vadd.f32 %v11329, %v11898
  %s11908 = scalar_lea.vmem %s16, 1
  %v11909 = vld [vmem:[%s11908] sm:$0x1]
  %v11911 = vperm.slane %v11909, 0
  %v11913 = vadd.f32 %v11900, %v11911
  %v11914 = vadd.f32 %v11901, %v11911
  %v11915 = vadd.f32 %v11902, %v11911
  %v11916 = vadd.f32 %v11903, %v11911
  %v11917 = vadd.f32 %v11904, %v11911
  %v11918 = vadd.f32 %v11905, %v11911
  %v11919 = vadd.f32 %v11906, %v11911
  %v11920 = vadd.f32 %v11907, %v11911
  %v11921 = vadd.f32 %v9585, %v11913
  %v11922 = vadd.f32 %v9586, %v11914
  %v11923 = vadd.f32 %v9587, %v11915
  %v11924 = vadd.f32 %v9588, %v11916
  %v11925 = vadd.f32 %v9589, %v11917
  %v11926 = vadd.f32 %v9590, %v11918
  %v11927 = vadd.f32 %v9591, %v11919
  %v11928 = vadd.f32 %v9592, %v11920
  %s11929 = scalar_lea.vmem %s11, 1
  %v11930 = vld [vmem:[%s11929] sm:$0x1]
  %s11931 = scalar_lea.vmem %s12, 1
  %v11932 = vld [vmem:[%s11931] sm:$0x1]
  %v11933 = vsel %vm304, %v11921, 0.0
  %11934 = vadd.xlane.f32.xlu0 %v11933
  %v11935 = vpop.xlane.xlu0 %11934
  %v11936 = vsel %vm304, %v11922, 0.0
  %11937 = vadd.xlane.f32.xlu0 %v11936
  %v11938 = vpop.xlane.xlu0 %11937
  %v11939 = vsel %vm304, %v11923, 0.0
  %11940 = vadd.xlane.f32.xlu0 %v11939
  %v11941 = vpop.xlane.xlu0 %11940
  %v11942 = vsel %vm304, %v11924, 0.0
  %11943 = vadd.xlane.f32.xlu0 %v11942
  %v11944 = vpop.xlane.xlu0 %11943
  %v11945 = vsel %vm304, %v11925, 0.0
  %11946 = vadd.xlane.f32.xlu0 %v11945
  %v11947 = vpop.xlane.xlu0 %11946
  %v11948 = vsel %vm304, %v11926, 0.0
  %11949 = vadd.xlane.f32.xlu0 %v11948
  %v11950 = vpop.xlane.xlu0 %11949
  %v11951 = vsel %vm304, %v11927, 0.0
  %11952 = vadd.xlane.f32.xlu0 %v11951
  %v11953 = vpop.xlane.xlu0 %11952
  %v11954 = vsel %vm304, %v11928, 0.0
  %11955 = vadd.xlane.f32.xlu0 %v11954
  %v11956 = vpop.xlane.xlu0 %11955
  %v11957 = vmul.f32 %v11935, %v3507
  %v11958 = vmul.f32 %v11938, %v3507
  %v11959 = vmul.f32 %v11941, %v3507
  %v11960 = vmul.f32 %v11944, %v3507
  %v11961 = vmul.f32 %v11947, %v3507
  %v11962 = vmul.f32 %v11950, %v3507
  %v11963 = vmul.f32 %v11953, %v3507
  %v11964 = vmul.f32 %v11956, %v3507
  %v11965 = vsub.f32 %v11921, %v11957
  %v11966 = vsub.f32 %v11922, %v11958
  %v11967 = vsub.f32 %v11923, %v11959
  %v11968 = vsub.f32 %v11924, %v11960
  %v11969 = vsub.f32 %v11925, %v11961
  %v11970 = vsub.f32 %v11926, %v11962
  %v11971 = vsub.f32 %v11927, %v11963
  %v11972 = vsub.f32 %v11928, %v11964
  %v11973 = vmul.f32 %v11965, %v11965
  %v11974 = vmul.f32 %v11966, %v11966
  %v11975 = vmul.f32 %v11967, %v11967
  %v11976 = vmul.f32 %v11968, %v11968
  %v11977 = vmul.f32 %v11969, %v11969
  %v11978 = vmul.f32 %v11970, %v11970
  %v11979 = vmul.f32 %v11971, %v11971
  %v11980 = vmul.f32 %v11972, %v11972
  %v11981 = vsel %vm304, %v11973, 0.0
  %11982 = vadd.xlane.f32.xlu0 %v11981
  %v11983 = vpop.xlane.xlu0 %11982
  %v11984 = vsel %vm304, %v11974, 0.0
  %11985 = vadd.xlane.f32.xlu0 %v11984
  %v11986 = vpop.xlane.xlu0 %11985
  %v11987 = vsel %vm304, %v11975, 0.0
  %11988 = vadd.xlane.f32.xlu0 %v11987
  %v11989 = vpop.xlane.xlu0 %11988
  %v11990 = vsel %vm304, %v11976, 0.0
  %11991 = vadd.xlane.f32.xlu0 %v11990
  %v11992 = vpop.xlane.xlu0 %11991
  %v11993 = vsel %vm304, %v11977, 0.0
  %11994 = vadd.xlane.f32.xlu0 %v11993
  %v11995 = vpop.xlane.xlu0 %11994
  %v11996 = vsel %vm304, %v11978, 0.0
  %11997 = vadd.xlane.f32.xlu0 %v11996
  %v11998 = vpop.xlane.xlu0 %11997
  %v11999 = vsel %vm304, %v11979, 0.0
  %12000 = vadd.xlane.f32.xlu0 %v11999
  %v12001 = vpop.xlane.xlu0 %12000
  %v12002 = vsel %vm304, %v11980, 0.0
  %12003 = vadd.xlane.f32.xlu0 %v12002
  %v12004 = vpop.xlane.xlu0 %12003
  %v12005 = vmul.f32 %v11983, %v3507
  %v12006 = vmul.f32 %v11986, %v3507
  %v12007 = vmul.f32 %v11989, %v3507
  %v12008 = vmul.f32 %v11992, %v3507
  %v12009 = vmul.f32 %v11995, %v3507
  %v12010 = vmul.f32 %v11998, %v3507
  %v12011 = vmul.f32 %v12001, %v3507
  %v12012 = vmul.f32 %v12004, %v3507
  %v12013 = vadd.f32 %v12005, 1e-05
  %v12014 = vadd.f32 %v12006, 1e-05
  %v12015 = vadd.f32 %v12007, 1e-05
  %v12016 = vadd.f32 %v12008, 1e-05
  %v12017 = vadd.f32 %v12009, 1e-05
  %v12018 = vadd.f32 %v12010, 1e-05
  %v12019 = vadd.f32 %v12011, 1e-05
  %v12020 = vadd.f32 %v12012, 1e-05
  %v12021 = vrsqrt.pop %v12013
  %v12022 = vmul.f32 %v12021, %v12013
  %v12023 = vmul.f32 %v12022, %v12021
  %v12024 = vmul.f32 0.5, %v12023
  %v12025 = vsub.f32 1.5, %v12024
  %v12026 = vmul.f32 %v12021, %v12025
  %vm12027 = vweird.f32 %v12013
  %vm12028 = vweird.f32 %v12021
  %vm12029 = vmor %vm12027, %vm12028
  %v12030 = vsel %vm12029, %v12021, %v12026
  %v12031 = vrsqrt.pop %v12014
  %v12032 = vmul.f32 %v12031, %v12014
  %v12033 = vmul.f32 %v12032, %v12031
  %v12034 = vmul.f32 0.5, %v12033
  %v12035 = vsub.f32 1.5, %v12034
  %v12036 = vmul.f32 %v12031, %v12035
  %vm12037 = vweird.f32 %v12014
  %vm12038 = vweird.f32 %v12031
  %vm12039 = vmor %vm12037, %vm12038
  %v12040 = vsel %vm12039, %v12031, %v12036
  %v12041 = vrsqrt.pop %v12015
  %v12042 = vmul.f32 %v12041, %v12015
  %v12043 = vmul.f32 %v12042, %v12041
  %v12044 = vmul.f32 0.5, %v12043
  %v12045 = vsub.f32 1.5, %v12044
  %v12046 = vmul.f32 %v12041, %v12045
  %vm12047 = vweird.f32 %v12015
  %vm12048 = vweird.f32 %v12041
  %vm12049 = vmor %vm12047, %vm12048
  %v12050 = vsel %vm12049, %v12041, %v12046
  %v12051 = vrsqrt.pop %v12016
  %v12052 = vmul.f32 %v12051, %v12016
  %v12053 = vmul.f32 %v12052, %v12051
  %v12054 = vmul.f32 0.5, %v12053
  %v12055 = vsub.f32 1.5, %v12054
  %v12056 = vmul.f32 %v12051, %v12055
  %vm12057 = vweird.f32 %v12016
  %vm12058 = vweird.f32 %v12051
  %vm12059 = vmor %vm12057, %vm12058
  %v12060 = vsel %vm12059, %v12051, %v12056
  %v12061 = vrsqrt.pop %v12017
  %v12062 = vmul.f32 %v12061, %v12017
  %v12063 = vmul.f32 %v12062, %v12061
  %v12064 = vmul.f32 0.5, %v12063
  %v12065 = vsub.f32 1.5, %v12064
  %v12066 = vmul.f32 %v12061, %v12065
  %vm12067 = vweird.f32 %v12017
  %vm12068 = vweird.f32 %v12061
  %vm12069 = vmor %vm12067, %vm12068
  %v12070 = vsel %vm12069, %v12061, %v12066
  %v12071 = vrsqrt.pop %v12018
  %v12072 = vmul.f32 %v12071, %v12018
  %v12073 = vmul.f32 %v12072, %v12071
  %v12074 = vmul.f32 0.5, %v12073
  %v12075 = vsub.f32 1.5, %v12074
  %v12076 = vmul.f32 %v12071, %v12075
  %vm12077 = vweird.f32 %v12018
  %vm12078 = vweird.f32 %v12071
  %vm12079 = vmor %vm12077, %vm12078
  %v12080 = vsel %vm12079, %v12071, %v12076
  %v12081 = vrsqrt.pop %v12019
  %v12082 = vmul.f32 %v12081, %v12019
  %v12083 = vmul.f32 %v12082, %v12081
  %v12084 = vmul.f32 0.5, %v12083
  %v12085 = vsub.f32 1.5, %v12084
  %v12086 = vmul.f32 %v12081, %v12085
  %vm12087 = vweird.f32 %v12019
  %vm12088 = vweird.f32 %v12081
  %vm12089 = vmor %vm12087, %vm12088
  %v12090 = vsel %vm12089, %v12081, %v12086
  %v12091 = vrsqrt.pop %v12020
  %v12092 = vmul.f32 %v12091, %v12020
  %v12093 = vmul.f32 %v12092, %v12091
  %v12094 = vmul.f32 0.5, %v12093
  %v12095 = vsub.f32 1.5, %v12094
  %v12096 = vmul.f32 %v12091, %v12095
  %vm12097 = vweird.f32 %v12020
  %vm12098 = vweird.f32 %v12091
  %vm12099 = vmor %vm12097, %vm12098
  %v12100 = vsel %vm12099, %v12091, %v12096
  %v12101 = vmul.f32 %v11965, %v12030
  %v12102 = vmul.f32 %v11966, %v12040
  %v12103 = vmul.f32 %v11967, %v12050
  %v12104 = vmul.f32 %v11968, %v12060
  %v12105 = vmul.f32 %v11969, %v12070
  %v12106 = vmul.f32 %v11970, %v12080
  %v12107 = vmul.f32 %v11971, %v12090
  %v12108 = vmul.f32 %v11972, %v12100
  %v12110 = vperm.slane %v11930, 0
  %v12112 = vmul.f32 %v12101, %v12110
  %v12113 = vmul.f32 %v12102, %v12110
  %v12114 = vmul.f32 %v12103, %v12110
  %v12115 = vmul.f32 %v12104, %v12110
  %v12116 = vmul.f32 %v12105, %v12110
  %v12117 = vmul.f32 %v12106, %v12110
  %v12118 = vmul.f32 %v12107, %v12110
  %v12119 = vmul.f32 %v12108, %v12110
  %v12121 = vperm.slane %v11932, 0
  %v12123 = vadd.f32 %v12112, %v12121
  %v12124 = vadd.f32 %v12113, %v12121
  %v12125 = vadd.f32 %v12114, %v12121
  %v12126 = vadd.f32 %v12115, %v12121
  %v12127 = vadd.f32 %v12116, %v12121
  %v12128 = vadd.f32 %v12117, %v12121
  %v12129 = vadd.f32 %v12118, %v12121
  %v12130 = vadd.f32 %v12119, %v12121
  %v12131 = vld [vmem:[%s17] sm:$0xff]
  %v12132 = vld [vmem:[%s19] sm:$0x1]
  %v12134 = vperm.slane %v12132, 0
  %v12137 = vsel %vm304, %v12123, 0
  %v12140 = vsel %vm304, %v12124, 0
  %v12143 = vsel %vm304, %v12125, 0
  %v12146 = vsel %vm304, %v12126, 0
  %v12149 = vsel %vm304, %v12127, 0
  %v12152 = vsel %vm304, %v12128, 0
  %v12155 = vsel %vm304, %v12129, 0
  %v12158 = vsel %vm304, %v12130, 0
  %12160 = vmatpush.msra.mxu0 0.0
  %12161 = vmatpush.msra.mxu0 0.0
  %12162 = vmatpush.msra.mxu0 0.0
  %12163 = vmatpush.msra.mxu0 0.0
  %12164 = vmatpush.msra.mxu0 0.0
  %12165 = vmatpush.msra.mxu0 0.0
  %12166 = vmatpush.msra.mxu0 0.0
  %12167 = vmatpush.msra.mxu0 0.0
  %12168 = vmatpush.msra.mxu0 0.0
  %12169 = vmatpush.msra.mxu0 0.0
  %12170 = vmatpush.msra.mxu0 0.0
  %12171 = vmatpush.msra.mxu0 0.0
  %12172 = vmatpush.msra.mxu0 0.0
  %12173 = vmatpush.msra.mxu0 0.0
  %12174 = vmatpush.msra.mxu0 0.0
  %12175 = vmatpush.msra.mxu0 %v12131
  %12176 = vmatmul.f32.gmra.mxu0 %v12137
  %v12177 = vpop.f32.mrf.mxu0
  %v12178 = vadd.f32 %v12134, %v12177
  %12179 = vmatmul.f32.gmra.mxu0 %v12140
  %v12180 = vpop.f32.mrf.mxu0
  %v12181 = vadd.f32 %v12134, %v12180
  %12182 = vmatmul.f32.gmra.mxu0 %v12143
  %v12183 = vpop.f32.mrf.mxu0
  %v12184 = vadd.f32 %v12134, %v12183
  %12185 = vmatmul.f32.gmra.mxu0 %v12146
  %v12186 = vpop.f32.mrf.mxu0
  %v12187 = vadd.f32 %v12134, %v12186
  %12188 = vmatmul.f32.gmra.mxu0 %v12149
  %v12189 = vpop.f32.mrf.mxu0
  %v12190 = vadd.f32 %v12134, %v12189
  %12191 = vmatmul.f32.gmra.mxu0 %v12152
  %v12192 = vpop.f32.mrf.mxu0
  %v12193 = vadd.f32 %v12134, %v12192
  %12194 = vmatmul.f32.gmra.mxu0 %v12155
  %v12195 = vpop.f32.mrf.mxu0
  %v12196 = vadd.f32 %v12134, %v12195
  %12197 = vmatmul.f32.gmra.mxu0 %v12158
  %v12198 = vpop.f32.mrf.mxu0
  %v12199 = vadd.f32 %v12134, %v12198
  %12200 = vdwg.mxu0
  %v12201 = vld [vmem:[%s18] sm:$0xff]
  %v12202 = vld [vmem:[%s18 + $0x8] sm:$0xff]
  %v12203 = vld [vmem:[%s18 + $0x10] sm:$0xff]
  %v12204 = vld [vmem:[%s18 + $0x18] sm:$0xff]
  %vm12205 = vcmask 261120
  %v12207 = vsel %vm12205, 0.0, 0
  %12209 = vmatpush.msra.mxu0 0.0
  %12210 = vmatpush.msra.mxu0 0.0
  %12211 = vmatpush.msra.mxu0 0.0
  %12212 = vmatpush.msra.mxu0 0.0
  %12213 = vmatpush.msra.mxu0 0.0
  %12214 = vmatpush.msra.mxu0 0.0
  %12215 = vmatpush.msra.mxu0 0.0
  %12216 = vmatpush.msra.mxu0 0.0
  %12217 = vmatpush.msra.mxu0 0.0
  %12218 = vmatpush.msra.mxu0 0.0
  %12219 = vmatpush.msra.mxu0 0.0
  %12220 = vmatpush.msra.mxu0 0.0
  %12221 = vmatpush.msra.mxu0 %v12204
  %12222 = vmatpush.msra.mxu0 %v12203
  %12223 = vmatpush.msra.mxu0 %v12202
  %12224 = vmatpush.msra.mxu0 %v12201
  %12225 = vmatmul.f32.gmra.mxu0 %v12207
  %v12226 = vpop.f32.mrf.mxu0
  %v12227 = vadd.f32 0.0, %v12226
  %12228 = vmatmul.f32.gmra.mxu0 %v12207
  %v12229 = vpop.f32.mrf.mxu0
  %v12230 = vadd.f32 0.0, %v12229
  %12231 = vdwg.mxu0
  %v12232 = vadd.f32 %v12178, %v12227
  %v12233 = vadd.f32 %v12181, %v12230
  %v12234 = vxor.u32 %v12232, 2147483648
  %v12235 = vxor.u32 %v12233, 2147483648
  %v12236 = vmul.f32 %v12234, 1.442695
  %v12237 = vpow.pop %v12236
  %v12238 = vmul.f32 %v12235, 1.442695
  %v12239 = vpow.pop %v12238
  %v12240 = vadd.f32 %v12237, 1.0
  %v12241 = vadd.f32 %v12239, 1.0
  %v12242 = vrcp.pop %v12240
  %v12243 = vmul.f32 %v12240, %v12242
  %v12244 = vsub.f32 1.0, %v12243
  %v12245 = vmul.f32 %v12242, %v12244
  %v12246 = vadd.f32 %v12242, %v12245
  %vm12247 = vweird.f32 %v12240
  %vm12248 = vweird.f32 %v12242
  %vm12249 = vmor %vm12247, %vm12248
  %v12250 = vsel %vm12249, %v12242, %v12246
  %v12251 = vand.u32 2147483647, %v12240
  %vm12252 = vcmp.eq.f32.partialorder %v12251, 8.507059e+37
  %v12253 = vand.u32 %v12240, 2147483648
  %v12254 = vor.u32 1.1754944e-38, %v12253
  %v12255 = vsel %vm12252, %v12254, %v12250
  %v12256 = vmul.f32 1.0, %v12255
  %v12257 = vrcp.pop %v12241
  %v12258 = vmul.f32 %v12241, %v12257
  %v12259 = vsub.f32 1.0, %v12258
  %v12260 = vmul.f32 %v12257, %v12259
  %v12261 = vadd.f32 %v12257, %v12260
  %vm12262 = vweird.f32 %v12241
  %vm12263 = vweird.f32 %v12257
  %vm12264 = vmor %vm12262, %vm12263
  %v12265 = vsel %vm12264, %v12257, %v12261
  %v12266 = vand.u32 2147483647, %v12241
  %vm12267 = vcmp.eq.f32.partialorder %v12266, 8.507059e+37
  %v12268 = vand.u32 %v12241, 2147483648
  %v12269 = vor.u32 1.1754944e-38, %v12268
  %v12270 = vsel %vm12267, %v12269, %v12265
  %v12271 = vmul.f32 1.0, %v12270
  %v12272 = vtanh.pop %v12232
  %v12273 = vtanh.pop %v12233
  %v12274 = vmul.f32 %v12256, 0.0
  %v12275 = vmul.f32 %v12271, 0.0
  %12278 = vrot.lane.b32.xlu0 %v12272, 32
  %v12279 = vpop.permute.xlu0 %12278
  %12280 = vrot.lane.b32.xlu0 %v12273, 32
  %v12281 = vpop.permute.xlu0 %12280
  %v12284 = vmul.f32 %v12256, %v12279
  %v12285 = vmul.f32 %v12271, %v12281
  %12288 = vrot.lane.b32.xlu0 %v12284, 32
  %v12289 = vpop.permute.xlu0 %12288
  %12290 = vrot.lane.b32.xlu0 %v12285, 32
  %v12291 = vpop.permute.xlu0 %12290
  %v12294 = vadd.f32 %v12274, %v12289
  %v12295 = vadd.f32 %v12275, %v12291
  %v12296 = vtanh.pop %v12294
  %v12297 = vtanh.pop %v12295
  %12300 = vrot.lane.b32.xlu0 %v12296, 32
  %v12301 = vpop.permute.xlu0 %12300
  %12302 = vrot.lane.b32.xlu0 %v12297, 32
  %v12303 = vpop.permute.xlu0 %12302
  %v12306 = vmul.f32 %v12256, %v12301
  %v12307 = vmul.f32 %v12271, %v12303
  %vm12308 = vcmask 785920
  %v12309 = vsel %vm12308, %v12306, 0.0
  %v12310 = vsel %vm12308, %v12307, 0.0
  %v12311 = vadd.f32 %v12309, %v12310
  %v12312 = vrot.slane %v12311, 4
  %v12313 = vadd.f32 %v12311, %v12312
  %v12314 = vrot.slane %v12313, 2
  %v12315 = vadd.f32 %v12313, %v12314
  %v12316 = vrot.slane %v12315, 1
  %v12317 = vadd.f32 %v12315, %v12316
  %v12318 = vrcp.pop 16.0
  %v12319 = vmul.f32 16.0, %v12318
  %v12320 = vsub.f32 1.0, %v12319
  %v12321 = vmul.f32 %v12318, %v12320
  %v12322 = vadd.f32 %v12318, %v12321
  %vm12323 = vweird.f32 %v12318
  %v12324 = vsel %vm12323, %v12318, %v12322
  %v12325 = vmul.f32 %v12317, %v12324
  %12328 = vrot.lane.b32.xlu0 %v12306, 64
  %v12329 = vpop.permute.xlu0 %12328
  %12330 = vrot.lane.b32.xlu0 %v12307, 64
  %v12331 = vpop.permute.xlu0 %12330
  %v12332 = vsel %vm12205, %v12329, 0
  %v12334 = vsel %vm12205, %v12331, 0
  %12336 = vmatpush.msra.mxu0 0.0
  %12337 = vmatpush.msra.mxu0 0.0
  %12338 = vmatpush.msra.mxu0 0.0
  %12339 = vmatpush.msra.mxu0 0.0
  %12340 = vmatpush.msra.mxu0 0.0
  %12341 = vmatpush.msra.mxu0 0.0
  %12342 = vmatpush.msra.mxu0 0.0
  %12343 = vmatpush.msra.mxu0 0.0
  %12344 = vmatpush.msra.mxu0 0.0
  %12345 = vmatpush.msra.mxu0 0.0
  %12346 = vmatpush.msra.mxu0 0.0
  %12347 = vmatpush.msra.mxu0 0.0
  %12348 = vmatpush.msra.mxu0 %v12204
  %12349 = vmatpush.msra.mxu0 %v12203
  %12350 = vmatpush.msra.mxu0 %v12202
  %12351 = vmatpush.msra.mxu0 %v12201
  %12352 = vmatmul.f32.gmra.mxu0 %v12332
  %v12353 = vpop.f32.mrf.mxu0
  %v12354 = vadd.f32 0.0, %v12353
  %12355 = vmatmul.f32.gmra.mxu0 %v12334
  %v12356 = vpop.f32.mrf.mxu0
  %v12357 = vadd.f32 0.0, %v12356
  %12358 = vdwg.mxu0
  %v12359 = vadd.f32 %v12184, %v12354
  %v12360 = vadd.f32 %v12187, %v12357
  %v12361 = vxor.u32 %v12359, 2147483648
  %v12362 = vxor.u32 %v12360, 2147483648
  %v12363 = vmul.f32 %v12361, 1.442695
  %v12364 = vpow.pop %v12363
  %v12365 = vmul.f32 %v12362, 1.442695
  %v12366 = vpow.pop %v12365
  %v12367 = vadd.f32 %v12364, 1.0
  %v12368 = vadd.f32 %v12366, 1.0
  %v12369 = vrcp.pop %v12367
  %v12370 = vmul.f32 %v12367, %v12369
  %v12371 = vsub.f32 1.0, %v12370
  %v12372 = vmul.f32 %v12369, %v12371
  %v12373 = vadd.f32 %v12369, %v12372
  %vm12374 = vweird.f32 %v12367
  %vm12375 = vweird.f32 %v12369
  %vm12376 = vmor %vm12374, %vm12375
  %v12377 = vsel %vm12376, %v12369, %v12373
  %v12378 = vand.u32 2147483647, %v12367
  %vm12379 = vcmp.eq.f32.partialorder %v12378, 8.507059e+37
  %v12380 = vand.u32 %v12367, 2147483648
  %v12381 = vor.u32 1.1754944e-38, %v12380
  %v12382 = vsel %vm12379, %v12381, %v12377
  %v12383 = vmul.f32 1.0, %v12382
  %v12384 = vrcp.pop %v12368
  %v12385 = vmul.f32 %v12368, %v12384
  %v12386 = vsub.f32 1.0, %v12385
  %v12387 = vmul.f32 %v12384, %v12386
  %v12388 = vadd.f32 %v12384, %v12387
  %vm12389 = vweird.f32 %v12368
  %vm12390 = vweird.f32 %v12384
  %vm12391 = vmor %vm12389, %vm12390
  %v12392 = vsel %vm12391, %v12384, %v12388
  %v12393 = vand.u32 2147483647, %v12368
  %vm12394 = vcmp.eq.f32.partialorder %v12393, 8.507059e+37
  %v12395 = vand.u32 %v12368, 2147483648
  %v12396 = vor.u32 1.1754944e-38, %v12395
  %v12397 = vsel %vm12394, %v12396, %v12392
  %v12398 = vmul.f32 1.0, %v12397
  %v12399 = vtanh.pop %v12359
  %v12400 = vtanh.pop %v12360
  %v12401 = vmul.f32 %v12383, %v12294
  %v12402 = vmul.f32 %v12398, %v12295
  %12405 = vrot.lane.b32.xlu0 %v12399, 32
  %v12406 = vpop.permute.xlu0 %12405
  %12407 = vrot.lane.b32.xlu0 %v12400, 32
  %v12408 = vpop.permute.xlu0 %12407
  %v12411 = vmul.f32 %v12383, %v12406
  %v12412 = vmul.f32 %v12398, %v12408
  %12415 = vrot.lane.b32.xlu0 %v12411, 32
  %v12416 = vpop.permute.xlu0 %12415
  %12417 = vrot.lane.b32.xlu0 %v12412, 32
  %v12418 = vpop.permute.xlu0 %12417
  %v12421 = vadd.f32 %v12401, %v12416
  %v12422 = vadd.f32 %v12402, %v12418
  %v12423 = vtanh.pop %v12421
  %v12424 = vtanh.pop %v12422
  %12427 = vrot.lane.b32.xlu0 %v12423, 32
  %v12428 = vpop.permute.xlu0 %12427
  %12429 = vrot.lane.b32.xlu0 %v12424, 32
  %v12430 = vpop.permute.xlu0 %12429
  %v12433 = vmul.f32 %v12383, %v12428
  %v12434 = vmul.f32 %v12398, %v12430
  %v12435 = vsel %vm12308, %v12433, 0.0
  %v12436 = vsel %vm12308, %v12434, 0.0
  %v12437 = vadd.f32 %v12435, %v12436
  %v12438 = vrot.slane %v12437, 4
  %v12439 = vadd.f32 %v12437, %v12438
  %v12440 = vrot.slane %v12439, 2
  %v12441 = vadd.f32 %v12439, %v12440
  %v12442 = vrot.slane %v12441, 1
  %v12443 = vadd.f32 %v12441, %v12442
  %v12444 = vmul.f32 %v12443, %v12324
  %12447 = vrot.lane.b32.xlu0 %v12433, 64
  %v12448 = vpop.permute.xlu0 %12447
  %12449 = vrot.lane.b32.xlu0 %v12434, 64
  %v12450 = vpop.permute.xlu0 %12449
  %v12451 = vsel %vm12205, %v12448, 0
  %v12453 = vsel %vm12205, %v12450, 0
  %12455 = vmatpush.msra.mxu0 0.0
  %12456 = vmatpush.msra.mxu0 0.0
  %12457 = vmatpush.msra.mxu0 0.0
  %12458 = vmatpush.msra.mxu0 0.0
  %12459 = vmatpush.msra.mxu0 0.0
  %12460 = vmatpush.msra.mxu0 0.0
  %12461 = vmatpush.msra.mxu0 0.0
  %12462 = vmatpush.msra.mxu0 0.0
  %12463 = vmatpush.msra.mxu0 0.0
  %12464 = vmatpush.msra.mxu0 0.0
  %12465 = vmatpush.msra.mxu0 0.0
  %12466 = vmatpush.msra.mxu0 0.0
  %12467 = vmatpush.msra.mxu0 %v12204
  %12468 = vmatpush.msra.mxu0 %v12203
  %12469 = vmatpush.msra.mxu0 %v12202
  %12470 = vmatpush.msra.mxu0 %v12201
  %12471 = vmatmul.f32.gmra.mxu0 %v12451
  %v12472 = vpop.f32.mrf.mxu0
  %v12473 = vadd.f32 0.0, %v12472
  %12474 = vmatmul.f32.gmra.mxu0 %v12453
  %v12475 = vpop.f32.mrf.mxu0
  %v12476 = vadd.f32 0.0, %v12475
  %12477 = vdwg.mxu0
  %v12478 = vadd.f32 %v12190, %v12473
  %v12479 = vadd.f32 %v12193, %v12476
  %v12480 = vxor.u32 %v12478, 2147483648
  %v12481 = vxor.u32 %v12479, 2147483648
  %v12482 = vmul.f32 %v12480, 1.442695
  %v12483 = vpow.pop %v12482
  %v12484 = vmul.f32 %v12481, 1.442695
  %v12485 = vpow.pop %v12484
  %v12486 = vadd.f32 %v12483, 1.0
  %v12487 = vadd.f32 %v12485, 1.0
  %v12488 = vrcp.pop %v12486
  %v12489 = vmul.f32 %v12486, %v12488
  %v12490 = vsub.f32 1.0, %v12489
  %v12491 = vmul.f32 %v12488, %v12490
  %v12492 = vadd.f32 %v12488, %v12491
  %vm12493 = vweird.f32 %v12486
  %vm12494 = vweird.f32 %v12488
  %vm12495 = vmor %vm12493, %vm12494
  %v12496 = vsel %vm12495, %v12488, %v12492
  %v12497 = vand.u32 2147483647, %v12486
  %vm12498 = vcmp.eq.f32.partialorder %v12497, 8.507059e+37
  %v12499 = vand.u32 %v12486, 2147483648
  %v12500 = vor.u32 1.1754944e-38, %v12499
  %v12501 = vsel %vm12498, %v12500, %v12496
  %v12502 = vmul.f32 1.0, %v12501
  %v12503 = vrcp.pop %v12487
  %v12504 = vmul.f32 %v12487, %v12503
  %v12505 = vsub.f32 1.0, %v12504
  %v12506 = vmul.f32 %v12503, %v12505
  %v12507 = vadd.f32 %v12503, %v12506
  %vm12508 = vweird.f32 %v12487
  %vm12509 = vweird.f32 %v12503
  %vm12510 = vmor %vm12508, %vm12509
  %v12511 = vsel %vm12510, %v12503, %v12507
  %v12512 = vand.u32 2147483647, %v12487
  %vm12513 = vcmp.eq.f32.partialorder %v12512, 8.507059e+37
  %v12514 = vand.u32 %v12487, 2147483648
  %v12515 = vor.u32 1.1754944e-38, %v12514
  %v12516 = vsel %vm12513, %v12515, %v12511
  %v12517 = vmul.f32 1.0, %v12516
  %v12518 = vtanh.pop %v12478
  %v12519 = vtanh.pop %v12479
  %v12520 = vmul.f32 %v12502, %v12421
  %v12521 = vmul.f32 %v12517, %v12422
  %12524 = vrot.lane.b32.xlu0 %v12518, 32
  %v12525 = vpop.permute.xlu0 %12524
  %12526 = vrot.lane.b32.xlu0 %v12519, 32
  %v12527 = vpop.permute.xlu0 %12526
  %v12530 = vmul.f32 %v12502, %v12525
  %v12531 = vmul.f32 %v12517, %v12527
  %12534 = vrot.lane.b32.xlu0 %v12530, 32
  %v12535 = vpop.permute.xlu0 %12534
  %12536 = vrot.lane.b32.xlu0 %v12531, 32
  %v12537 = vpop.permute.xlu0 %12536
  %v12540 = vadd.f32 %v12520, %v12535
  %v12541 = vadd.f32 %v12521, %v12537
  %v12542 = vtanh.pop %v12540
  %v12543 = vtanh.pop %v12541
  %12546 = vrot.lane.b32.xlu0 %v12542, 32
  %v12547 = vpop.permute.xlu0 %12546
  %12548 = vrot.lane.b32.xlu0 %v12543, 32
  %v12549 = vpop.permute.xlu0 %12548
  %v12552 = vmul.f32 %v12502, %v12547
  %v12553 = vmul.f32 %v12517, %v12549
  %v12554 = vsel %vm12308, %v12552, 0.0
  %v12555 = vsel %vm12308, %v12553, 0.0
  %v12556 = vadd.f32 %v12554, %v12555
  %v12557 = vrot.slane %v12556, 4
  %v12558 = vadd.f32 %v12556, %v12557
  %v12559 = vrot.slane %v12558, 2
  %v12560 = vadd.f32 %v12558, %v12559
  %v12561 = vrot.slane %v12560, 1
  %v12562 = vadd.f32 %v12560, %v12561
  %v12563 = vmul.f32 %v12562, %v12324
  %12566 = vrot.lane.b32.xlu0 %v12552, 64
  %v12567 = vpop.permute.xlu0 %12566
  %12568 = vrot.lane.b32.xlu0 %v12553, 64
  %v12569 = vpop.permute.xlu0 %12568
  %v12570 = vsel %vm12205, %v12567, 0
  %v12572 = vsel %vm12205, %v12569, 0
  %12574 = vmatpush.msra.mxu0 0.0
  %12575 = vmatpush.msra.mxu0 0.0
  %12576 = vmatpush.msra.mxu0 0.0
  %12577 = vmatpush.msra.mxu0 0.0
  %12578 = vmatpush.msra.mxu0 0.0
  %12579 = vmatpush.msra.mxu0 0.0
  %12580 = vmatpush.msra.mxu0 0.0
  %12581 = vmatpush.msra.mxu0 0.0
  %12582 = vmatpush.msra.mxu0 0.0
  %12583 = vmatpush.msra.mxu0 0.0
  %12584 = vmatpush.msra.mxu0 0.0
  %12585 = vmatpush.msra.mxu0 0.0
  %12586 = vmatpush.msra.mxu0 %v12204
  %12587 = vmatpush.msra.mxu0 %v12203
  %12588 = vmatpush.msra.mxu0 %v12202
  %12589 = vmatpush.msra.mxu0 %v12201
  %12590 = vmatmul.f32.gmra.mxu0 %v12570
  %v12591 = vpop.f32.mrf.mxu0
  %v12592 = vadd.f32 0.0, %v12591
  %12593 = vmatmul.f32.gmra.mxu0 %v12572
  %v12594 = vpop.f32.mrf.mxu0
  %v12595 = vadd.f32 0.0, %v12594
  %12596 = vdwg.mxu0
  %v12597 = vadd.f32 %v12196, %v12592
  %v12598 = vadd.f32 %v12199, %v12595
  %v12599 = vxor.u32 %v12597, 2147483648
  %v12600 = vxor.u32 %v12598, 2147483648
  %v12601 = vmul.f32 %v12599, 1.442695
  %v12602 = vpow.pop %v12601
  %v12603 = vmul.f32 %v12600, 1.442695
  %v12604 = vpow.pop %v12603
  %v12605 = vadd.f32 %v12602, 1.0
  %v12606 = vadd.f32 %v12604, 1.0
  %v12607 = vrcp.pop %v12605
  %v12608 = vmul.f32 %v12605, %v12607
  %v12609 = vsub.f32 1.0, %v12608
  %v12610 = vmul.f32 %v12607, %v12609
  %v12611 = vadd.f32 %v12607, %v12610
  %vm12612 = vweird.f32 %v12605
  %vm12613 = vweird.f32 %v12607
  %vm12614 = vmor %vm12612, %vm12613
  %v12615 = vsel %vm12614, %v12607, %v12611
  %v12616 = vand.u32 2147483647, %v12605
  %vm12617 = vcmp.eq.f32.partialorder %v12616, 8.507059e+37
  %v12618 = vand.u32 %v12605, 2147483648
  %v12619 = vor.u32 1.1754944e-38, %v12618
  %v12620 = vsel %vm12617, %v12619, %v12615
  %v12621 = vmul.f32 1.0, %v12620
  %v12622 = vrcp.pop %v12606
  %v12623 = vmul.f32 %v12606, %v12622
  %v12624 = vsub.f32 1.0, %v12623
  %v12625 = vmul.f32 %v12622, %v12624
  %v12626 = vadd.f32 %v12622, %v12625
  %vm12627 = vweird.f32 %v12606
  %vm12628 = vweird.f32 %v12622
  %vm12629 = vmor %vm12627, %vm12628
  %v12630 = vsel %vm12629, %v12622, %v12626
  %v12631 = vand.u32 2147483647, %v12606
  %vm12632 = vcmp.eq.f32.partialorder %v12631, 8.507059e+37
  %v12633 = vand.u32 %v12606, 2147483648
  %v12634 = vor.u32 1.1754944e-38, %v12633
  %v12635 = vsel %vm12632, %v12634, %v12630
  %v12636 = vmul.f32 1.0, %v12635
  %v12637 = vtanh.pop %v12597
  %v12638 = vtanh.pop %v12598
  %v12639 = vmul.f32 %v12621, %v12540
  %v12640 = vmul.f32 %v12636, %v12541
  %12643 = vrot.lane.b32.xlu0 %v12637, 32
  %v12644 = vpop.permute.xlu0 %12643
  %12645 = vrot.lane.b32.xlu0 %v12638, 32
  %v12646 = vpop.permute.xlu0 %12645
  %v12649 = vmul.f32 %v12621, %v12644
  %v12650 = vmul.f32 %v12636, %v12646
  %12653 = vrot.lane.b32.xlu0 %v12649, 32
  %v12654 = vpop.permute.xlu0 %12653
  %12655 = vrot.lane.b32.xlu0 %v12650, 32
  %v12656 = vpop.permute.xlu0 %12655
  %v12659 = vadd.f32 %v12639, %v12654
  %v12660 = vadd.f32 %v12640, %v12656
  %v12661 = vtanh.pop %v12659
  %v12662 = vtanh.pop %v12660
  %12665 = vrot.lane.b32.xlu0 %v12661, 32
  %v12666 = vpop.permute.xlu0 %12665
  %12667 = vrot.lane.b32.xlu0 %v12662, 32
  %v12668 = vpop.permute.xlu0 %12667
  %v12671 = vmul.f32 %v12621, %v12666
  %v12672 = vmul.f32 %v12636, %v12668
  %v12673 = vsel %vm12308, %v12671, 0.0
  %v12674 = vsel %vm12308, %v12672, 0.0
  %v12675 = vadd.f32 %v12673, %v12674
  %v12676 = vrot.slane %v12675, 4
  %v12677 = vadd.f32 %v12675, %v12676
  %v12678 = vrot.slane %v12677, 2
  %v12679 = vadd.f32 %v12677, %v12678
  %v12680 = vrot.slane %v12679, 1
  %v12681 = vadd.f32 %v12679, %v12680
  %v12682 = vmul.f32 %v12681, %v12324
  %vm12683 = vcmask 1040384
  %v12684 = vsel %vm12683, %v12325, %v12444
  %vm12685 = vcmask 1041408
  %v12686 = vsel %vm12685, %v12684, %v12563
  %vm12687 = vcmask 1042432
  %v12688 = vsel %vm12687, %v12686, %v12682
  %v12689 = vld [vmem:[%s20] sm:$0x1]
  %v12691 = vperm.slane %v12689, 0
  %12692 = vrot.lane.b32.xlu0 %v12691, 64
  %v12693 = vpop.permute.xlu0 %12692
  %v12695 = vmul.f32 %v12688, %v12693
  %12697 = vrot.lane.b32.xlu0 %v12695, 64
  %v12698 = vpop.permute.xlu0 %12697
  %vm12700 = vcmask 257024
  %v12701 = vsel %vm12700, %v12698, 0.0
  %12702 = vadd.xlane.f32.xlu0 %v12701
  %v12703 = vpop.xlane.xlu0 %12702
  %v12704 = vld [vmem:[#allocation2] sm:$0x1]
  %v12706 = vperm.slane %v12704, 0
  %v12708 = vadd.f32 %v12703, %v12706
  %vm12709 = vcmask 3072
  %12710 = vst.msk [vmem:[%s22] sm:$0xf] %vm12709, %v12708
  // Predicated region
  $region90: #{transam_forward.1} parent=0 // pred_check
    _
  $region91: #{transam_forward.1} parent=0 // pred_check_branch
    %12712 = sbr.rel (0) target = $region93
  $region92: #{transam_forward.1} parent=0 // pred_region
    _
  $region93: #{transam_forward.1} parent=0 // pred_fallthru
    _
  // Predicated region
  $region94: #{transam_forward.1} parent=0 // pred_check
    _
  $region95: #{transam_forward.1} parent=0 // pred_check_branch
    %12714 = sbr.rel (0) target = $region97
  $region96: #{transam_forward.1} parent=0 // pred_region
    _
  $region97: #{transam_forward.1} parent=0 // pred_fallthru
    _

</llo_original>
